<compile_context>
chip_gen: v5e
topology: v5e:2x2
jax: 0.10.0
libtpu: 0.0.40
codegen_flags: <defaults>
</compile_context>

<pallas_src>
import jax
import jax.numpy as jnp
from jax import lax
from jax.experimental import pallas as pl
from jax.experimental.pallas import tpu as pltpu

HIDDEN = 32          # hidden_dim == feature_dim of MolAggregator
B = 2                # graphs per batch
N_PER_GRAPH = 64     # nodes per graph (ratio=0.5 pooling: 64 -> 32 -> 16)
ALPHA = 0.2          # GCN2Conv alpha (theta=None -> beta=1, shared weights)
EPS = 1e-5           # InstanceNorm eps (affine=False, batch statistics)
NEG = -1e30          # large-negative fill for masked max / softmax

LANES = 128          # packed-slab width (one full vreg lane row)
FIT_OFF = HIDDEN     # lane holding the LEConv fitness in the packed slab
ADJ_OFF = 64         # lanes [64, 64+k) hold the coarsening pattern
X1_OFF = 96          # lanes [96, 128) hold the pooled x0 (stage2 slab only)

_CPARAMS = pltpu.CompilerParams(dimension_semantics=("parallel",))


# ------------------------------------------------------------------ in-kernel helpers

def _mean_max(h):
    """hstack(MeanAggregation, MaxAggregation) for the single graph in this block."""
    n = h.shape[0]
    return jnp.concatenate([jnp.sum(h, axis=0, keepdims=True) * (1.0 / n),
                            jnp.max(h, axis=0, keepdims=True)], axis=1)


def _eye(n):
    return (lax.broadcasted_iota(jnp.int32, (n, n), 0)
            == lax.broadcasted_iota(jnp.int32, (n, n), 1)).astype(jnp.float32)


def _gcn2_instnorm_relu(h, x0, M, W):
    """GCN2Conv(alpha=0.2, beta=1, shared weights) -> InstanceNorm(affine=False) -> ReLU."""
    n = h.shape[0]
    deg_r = jnp.sum(M, axis=1, keepdims=True)
    deg_c = jnp.sum(M, axis=0, keepdims=True)
    dr = jnp.where(deg_r > 0, lax.rsqrt(deg_r), 0.0)
    dc = jnp.where(deg_c > 0, lax.rsqrt(deg_c), 0.0)
    prop = jnp.dot(dr * M * dc, h, preferred_element_type=jnp.float32)   # A_hat @ h
    m = (1.0 - ALPHA) * prop + ALPHA * x0
    out = jnp.dot(m, W, preferred_element_type=jnp.float32)              # beta = 1
    # InstanceNorm: per-graph per-channel mean / biased variance (block == one graph).
    mu = jnp.sum(out, axis=0, keepdims=True) * (1.0 / n)
    cen = out - mu
    var = jnp.sum(cen * cen, axis=0, keepdims=True) * (1.0 / n)
    return jnp.maximum(cen * lax.rsqrt(var + EPS), 0.0)


def _asap_pool_block(x, M, pw, vec, att_b, le_b1, le_b3):
    """Dense ASAPooling compute for one graph (top-k selection happens outside).

    x   : [n, H] features fed to the pooling layer
    M   : [n, n] 0/1 symmetric adjacency incl. self loops
    pw  : [2H+8, H] rows = [W_root | W_rel | b_rel | a2^T | pad]   (GraphConv + att a2)
    vec : [H, 8]  columns = [Lin.W @ att_a1 | le_w1 | le_w2 | le_w3 | pad]
    att_b/le_b1/le_b3 : fused scalar biases (read from SMEM)
    returns (x_new [n,H], fitness = sigmoid(LEConv) [n,1], 3-hop reach pattern [n,n])
    """
    n, hd = x.shape
    wroot = pw[0:hd, :]
    wrel = pw[hd:2 * hd, :]
    brel = pw[2 * hd:2 * hd + 1, :]             # [1, H]
    a2row = pw[2 * hd + 1:2 * hd + 2, :]        # [1, H]
    wla1 = vec[:, 0:1]                          # [H, 1] = Lin.W @ att_a1
    le_w = vec[:, 1:4]                          # [H, 3] LEConv lin1|lin2|lin3

    # GraphConv (gnn_intra_cluster), unfused (no lane-axis concat):
    agg = jnp.dot(M, x, preferred_element_type=jnp.float32)
    x_pool = (jnp.dot(x, wroot, preferred_element_type=jnp.float32)
              + jnp.dot(agg, wrel, preferred_element_type=jnp.float32) + brel)

    # x_q_i = Lin(max_{j in N(i)} x_pool_j) only feeds the a1 score, so the Lin is folded
    # into wla1 and the lane-dense masked neighbour max is CHUNKED over channels (8 at a
    # time, static slices) and reduced against wla1 on the fly -> no [H, n, n] live tensor.
    xpT = jnp.transpose(x_pool)                                          # [H, n(j)]
    s1_row = jnp.zeros((1, n), jnp.float32)
    CH = 8
    for c in range(0, hd, CH):
        xp_c = xpT[c:c + CH, :]                                          # [8, n(j)]
        w_c = wla1[c:c + CH, :]                                          # [8, 1]
        mx = jnp.max(jnp.where(M[None, :, :] > 0, xp_c[:, :, None], NEG), axis=1)  # [8, n(i)]
        s1_row = s1_row + jnp.sum(w_c * mx, axis=0, keepdims=True)       # [1, n(i)]
    s1_col = jnp.transpose(s1_row)                                       # [n(i), 1]
    s2_row = jnp.dot(a2row, xpT, preferred_element_type=jnp.float32)     # [1, n(j)]

    # attention score of edge j -> i: leaky_relu(0.2), softmax over incoming j.
    S = s1_col + s2_row + att_b                                          # [n(i), n(j)]
    S = jnp.where(S > 0, S, 0.2 * S)
    S = jnp.where(M > 0, S, NEG)
    E = jnp.where(M > 0, jnp.exp(S - jnp.max(S, axis=1, keepdims=True)), 0.0)
    P = E * pl.reciprocal(jnp.sum(E, axis=1, keepdims=True), approx=True)
    x_new = jnp.dot(P, x, preferred_element_type=jnp.float32)            # [n, H]

    # LEConv fitness on the unweighted graph, then sigmoid.
    lec = jnp.dot(x_new, le_w, preferred_element_type=jnp.float32)       # [n, 3]
    deg = jnp.sum(M, axis=1, keepdims=True)
    fit = (jnp.dot(M, lec[:, 0:1], preferred_element_type=jnp.float32)
           + deg * le_b1 - deg * lec[:, 1:2] + lec[:, 2:3] + le_b3)
    fit = 1.0 / (1.0 + jnp.exp(-fit))

    # Graph coarsening pattern: S^T A S has the sparsity pattern of M @ M @ M.
    # bf16 is exact enough here: non-negative integer sums, only (>0) is consumed.
    Mb = M.astype(jnp.bfloat16)
    m2 = jnp.dot(Mb, Mb, preferred_element_type=jnp.float32)
    m3 = jnp.dot(m2.astype(jnp.bfloat16), Mb, preferred_element_type=jnp.float32)
    return x_new, fit, (m3 > 0).astype(jnp.float32)


def _pack_slab(x_new, fit, m3, extra, ro):
    """Pack one graph's stage outputs into a single lane-dense [n+8, 128] slab.

    rows 0..n-1 : [x_new (H) | fit (1) | pad | m3 pattern | extra(pooled x0) | pad]
    rows n..n+7 : readout row [mean | max | pad] broadcast (read back at row n).
    Single unmasked 128-lane store -> one output DMA per grid step."""
    n, hd = x_new.shape
    parts = [x_new, fit, jnp.zeros((n, ADJ_OFF - hd - 1), jnp.float32), m3]
    width = ADJ_OFF + m3.shape[1]
    if extra is not None:
        parts.append(extra)
        width += extra.shape[1]
    if width < LANES:
        parts.append(jnp.zeros((n, LANES - width), jnp.float32))
    rows = jnp.concatenate(parts, axis=1)                                # [n, 128]
    ro_row = jnp.concatenate(
        [ro, jnp.zeros((1, LANES - ro.shape[1]), jnp.float32)], axis=1)  # [1, 128]
    return jnp.concatenate([rows, jnp.broadcast_to(ro_row, (8, LANES))], axis=0)


# -------------------------------------------------------------------------- kernels

def _stage1_kernel(x_ref, adj_ref, pw_ref, vec_ref, sc_ref, slab_ref):
    x = x_ref[0]                                                         # [n, H]
    n = x.shape[0]
    ro = _mean_max(x)                                                    # readout1 on raw x
    M = jnp.maximum(adj_ref[0], _eye(n))                                 # add self loops
    x_new, fit, m3 = _asap_pool_block(x, M, pw_ref[...], vec_ref[...],
                                      sc_ref[0], sc_ref[1], sc_ref[2])
    slab_ref[0] = _pack_slab(x_new, fit, m3, None, ro)


def _stage2_kernel(slab1_ref, x_ref, sel_ref, convw_ref, pw_ref, vec_ref, sc_ref,
                   slab2_ref):
    slab1 = slab1_ref[0]                       # [n0, 128] node rows of the stage1 slab
    x_full = x_ref[0]                          # [n0, H] original node features
    sel = sel_ref[0]                           # [k, n0] one-hot top-k cluster selection
    n0, hd = x_full.shape
    k = sel.shape[0]

    xnew1 = slab1[:, 0:hd]
    fit1 = slab1[:, FIT_OFF:FIT_OFF + 1]
    m31 = slab1[:, ADJ_OFF:ADJ_OFF + n0]

    # ASAPooling cluster selection as one-hot matmuls (gathers stay on-chip).
    h1 = (jnp.dot(sel, xnew1, preferred_element_type=jnp.float32)
          * jnp.dot(sel, fit1, preferred_element_type=jnp.float32))      # x[perm]*fit[perm]
    x1 = jnp.dot(sel, x_full, preferred_element_type=jnp.float32)        # x = x[k_index]
    selT = jnp.transpose(sel)
    A = jnp.dot(jnp.dot(sel, m31, preferred_element_type=jnp.float32), selT,
                preferred_element_type=jnp.float32)                      # [k, k]
    M = jnp.maximum(A, _eye(k))                                          # A.fill_diag(1.)

    h = _gcn2_instnorm_relu(h1, x1, M, convw_ref[...])
    ro2 = _mean_max(h)                                                   # readout2
    x_new, fit, m3 = _asap_pool_block(h, M, pw_ref[...], vec_ref[...],
                                      sc_ref[0], sc_ref[1], sc_ref[2])
    slab2_ref[0] = _pack_slab(x_new, fit, m3, x1, ro2)


def _stage3_kernel(slab2_ref, sel_ref, convw_ref, aggw_ref, aggvec_ref, sc_ref,
                   out_ref):
    slab2 = slab2_ref[0]                       # [k1, 128] node rows of the stage2 slab
    sel = sel_ref[0]                           # [k2, k1]
    k2, k1 = sel.shape
    hd = HIDDEN

    xnew2 = slab2[:, 0:hd]
    fit2 = slab2[:, FIT_OFF:FIT_OFF + 1]
    m32 = slab2[:, ADJ_OFF:ADJ_OFF + k1]
    x1 = slab2[:, X1_OFF:X1_OFF + hd]

    h2 = (jnp.dot(sel, xnew2, preferred_element_type=jnp.float32)
          * jnp.dot(sel, fit2, preferred_element_type=jnp.float32))
    x2 = jnp.dot(sel, x1, preferred_element_type=jnp.float32)
    selT = jnp.transpose(sel)
    A = jnp.dot(jnp.dot(sel, m32, preferred_element_type=jnp.float32), selT,
                preferred_element_type=jnp.float32)
    M = jnp.maximum(A, _eye(k2))

    h = _gcn2_instnorm_relu(h2, x2, M, convw_ref[...])

    # AttentionalAggregation: softmax(gate_nn(h)) weighted sum of nn(h), unfused matmuls.
    aggw = aggw_ref[...]
    nn_w = aggw[0:hd, :]
    nn_b = aggw[hd:hd + 1, :]
    gate_w = aggvec_ref[...][:, 0:1]
    gate_b = sc_ref[0]
    feat = jnp.dot(h, nn_w, preferred_element_type=jnp.float32) + nn_b
    gate = jnp.dot(h, gate_w, preferred_element_type=jnp.float32) + gate_b
    e = jnp.exp(gate - jnp.max(gate, axis=0, keepdims=True))
    p = e * pl.reciprocal(jnp.sum(e, axis=0, keepdims=True), approx=True)
    mol = jnp.sum(p * feat, axis=0, keepdims=True)                       # [1, H]
    out_ref[0] = jnp.concatenate(
        [mol, jnp.zeros((1, LANES - hd), jnp.float32)], axis=1)          # lane-dense store


# ------------------------------------------------------------------- pallas wrappers

def _bspec(shape):
    if len(shape) == 3:                        # per-graph block
        return pl.BlockSpec(shape, lambda g: (g, 0, 0))
    return pl.BlockSpec(shape, lambda g: (0, 0))   # shared parameter block


_SMEM_SPEC = pl.BlockSpec(memory_space=pltpu.MemorySpace.SMEM)  # fused scalar biases


def stage1(x, adj, pw, vec, sc):
    b, n, h = x.shape
    return pl.pallas_call(
        _stage1_kernel,
        grid=(b,),
        in_specs=[_bspec((1, n, h)), _bspec((1, n, n)),
                  _bspec(pw.shape), _bspec(vec.shape), _SMEM_SPEC],
        out_specs=_bspec((1, n + 8, LANES)),
        out_shape=jax.ShapeDtypeStruct((b, n + 8, LANES), jnp.float32),
        compiler_params=_CPARAMS,
    )(x, adj, pw, vec, sc)


def stage2(slab1, x, sel, conv_w, pw, vec, sc):
    b, n, h = x.shape
    k = sel.shape[1]
    return pl.pallas_call(
        _stage2_kernel,
        grid=(b,),
        in_specs=[_bspec((1, n, LANES)),       # node rows of slab1 only (skip ro rows)
                  _bspec((1, n, h)),
                  _bspec((1, k, n)),
                  _bspec(conv_w.shape), _bspec(pw.shape), _bspec(vec.shape), _SMEM_SPEC],
        out_specs=_bspec((1, k + 8, LANES)),
        out_shape=jax.ShapeDtypeStruct((b, k + 8, LANES), jnp.float32),
        compiler_params=_CPARAMS,
    )(slab1, x, sel, conv_w, pw, vec, sc)


def stage3(slab2, sel, conv_w, aggw, aggvec, sc):
    b = slab2.shape[0]
    k2, k1 = sel.shape[1], sel.shape[2]
    return pl.pallas_call(
        _stage3_kernel,
        grid=(b,),
        in_specs=[_bspec((1, k1, LANES)),
                  _bspec((1, k2, k1)),
                  _bspec(conv_w.shape), _bspec(aggw.shape), _bspec(aggvec.shape),
                  _SMEM_SPEC],
        out_specs=_bspec((1, 1, LANES)),
        out_shape=jax.ShapeDtypeStruct((b, 1, LANES), jnp.float32),
        compiler_params=_CPARAMS,
    )(slab2, sel, conv_w, aggw, aggvec, sc)


# ---------------------------------------------------------------------- JAX-side glue

def _topk_onehot(fit, k, n):
    """ASAPooling cluster selection: per-graph top-k by fitness -> one-hot selection."""
    # TODO(synk): data-dependent per-graph top-k has no clean Pallas TPU equivalent at
    # these sizes; top-k and the one-hot compare stay in XLA, all gathers run in-kernel.
    _, idx = lax.top_k(fit, k)                                           # [B, k]
    hot = idx[:, :, None] == jnp.arange(n, dtype=idx.dtype)[None, None, :]
    return hot.astype(jnp.float32)                                       # [B, k, n]


@jax.jit
def mol_aggregator_forward(p, x, adj):
    """x: [B, n, H] node features; adj: [B, n, n] symmetric 0/1 adjacency (undirected)."""
    b, n0, hd = x.shape

    # ---- stage 1: readout1 + ASAP pool1 (one packed slab out) ----
    slab1 = stage1(x, adj, p['pool1_pw'], p['pool1_vec'], p['pool1_sc'])
    ro1 = slab1[:, n0, :2 * hd]
    k1 = -(-n0 // 2)                                                     # ceil(0.5 * n)
    sel1 = _topk_onehot(slab1[:, :n0, FIT_OFF], k1, n0)

    # ---- stage 2: gather + conv1 + norm1 + relu + readout2 + ASAP pool2 ----
    slab2 = stage2(slab1, x, sel1, p['conv1_w'],
                   p['pool2_pw'], p['pool2_vec'], p['pool2_sc'])
    ro2 = slab2[:, k1, :2 * hd]
    k2 = -(-k1 // 2)
    sel2 = _topk_onehot(slab2[:, :k1, FIT_OFF], k2, k1)

    # ---- stage 3: gather + conv2 + norm2 + relu + attentional aggregation ----
    mol = stage3(slab2, sel2, p['conv2_w'],
                 p['agg_w'], p['agg_vec'], p['agg_sc'])[:, 0, :hd]

    # hstack([mol_aggr(h), readout2, readout1])
    return jnp.concatenate([mol, ro2, ro1], axis=1)


# ------------------------------------------------------------------------- parameters

def init_params(key):
    H = HIDDEN
    keys = iter(jax.random.split(key, 48))

    def w(shape, s=0.2):
        return s * jax.random.normal(next(keys), shape, jnp.float32)

    def pool():
        return dict(wrel=w((H, H)), wroot=w((H, H)), brel=w((H,)),
                    wl=w((H, H)), bl=w((H,)),
                    a1=w((H, 1)), a2=w((H, 1)), ab=w(()),
                    le_w1=w((H, 1)), le_b1=w(()), le_w2=w((H, 1)),
                    le_w3=w((H, 1)), le_b3=w(()))

    return dict(pool1=pool(), pool2=pool(), conv1=w((H, H)), conv2=w((H, H)),
                gate_w=w((H, 1)), gate_b=w(()), nn_w=w((H, H)), nn_b=w((H,)))


def pack_params(raw):
    """Fold biases / fuse the tiny weights into the slabs the kernels consume."""
    H = HIDDEN

    def pack_pool(q):
        pw = jnp.zeros((2 * H + 8, H), jnp.float32)
        pw = pw.at[0:H].set(q['wroot'])
        pw = pw.at[H:2 * H].set(q['wrel'])
        pw = pw.at[2 * H].set(q['brel'])
        pw = pw.at[2 * H + 1].set(q['a2'][:, 0])
        wla1 = q['wl'] @ q['a1']                                         # Lin folded into att
        vec = jnp.concatenate([wla1, q['le_w1'], q['le_w2'], q['le_w3'],
                               jnp.zeros((H, 4), jnp.float32)], axis=1)  # [H, 8]
        att_b = jnp.dot(q['bl'], q['a1'][:, 0]) + q['ab']
        sc = jnp.stack([att_b, q['le_b1'], q['le_b3'],
                        jnp.zeros((), jnp.float32)])                     # SMEM scalars
        return pw, vec, sc

    pw1, vec1, sc1 = pack_pool(raw['pool1'])
    pw2, vec2, sc2 = pack_pool(raw['pool2'])
    aggw = jnp.zeros((H + 8, H), jnp.float32)
    aggw = aggw.at[0:H].set(raw['nn_w'])
    aggw = aggw.at[H].set(raw['nn_b'])
    aggvec = jnp.concatenate([raw['gate_w'], jnp.zeros((H, 7), jnp.float32)], axis=1)
    agg_sc = jnp.stack([raw['gate_b'], jnp.zeros((), jnp.float32),
                        jnp.zeros((), jnp.float32), jnp.zeros((), jnp.float32)])
    return dict(pool1_pw=pw1, pool1_vec=vec1, pool1_sc=sc1,
                pool2_pw=pw2, pool2_vec=vec2, pool2_sc=sc2,
                conv1_w=raw['conv1'], conv2_w=raw['conv2'],
                agg_w=aggw, agg_vec=aggvec, agg_sc=agg_sc)


# -------------------------------------------------------------------------------- main

if __name__ == "__main__":
    key = jax.random.PRNGKey(0)
    kp, kx, ka = jax.random.split(key, 3)
    params = pack_params(init_params(kp))

    # Two undirected random graphs, 64 nodes each, 32 hidden features.
    x = jax.random.normal(kx, (B, N_PER_GRAPH, HIDDEN), jnp.float32)
    upper = (jax.random.uniform(ka, (B, N_PER_GRAPH, N_PER_GRAPH)) < 0.08).astype(jnp.float32)
    adj = jnp.maximum(upper, jnp.transpose(upper, (0, 2, 1)))            # symmetrize
    adj = adj * (1.0 - jnp.eye(N_PER_GRAPH, dtype=jnp.float32)[None])    # loops added in-kernel

    out = mol_aggregator_forward(params, x, adj)
    jax.block_until_ready(out)
    assert out.shape == (B, 5 * HIDDEN), out.shape
    assert bool(jnp.all(jnp.isfinite(out)))
    print("KERNEL_OK")
</pallas_src>

<mosaic_0001>
module attributes {stable_mosaic.version = 11 : i64} {
  func.func @_stage1_kernel(%arg0: i32, %arg1: memref<1x64x32xf32, #tpu.memory_space<vmem>>, %arg2: memref<1x64x64xf32, #tpu.memory_space<vmem>>, %arg3: memref<72x32xf32, #tpu.memory_space<vmem>>, %arg4: memref<32x8xf32, #tpu.memory_space<vmem>>, %arg5: memref<4xf32, #tpu.memory_space<smem>>, %arg6: memref<1x72x128xf32, #tpu.memory_space<vmem>>) attributes {dimension_semantics = [#tpu.dimension_semantics<parallel>], iteration_bounds = array<i64: 2>, scalar_prefetch = 0 : i64, scratch_operands = 0 : i64, tpu.core_type = #tpu.core_type<tc>, window_params = [{transform_indices = @transform_0, window_bounds = array<i64: 1, 64, 32>}, {transform_indices = @transform_1, window_bounds = array<i64: 1, 64, 64>}, {pipeline_mode = #tpu.pipeline_mode<synchronous>, transform_indices = @transform_2, window_bounds = array<i64: 72, 32>}, {pipeline_mode = #tpu.pipeline_mode<synchronous>, transform_indices = @transform_3, window_bounds = array<i64: 32, 8>}, {transform_indices = @transform_4, window_bounds = array<i64: 4>}, {transform_indices = @transform_5, window_bounds = array<i64: 1, 72, 128>}]} {
    %c0 = arith.constant 0 : index
    %c0_0 = arith.constant 0 : index
    %c0_1 = arith.constant 0 : index
    %0 = vector.load %arg1[%c0, %c0_0, %c0_1] : memref<1x64x32xf32, #tpu.memory_space<vmem>>, vector<1x64x32xf32>
    %1 = vector.shape_cast %0 : vector<1x64x32xf32> to vector<64x32xf32>
    %cst = arith.constant dense<0.000000e+00> : vector<32xf32>
    %2 = vector.multi_reduction <add>, %1, %cst [0] : vector<64x32xf32> to vector<32xf32>
    %3 = vector.shape_cast %2 : vector<32xf32> to vector<1x32xf32>
    %cst_2 = arith.constant 1.562500e-02 : f32
    %4 = vector.broadcast %cst_2 : f32 to vector<1x32xf32>
    %5 = arith.mulf %3, %4 : vector<1x32xf32>
    %cst_3 = arith.constant dense<0xFF800000> : vector<32xf32>
    %6 = vector.multi_reduction <maximumf>, %1, %cst_3 [0] : vector<64x32xf32> to vector<32xf32>
    %7 = vector.shape_cast %6 : vector<32xf32> to vector<1x32xf32>
    %8 = tpu.concatenate %5, %7 in 1 : vector<1x32xf32>, vector<1x32xf32> -> vector<1x64xf32>
    %c0_4 = arith.constant 0 : index
    %c0_5 = arith.constant 0 : index
    %c0_6 = arith.constant 0 : index
    %9 = vector.load %arg2[%c0_4, %c0_5, %c0_6] : memref<1x64x64xf32, #tpu.memory_space<vmem>>, vector<1x64x64xf32>
    %10 = vector.shape_cast %9 : vector<1x64x64xf32> to vector<64x64xf32>
    %11 = tpu.iota {dimensions = array<i32: 0>} : vector<64x64xi32>
    %12 = tpu.iota {dimensions = array<i32: 1>} : vector<64x64xi32>
    %13 = arith.cmpi eq, %11, %12 : vector<64x64xi32>
    %14 = arith.extui %13 : vector<64x64xi1> to vector<64x64xi32>
    %15 = arith.sitofp %14 : vector<64x64xi32> to vector<64x64xf32>
    %16 = arith.maximumf %10, %15 : vector<64x64xf32>
    %c0_7 = arith.constant 0 : index
    %c0_8 = arith.constant 0 : index
    %17 = vector.load %arg3[%c0_7, %c0_8] : memref<72x32xf32, #tpu.memory_space<vmem>>, vector<72x32xf32>
    %c0_9 = arith.constant 0 : index
    %c0_10 = arith.constant 0 : index
    %18 = vector.load %arg4[%c0_9, %c0_10] : memref<32x8xf32, #tpu.memory_space<vmem>>, vector<32x8xf32>
    %c0_11 = arith.constant 0 : index
    %19 = memref.load %arg5[%c0_11] : memref<4xf32, #tpu.memory_space<smem>>
    %c1 = arith.constant 1 : index
    %20 = memref.load %arg5[%c1] : memref<4xf32, #tpu.memory_space<smem>>
    %c2 = arith.constant 2 : index
    %21 = memref.load %arg5[%c2] : memref<4xf32, #tpu.memory_space<smem>>
    %22 = vector.extract_strided_slice %17 {offsets = [0, 0], sizes = [32, 32], strides = [1, 1]} : vector<72x32xf32> to vector<32x32xf32>
    %23 = vector.extract_strided_slice %17 {offsets = [32, 0], sizes = [32, 32], strides = [1, 1]} : vector<72x32xf32> to vector<32x32xf32>
    %24 = vector.extract_strided_slice %17 {offsets = [64, 0], sizes = [1, 32], strides = [1, 1]} : vector<72x32xf32> to vector<1x32xf32>
    %25 = vector.extract_strided_slice %17 {offsets = [65, 0], sizes = [1, 32], strides = [1, 1]} : vector<72x32xf32> to vector<1x32xf32>
    %26 = vector.extract_strided_slice %18 {offsets = [0, 0], sizes = [32, 1], strides = [1, 1]} : vector<32x8xf32> to vector<32x1xf32>
    %27 = vector.extract_strided_slice %18 {offsets = [0, 1], sizes = [32, 3], strides = [1, 1]} : vector<32x8xf32> to vector<32x3xf32>
    %cst_12 = arith.constant dense<0.000000e+00> : vector<64x32xf32>
    %28 = tpu.matmul %16, %1, %cst_12 {dimension_numbers = #tpu.dot_dimension_numbers<[1], [0], [0], [1], [0, 0, 1, 1], [], []>} : vector<64x64xf32>, vector<64x32xf32>, vector<64x32xf32> -> vector<64x32xf32>
    %cst_13 = arith.constant dense<0.000000e+00> : vector<64x32xf32>
    %29 = tpu.matmul %1, %22, %cst_13 {dimension_numbers = #tpu.dot_dimension_numbers<[1], [0], [0], [1], [0, 0, 1, 1], [], []>} : vector<64x32xf32>, vector<32x32xf32>, vector<64x32xf32> -> vector<64x32xf32>
    %cst_14 = arith.constant dense<0.000000e+00> : vector<64x32xf32>
    %30 = tpu.matmul %28, %23, %cst_14 {dimension_numbers = #tpu.dot_dimension_numbers<[1], [0], [0], [1], [0, 0, 1, 1], [], []>} : vector<64x32xf32>, vector<32x32xf32>, vector<64x32xf32> -> vector<64x32xf32>
    %31 = arith.addf %29, %30 : vector<64x32xf32>
    %32 = vector.broadcast %24 : vector<1x32xf32> to vector<64x32xf32>
    %33 = arith.addf %31, %32 : vector<64x32xf32>
    %34 = tpu.transpose %33, [1, 0] : vector<64x32xf32> -> vector<32x64xf32>
    %cst_15 = arith.constant 0.000000e+00 : f32
    %35 = vector.broadcast %cst_15 : f32 to vector<1x64xf32>
    %36 = vector.extract_strided_slice %34 {offsets = [0, 0], sizes = [8, 64], strides = [1, 1]} : vector<32x64xf32> to vector<8x64xf32>
    %37 = vector.extract_strided_slice %26 {offsets = [0, 0], sizes = [8, 1], strides = [1, 1]} : vector<32x1xf32> to vector<8x1xf32>
    %38 = vector.shape_cast %16 : vector<64x64xf32> to vector<1x64x64xf32>
    %cst_16 = arith.constant 0.000000e+00 : f32
    %39 = vector.broadcast %cst_16 : f32 to vector<1x64x64xf32>
    %40 = arith.cmpf ogt, %38, %39 : vector<1x64x64xf32>
    %41 = vector.shape_cast %36 : vector<8x64xf32> to vector<8x64x1xf32>
    %cst_17 = arith.constant -1.000000e+30 : f32
    %42 = vector.shape_cast %40 : vector<1x64x64xi1> to vector<1x64x64xi1>
    %43 = vector.broadcast %42 : vector<1x64x64xi1> to vector<8x64x64xi1>
    %44 = vector.shape_cast %41 : vector<8x64x1xf32> to vector<8x64x1xf32>
    %45 = vector.broadcast %44 : vector<8x64x1xf32> to vector<8x64x64xf32>
    %46 = vector.broadcast %cst_17 : f32 to vector<8x64x64xf32>
    %47 = arith.select %43, %45, %46 : vector<8x64x64xi1>, vector<8x64x64xf32>
    %cst_18 = arith.constant dense<0xFF800000> : vector<8x64xf32>
    %48 = vector.multi_reduction <maximumf>, %47, %cst_18 [1] : vector<8x64x64xf32> to vector<8x64xf32>
    %49 = vector.broadcast %37 : vector<8x1xf32> to vector<8x64xf32>
    %50 = arith.mulf %49, %48 : vector<8x64xf32>
    %cst_19 = arith.constant dense<0.000000e+00> : vector<64xf32>
    %51 = vector.multi_reduction <add>, %50, %cst_19 [0] : vector<8x64xf32> to vector<64xf32>
    %52 = vector.shape_cast %51 : vector<64xf32> to vector<1x64xf32>
    %53 = arith.addf %35, %52 : vector<1x64xf32>
    %54 = vector.extract_strided_slice %34 {offsets = [8, 0], sizes = [8, 64], strides = [1, 1]} : vector<32x64xf32> to vector<8x64xf32>
    %55 = vector.extract_strided_slice %26 {offsets = [8, 0], sizes = [8, 1], strides = [1, 1]} : vector<32x1xf32> to vector<8x1xf32>
    %56 = vector.shape_cast %16 : vector<64x64xf32> to vector<1x64x64xf32>
    %cst_20 = arith.constant 0.000000e+00 : f32
    %57 = vector.broadcast %cst_20 : f32 to vector<1x64x64xf32>
    %58 = arith.cmpf ogt, %56, %57 : vector<1x64x64xf32>
    %59 = vector.shape_cast %54 : vector<8x64xf32> to vector<8x64x1xf32>
    %cst_21 = arith.constant -1.000000e+30 : f32
    %60 = vector.shape_cast %58 : vector<1x64x64xi1> to vector<1x64x64xi1>
    %61 = vector.broadcast %60 : vector<1x64x64xi1> to vector<8x64x64xi1>
    %62 = vector.shape_cast %59 : vector<8x64x1xf32> to vector<8x64x1xf32>
    %63 = vector.broadcast %62 : vector<8x64x1xf32> to vector<8x64x64xf32>
    %64 = vector.broadcast %cst_21 : f32 to vector<8x64x64xf32>
    %65 = arith.select %61, %63, %64 : vector<8x64x64xi1>, vector<8x64x64xf32>
    %cst_22 = arith.constant dense<0xFF800000> : vector<8x64xf32>
    %66 = vector.multi_reduction <maximumf>, %65, %cst_22 [1] : vector<8x64x64xf32> to vector<8x64xf32>
    %67 = vector.broadcast %55 : vector<8x1xf32> to vector<8x64xf32>
    %68 = arith.mulf %67, %66 : vector<8x64xf32>
    %cst_23 = arith.constant dense<0.000000e+00> : vector<64xf32>
    %69 = vector.multi_reduction <add>, %68, %cst_23 [0] : vector<8x64xf32> to vector<64xf32>
    %70 = vector.shape_cast %69 : vector<64xf32> to vector<1x64xf32>
    %71 = arith.addf %53, %70 : vector<1x64xf32>
    %72 = vector.extract_strided_slice %34 {offsets = [16, 0], sizes = [8, 64], strides = [1, 1]} : vector<32x64xf32> to vector<8x64xf32>
    %73 = vector.extract_strided_slice %26 {offsets = [16, 0], sizes = [8, 1], strides = [1, 1]} : vector<32x1xf32> to vector<8x1xf32>
    %74 = vector.shape_cast %16 : vector<64x64xf32> to vector<1x64x64xf32>
    %cst_24 = arith.constant 0.000000e+00 : f32
    %75 = vector.broadcast %cst_24 : f32 to vector<1x64x64xf32>
    %76 = arith.cmpf ogt, %74, %75 : vector<1x64x64xf32>
    %77 = vector.shape_cast %72 : vector<8x64xf32> to vector<8x64x1xf32>
    %cst_25 = arith.constant -1.000000e+30 : f32
    %78 = vector.shape_cast %76 : vector<1x64x64xi1> to vector<1x64x64xi1>
    %79 = vector.broadcast %78 : vector<1x64x64xi1> to vector<8x64x64xi1>
    %80 = vector.shape_cast %77 : vector<8x64x1xf32> to vector<8x64x1xf32>
    %81 = vector.broadcast %80 : vector<8x64x1xf32> to vector<8x64x64xf32>
    %82 = vector.broadcast %cst_25 : f32 to vector<8x64x64xf32>
    %83 = arith.select %79, %81, %82 : vector<8x64x64xi1>, vector<8x64x64xf32>
    %cst_26 = arith.constant dense<0xFF800000> : vector<8x64xf32>
    %84 = vector.multi_reduction <maximumf>, %83, %cst_26 [1] : vector<8x64x64xf32> to vector<8x64xf32>
    %85 = vector.broadcast %73 : vector<8x1xf32> to vector<8x64xf32>
    %86 = arith.mulf %85, %84 : vector<8x64xf32>
    %cst_27 = arith.constant dense<0.000000e+00> : vector<64xf32>
    %87 = vector.multi_reduction <add>, %86, %cst_27 [0] : vector<8x64xf32> to vector<64xf32>
    %88 = vector.shape_cast %87 : vector<64xf32> to vector<1x64xf32>
    %89 = arith.addf %71, %88 : vector<1x64xf32>
    %90 = vector.extract_strided_slice %34 {offsets = [24, 0], sizes = [8, 64], strides = [1, 1]} : vector<32x64xf32> to vector<8x64xf32>
    %91 = vector.extract_strided_slice %26 {offsets = [24, 0], sizes = [8, 1], strides = [1, 1]} : vector<32x1xf32> to vector<8x1xf32>
    %92 = vector.shape_cast %16 : vector<64x64xf32> to vector<1x64x64xf32>
    %cst_28 = arith.constant 0.000000e+00 : f32
    %93 = vector.broadcast %cst_28 : f32 to vector<1x64x64xf32>
    %94 = arith.cmpf ogt, %92, %93 : vector<1x64x64xf32>
    %95 = vector.shape_cast %90 : vector<8x64xf32> to vector<8x64x1xf32>
    %cst_29 = arith.constant -1.000000e+30 : f32
    %96 = vector.shape_cast %94 : vector<1x64x64xi1> to vector<1x64x64xi1>
    %97 = vector.broadcast %96 : vector<1x64x64xi1> to vector<8x64x64xi1>
    %98 = vector.shape_cast %95 : vector<8x64x1xf32> to vector<8x64x1xf32>
    %99 = vector.broadcast %98 : vector<8x64x1xf32> to vector<8x64x64xf32>
    %100 = vector.broadcast %cst_29 : f32 to vector<8x64x64xf32>
    %101 = arith.select %97, %99, %100 : vector<8x64x64xi1>, vector<8x64x64xf32>
    %cst_30 = arith.constant dense<0xFF800000> : vector<8x64xf32>
    %102 = vector.multi_reduction <maximumf>, %101, %cst_30 [1] : vector<8x64x64xf32> to vector<8x64xf32>
    %103 = vector.broadcast %91 : vector<8x1xf32> to vector<8x64xf32>
    %104 = arith.mulf %103, %102 : vector<8x64xf32>
    %cst_31 = arith.constant dense<0.000000e+00> : vector<64xf32>
    %105 = vector.multi_reduction <add>, %104, %cst_31 [0] : vector<8x64xf32> to vector<64xf32>
    %106 = vector.shape_cast %105 : vector<64xf32> to vector<1x64xf32>
    %107 = arith.addf %89, %106 : vector<1x64xf32>
    %108 = tpu.transpose %107, [1, 0] : vector<1x64xf32> -> vector<64x1xf32>
    %cst_32 = arith.constant dense<0.000000e+00> : vector<1x64xf32>
    %109 = tpu.matmul %25, %34, %cst_32 {dimension_numbers = #tpu.dot_dimension_numbers<[1], [0], [0], [1], [0, 0, 1, 1], [], []>} : vector<1x32xf32>, vector<32x64xf32>, vector<1x64xf32> -> vector<1x64xf32>
    %110 = vector.broadcast %108 : vector<64x1xf32> to vector<64x64xf32>
    %111 = vector.broadcast %109 : vector<1x64xf32> to vector<64x64xf32>
    %112 = arith.addf %110, %111 : vector<64x64xf32>
    %113 = vector.broadcast %19 : f32 to vector<64x64xf32>
    %114 = arith.addf %112, %113 : vector<64x64xf32>
    %cst_33 = arith.constant 0.000000e+00 : f32
    %115 = vector.broadcast %cst_33 : f32 to vector<64x64xf32>
    %116 = arith.cmpf ogt, %114, %115 : vector<64x64xf32>
    %cst_34 = arith.constant 2.000000e-01 : f32
    %117 = vector.broadcast %cst_34 : f32 to vector<64x64xf32>
    %118 = arith.mulf %117, %114 : vector<64x64xf32>
    %119 = arith.select %116, %114, %118 : vector<64x64xi1>, vector<64x64xf32>
    %cst_35 = arith.constant 0.000000e+00 : f32
    %120 = vector.broadcast %cst_35 : f32 to vector<64x64xf32>
    %121 = arith.cmpf ogt, %16, %120 : vector<64x64xf32>
    %cst_36 = arith.constant -1.000000e+30 : f32
    %122 = vector.broadcast %cst_36 : f32 to vector<64x64xf32>
    %123 = arith.select %121, %119, %122 : vector<64x64xi1>, vector<64x64xf32>
    %cst_37 = arith.constant 0.000000e+00 : f32
    %124 = vector.broadcast %cst_37 : f32 to vector<64x64xf32>
    %125 = arith.cmpf ogt, %16, %124 : vector<64x64xf32>
    %cst_38 = arith.constant dense<0xFF800000> : vector<64xf32>
    %126 = vector.multi_reduction <maximumf>, %123, %cst_38 [1] : vector<64x64xf32> to vector<64xf32>
    %127 = vector.shape_cast %126 : vector<64xf32> to vector<64x1xf32>
    %128 = vector.broadcast %127 : vector<64x1xf32> to vector<64x64xf32>
    %129 = arith.subf %123, %128 : vector<64x64xf32>
    %130 = math.exp %129 : vector<64x64xf32>
    %cst_39 = arith.constant 0.000000e+00 : f32
    %131 = vector.broadcast %cst_39 : f32 to vector<64x64xf32>
    %132 = arith.select %125, %130, %131 : vector<64x64xi1>, vector<64x64xf32>
    %cst_40 = arith.constant dense<0.000000e+00> : vector<64xf32>
    %133 = vector.multi_reduction <add>, %132, %cst_40 [1] : vector<64x64xf32> to vector<64xf32>
    %134 = vector.shape_cast %133 : vector<64xf32> to vector<64x1xf32>
    %135 = tpu.reciprocal %134 {approx = true} : vector<64x1xf32> -> vector<64x1xf32>
    %136 = vector.broadcast %135 : vector<64x1xf32> to vector<64x64xf32>
    %137 = arith.mulf %132, %136 : vector<64x64xf32>
    %cst_41 = arith.constant dense<0.000000e+00> : vector<64x32xf32>
    %138 = tpu.matmul %137, %1, %cst_41 {dimension_numbers = #tpu.dot_dimension_numbers<[1], [0], [0], [1], [0, 0, 1, 1], [], []>} : vector<64x64xf32>, vector<64x32xf32>, vector<64x32xf32> -> vector<64x32xf32>
    %cst_42 = arith.constant dense<0.000000e+00> : vector<64x3xf32>
    %139 = tpu.matmul %138, %27, %cst_42 {dimension_numbers = #tpu.dot_dimension_numbers<[1], [0], [0], [1], [0, 0, 1, 1], [], []>} : vector<64x32xf32>, vector<32x3xf32>, vector<64x3xf32> -> vector<64x3xf32>
    %cst_43 = arith.constant dense<0.000000e+00> : vector<64xf32>
    %140 = vector.multi_reduction <add>, %16, %cst_43 [1] : vector<64x64xf32> to vector<64xf32>
    %141 = vector.shape_cast %140 : vector<64xf32> to vector<64x1xf32>
    %142 = vector.extract_strided_slice %139 {offsets = [0, 0], sizes = [64, 1], strides = [1, 1]} : vector<64x3xf32> to vector<64x1xf32>
    %cst_44 = arith.constant dense<0.000000e+00> : vector<64x1xf32>
    %143 = tpu.matmul %16, %142, %cst_44 {dimension_numbers = #tpu.dot_dimension_numbers<[1], [0], [0], [1], [0, 0, 1, 1], [], []>} : vector<64x64xf32>, vector<64x1xf32>, vector<64x1xf32> -> vector<64x1xf32>
    %144 = vector.broadcast %20 : f32 to vector<64x1xf32>
    %145 = arith.mulf %141, %144 : vector<64x1xf32>
    %146 = arith.addf %143, %145 : vector<64x1xf32>
    %147 = vector.extract_strided_slice %139 {offsets = [0, 1], sizes = [64, 1], strides = [1, 1]} : vector<64x3xf32> to vector<64x1xf32>
    %148 = arith.mulf %141, %147 : vector<64x1xf32>
    %149 = arith.subf %146, %148 : vector<64x1xf32>
    %150 = vector.extract_strided_slice %139 {offsets = [0, 2], sizes = [64, 1], strides = [1, 1]} : vector<64x3xf32> to vector<64x1xf32>
    %151 = arith.addf %149, %150 : vector<64x1xf32>
    %152 = vector.broadcast %21 : f32 to vector<64x1xf32>
    %153 = arith.addf %151, %152 : vector<64x1xf32>
    %cst_45 = arith.constant 0.000000e+00 : f32
    %154 = vector.broadcast %cst_45 : f32 to vector<64x1xf32>
    %155 = arith.subf %154, %153 : vector<64x1xf32>
    %156 = math.exp %155 : vector<64x1xf32>
    %cst_46 = arith.constant 1.000000e+00 : f32
    %157 = vector.broadcast %cst_46 : f32 to vector<64x1xf32>
    %158 = arith.addf %157, %156 : vector<64x1xf32>
    %cst_47 = arith.constant 1.000000e+00 : f32
    %159 = vector.broadcast %cst_47 : f32 to vector<64x1xf32>
    %160 = arith.divf %159, %158 : vector<64x1xf32>
    %161 = arith.truncf %16 : vector<64x64xf32> to vector<64x64xbf16>
    %cst_48 = arith.constant dense<0.000000e+00> : vector<64x64xf32>
    %162 = tpu.matmul %161, %161, %cst_48 {dimension_numbers = #tpu.dot_dimension_numbers<[1], [0], [0], [1], [0, 0, 1, 1], [], []>} : vector<64x64xbf16>, vector<64x64xbf16>, vector<64x64xf32> -> vector<64x64xf32>
    %163 = arith.truncf %162 : vector<64x64xf32> to vector<64x64xbf16>
    %cst_49 = arith.constant dense<0.000000e+00> : vector<64x64xf32>
    %164 = tpu.matmul %163, %161, %cst_49 {dimension_numbers = #tpu.dot_dimension_numbers<[1], [0], [0], [1], [0, 0, 1, 1], [], []>} : vector<64x64xbf16>, vector<64x64xbf16>, vector<64x64xf32> -> vector<64x64xf32>
    %cst_50 = arith.constant 0.000000e+00 : f32
    %165 = vector.broadcast %cst_50 : f32 to vector<64x64xf32>
    %166 = arith.cmpf ogt, %164, %165 : vector<64x64xf32>
    %167 = arith.extui %166 : vector<64x64xi1> to vector<64x64xi32>
    %168 = arith.sitofp %167 : vector<64x64xi32> to vector<64x64xf32>
    %cst_51 = arith.constant 0.000000e+00 : f32
    %169 = vector.broadcast %cst_51 : f32 to vector<64x31xf32>
    %170 = tpu.concatenate %138, %160, %169, %168 in 1 : vector<64x32xf32>, vector<64x1xf32>, vector<64x31xf32>, vector<64x64xf32> -> vector<64x128xf32>
    %cst_52 = arith.constant 0.000000e+00 : f32
    %171 = vector.broadcast %cst_52 : f32 to vector<1x64xf32>
    %172 = tpu.concatenate %8, %171 in 1 : vector<1x64xf32>, vector<1x64xf32> -> vector<1x128xf32>
    %173 = vector.shape_cast %172 : vector<1x128xf32> to vector<1x128xf32>
    %174 = vector.broadcast %173 : vector<1x128xf32> to vector<8x128xf32>
    %175 = tpu.concatenate %170, %174 in 0 : vector<64x128xf32>, vector<8x128xf32> -> vector<72x128xf32>
    %c0_53 = arith.constant 0 : index
    %c0_54 = arith.constant 0 : index
    %c0_55 = arith.constant 0 : index
    %176 = vector.load %arg6[%c0_53, %c0_54, %c0_55] : memref<1x72x128xf32, #tpu.memory_space<vmem>>, vector<1x72x128xf32>
    %177 = vector.shape_cast %176 : vector<1x72x128xf32> to vector<72x128xf32>
    %178 = vector.shape_cast %175 : vector<72x128xf32> to vector<1x72x128xf32>
    tpu.vector_store %arg6[%c0_53, %c0_54, %c0_55], %178 {strides = array<i32>} : memref<1x72x128xf32, #tpu.memory_space<vmem>>, vector<1x72x128xf32>,
    return
  }
  func.func @transform_0(%arg0: i32) -> (i32, i32, i32) {
    %c0_i32 = arith.constant 0 : i32
    %c0_i32_0 = arith.constant 0 : i32
    %c0_i32_1 = arith.constant 0 : i32
    return %arg0, %c0_i32, %c0_i32_0 : i32, i32, i32
  }
  func.func @transform_1(%arg0: i32) -> (i32, i32, i32) {
    %c0_i32 = arith.constant 0 : i32
    %c0_i32_0 = arith.constant 0 : i32
    %c0_i32_1 = arith.constant 0 : i32
    return %arg0, %c0_i32, %c0_i32_0 : i32, i32, i32
  }
  func.func @transform_2(%arg0: i32) -> (i32, i32) {
    %c0_i32 = arith.constant 0 : i32
    %c0_i32_0 = arith.constant 0 : i32
    %c0_i32_1 = arith.constant 0 : i32
    return %c0_i32, %c0_i32_0 : i32, i32
  }
  func.func @transform_3(%arg0: i32) -> (i32, i32) {
    %c0_i32 = arith.constant 0 : i32
    %c0_i32_0 = arith.constant 0 : i32
    %c0_i32_1 = arith.constant 0 : i32
    return %c0_i32, %c0_i32_0 : i32, i32
  }
  func.func @transform_4(%arg0: i32) -> i32 {
    %c0_i32 = arith.constant 0 : i32
    %c0_i32_0 = arith.constant 0 : i32
    return %c0_i32 : i32
  }
  func.func @transform_5(%arg0: i32) -> (i32, i32, i32) {
    %c0_i32 = arith.constant 0 : i32
    %c0_i32_0 = arith.constant 0 : i32
    %c0_i32_1 = arith.constant 0 : i32
    return %arg0, %c0_i32, %c0_i32_0 : i32, i32, i32
  }
}

module attributes {stable_mosaic.version = 11 : i64} {
  func.func @_stage2_kernel(%arg0: i32, %arg1: memref<1x64x128xf32, #tpu.memory_space<vmem>>, %arg2: memref<1x64x32xf32, #tpu.memory_space<vmem>>, %arg3: memref<1x32x64xf32, #tpu.memory_space<vmem>>, %arg4: memref<32x32xf32, #tpu.memory_space<vmem>>, %arg5: memref<72x32xf32, #tpu.memory_space<vmem>>, %arg6: memref<32x8xf32, #tpu.memory_space<vmem>>, %arg7: memref<4xf32, #tpu.memory_space<smem>>, %arg8: memref<1x40x128xf32, #tpu.memory_space<vmem>>) attributes {dimension_semantics = [#tpu.dimension_semantics<parallel>], iteration_bounds = array<i64: 2>, scalar_prefetch = 0 : i64, scratch_operands = 0 : i64, tpu.core_type = #tpu.core_type<tc>, window_params = [{transform_indices = @transform_0, window_bounds = array<i64: 1, 64, 128>}, {transform_indices = @transform_1, window_bounds = array<i64: 1, 64, 32>}, {transform_indices = @transform_2, window_bounds = array<i64: 1, 32, 64>}, {pipeline_mode = #tpu.pipeline_mode<synchronous>, transform_indices = @transform_3, window_bounds = array<i64: 32, 32>}, {pipeline_mode = #tpu.pipeline_mode<synchronous>, transform_indices = @transform_4, window_bounds = array<i64: 72, 32>}, {pipeline_mode = #tpu.pipeline_mode<synchronous>, transform_indices = @transform_5, window_bounds = array<i64: 32, 8>}, {transform_indices = @transform_6, window_bounds = array<i64: 4>}, {transform_indices = @transform_7, window_bounds = array<i64: 1, 40, 128>}]} {
    %c0 = arith.constant 0 : index
    %c0_0 = arith.constant 0 : index
    %c0_1 = arith.constant 0 : index
    %0 = vector.load %arg1[%c0, %c0_0, %c0_1] : memref<1x64x128xf32, #tpu.memory_space<vmem>>, vector<1x64x128xf32>
    %1 = vector.shape_cast %0 : vector<1x64x128xf32> to vector<64x128xf32>
    %c0_2 = arith.constant 0 : index
    %c0_3 = arith.constant 0 : index
    %c0_4 = arith.constant 0 : index
    %2 = vector.load %arg2[%c0_2, %c0_3, %c0_4] : memref<1x64x32xf32, #tpu.memory_space<vmem>>, vector<1x64x32xf32>
    %3 = vector.shape_cast %2 : vector<1x64x32xf32> to vector<64x32xf32>
    %c0_5 = arith.constant 0 : index
    %c0_6 = arith.constant 0 : index
    %c0_7 = arith.constant 0 : index
    %4 = vector.load %arg3[%c0_5, %c0_6, %c0_7] : memref<1x32x64xf32, #tpu.memory_space<vmem>>, vector<1x32x64xf32>
    %5 = vector.shape_cast %4 : vector<1x32x64xf32> to vector<32x64xf32>
    %6 = vector.extract_strided_slice %1 {offsets = [0, 0], sizes = [64, 32], strides = [1, 1]} : vector<64x128xf32> to vector<64x32xf32>
    %7 = vector.extract_strided_slice %1 {offsets = [0, 32], sizes = [64, 1], strides = [1, 1]} : vector<64x128xf32> to vector<64x1xf32>
    %8 = vector.extract_strided_slice %1 {offsets = [0, 64], sizes = [64, 64], strides = [1, 1]} : vector<64x128xf32> to vector<64x64xf32>
    %cst = arith.constant dense<0.000000e+00> : vector<32x32xf32>
    %9 = tpu.matmul %5, %6, %cst {dimension_numbers = #tpu.dot_dimension_numbers<[1], [0], [0], [1], [0, 0, 1, 1], [], []>} : vector<32x64xf32>, vector<64x32xf32>, vector<32x32xf32> -> vector<32x32xf32>
    %cst_8 = arith.constant dense<0.000000e+00> : vector<32x1xf32>
    %10 = tpu.matmul %5, %7, %cst_8 {dimension_numbers = #tpu.dot_dimension_numbers<[1], [0], [0], [1], [0, 0, 1, 1], [], []>} : vector<32x64xf32>, vector<64x1xf32>, vector<32x1xf32> -> vector<32x1xf32>
    %11 = vector.broadcast %10 : vector<32x1xf32> to vector<32x32xf32>
    %12 = arith.mulf %9, %11 : vector<32x32xf32>
    %cst_9 = arith.constant dense<0.000000e+00> : vector<32x32xf32>
    %13 = tpu.matmul %5, %3, %cst_9 {dimension_numbers = #tpu.dot_dimension_numbers<[1], [0], [0], [1], [0, 0, 1, 1], [], []>} : vector<32x64xf32>, vector<64x32xf32>, vector<32x32xf32> -> vector<32x32xf32>
    %14 = tpu.transpose %5, [1, 0] : vector<32x64xf32> -> vector<64x32xf32>
    %cst_10 = arith.constant dense<0.000000e+00> : vector<32x64xf32>
    %15 = tpu.matmul %5, %8, %cst_10 {dimension_numbers = #tpu.dot_dimension_numbers<[1], [0], [0], [1], [0, 0, 1, 1], [], []>} : vector<32x64xf32>, vector<64x64xf32>, vector<32x64xf32> -> vector<32x64xf32>
    %cst_11 = arith.constant dense<0.000000e+00> : vector<32x32xf32>
    %16 = tpu.matmul %15, %14, %cst_11 {dimension_numbers = #tpu.dot_dimension_numbers<[1], [0], [0], [1], [0, 0, 1, 1], [], []>} : vector<32x64xf32>, vector<64x32xf32>, vector<32x32xf32> -> vector<32x32xf32>
    %17 = tpu.iota {dimensions = array<i32: 0>} : vector<32x32xi32>
    %18 = tpu.iota {dimensions = array<i32: 1>} : vector<32x32xi32>
    %19 = arith.cmpi eq, %17, %18 : vector<32x32xi32>
    %20 = arith.extui %19 : vector<32x32xi1> to vector<32x32xi32>
    %21 = arith.sitofp %20 : vector<32x32xi32> to vector<32x32xf32>
    %22 = arith.maximumf %16, %21 : vector<32x32xf32>
    %c0_12 = arith.constant 0 : index
    %c0_13 = arith.constant 0 : index
    %23 = vector.load %arg4[%c0_12, %c0_13] : memref<32x32xf32, #tpu.memory_space<vmem>>, vector<32x32xf32>
    %cst_14 = arith.constant dense<0.000000e+00> : vector<32xf32>
    %24 = vector.multi_reduction <add>, %22, %cst_14 [1] : vector<32x32xf32> to vector<32xf32>
    %25 = vector.shape_cast %24 : vector<32xf32> to vector<32x1xf32>
    %cst_15 = arith.constant dense<0.000000e+00> : vector<32xf32>
    %26 = vector.multi_reduction <add>, %22, %cst_15 [0] : vector<32x32xf32> to vector<32xf32>
    %27 = vector.shape_cast %26 : vector<32xf32> to vector<1x32xf32>
    %cst_16 = arith.constant 0.000000e+00 : f32
    %28 = vector.broadcast %cst_16 : f32 to vector<32x1xf32>
    %29 = arith.cmpf ogt, %25, %28 : vector<32x1xf32>
    %30 = math.rsqrt %25 : vector<32x1xf32>
    %cst_17 = arith.constant 0.000000e+00 : f32
    %31 = vector.broadcast %cst_17 : f32 to vector<32x1xf32>
    %32 = arith.select %29, %30, %31 : vector<32x1xi1>, vector<32x1xf32>
    %cst_18 = arith.constant 0.000000e+00 : f32
    %33 = vector.broadcast %cst_18 : f32 to vector<1x32xf32>
    %34 = arith.cmpf ogt, %27, %33 : vector<1x32xf32>
    %35 = math.rsqrt %27 : vector<1x32xf32>
    %cst_19 = arith.constant 0.000000e+00 : f32
    %36 = vector.broadcast %cst_19 : f32 to vector<1x32xf32>
    %37 = arith.select %34, %35, %36 : vector<1x32xi1>, vector<1x32xf32>
    %38 = vector.broadcast %32 : vector<32x1xf32> to vector<32x32xf32>
    %39 = arith.mulf %38, %22 : vector<32x32xf32>
    %40 = vector.broadcast %37 : vector<1x32xf32> to vector<32x32xf32>
    %41 = arith.mulf %39, %40 : vector<32x32xf32>
    %cst_20 = arith.constant dense<0.000000e+00> : vector<32x32xf32>
    %42 = tpu.matmul %41, %12, %cst_20 {dimension_numbers = #tpu.dot_dimension_numbers<[1], [0], [0], [1], [0, 0, 1, 1], [], []>} : vector<32x32xf32>, vector<32x32xf32>, vector<32x32xf32> -> vector<32x32xf32>
    %cst_21 = arith.constant 8.000000e-01 : f32
    %43 = vector.broadcast %cst_21 : f32 to vector<32x32xf32>
    %44 = arith.mulf %43, %42 : vector<32x32xf32>
    %cst_22 = arith.constant 2.000000e-01 : f32
    %45 = vector.broadcast %cst_22 : f32 to vector<32x32xf32>
    %46 = arith.mulf %45, %13 : vector<32x32xf32>
    %47 = arith.addf %44, %46 : vector<32x32xf32>
    %cst_23 = arith.constant dense<0.000000e+00> : vector<32x32xf32>
    %48 = tpu.matmul %47, %23, %cst_23 {dimension_numbers = #tpu.dot_dimension_numbers<[1], [0], [0], [1], [0, 0, 1, 1], [], []>} : vector<32x32xf32>, vector<32x32xf32>, vector<32x32xf32> -> vector<32x32xf32>
    %cst_24 = arith.constant dense<0.000000e+00> : vector<32xf32>
    %49 = vector.multi_reduction <add>, %48, %cst_24 [0] : vector<32x32xf32> to vector<32xf32>
    %50 = vector.shape_cast %49 : vector<32xf32> to vector<1x32xf32>
    %cst_25 = arith.constant 3.125000e-02 : f32
    %51 = vector.broadcast %cst_25 : f32 to vector<1x32xf32>
    %52 = arith.mulf %50, %51 : vector<1x32xf32>
    %53 = vector.broadcast %52 : vector<1x32xf32> to vector<32x32xf32>
    %54 = arith.subf %48, %53 : vector<32x32xf32>
    %55 = arith.mulf %54, %54 : vector<32x32xf32>
    %cst_26 = arith.constant dense<0.000000e+00> : vector<32xf32>
    %56 = vector.multi_reduction <add>, %55, %cst_26 [0] : vector<32x32xf32> to vector<32xf32>
    %57 = vector.shape_cast %56 : vector<32xf32> to vector<1x32xf32>
    %cst_27 = arith.constant 3.125000e-02 : f32
    %58 = vector.broadcast %cst_27 : f32 to vector<1x32xf32>
    %59 = arith.mulf %57, %58 : vector<1x32xf32>
    %cst_28 = arith.constant 9.99999974E-6 : f32
    %60 = vector.broadcast %cst_28 : f32 to vector<1x32xf32>
    %61 = arith.addf %59, %60 : vector<1x32xf32>
    %62 = math.rsqrt %61 : vector<1x32xf32>
    %63 = vector.broadcast %62 : vector<1x32xf32> to vector<32x32xf32>
    %64 = arith.mulf %54, %63 : vector<32x32xf32>
    %cst_29 = arith.constant 0.000000e+00 : f32
    %65 = vector.broadcast %cst_29 : f32 to vector<32x32xf32>
    %66 = arith.maximumf %64, %65 : vector<32x32xf32>
    %cst_30 = arith.constant dense<0.000000e+00> : vector<32xf32>
    %67 = vector.multi_reduction <add>, %66, %cst_30 [0] : vector<32x32xf32> to vector<32xf32>
    %68 = vector.shape_cast %67 : vector<32xf32> to vector<1x32xf32>
    %cst_31 = arith.constant 3.125000e-02 : f32
    %69 = vector.broadcast %cst_31 : f32 to vector<1x32xf32>
    %70 = arith.mulf %68, %69 : vector<1x32xf32>
    %cst_32 = arith.constant dense<0xFF800000> : vector<32xf32>
    %71 = vector.multi_reduction <maximumf>, %66, %cst_32 [0] : vector<32x32xf32> to vector<32xf32>
    %72 = vector.shape_cast %71 : vector<32xf32> to vector<1x32xf32>
    %73 = tpu.concatenate %70, %72 in 1 : vector<1x32xf32>, vector<1x32xf32> -> vector<1x64xf32>
    %c0_33 = arith.constant 0 : index
    %c0_34 = arith.constant 0 : index
    %74 = vector.load %arg5[%c0_33, %c0_34] : memref<72x32xf32, #tpu.memory_space<vmem>>, vector<72x32xf32>
    %c0_35 = arith.constant 0 : index
    %c0_36 = arith.constant 0 : index
    %75 = vector.load %arg6[%c0_35, %c0_36] : memref<32x8xf32, #tpu.memory_space<vmem>>, vector<32x8xf32>
    %c0_37 = arith.constant 0 : index
    %76 = memref.load %arg7[%c0_37] : memref<4xf32, #tpu.memory_space<smem>>
    %c1 = arith.constant 1 : index
    %77 = memref.load %arg7[%c1] : memref<4xf32, #tpu.memory_space<smem>>
    %c2 = arith.constant 2 : index
    %78 = memref.load %arg7[%c2] : memref<4xf32, #tpu.memory_space<smem>>
    %79 = vector.extract_strided_slice %74 {offsets = [0, 0], sizes = [32, 32], strides = [1, 1]} : vector<72x32xf32> to vector<32x32xf32>
    %80 = vector.extract_strided_slice %74 {offsets = [32, 0], sizes = [32, 32], strides = [1, 1]} : vector<72x32xf32> to vector<32x32xf32>
    %81 = vector.extract_strided_slice %74 {offsets = [64, 0], sizes = [1, 32], strides = [1, 1]} : vector<72x32xf32> to vector<1x32xf32>
    %82 = vector.extract_strided_slice %74 {offsets = [65, 0], sizes = [1, 32], strides = [1, 1]} : vector<72x32xf32> to vector<1x32xf32>
    %83 = vector.extract_strided_slice %75 {offsets = [0, 0], sizes = [32, 1], strides = [1, 1]} : vector<32x8xf32> to vector<32x1xf32>
    %84 = vector.extract_strided_slice %75 {offsets = [0, 1], sizes = [32, 3], strides = [1, 1]} : vector<32x8xf32> to vector<32x3xf32>
    %cst_38 = arith.constant dense<0.000000e+00> : vector<32x32xf32>
    %85 = tpu.matmul %22, %66, %cst_38 {dimension_numbers = #tpu.dot_dimension_numbers<[1], [0], [0], [1], [0, 0, 1, 1], [], []>} : vector<32x32xf32>, vector<32x32xf32>, vector<32x32xf32> -> vector<32x32xf32>
    %cst_39 = arith.constant dense<0.000000e+00> : vector<32x32xf32>
    %86 = tpu.matmul %66, %79, %cst_39 {dimension_numbers = #tpu.dot_dimension_numbers<[1], [0], [0], [1], [0, 0, 1, 1], [], []>} : vector<32x32xf32>, vector<32x32xf32>, vector<32x32xf32> -> vector<32x32xf32>
    %cst_40 = arith.constant dense<0.000000e+00> : vector<32x32xf32>
    %87 = tpu.matmul %85, %80, %cst_40 {dimension_numbers = #tpu.dot_dimension_numbers<[1], [0], [0], [1], [0, 0, 1, 1], [], []>} : vector<32x32xf32>, vector<32x32xf32>, vector<32x32xf32> -> vector<32x32xf32>
    %88 = arith.addf %86, %87 : vector<32x32xf32>
    %89 = vector.broadcast %81 : vector<1x32xf32> to vector<32x32xf32>
    %90 = arith.addf %88, %89 : vector<32x32xf32>
    %91 = tpu.transpose %90, [1, 0] : vector<32x32xf32> -> vector<32x32xf32>
    %cst_41 = arith.constant 0.000000e+00 : f32
    %92 = vector.broadcast %cst_41 : f32 to vector<1x32xf32>
    %93 = vector.extract_strided_slice %91 {offsets = [0, 0], sizes = [8, 32], strides = [1, 1]} : vector<32x32xf32> to vector<8x32xf32>
    %94 = vector.extract_strided_slice %83 {offsets = [0, 0], sizes = [8, 1], strides = [1, 1]} : vector<32x1xf32> to vector<8x1xf32>
    %95 = vector.shape_cast %22 : vector<32x32xf32> to vector<1x32x32xf32>
    %cst_42 = arith.constant 0.000000e+00 : f32
    %96 = vector.broadcast %cst_42 : f32 to vector<1x32x32xf32>
    %97 = arith.cmpf ogt, %95, %96 : vector<1x32x32xf32>
    %98 = vector.shape_cast %93 : vector<8x32xf32> to vector<8x32x1xf32>
    %cst_43 = arith.constant -1.000000e+30 : f32
    %99 = vector.shape_cast %97 : vector<1x32x32xi1> to vector<1x32x32xi1>
    %100 = vector.broadcast %99 : vector<1x32x32xi1> to vector<8x32x32xi1>
    %101 = vector.shape_cast %98 : vector<8x32x1xf32> to vector<8x32x1xf32>
    %102 = vector.broadcast %101 : vector<8x32x1xf32> to vector<8x32x32xf32>
    %103 = vector.broadcast %cst_43 : f32 to vector<8x32x32xf32>
    %104 = arith.select %100, %102, %103 : vector<8x32x32xi1>, vector<8x32x32xf32>
    %cst_44 = arith.constant dense<0xFF800000> : vector<8x32xf32>
    %105 = vector.multi_reduction <maximumf>, %104, %cst_44 [1] : vector<8x32x32xf32> to vector<8x32xf32>
    %106 = vector.broadcast %94 : vector<8x1xf32> to vector<8x32xf32>
    %107 = arith.mulf %106, %105 : vector<8x32xf32>
    %cst_45 = arith.constant dense<0.000000e+00> : vector<32xf32>
    %108 = vector.multi_reduction <add>, %107, %cst_45 [0] : vector<8x32xf32> to vector<32xf32>
    %109 = vector.shape_cast %108 : vector<32xf32> to vector<1x32xf32>
    %110 = arith.addf %92, %109 : vector<1x32xf32>
    %111 = vector.extract_strided_slice %91 {offsets = [8, 0], sizes = [8, 32], strides = [1, 1]} : vector<32x32xf32> to vector<8x32xf32>
    %112 = vector.extract_strided_slice %83 {offsets = [8, 0], sizes = [8, 1], strides = [1, 1]} : vector<32x1xf32> to vector<8x1xf32>
    %113 = vector.shape_cast %22 : vector<32x32xf32> to vector<1x32x32xf32>
    %cst_46 = arith.constant 0.000000e+00 : f32
    %114 = vector.broadcast %cst_46 : f32 to vector<1x32x32xf32>
    %115 = arith.cmpf ogt, %113, %114 : vector<1x32x32xf32>
    %116 = vector.shape_cast %111 : vector<8x32xf32> to vector<8x32x1xf32>
    %cst_47 = arith.constant -1.000000e+30 : f32
    %117 = vector.shape_cast %115 : vector<1x32x32xi1> to vector<1x32x32xi1>
    %118 = vector.broadcast %117 : vector<1x32x32xi1> to vector<8x32x32xi1>
    %119 = vector.shape_cast %116 : vector<8x32x1xf32> to vector<8x32x1xf32>
    %120 = vector.broadcast %119 : vector<8x32x1xf32> to vector<8x32x32xf32>
    %121 = vector.broadcast %cst_47 : f32 to vector<8x32x32xf32>
    %122 = arith.select %118, %120, %121 : vector<8x32x32xi1>, vector<8x32x32xf32>
    %cst_48 = arith.constant dense<0xFF800000> : vector<8x32xf32>
    %123 = vector.multi_reduction <maximumf>, %122, %cst_48 [1] : vector<8x32x32xf32> to vector<8x32xf32>
    %124 = vector.broadcast %112 : vector<8x1xf32> to vector<8x32xf32>
    %125 = arith.mulf %124, %123 : vector<8x32xf32>
    %cst_49 = arith.constant dense<0.000000e+00> : vector<32xf32>
    %126 = vector.multi_reduction <add>, %125, %cst_49 [0] : vector<8x32xf32> to vector<32xf32>
    %127 = vector.shape_cast %126 : vector<32xf32> to vector<1x32xf32>
    %128 = arith.addf %110, %127 : vector<1x32xf32>
    %129 = vector.extract_strided_slice %91 {offsets = [16, 0], sizes = [8, 32], strides = [1, 1]} : vector<32x32xf32> to vector<8x32xf32>
    %130 = vector.extract_strided_slice %83 {offsets = [16, 0], sizes = [8, 1], strides = [1, 1]} : vector<32x1xf32> to vector<8x1xf32>
    %131 = vector.shape_cast %22 : vector<32x32xf32> to vector<1x32x32xf32>
    %cst_50 = arith.constant 0.000000e+00 : f32
    %132 = vector.broadcast %cst_50 : f32 to vector<1x32x32xf32>
    %133 = arith.cmpf ogt, %131, %132 : vector<1x32x32xf32>
    %134 = vector.shape_cast %129 : vector<8x32xf32> to vector<8x32x1xf32>
    %cst_51 = arith.constant -1.000000e+30 : f32
    %135 = vector.shape_cast %133 : vector<1x32x32xi1> to vector<1x32x32xi1>
    %136 = vector.broadcast %135 : vector<1x32x32xi1> to vector<8x32x32xi1>
    %137 = vector.shape_cast %134 : vector<8x32x1xf32> to vector<8x32x1xf32>
    %138 = vector.broadcast %137 : vector<8x32x1xf32> to vector<8x32x32xf32>
    %139 = vector.broadcast %cst_51 : f32 to vector<8x32x32xf32>
    %140 = arith.select %136, %138, %139 : vector<8x32x32xi1>, vector<8x32x32xf32>
    %cst_52 = arith.constant dense<0xFF800000> : vector<8x32xf32>
    %141 = vector.multi_reduction <maximumf>, %140, %cst_52 [1] : vector<8x32x32xf32> to vector<8x32xf32>
    %142 = vector.broadcast %130 : vector<8x1xf32> to vector<8x32xf32>
    %143 = arith.mulf %142, %141 : vector<8x32xf32>
    %cst_53 = arith.constant dense<0.000000e+00> : vector<32xf32>
    %144 = vector.multi_reduction <add>, %143, %cst_53 [0] : vector<8x32xf32> to vector<32xf32>
    %145 = vector.shape_cast %144 : vector<32xf32> to vector<1x32xf32>
    %146 = arith.addf %128, %145 : vector<1x32xf32>
    %147 = vector.extract_strided_slice %91 {offsets = [24, 0], sizes = [8, 32], strides = [1, 1]} : vector<32x32xf32> to vector<8x32xf32>
    %148 = vector.extract_strided_slice %83 {offsets = [24, 0], sizes = [8, 1], strides = [1, 1]} : vector<32x1xf32> to vector<8x1xf32>
    %149 = vector.shape_cast %22 : vector<32x32xf32> to vector<1x32x32xf32>
    %cst_54 = arith.constant 0.000000e+00 : f32
    %150 = vector.broadcast %cst_54 : f32 to vector<1x32x32xf32>
    %151 = arith.cmpf ogt, %149, %150 : vector<1x32x32xf32>
    %152 = vector.shape_cast %147 : vector<8x32xf32> to vector<8x32x1xf32>
    %cst_55 = arith.constant -1.000000e+30 : f32
    %153 = vector.shape_cast %151 : vector<1x32x32xi1> to vector<1x32x32xi1>
    %154 = vector.broadcast %153 : vector<1x32x32xi1> to vector<8x32x32xi1>
    %155 = vector.shape_cast %152 : vector<8x32x1xf32> to vector<8x32x1xf32>
    %156 = vector.broadcast %155 : vector<8x32x1xf32> to vector<8x32x32xf32>
    %157 = vector.broadcast %cst_55 : f32 to vector<8x32x32xf32>
    %158 = arith.select %154, %156, %157 : vector<8x32x32xi1>, vector<8x32x32xf32>
    %cst_56 = arith.constant dense<0xFF800000> : vector<8x32xf32>
    %159 = vector.multi_reduction <maximumf>, %158, %cst_56 [1] : vector<8x32x32xf32> to vector<8x32xf32>
    %160 = vector.broadcast %148 : vector<8x1xf32> to vector<8x32xf32>
    %161 = arith.mulf %160, %159 : vector<8x32xf32>
    %cst_57 = arith.constant dense<0.000000e+00> : vector<32xf32>
    %162 = vector.multi_reduction <add>, %161, %cst_57 [0] : vector<8x32xf32> to vector<32xf32>
    %163 = vector.shape_cast %162 : vector<32xf32> to vector<1x32xf32>
    %164 = arith.addf %146, %163 : vector<1x32xf32>
    %165 = tpu.transpose %164, [1, 0] : vector<1x32xf32> -> vector<32x1xf32>
    %cst_58 = arith.constant dense<0.000000e+00> : vector<1x32xf32>
    %166 = tpu.matmul %82, %91, %cst_58 {dimension_numbers = #tpu.dot_dimension_numbers<[1], [0], [0], [1], [0, 0, 1, 1], [], []>} : vector<1x32xf32>, vector<32x32xf32>, vector<1x32xf32> -> vector<1x32xf32>
    %167 = vector.broadcast %165 : vector<32x1xf32> to vector<32x32xf32>
    %168 = vector.broadcast %166 : vector<1x32xf32> to vector<32x32xf32>
    %169 = arith.addf %167, %168 : vector<32x32xf32>
    %170 = vector.broadcast %76 : f32 to vector<32x32xf32>
    %171 = arith.addf %169, %170 : vector<32x32xf32>
    %cst_59 = arith.constant 0.000000e+00 : f32
    %172 = vector.broadcast %cst_59 : f32 to vector<32x32xf32>
    %173 = arith.cmpf ogt, %171, %172 : vector<32x32xf32>
    %cst_60 = arith.constant 2.000000e-01 : f32
    %174 = vector.broadcast %cst_60 : f32 to vector<32x32xf32>
    %175 = arith.mulf %174, %171 : vector<32x32xf32>
    %176 = arith.select %173, %171, %175 : vector<32x32xi1>, vector<32x32xf32>
    %cst_61 = arith.constant 0.000000e+00 : f32
    %177 = vector.broadcast %cst_61 : f32 to vector<32x32xf32>
    %178 = arith.cmpf ogt, %22, %177 : vector<32x32xf32>
    %cst_62 = arith.constant -1.000000e+30 : f32
    %179 = vector.broadcast %cst_62 : f32 to vector<32x32xf32>
    %180 = arith.select %178, %176, %179 : vector<32x32xi1>, vector<32x32xf32>
    %cst_63 = arith.constant 0.000000e+00 : f32
    %181 = vector.broadcast %cst_63 : f32 to vector<32x32xf32>
    %182 = arith.cmpf ogt, %22, %181 : vector<32x32xf32>
    %cst_64 = arith.constant dense<0xFF800000> : vector<32xf32>
    %183 = vector.multi_reduction <maximumf>, %180, %cst_64 [1] : vector<32x32xf32> to vector<32xf32>
    %184 = vector.shape_cast %183 : vector<32xf32> to vector<32x1xf32>
    %185 = vector.broadcast %184 : vector<32x1xf32> to vector<32x32xf32>
    %186 = arith.subf %180, %185 : vector<32x32xf32>
    %187 = math.exp %186 : vector<32x32xf32>
    %cst_65 = arith.constant 0.000000e+00 : f32
    %188 = vector.broadcast %cst_65 : f32 to vector<32x32xf32>
    %189 = arith.select %182, %187, %188 : vector<32x32xi1>, vector<32x32xf32>
    %cst_66 = arith.constant dense<0.000000e+00> : vector<32xf32>
    %190 = vector.multi_reduction <add>, %189, %cst_66 [1] : vector<32x32xf32> to vector<32xf32>
    %191 = vector.shape_cast %190 : vector<32xf32> to vector<32x1xf32>
    %192 = tpu.reciprocal %191 {approx = true} : vector<32x1xf32> -> vector<32x1xf32>
    %193 = vector.broadcast %192 : vector<32x1xf32> to vector<32x32xf32>
    %194 = arith.mulf %189, %193 : vector<32x32xf32>
    %cst_67 = arith.constant dense<0.000000e+00> : vector<32x32xf32>
    %195 = tpu.matmul %194, %66, %cst_67 {dimension_numbers = #tpu.dot_dimension_numbers<[1], [0], [0], [1], [0, 0, 1, 1], [], []>} : vector<32x32xf32>, vector<32x32xf32>, vector<32x32xf32> -> vector<32x32xf32>
    %cst_68 = arith.constant dense<0.000000e+00> : vector<32x3xf32>
    %196 = tpu.matmul %195, %84, %cst_68 {dimension_numbers = #tpu.dot_dimension_numbers<[1], [0], [0], [1], [0, 0, 1, 1], [], []>} : vector<32x32xf32>, vector<32x3xf32>, vector<32x3xf32> -> vector<32x3xf32>
    %cst_69 = arith.constant dense<0.000000e+00> : vector<32xf32>
    %197 = vector.multi_reduction <add>, %22, %cst_69 [1] : vector<32x32xf32> to vector<32xf32>
    %198 = vector.shape_cast %197 : vector<32xf32> to vector<32x1xf32>
    %199 = vector.extract_strided_slice %196 {offsets = [0, 0], sizes = [32, 1], strides = [1, 1]} : vector<32x3xf32> to vector<32x1xf32>
    %cst_70 = arith.constant dense<0.000000e+00> : vector<32x1xf32>
    %200 = tpu.matmul %22, %199, %cst_70 {dimension_numbers = #tpu.dot_dimension_numbers<[1], [0], [0], [1], [0, 0, 1, 1], [], []>} : vector<32x32xf32>, vector<32x1xf32>, vector<32x1xf32> -> vector<32x1xf32>
    %201 = vector.broadcast %77 : f32 to vector<32x1xf32>
    %202 = arith.mulf %198, %201 : vector<32x1xf32>
    %203 = arith.addf %200, %202 : vector<32x1xf32>
    %204 = vector.extract_strided_slice %196 {offsets = [0, 1], sizes = [32, 1], strides = [1, 1]} : vector<32x3xf32> to vector<32x1xf32>
    %205 = arith.mulf %198, %204 : vector<32x1xf32>
    %206 = arith.subf %203, %205 : vector<32x1xf32>
    %207 = vector.extract_strided_slice %196 {offsets = [0, 2], sizes = [32, 1], strides = [1, 1]} : vector<32x3xf32> to vector<32x1xf32>
    %208 = arith.addf %206, %207 : vector<32x1xf32>
    %209 = vector.broadcast %78 : f32 to vector<32x1xf32>
    %210 = arith.addf %208, %209 : vector<32x1xf32>
    %cst_71 = arith.constant 0.000000e+00 : f32
    %211 = vector.broadcast %cst_71 : f32 to vector<32x1xf32>
    %212 = arith.subf %211, %210 : vector<32x1xf32>
    %213 = math.exp %212 : vector<32x1xf32>
    %cst_72 = arith.constant 1.000000e+00 : f32
    %214 = vector.broadcast %cst_72 : f32 to vector<32x1xf32>
    %215 = arith.addf %214, %213 : vector<32x1xf32>
    %cst_73 = arith.constant 1.000000e+00 : f32
    %216 = vector.broadcast %cst_73 : f32 to vector<32x1xf32>
    %217 = arith.divf %216, %215 : vector<32x1xf32>
    %218 = arith.truncf %22 : vector<32x32xf32> to vector<32x32xbf16>
    %cst_74 = arith.constant dense<0.000000e+00> : vector<32x32xf32>
    %219 = tpu.matmul %218, %218, %cst_74 {dimension_numbers = #tpu.dot_dimension_numbers<[1], [0], [0], [1], [0, 0, 1, 1], [], []>} : vector<32x32xbf16>, vector<32x32xbf16>, vector<32x32xf32> -> vector<32x32xf32>
    %220 = arith.truncf %219 : vector<32x32xf32> to vector<32x32xbf16>
    %cst_75 = arith.constant dense<0.000000e+00> : vector<32x32xf32>
    %221 = tpu.matmul %220, %218, %cst_75 {dimension_numbers = #tpu.dot_dimension_numbers<[1], [0], [0], [1], [0, 0, 1, 1], [], []>} : vector<32x32xbf16>, vector<32x32xbf16>, vector<32x32xf32> -> vector<32x32xf32>
    %cst_76 = arith.constant 0.000000e+00 : f32
    %222 = vector.broadcast %cst_76 : f32 to vector<32x32xf32>
    %223 = arith.cmpf ogt, %221, %222 : vector<32x32xf32>
    %224 = arith.extui %223 : vector<32x32xi1> to vector<32x32xi32>
    %225 = arith.sitofp %224 : vector<32x32xi32> to vector<32x32xf32>
    %cst_77 = arith.constant 0.000000e+00 : f32
    %226 = vector.broadcast %cst_77 : f32 to vector<32x31xf32>
    %227 = tpu.concatenate %195, %217, %226, %225, %13 in 1 : vector<32x32xf32>, vector<32x1xf32>, vector<32x31xf32>, vector<32x32xf32>, vector<32x32xf32> -> vector<32x128xf32>
    %cst_78 = arith.constant 0.000000e+00 : f32
    %228 = vector.broadcast %cst_78 : f32 to vector<1x64xf32>
    %229 = tpu.concatenate %73, %228 in 1 : vector<1x64xf32>, vector<1x64xf32> -> vector<1x128xf32>
    %230 = vector.shape_cast %229 : vector<1x128xf32> to vector<1x128xf32>
    %231 = vector.broadcast %230 : vector<1x128xf32> to vector<8x128xf32>
    %232 = tpu.concatenate %227, %231 in 0 : vector<32x128xf32>, vector<8x128xf32> -> vector<40x128xf32>
    %c0_79 = arith.constant 0 : index
    %c0_80 = arith.constant 0 : index
    %c0_81 = arith.constant 0 : index
    %233 = vector.load %arg8[%c0_79, %c0_80, %c0_81] : memref<1x40x128xf32, #tpu.memory_space<vmem>>, vector<1x40x128xf32>
    %234 = vector.shape_cast %233 : vector<1x40x128xf32> to vector<40x128xf32>
    %235 = vector.shape_cast %232 : vector<40x128xf32> to vector<1x40x128xf32>
    tpu.vector_store %arg8[%c0_79, %c0_80, %c0_81], %235 {strides = array<i32>} : memref<1x40x128xf32, #tpu.memory_space<vmem>>, vector<1x40x128xf32>,
    return
  }
  func.func @transform_0(%arg0: i32) -> (i32, i32, i32) {
    %c0_i32 = arith.constant 0 : i32
    %c0_i32_0 = arith.constant 0 : i32
    %c0_i32_1 = arith.constant 0 : i32
    return %arg0, %c0_i32, %c0_i32_0 : i32, i32, i32
  }
  func.func @transform_1(%arg0: i32) -> (i32, i32, i32) {
    %c0_i32 = arith.constant 0 : i32
    %c0_i32_0 = arith.constant 0 : i32
    %c0_i32_1 = arith.constant 0 : i32
    return %arg0, %c0_i32, %c0_i32_0 : i32, i32, i32
  }
  func.func @transform_2(%arg0: i32) -> (i32, i32, i32) {
    %c0_i32 = arith.constant 0 : i32
    %c0_i32_0 = arith.constant 0 : i32
    %c0_i32_1 = arith.constant 0 : i32
    return %arg0, %c0_i32, %c0_i32_0 : i32, i32, i32
  }
  func.func @transform_3(%arg0: i32) -> (i32, i32) {
    %c0_i32 = arith.constant 0 : i32
    %c0_i32_0 = arith.constant 0 : i32
    %c0_i32_1 = arith.constant 0 : i32
    return %c0_i32, %c0_i32_0 : i32, i32
  }
  func.func @transform_4(%arg0: i32) -> (i32, i32) {
    %c0_i32 = arith.constant 0 : i32
    %c0_i32_0 = arith.constant 0 : i32
    %c0_i32_1 = arith.constant 0 : i32
    return %c0_i32, %c0_i32_0 : i32, i32
  }
  func.func @transform_5(%arg0: i32) -> (i32, i32) {
    %c0_i32 = arith.constant 0 : i32
    %c0_i32_0 = arith.constant 0 : i32
    %c0_i32_1 = arith.constant 0 : i32
    return %c0_i32, %c0_i32_0 : i32, i32
  }
  func.func @transform_6(%arg0: i32) -> i32 {
    %c0_i32 = arith.constant 0 : i32
    %c0_i32_0 = arith.constant 0 : i32
    return %c0_i32 : i32
  }
  func.func @transform_7(%arg0: i32) -> (i32, i32, i32) {
    %c0_i32 = arith.constant 0 : i32
    %c0_i32_0 = arith.constant 0 : i32
    %c0_i32_1 = arith.constant 0 : i32
    return %arg0, %c0_i32, %c0_i32_0 : i32, i32, i32
  }
}

module attributes {stable_mosaic.version = 11 : i64} {
  func.func @_stage3_kernel(%arg0: i32, %arg1: memref<1x32x128xf32, #tpu.memory_space<vmem>>, %arg2: memref<1x16x32xf32, #tpu.memory_space<vmem>>, %arg3: memref<32x32xf32, #tpu.memory_space<vmem>>, %arg4: memref<40x32xf32, #tpu.memory_space<vmem>>, %arg5: memref<32x8xf32, #tpu.memory_space<vmem>>, %arg6: memref<4xf32, #tpu.memory_space<smem>>, %arg7: memref<1x1x128xf32, #tpu.memory_space<vmem>>) attributes {dimension_semantics = [#tpu.dimension_semantics<parallel>], iteration_bounds = array<i64: 2>, scalar_prefetch = 0 : i64, scratch_operands = 0 : i64, tpu.core_type = #tpu.core_type<tc>, window_params = [{transform_indices = @transform_0, window_bounds = array<i64: 1, 32, 128>}, {transform_indices = @transform_1, window_bounds = array<i64: 1, 16, 32>}, {pipeline_mode = #tpu.pipeline_mode<synchronous>, transform_indices = @transform_2, window_bounds = array<i64: 32, 32>}, {pipeline_mode = #tpu.pipeline_mode<synchronous>, transform_indices = @transform_3, window_bounds = array<i64: 40, 32>}, {pipeline_mode = #tpu.pipeline_mode<synchronous>, transform_indices = @transform_4, window_bounds = array<i64: 32, 8>}, {transform_indices = @transform_5, window_bounds = array<i64: 4>}, {transform_indices = @transform_6, window_bounds = array<i64: 1, 1, 128>}]} {
    %c0 = arith.constant 0 : index
    %c0_0 = arith.constant 0 : index
    %c0_1 = arith.constant 0 : index
    %0 = vector.load %arg1[%c0, %c0_0, %c0_1] : memref<1x32x128xf32, #tpu.memory_space<vmem>>, vector<1x32x128xf32>
    %1 = vector.shape_cast %0 : vector<1x32x128xf32> to vector<32x128xf32>
    %c0_2 = arith.constant 0 : index
    %c0_3 = arith.constant 0 : index
    %c0_4 = arith.constant 0 : index
    %2 = vector.load %arg2[%c0_2, %c0_3, %c0_4] : memref<1x16x32xf32, #tpu.memory_space<vmem>>, vector<1x16x32xf32>
    %3 = vector.shape_cast %2 : vector<1x16x32xf32> to vector<16x32xf32>
    %4 = vector.extract_strided_slice %1 {offsets = [0, 0], sizes = [32, 32], strides = [1, 1]} : vector<32x128xf32> to vector<32x32xf32>
    %5 = vector.extract_strided_slice %1 {offsets = [0, 32], sizes = [32, 1], strides = [1, 1]} : vector<32x128xf32> to vector<32x1xf32>
    %6 = vector.extract_strided_slice %1 {offsets = [0, 64], sizes = [32, 32], strides = [1, 1]} : vector<32x128xf32> to vector<32x32xf32>
    %7 = vector.extract_strided_slice %1 {offsets = [0, 96], sizes = [32, 32], strides = [1, 1]} : vector<32x128xf32> to vector<32x32xf32>
    %cst = arith.constant dense<0.000000e+00> : vector<16x32xf32>
    %8 = tpu.matmul %3, %4, %cst {dimension_numbers = #tpu.dot_dimension_numbers<[1], [0], [0], [1], [0, 0, 1, 1], [], []>} : vector<16x32xf32>, vector<32x32xf32>, vector<16x32xf32> -> vector<16x32xf32>
    %cst_5 = arith.constant dense<0.000000e+00> : vector<16x1xf32>
    %9 = tpu.matmul %3, %5, %cst_5 {dimension_numbers = #tpu.dot_dimension_numbers<[1], [0], [0], [1], [0, 0, 1, 1], [], []>} : vector<16x32xf32>, vector<32x1xf32>, vector<16x1xf32> -> vector<16x1xf32>
    %10 = vector.broadcast %9 : vector<16x1xf32> to vector<16x32xf32>
    %11 = arith.mulf %8, %10 : vector<16x32xf32>
    %cst_6 = arith.constant dense<0.000000e+00> : vector<16x32xf32>
    %12 = tpu.matmul %3, %7, %cst_6 {dimension_numbers = #tpu.dot_dimension_numbers<[1], [0], [0], [1], [0, 0, 1, 1], [], []>} : vector<16x32xf32>, vector<32x32xf32>, vector<16x32xf32> -> vector<16x32xf32>
    %13 = tpu.transpose %3, [1, 0] : vector<16x32xf32> -> vector<32x16xf32>
    %cst_7 = arith.constant dense<0.000000e+00> : vector<16x32xf32>
    %14 = tpu.matmul %3, %6, %cst_7 {dimension_numbers = #tpu.dot_dimension_numbers<[1], [0], [0], [1], [0, 0, 1, 1], [], []>} : vector<16x32xf32>, vector<32x32xf32>, vector<16x32xf32> -> vector<16x32xf32>
    %cst_8 = arith.constant dense<0.000000e+00> : vector<16x16xf32>
    %15 = tpu.matmul %14, %13, %cst_8 {dimension_numbers = #tpu.dot_dimension_numbers<[1], [0], [0], [1], [0, 0, 1, 1], [], []>} : vector<16x32xf32>, vector<32x16xf32>, vector<16x16xf32> -> vector<16x16xf32>
    %16 = tpu.iota {dimensions = array<i32: 0>} : vector<16x16xi32>
    %17 = tpu.iota {dimensions = array<i32: 1>} : vector<16x16xi32>
    %18 = arith.cmpi eq, %16, %17 : vector<16x16xi32>
    %19 = arith.extui %18 : vector<16x16xi1> to vector<16x16xi32>
    %20 = arith.sitofp %19 : vector<16x16xi32> to vector<16x16xf32>
    %21 = arith.maximumf %15, %20 : vector<16x16xf32>
    %c0_9 = arith.constant 0 : index
    %c0_10 = arith.constant 0 : index
    %22 = vector.load %arg3[%c0_9, %c0_10] : memref<32x32xf32, #tpu.memory_space<vmem>>, vector<32x32xf32>
    %cst_11 = arith.constant dense<0.000000e+00> : vector<16xf32>
    %23 = vector.multi_reduction <add>, %21, %cst_11 [1] : vector<16x16xf32> to vector<16xf32>
    %24 = vector.shape_cast %23 : vector<16xf32> to vector<16x1xf32>
    %cst_12 = arith.constant dense<0.000000e+00> : vector<16xf32>
    %25 = vector.multi_reduction <add>, %21, %cst_12 [0] : vector<16x16xf32> to vector<16xf32>
    %26 = vector.shape_cast %25 : vector<16xf32> to vector<1x16xf32>
    %cst_13 = arith.constant 0.000000e+00 : f32
    %27 = vector.broadcast %cst_13 : f32 to vector<16x1xf32>
    %28 = arith.cmpf ogt, %24, %27 : vector<16x1xf32>
    %29 = math.rsqrt %24 : vector<16x1xf32>
    %cst_14 = arith.constant 0.000000e+00 : f32
    %30 = vector.broadcast %cst_14 : f32 to vector<16x1xf32>
    %31 = arith.select %28, %29, %30 : vector<16x1xi1>, vector<16x1xf32>
    %cst_15 = arith.constant 0.000000e+00 : f32
    %32 = vector.broadcast %cst_15 : f32 to vector<1x16xf32>
    %33 = arith.cmpf ogt, %26, %32 : vector<1x16xf32>
    %34 = math.rsqrt %26 : vector<1x16xf32>
    %cst_16 = arith.constant 0.000000e+00 : f32
    %35 = vector.broadcast %cst_16 : f32 to vector<1x16xf32>
    %36 = arith.select %33, %34, %35 : vector<1x16xi1>, vector<1x16xf32>
    %37 = vector.broadcast %31 : vector<16x1xf32> to vector<16x16xf32>
    %38 = arith.mulf %37, %21 : vector<16x16xf32>
    %39 = vector.broadcast %36 : vector<1x16xf32> to vector<16x16xf32>
    %40 = arith.mulf %38, %39 : vector<16x16xf32>
    %cst_17 = arith.constant dense<0.000000e+00> : vector<16x32xf32>
    %41 = tpu.matmul %40, %11, %cst_17 {dimension_numbers = #tpu.dot_dimension_numbers<[1], [0], [0], [1], [0, 0, 1, 1], [], []>} : vector<16x16xf32>, vector<16x32xf32>, vector<16x32xf32> -> vector<16x32xf32>
    %cst_18 = arith.constant 8.000000e-01 : f32
    %42 = vector.broadcast %cst_18 : f32 to vector<16x32xf32>
    %43 = arith.mulf %42, %41 : vector<16x32xf32>
    %cst_19 = arith.constant 2.000000e-01 : f32
    %44 = vector.broadcast %cst_19 : f32 to vector<16x32xf32>
    %45 = arith.mulf %44, %12 : vector<16x32xf32>
    %46 = arith.addf %43, %45 : vector<16x32xf32>
    %cst_20 = arith.constant dense<0.000000e+00> : vector<16x32xf32>
    %47 = tpu.matmul %46, %22, %cst_20 {dimension_numbers = #tpu.dot_dimension_numbers<[1], [0], [0], [1], [0, 0, 1, 1], [], []>} : vector<16x32xf32>, vector<32x32xf32>, vector<16x32xf32> -> vector<16x32xf32>
    %cst_21 = arith.constant dense<0.000000e+00> : vector<32xf32>
    %48 = vector.multi_reduction <add>, %47, %cst_21 [0] : vector<16x32xf32> to vector<32xf32>
    %49 = vector.shape_cast %48 : vector<32xf32> to vector<1x32xf32>
    %cst_22 = arith.constant 6.250000e-02 : f32
    %50 = vector.broadcast %cst_22 : f32 to vector<1x32xf32>
    %51 = arith.mulf %49, %50 : vector<1x32xf32>
    %52 = vector.broadcast %51 : vector<1x32xf32> to vector<16x32xf32>
    %53 = arith.subf %47, %52 : vector<16x32xf32>
    %54 = arith.mulf %53, %53 : vector<16x32xf32>
    %cst_23 = arith.constant dense<0.000000e+00> : vector<32xf32>
    %55 = vector.multi_reduction <add>, %54, %cst_23 [0] : vector<16x32xf32> to vector<32xf32>
    %56 = vector.shape_cast %55 : vector<32xf32> to vector<1x32xf32>
    %cst_24 = arith.constant 6.250000e-02 : f32
    %57 = vector.broadcast %cst_24 : f32 to vector<1x32xf32>
    %58 = arith.mulf %56, %57 : vector<1x32xf32>
    %cst_25 = arith.constant 9.99999974E-6 : f32
    %59 = vector.broadcast %cst_25 : f32 to vector<1x32xf32>
    %60 = arith.addf %58, %59 : vector<1x32xf32>
    %61 = math.rsqrt %60 : vector<1x32xf32>
    %62 = vector.broadcast %61 : vector<1x32xf32> to vector<16x32xf32>
    %63 = arith.mulf %53, %62 : vector<16x32xf32>
    %cst_26 = arith.constant 0.000000e+00 : f32
    %64 = vector.broadcast %cst_26 : f32 to vector<16x32xf32>
    %65 = arith.maximumf %63, %64 : vector<16x32xf32>
    %c0_27 = arith.constant 0 : index
    %c0_28 = arith.constant 0 : index
    %66 = vector.load %arg4[%c0_27, %c0_28] : memref<40x32xf32, #tpu.memory_space<vmem>>, vector<40x32xf32>
    %67 = vector.extract_strided_slice %66 {offsets = [0, 0], sizes = [32, 32], strides = [1, 1]} : vector<40x32xf32> to vector<32x32xf32>
    %68 = vector.extract_strided_slice %66 {offsets = [32, 0], sizes = [1, 32], strides = [1, 1]} : vector<40x32xf32> to vector<1x32xf32>
    %c0_29 = arith.constant 0 : index
    %c0_30 = arith.constant 0 : index
    %69 = vector.load %arg5[%c0_29, %c0_30] : memref<32x8xf32, #tpu.memory_space<vmem>>, vector<32x8xf32>
    %70 = vector.extract_strided_slice %69 {offsets = [0, 0], sizes = [32, 1], strides = [1, 1]} : vector<32x8xf32> to vector<32x1xf32>
    %c0_31 = arith.constant 0 : index
    %71 = memref.load %arg6[%c0_31] : memref<4xf32, #tpu.memory_space<smem>>
    %cst_32 = arith.constant dense<0.000000e+00> : vector<16x32xf32>
    %72 = tpu.matmul %65, %67, %cst_32 {dimension_numbers = #tpu.dot_dimension_numbers<[1], [0], [0], [1], [0, 0, 1, 1], [], []>} : vector<16x32xf32>, vector<32x32xf32>, vector<16x32xf32> -> vector<16x32xf32>
    %73 = vector.broadcast %68 : vector<1x32xf32> to vector<16x32xf32>
    %74 = arith.addf %72, %73 : vector<16x32xf32>
    %cst_33 = arith.constant dense<0.000000e+00> : vector<16x1xf32>
    %75 = tpu.matmul %65, %70, %cst_33 {dimension_numbers = #tpu.dot_dimension_numbers<[1], [0], [0], [1], [0, 0, 1, 1], [], []>} : vector<16x32xf32>, vector<32x1xf32>, vector<16x1xf32> -> vector<16x1xf32>
    %76 = vector.broadcast %71 : f32 to vector<16x1xf32>
    %77 = arith.addf %75, %76 : vector<16x1xf32>
    %cst_34 = arith.constant dense<0xFF800000> : vector<1xf32>
    %78 = vector.multi_reduction <maximumf>, %77, %cst_34 [0] : vector<16x1xf32> to vector<1xf32>
    %79 = vector.shape_cast %78 : vector<1xf32> to vector<1x1xf32>
    %80 = vector.broadcast %79 : vector<1x1xf32> to vector<16x1xf32>
    %81 = arith.subf %77, %80 : vector<16x1xf32>
    %82 = math.exp %81 : vector<16x1xf32>
    %cst_35 = arith.constant dense<0.000000e+00> : vector<1xf32>
    %83 = vector.multi_reduction <add>, %82, %cst_35 [0] : vector<16x1xf32> to vector<1xf32>
    %84 = vector.shape_cast %83 : vector<1xf32> to vector<1x1xf32>
    %85 = tpu.reciprocal %84 {approx = true} : vector<1x1xf32> -> vector<1x1xf32>
    %86 = vector.broadcast %85 : vector<1x1xf32> to vector<16x1xf32>
    %87 = arith.mulf %82, %86 : vector<16x1xf32>
    %88 = vector.broadcast %87 : vector<16x1xf32> to vector<16x32xf32>
    %89 = arith.mulf %88, %74 : vector<16x32xf32>
    %cst_36 = arith.constant dense<0.000000e+00> : vector<32xf32>
    %90 = vector.multi_reduction <add>, %89, %cst_36 [0] : vector<16x32xf32> to vector<32xf32>
    %91 = vector.shape_cast %90 : vector<32xf32> to vector<1x32xf32>
    %cst_37 = arith.constant 0.000000e+00 : f32
    %92 = vector.broadcast %cst_37 : f32 to vector<1x96xf32>
    %93 = tpu.concatenate %91, %92 in 1 : vector<1x32xf32>, vector<1x96xf32> -> vector<1x128xf32>
    %c0_38 = arith.constant 0 : index
    %c0_39 = arith.constant 0 : index
    %c0_40 = arith.constant 0 : index
    %94 = vector.load %arg7[%c0_38, %c0_39, %c0_40] : memref<1x1x128xf32, #tpu.memory_space<vmem>>, vector<1x1x128xf32>
    %95 = vector.shape_cast %94 : vector<1x1x128xf32> to vector<1x128xf32>
    %96 = vector.shape_cast %93 : vector<1x128xf32> to vector<1x1x128xf32>
    tpu.vector_store %arg7[%c0_38, %c0_39, %c0_40], %96 {strides = array<i32>} : memref<1x1x128xf32, #tpu.memory_space<vmem>>, vector<1x1x128xf32>,
    return
  }
  func.func @transform_0(%arg0: i32) -> (i32, i32, i32) {
    %c0_i32 = arith.constant 0 : i32
    %c0_i32_0 = arith.constant 0 : i32
    %c0_i32_1 = arith.constant 0 : i32
    return %arg0, %c0_i32, %c0_i32_0 : i32, i32, i32
  }
  func.func @transform_1(%arg0: i32) -> (i32, i32, i32) {
    %c0_i32 = arith.constant 0 : i32
    %c0_i32_0 = arith.constant 0 : i32
    %c0_i32_1 = arith.constant 0 : i32
    return %arg0, %c0_i32, %c0_i32_0 : i32, i32, i32
  }
  func.func @transform_2(%arg0: i32) -> (i32, i32) {
    %c0_i32 = arith.constant 0 : i32
    %c0_i32_0 = arith.constant 0 : i32
    %c0_i32_1 = arith.constant 0 : i32
    return %c0_i32, %c0_i32_0 : i32, i32
  }
  func.func @transform_3(%arg0: i32) -> (i32, i32) {
    %c0_i32 = arith.constant 0 : i32
    %c0_i32_0 = arith.constant 0 : i32
    %c0_i32_1 = arith.constant 0 : i32
    return %c0_i32, %c0_i32_0 : i32, i32
  }
  func.func @transform_4(%arg0: i32) -> (i32, i32) {
    %c0_i32 = arith.constant 0 : i32
    %c0_i32_0 = arith.constant 0 : i32
    %c0_i32_1 = arith.constant 0 : i32
    return %c0_i32, %c0_i32_0 : i32, i32
  }
  func.func @transform_5(%arg0: i32) -> i32 {
    %c0_i32 = arith.constant 0 : i32
    %c0_i32_0 = arith.constant 0 : i32
    return %c0_i32 : i32
  }
  func.func @transform_6(%arg0: i32) -> (i32, i32, i32) {
    %c0_i32 = arith.constant 0 : i32
    %c0_i32_0 = arith.constant 0 : i32
    %c0_i32_1 = arith.constant 0 : i32
    return %arg0, %c0_i32, %c0_i32_0 : i32, i32, i32
  }
}

</mosaic_0001>

<llo_original>
// kernel: mol_aggregator_forward.3
$region0: #{mol_aggregator_forward.3}
  #allocation0 [shape = 'u32[]', space=smem, size = 0x4, offset = 0x4, fixed_abs, tag = 'smem constant byte address 0x4 - core index']
  #allocation1 [shape = 'u32[72,128]{1,0:T(1,128)}', space=vmem, size = 0x9000, scoped, tag = 'internal scratch']
  %s0 = inlined_call_operand.vmem [shape: f32[2,64,32], index: 0, kind: input, shape index: {}]
  %s1 = inlined_call_operand.vmem [shape: f32[2,64,64], index: 1, kind: input, shape index: {}]
  %s2 = inlined_call_operand.vmem [shape: f32[72,32], index: 2, kind: input, shape index: {}]
  %s3 = inlined_call_operand.vmem [shape: f32[32,8], index: 3, kind: input, shape index: {}]
  %s4 = inlined_call_operand.vmem [shape: f32[4], index: 4, kind: input, shape index: {}]
  %s5 = inlined_call_operand.vmem [shape: f32[2,72,128], index: 5, kind: output, shape index: {}]
  %s6 = sld [smem:[#allocation0]]
  $region57: #{mol_aggregator_forward.3} parent=0
    _
  %s8 = ssub.s32 1, %s6
  %s9 = scalar_select 0, %s8, %s6
  $region1: #{mol_aggregator_forward.3} parent=0
    #allocation2 [shape = 'u8[512]{0}', space=smem, size = 0x200, scoped, tag = 'input window, operand 4, single buffered']
    #allocation3 [shape = 's32[2]{0}', space=sflag, size = 0x8, scoped, tag = 'scoped memory for mol_aggregator_forward.3']
    %10 = vsyncpa [#allocation3], 0
    loop: start=0, step=1, limit=4
    $region2: #{mol_aggregator_forward.3} parent=1 // loop_pre_header
      _
    $region3: #{mol_aggregator_forward.3} parent=1 // loop_header
      %s12 = sphi 0, %s16
      %p13 = scmp.ge.s32.totalorder %s12, 4
      %s22 = sphi 0, %s24
      %s25 = sphi 0, %s22
      %s26 = sphi 0, %s25
      %s42 = sphi 0, %s26
      %s48 = sphi 0, %s50
      %s51 = sphi 0, %s48
      %s52 = sphi 0, %s51
      %s68 = sphi 0, %s52
      %s72 = sphi 0, %s72
      %s74 = sphi 0, %s72
      %s75 = sphi 0, %s74
      %s89 = sphi 0, %s75
      %s93 = sphi 0, %s93
      %s95 = sphi 0, %s93
      %s96 = sphi 0, %s95
      %s110 = sphi 0, %s96
      %s114 = sphi 0, %s114
      %s116 = sphi 0, %s114
      %s117 = sphi 0, %s116
      %s131 = sphi 0, %s117
      %s137 = sphi 0, %s139
      %s140 = sphi 0, %s137
      %s141 = sphi 0, %s140
      %s157 = sphi 0, %s141
    $region4: #{mol_aggregator_forward.3} parent=1 // loop_header_branch
      %15 = sbr.rel (%p13) target = $region8
    $region5: #{mol_aggregator_forward.3} parent=1 // loop_body
      %s17 = ssub.s32 %s12, 1
      %s18 = ssub.s32 %s12, 2
      %s19 = sadd.s32 %s12, 1
      %s20 = ssub.s32 %s12, %s19
      %p21 = scmp.eq.s32.totalorder %s20, 0
      %s23 = sadd.s32 %s22, 1
      %s24 = scalar_select %p21, %s22, %s23
      %p27 = pneg %p21
      %p28 = scmp.eq.s32.totalorder %s12, 1
      %p29 = por %p27, %p28
      %p30 = scmp.ne.s32.totalorder %s22, %s25
      %p31 = scmp.eq.s32.totalorder %s12, 0
      %p32 = por %p30, %p31
      %p33 = scmp.ne.s32.totalorder %s22, %s25
      %p34 = scmp.eq.s32.totalorder %s17, 1
      %p35 = por %p33, %p34
      %p36 = scmp.ne.s32.totalorder %s25, %s26
      %p37 = scmp.eq.s32.totalorder %s17, 0
      %p38 = por %p36, %p37
      %p39 = scmp.ne.s32.totalorder %s25, %s26
      %p40 = scmp.eq.s32.totalorder %s18, 1
      %p41 = por %p39, %p40
      %p43 = scmp.ne.s32.totalorder %s26, %s42
      %p44 = scmp.eq.s32.totalorder %s18, 0
      %p45 = por %p43, %p44
      %s46 = ssub.s32 %s12, %s19
      %p47 = scmp.eq.s32.totalorder %s46, 0
      %s49 = sadd.s32 %s48, 1
      %s50 = scalar_select %p47, %s48, %s49
      %p53 = pneg %p47
      %p54 = scmp.eq.s32.totalorder %s12, 1
      %p55 = por %p53, %p54
      %p56 = scmp.ne.s32.totalorder %s48, %s51
      %p57 = scmp.eq.s32.totalorder %s12, 0
      %p58 = por %p56, %p57
      %p59 = scmp.ne.s32.totalorder %s48, %s51
      %p60 = scmp.eq.s32.totalorder %s17, 1
      %p61 = por %p59, %p60
      %p62 = scmp.ne.s32.totalorder %s51, %s52
      %p63 = scmp.eq.s32.totalorder %s17, 0
      %p64 = por %p62, %p63
      %p65 = scmp.ne.s32.totalorder %s51, %s52
      %p66 = scmp.eq.s32.totalorder %s18, 1
      %p67 = por %p65, %p66
      %p69 = scmp.ne.s32.totalorder %s52, %s68
      %p70 = scmp.eq.s32.totalorder %s18, 0
      %p71 = por %p69, %p70
      %s73 = sadd.s32 %s72, 1
      %p76 = scmp.eq.s32.totalorder %s12, 1
      %p77 = scmp.ne.s32.totalorder %s72, %s74
      %p78 = scmp.eq.s32.totalorder %s12, 0
      %p79 = por %p77, %p78
      %p80 = scmp.ne.s32.totalorder %s72, %s74
      %p81 = scmp.eq.s32.totalorder %s17, 1
      %p82 = por %p80, %p81
      %p83 = scmp.ne.s32.totalorder %s74, %s75
      %p84 = scmp.eq.s32.totalorder %s17, 0
      %p85 = por %p83, %p84
      %p86 = scmp.ne.s32.totalorder %s74, %s75
      %p87 = scmp.eq.s32.totalorder %s18, 1
      %p88 = por %p86, %p87
      %p90 = scmp.ne.s32.totalorder %s75, %s89
      %p91 = scmp.eq.s32.totalorder %s18, 0
      %p92 = por %p90, %p91
      %s94 = sadd.s32 %s93, 1
      %p97 = scmp.eq.s32.totalorder %s12, 1
      %p98 = scmp.ne.s32.totalorder %s93, %s95
      %p99 = scmp.eq.s32.totalorder %s12, 0
      %p100 = por %p98, %p99
      %p101 = scmp.ne.s32.totalorder %s93, %s95
      %p102 = scmp.eq.s32.totalorder %s17, 1
      %p103 = por %p101, %p102
      %p104 = scmp.ne.s32.totalorder %s95, %s96
      %p105 = scmp.eq.s32.totalorder %s17, 0
      %p106 = por %p104, %p105
      %p107 = scmp.ne.s32.totalorder %s95, %s96
      %p108 = scmp.eq.s32.totalorder %s18, 1
      %p109 = por %p107, %p108
      %p111 = scmp.ne.s32.totalorder %s96, %s110
      %p112 = scmp.eq.s32.totalorder %s18, 0
      %p113 = por %p111, %p112
      %s115 = sadd.s32 %s114, 1
      %p118 = scmp.eq.s32.totalorder %s12, 1
      %p119 = scmp.ne.s32.totalorder %s114, %s116
      %p120 = scmp.eq.s32.totalorder %s12, 0
      %p121 = por %p119, %p120
      %p122 = scmp.ne.s32.totalorder %s114, %s116
      %p123 = scmp.eq.s32.totalorder %s17, 1
      %p124 = por %p122, %p123
      %p125 = scmp.ne.s32.totalorder %s116, %s117
      %p126 = scmp.eq.s32.totalorder %s17, 0
      %p127 = por %p125, %p126
      %p128 = scmp.ne.s32.totalorder %s116, %s117
      %p129 = scmp.eq.s32.totalorder %s18, 1
      %p130 = por %p128, %p129
      %p132 = scmp.ne.s32.totalorder %s117, %s131
      %p133 = scmp.eq.s32.totalorder %s18, 0
      %p134 = por %p132, %p133
      %s135 = ssub.s32 %s12, %s19
      %p136 = scmp.eq.s32.totalorder %s135, 0
      %s138 = sadd.s32 %s137, 1
      %s139 = scalar_select %p136, %s137, %s138
      %p142 = pneg %p136
      %p143 = scmp.eq.s32.totalorder %s12, 1
      %p144 = por %p142, %p143
      %p145 = scmp.ne.s32.totalorder %s137, %s140
      %p146 = scmp.eq.s32.totalorder %s12, 0
      %p147 = por %p145, %p146
      %p148 = scmp.ne.s32.totalorder %s137, %s140
      %p149 = scmp.eq.s32.totalorder %s17, 1
      %p150 = por %p148, %p149
      %p151 = scmp.ne.s32.totalorder %s140, %s141
      %p152 = scmp.eq.s32.totalorder %s17, 0
      %p153 = por %p151, %p152
      %p154 = scmp.ne.s32.totalorder %s140, %s141
      %p155 = scmp.eq.s32.totalorder %s18, 1
      %p156 = por %p154, %p155
      %p158 = scmp.ne.s32.totalorder %s141, %s157
      %p159 = scmp.eq.s32.totalorder %s18, 0
      %p160 = por %p158, %p159
      %p161 = scmp.le.s32.totalorder 1, %s12
      %p162 = scmp.lt.s32.totalorder %s12, 3
      %p163 = pnand %p161, %p162
      %p164 = pneg %p163
      // Predicated region
      $region9: #{mol_aggregator_forward.3} parent=5 // pred_check
        _
      $region10: #{mol_aggregator_forward.3} parent=5 // pred_check_branch
        %166 = sbr.rel (%p163) target = $region12
      $region11: #{mol_aggregator_forward.3} parent=5 // pred_region
        %s167 = ssub.s32 %s12, 1
        // Predicated region
        $region13: #{mol_aggregator_forward.3} parent=11 // pred_check
          %p168 = pneg %p85
        $region14: #{mol_aggregator_forward.3} parent=11 // pred_check_branch
          %170 = sbr.rel (%p168) target = $region16
        $region15: #{mol_aggregator_forward.3} parent=11 // pred_region
          _
        $region16: #{mol_aggregator_forward.3} parent=11 // pred_fallthru
          _
        // Predicated region
        $region17: #{mol_aggregator_forward.3} parent=11 // pred_check
          %p171 = pneg %p106
        $region18: #{mol_aggregator_forward.3} parent=11 // pred_check_branch
          %173 = sbr.rel (%p171) target = $region20
        $region19: #{mol_aggregator_forward.3} parent=11 // pred_region
          _
        $region20: #{mol_aggregator_forward.3} parent=11 // pred_fallthru
          _
        // Predicated region
        $region21: #{mol_aggregator_forward.3} parent=11 // pred_check
          %p174 = pneg %p127
        $region22: #{mol_aggregator_forward.3} parent=11 // pred_check_branch
          %176 = sbr.rel (%p174) target = $region24
        $region23: #{mol_aggregator_forward.3} parent=11 // pred_region
          %178 = vsyncadd [#allocation3], 0
          %s180 = sshll.u32 %s4, 4
          %s181 = int_to_ptr.vmem [resolvable:$true] %s180
          %183 = dma.vmem_to_smem %s181, 16, [#allocation2], [#allocation3]
        $region24: #{mol_aggregator_forward.3} parent=11 // pred_fallthru
          _
      $region12: #{mol_aggregator_forward.3} parent=5 // pred_fallthru
        _
      %p184 = scmp.lt.s32.totalorder %s12, 2
      // Predicated region
      $region25: #{mol_aggregator_forward.3} parent=5 // pred_check
        %p185 = pneg %p184
      $region26: #{mol_aggregator_forward.3} parent=5 // pred_check_branch
        %187 = sbr.rel (%p185) target = $region28
      $region27: #{mol_aggregator_forward.3} parent=5 // pred_region
        // Predicated region
        $region29: #{mol_aggregator_forward.3} parent=27 // pred_check
          %p188 = pneg %p32
        $region30: #{mol_aggregator_forward.3} parent=27 // pred_check_branch
          %190 = sbr.rel (%p188) target = $region32
        $region31: #{mol_aggregator_forward.3} parent=27 // pred_region
          %p191 = scmp.lt.s32.totalorder %s12, 1
          %s192 = scalar_select %p191, %s12, 1
          %s193 = smul.addr %s192, 8
          %s194 = smul.addr %s193, 8
          %s195 = scalar_lea.vmem %s0, %s194
        $region32: #{mol_aggregator_forward.3} parent=27 // pred_fallthru
          _
        // Predicated region
        $region33: #{mol_aggregator_forward.3} parent=27 // pred_check
          %p196 = pneg %p58
        $region34: #{mol_aggregator_forward.3} parent=27 // pred_check_branch
          %198 = sbr.rel (%p196) target = $region36
        $region35: #{mol_aggregator_forward.3} parent=27 // pred_region
          %p199 = scmp.lt.s32.totalorder %s12, 1
          %s200 = scalar_select %p199, %s12, 1
          %s201 = smul.addr %s200, 8
          %s202 = smul.addr %s201, 8
          %s203 = scalar_lea.vmem %s1, %s202
        $region36: #{mol_aggregator_forward.3} parent=27 // pred_fallthru
          _
      $region28: #{mol_aggregator_forward.3} parent=5 // pred_fallthru
        _
      %p204 = scmp.le.s32.totalorder 1, %s12
      %p205 = scmp.lt.s32.totalorder %s12, 3
      %p206 = pnand %p204, %p205
      %p207 = pneg %p206
      // Predicated region
      $region37: #{mol_aggregator_forward.3} parent=5 // pred_check
        _
      $region38: #{mol_aggregator_forward.3} parent=5 // pred_check_branch
        %209 = sbr.rel (%p206) target = $region40
      $region39: #{mol_aggregator_forward.3} parent=5 // pred_region
        %s210 = ssub.s32 %s12, 1
        // Predicated region
        $region41: #{mol_aggregator_forward.3} parent=39 // pred_check
          %p211 = pneg %p127
        $region42: #{mol_aggregator_forward.3} parent=39 // pred_check_branch
          %213 = sbr.rel (%p211) target = $region44
        $region43: #{mol_aggregator_forward.3} parent=39 // pred_region
          %215 = dma.done [#allocation3], 16
        $region44: #{mol_aggregator_forward.3} parent=39 // pred_fallthru
          _
        %216 = sfence
        %p217 = scmp.lt.s32.totalorder %s17, 1
        %s218 = scalar_select %p217, %s17, 1
        %s219 = smul.addr %s218, 8
        %s220 = smul.addr %s219, 8
        %s221 = scalar_lea.vmem %s0, %s220
        %p222 = pneg %p38
        %p223 = pneg %p35
        %p224 = scmp.lt.s32.totalorder %s17, 1
        %s225 = scalar_select %p224, %s17, 1
        %s226 = smul.addr %s225, 8
        %s227 = smul.addr %s226, 8
        %s228 = scalar_lea.vmem %s1, %s227
        %p229 = pneg %p64
        %p230 = pneg %p61
        %p231 = pneg %p85
        %p232 = pneg %p82
        %p233 = pneg %p106
        %p234 = pneg %p103
        %p235 = pneg %p127
        %p236 = pneg %p124
        %p237 = pneg %p153
        %p238 = pneg %p150
        %p239 = scmp.lt.s32.totalorder %s17, 1
        %s240 = scalar_select %p239, %s17, 1
        %s241 = smul.addr %s240, 9
        %s242 = smul.addr %s241, 8
        %s243 = scalar_lea.vmem %s5, %s242
        %p244 = scmp.lt.s32.totalorder %s17, 1
        %s245 = scalar_select %p244, %s17, 1
        %s246 = smul.addr %s245, 8
        %s247 = smul.addr %s246, 8
        %s248 = scalar_lea.vmem %s0, %s247
        %p249 = scmp.lt.s32.totalorder %s17, 1
        %s250 = scalar_select %p249, %s17, 1
        %s251 = smul.addr %s250, 8
        %s252 = smul.addr %s251, 8
        %s253 = scalar_lea.vmem %s1, %s252
        %p254 = scmp.lt.s32.totalorder %s17, 1
        %s255 = scalar_select %p254, %s17, 1
        %s256 = smul.addr %s255, 9
        %s257 = smul.addr %s256, 8
        %s258 = scalar_lea.vmem %s5, %s257
        %v260 = vld [vmem:[%s248] sm:$0xff]
        %v261 = vld [vmem:[%s248 + $0x8] sm:$0xff]
        %v262 = vld [vmem:[%s248 + $0x10] sm:$0xff]
        %v263 = vld [vmem:[%s248 + $0x18] sm:$0xff]
        %v264 = vld [vmem:[%s248 + $0x20] sm:$0xff]
        %v265 = vld [vmem:[%s248 + $0x28] sm:$0xff]
        %v266 = vld [vmem:[%s248 + $0x30] sm:$0xff]
        %v267 = vld [vmem:[%s248 + $0x38] sm:$0xff]
        %vm268 = vcmask 261120
        %v269 = vsel %vm268, %v260, 0.0
        %v270 = vsel %vm268, %v261, 0.0
        %v271 = vadd.f32 %v269, %v270
        %v272 = vsel %vm268, %v262, 0.0
        %v273 = vadd.f32 %v271, %v272
        %v274 = vsel %vm268, %v263, 0.0
        %v275 = vadd.f32 %v273, %v274
        %v276 = vsel %vm268, %v264, 0.0
        %v277 = vadd.f32 %v275, %v276
        %v278 = vsel %vm268, %v265, 0.0
        %v279 = vadd.f32 %v277, %v278
        %v280 = vsel %vm268, %v266, 0.0
        %v281 = vadd.f32 %v279, %v280
        %v282 = vsel %vm268, %v267, 0.0
        %v283 = vadd.f32 %v281, %v282
        %v284 = vrot.slane %v283, 4
        %v285 = vadd.f32 %v283, %v284
        %v286 = vrot.slane %v285, 2
        %v287 = vadd.f32 %v285, %v286
        %v288 = vrot.slane %v287, 1
        %v289 = vadd.f32 %v287, %v288
        %v290 = vmul.f32 %v289, 0.015625
        %v291 = vsel %vm268, %v260, -inf
        %v292 = vsel %vm268, %v261, -inf
        %v293 = vsel %vm268, %v262, -inf
        %v294 = vsel %vm268, %v263, -inf
        %v295 = vsel %vm268, %v264, -inf
        %v296 = vmax.f32 %v291, %v295
        %v297 = vsel %vm268, %v265, -inf
        %v298 = vmax.f32 %v292, %v297
        %v299 = vsel %vm268, %v266, -inf
        %v300 = vmax.f32 %v293, %v299
        %v301 = vsel %vm268, %v267, -inf
        %v302 = vmax.f32 %v294, %v301
        %v303 = vmax.f32 %v296, %v298
        %v304 = vmax.f32 %v300, %v302
        %v305 = vmax.f32 %v303, %v304
        %v306 = vrot.slane %v305, 4
        %v307 = vmax.f32 %v305, %v306
        %v308 = vrot.slane %v307, 2
        %v309 = vmax.f32 %v307, %v308
        %v310 = vrot.slane %v309, 1
        %v311 = vmax.f32 %v309, %v310
        %313 = vrot.lane.b32.xlu0 %v311, 32
        %v314 = vpop.permute.xlu0 %313
        %v316 = vsel %vm268, %v290, %v314
        %v317 = vld [vmem:[%s253] sm:$0xff]
        %v318 = vld [vmem:[%s253 + $0x8] sm:$0xff]
        %v319 = vld [vmem:[%s253 + $0x10] sm:$0xff]
        %v320 = vld [vmem:[%s253 + $0x18] sm:$0xff]
        %v321 = vld [vmem:[%s253 + $0x20] sm:$0xff]
        %v322 = vld [vmem:[%s253 + $0x28] sm:$0xff]
        %v323 = vld [vmem:[%s253 + $0x30] sm:$0xff]
        %v324 = vld [vmem:[%s253 + $0x38] sm:$0xff]
        %v325 = vlaneseq
        %v326 = vshrl.u32 %v325, 7
        %v327 = vadd.s32 %v326, 8
        %v328 = vadd.s32 %v326, 16
        %v329 = vadd.s32 %v326, 24
        %v330 = vadd.s32 %v326, 32
        %v331 = vadd.s32 %v326, 40
        %v332 = vadd.s32 %v326, 48
        %v333 = vadd.s32 %v326, 56
        %v334 = vlaneseq
        %v335 = vand.u32 %v334, 127
        %vm336 = vcmp.eq.s32.totalorder %v326, %v335
        %vm337 = vcmp.eq.s32.totalorder %v327, %v335
        %vm338 = vcmp.eq.s32.totalorder %v328, %v335
        %vm339 = vcmp.eq.s32.totalorder %v329, %v335
        %vm340 = vcmp.eq.s32.totalorder %v330, %v335
        %vm341 = vcmp.eq.s32.totalorder %v331, %v335
        %vm342 = vcmp.eq.s32.totalorder %v332, %v335
        %vm343 = vcmp.eq.s32.totalorder %v333, %v335
        %v344 = vsel %vm336, 1, 0
        %v345 = vsel %vm337, 1, 0
        %v346 = vsel %vm338, 1, 0
        %v347 = vsel %vm339, 1, 0
        %v348 = vsel %vm340, 1, 0
        %v349 = vsel %vm341, 1, 0
        %v350 = vsel %vm342, 1, 0
        %v351 = vsel %vm343, 1, 0
        %v352 = vcvt.s32.f32 %v344
        %v353 = vcvt.s32.f32 %v345
        %v354 = vcvt.s32.f32 %v346
        %v355 = vcvt.s32.f32 %v347
        %v356 = vcvt.s32.f32 %v348
        %v357 = vcvt.s32.f32 %v349
        %v358 = vcvt.s32.f32 %v350
        %v359 = vcvt.s32.f32 %v351
        %v360 = vmax.f32 %v317, %v352
        %v361 = vmax.f32 %v318, %v353
        %v362 = vmax.f32 %v319, %v354
        %v363 = vmax.f32 %v320, %v355
        %v364 = vmax.f32 %v321, %v356
        %v365 = vmax.f32 %v322, %v357
        %v366 = vmax.f32 %v323, %v358
        %v367 = vmax.f32 %v324, %v359
        %v368 = vld [vmem:[%s2] sm:$0xff]
        %v369 = vld [vmem:[%s2 + $0x8] sm:$0xff]
        %v370 = vld [vmem:[%s2 + $0x10] sm:$0xff]
        %v371 = vld [vmem:[%s2 + $0x18] sm:$0xff]
        %v372 = vld [vmem:[%s2 + $0x20] sm:$0xff]
        %v373 = vld [vmem:[%s2 + $0x28] sm:$0xff]
        %v374 = vld [vmem:[%s2 + $0x30] sm:$0xff]
        %v375 = vld [vmem:[%s2 + $0x38] sm:$0xff]
        %v376 = vld [vmem:[%s2 + $0x40] sm:$0xff]
        %v377 = vld [vmem:[%s3] sm:$0xff]
        %v378 = vld [vmem:[%s3 + $0x8] sm:$0xff]
        %v379 = vld [vmem:[%s3 + $0x10] sm:$0xff]
        %v380 = vld [vmem:[%s3 + $0x18] sm:$0xff]
        %s381 = sld [smem:[#allocation2]]
        %s382 = sld [smem:[#allocation2 + $0x1]]
        %s383 = sld [smem:[#allocation2 + $0x2]]
        %vm384 = vcmask 523264
        %v386 = vsel %vm384, %v360, 0
        %v389 = vsel %vm384, %v361, 0
        %v392 = vsel %vm384, %v362, 0
        %v395 = vsel %vm384, %v363, 0
        %v398 = vsel %vm384, %v364, 0
        %v401 = vsel %vm384, %v365, 0
        %v404 = vsel %vm384, %v366, 0
        %v407 = vsel %vm384, %v367, 0
        %409 = vmatpush.msra.mxu0 0.0
        %410 = vmatpush.msra.mxu0 0.0
        %411 = vmatpush.msra.mxu0 0.0
        %412 = vmatpush.msra.mxu0 0.0
        %413 = vmatpush.msra.mxu0 0.0
        %414 = vmatpush.msra.mxu0 0.0
        %415 = vmatpush.msra.mxu0 0.0
        %416 = vmatpush.msra.mxu0 0.0
        %417 = vmatpush.msra.mxu0 %v267
        %418 = vmatpush.msra.mxu0 %v266
        %419 = vmatpush.msra.mxu0 %v265
        %420 = vmatpush.msra.mxu0 %v264
        %421 = vmatpush.msra.mxu0 %v263
        %422 = vmatpush.msra.mxu0 %v262
        %423 = vmatpush.msra.mxu0 %v261
        %424 = vmatpush.msra.mxu0 %v260
        %425 = vmatmul.f32.gmra.mxu0 %v386
        %v426 = vpop.f32.mrf.mxu0
        %v427 = vadd.f32 0.0, %v426
        %428 = vmatmul.f32.gmra.mxu0 %v389
        %v429 = vpop.f32.mrf.mxu0
        %v430 = vadd.f32 0.0, %v429
        %431 = vmatmul.f32.gmra.mxu0 %v392
        %v432 = vpop.f32.mrf.mxu0
        %v433 = vadd.f32 0.0, %v432
        %434 = vmatmul.f32.gmra.mxu0 %v395
        %v435 = vpop.f32.mrf.mxu0
        %v436 = vadd.f32 0.0, %v435
        %437 = vmatmul.f32.gmra.mxu0 %v398
        %v438 = vpop.f32.mrf.mxu0
        %v439 = vadd.f32 0.0, %v438
        %440 = vmatmul.f32.gmra.mxu0 %v401
        %v441 = vpop.f32.mrf.mxu0
        %v442 = vadd.f32 0.0, %v441
        %443 = vmatmul.f32.gmra.mxu0 %v404
        %v444 = vpop.f32.mrf.mxu0
        %v445 = vadd.f32 0.0, %v444
        %446 = vmatmul.f32.gmra.mxu0 %v407
        %v447 = vpop.f32.mrf.mxu0
        %v448 = vadd.f32 0.0, %v447
        %449 = vdwg.mxu0
        %v451 = vsel %vm268, %v427, 0
        %v454 = vsel %vm268, %v430, 0
        %v457 = vsel %vm268, %v433, 0
        %v460 = vsel %vm268, %v436, 0
        %v463 = vsel %vm268, %v439, 0
        %v466 = vsel %vm268, %v442, 0
        %v469 = vsel %vm268, %v445, 0
        %v472 = vsel %vm268, %v448, 0
        %474 = vmatpush.msra.mxu0 0.0
        %475 = vmatpush.msra.mxu0 0.0
        %476 = vmatpush.msra.mxu0 0.0
        %477 = vmatpush.msra.mxu0 0.0
        %478 = vmatpush.msra.mxu0 0.0
        %479 = vmatpush.msra.mxu0 0.0
        %480 = vmatpush.msra.mxu0 0.0
        %481 = vmatpush.msra.mxu0 0.0
        %482 = vmatpush.msra.mxu0 0.0
        %483 = vmatpush.msra.mxu0 0.0
        %484 = vmatpush.msra.mxu0 0.0
        %485 = vmatpush.msra.mxu0 0.0
        %486 = vmatpush.msra.mxu0 %v375
        %487 = vmatpush.msra.mxu0 %v374
        %488 = vmatpush.msra.mxu0 %v373
        %489 = vmatpush.msra.mxu0 %v372
        %490 = vmatmul.f32.gmra.mxu0 %v451
        %v491 = vpop.f32.mrf.mxu0
        %v492 = vadd.f32 0.0, %v491
        %493 = vmatmul.f32.gmra.mxu0 %v454
        %v494 = vpop.f32.mrf.mxu0
        %v495 = vadd.f32 0.0, %v494
        %496 = vmatmul.f32.gmra.mxu0 %v457
        %v497 = vpop.f32.mrf.mxu0
        %v498 = vadd.f32 0.0, %v497
        %499 = vmatmul.f32.gmra.mxu0 %v460
        %v500 = vpop.f32.mrf.mxu0
        %v501 = vadd.f32 0.0, %v500
        %502 = vmatmul.f32.gmra.mxu0 %v463
        %v503 = vpop.f32.mrf.mxu0
        %v504 = vadd.f32 0.0, %v503
        %505 = vmatmul.f32.gmra.mxu0 %v466
        %v506 = vpop.f32.mrf.mxu0
        %v507 = vadd.f32 0.0, %v506
        %508 = vmatmul.f32.gmra.mxu0 %v469
        %v509 = vpop.f32.mrf.mxu0
        %v510 = vadd.f32 0.0, %v509
        %511 = vmatmul.f32.gmra.mxu0 %v472
        %v512 = vpop.f32.mrf.mxu0
        %v513 = vadd.f32 0.0, %v512
        %514 = vdwg.mxu0
        %v516 = vsel %vm268, %v260, 0
        %v519 = vsel %vm268, %v261, 0
        %v522 = vsel %vm268, %v262, 0
        %v525 = vsel %vm268, %v263, 0
        %v528 = vsel %vm268, %v264, 0
        %v531 = vsel %vm268, %v265, 0
        %v534 = vsel %vm268, %v266, 0
        %v537 = vsel %vm268, %v267, 0
        %539 = vmatpush.msra.mxu0 0.0
        %540 = vmatpush.msra.mxu0 0.0
        %541 = vmatpush.msra.mxu0 0.0
        %542 = vmatpush.msra.mxu0 0.0
        %543 = vmatpush.msra.mxu0 0.0
        %544 = vmatpush.msra.mxu0 0.0
        %545 = vmatpush.msra.mxu0 0.0
        %546 = vmatpush.msra.mxu0 0.0
        %547 = vmatpush.msra.mxu0 0.0
        %548 = vmatpush.msra.mxu0 0.0
        %549 = vmatpush.msra.mxu0 0.0
        %550 = vmatpush.msra.mxu0 0.0
        %551 = vmatpush.msra.mxu0 %v371
        %552 = vmatpush.msra.mxu0 %v370
        %553 = vmatpush.msra.mxu0 %v369
        %554 = vmatpush.msra.mxu0 %v368
        %555 = vmatmul.f32.gmra.mxu0 %v516
        %v556 = vpop.f32.mrf.mxu0
        %v557 = vadd.f32 %v492, %v556
        %558 = vmatmul.f32.gmra.mxu0 %v519
        %v559 = vpop.f32.mrf.mxu0
        %v560 = vadd.f32 %v495, %v559
        %561 = vmatmul.f32.gmra.mxu0 %v522
        %v562 = vpop.f32.mrf.mxu0
        %v563 = vadd.f32 %v498, %v562
        %564 = vmatmul.f32.gmra.mxu0 %v525
        %v565 = vpop.f32.mrf.mxu0
        %v566 = vadd.f32 %v501, %v565
        %567 = vmatmul.f32.gmra.mxu0 %v528
        %v568 = vpop.f32.mrf.mxu0
        %v569 = vadd.f32 %v504, %v568
        %570 = vmatmul.f32.gmra.mxu0 %v531
        %v571 = vpop.f32.mrf.mxu0
        %v572 = vadd.f32 %v507, %v571
        %573 = vmatmul.f32.gmra.mxu0 %v534
        %v574 = vpop.f32.mrf.mxu0
        %v575 = vadd.f32 %v510, %v574
        %576 = vmatmul.f32.gmra.mxu0 %v537
        %v577 = vpop.f32.mrf.mxu0
        %v578 = vadd.f32 %v513, %v577
        %579 = vdwg.mxu0
        %v580 = vperm.slane %v376, 0
        %v581 = vadd.f32 %v557, %v580
        %v582 = vadd.f32 %v560, %v580
        %v583 = vadd.f32 %v563, %v580
        %v584 = vadd.f32 %v566, %v580
        %v585 = vadd.f32 %v569, %v580
        %v586 = vadd.f32 %v572, %v580
        %v587 = vadd.f32 %v575, %v580
        %v588 = vadd.f32 %v578, %v580
        %589 = vxpose.xlu0.b32.start [1/16] %v581, 128
        %590 = vxpose.xlu0.b32.cont [2/16] %v582, 128
        %591 = vxpose.xlu0.b32.cont [3/16] %v583, 128
        %592 = vxpose.xlu0.b32.cont [4/16] %v584, 128
        %593 = vxpose.xlu0.b32.cont [5/16] %v585, 128
        %594 = vxpose.xlu0.b32.cont [6/16] %v586, 128
        %595 = vxpose.xlu0.b32.cont [7/16] %v587, 128
        %596 = vxpose.xlu0.b32.cont [8/16] %v588, 128
        %597 = vxpose.xlu0.b32.cont [9/16] 0.0, 128
        %598 = vxpose.xlu0.b32.cont [10/16] 0.0, 128
        %599 = vxpose.xlu0.b32.cont [11/16] 0.0, 128
        %600 = vxpose.xlu0.b32.cont [12/16] 0.0, 128
        %601 = vxpose.xlu0.b32.cont [13/16] 0.0, 128
        %602 = vxpose.xlu0.b32.cont [14/16] 0.0, 128
        %603 = vxpose.xlu0.b32.cont [15/16] 0.0, 128
        %604 = vxpose.xlu0.b32.end [16/16] 0.0, 128
        %v605 = vpop.trf.xlu0
        %v606 = vpop.trf.xlu0
        %v607 = vpop.trf.xlu0
        %v608 = vpop.trf.xlu0
        %v609 = vpop.trf.xlu0
        %v610 = vpop.trf.xlu0
        %v611 = vpop.trf.xlu0
        %v612 = vpop.trf.xlu0
        %v613 = vpop.trf.xlu0
        %v614 = vpop.trf.xlu0
        %v615 = vpop.trf.xlu0
        %v616 = vpop.trf.xlu0
        %v617 = vpop.trf.xlu0
        %v618 = vpop.trf.xlu0
        %v619 = vpop.trf.xlu0
        %v620 = vpop.trf.xlu0
        %vm621 = vcmp.gt.f32.partialorder %v360, 0.0
        %vm622 = vcmp.gt.f32.partialorder %v361, 0.0
        %vm623 = vcmp.gt.f32.partialorder %v362, 0.0
        %vm624 = vcmp.gt.f32.partialorder %v363, 0.0
        %vm625 = vcmp.gt.f32.partialorder %v364, 0.0
        %vm626 = vcmp.gt.f32.partialorder %v365, 0.0
        %vm627 = vcmp.gt.f32.partialorder %v366, 0.0
        %vm628 = vcmp.gt.f32.partialorder %v367, 0.0
        %v629 = vperm.slane %v605, 0
        %v630 = vlaneseq
        %v631 = vshrl.u32 %v630, 7
        %633 = vset.pattern.permute.xlu0 %v631
        %634 = vperm.xlu0 %633, %v629
        %v635 = vpop.permute.xlu0 %634
        %v636 = vlaneseq
        %v637 = vshrl.u32 %v636, 7
        %v638 = vadd.s32 %v637, 8
        %639 = vset.pattern.permute.xlu0 %v638
        %640 = vperm.xlu0 %639, %v629
        %v641 = vpop.permute.xlu0 %640
        %v642 = vlaneseq
        %v643 = vshrl.u32 %v642, 7
        %v644 = vadd.s32 %v643, 16
        %645 = vset.pattern.permute.xlu0 %v644
        %646 = vperm.xlu0 %645, %v629
        %v647 = vpop.permute.xlu0 %646
        %v648 = vlaneseq
        %v649 = vshrl.u32 %v648, 7
        %v650 = vadd.s32 %v649, 24
        %651 = vset.pattern.permute.xlu0 %v650
        %652 = vperm.xlu0 %651, %v629
        %v653 = vpop.permute.xlu0 %652
        %v654 = vlaneseq
        %v655 = vshrl.u32 %v654, 7
        %v656 = vadd.s32 %v655, 32
        %657 = vset.pattern.permute.xlu0 %v656
        %658 = vperm.xlu0 %657, %v629
        %v659 = vpop.permute.xlu0 %658
        %v660 = vlaneseq
        %v661 = vshrl.u32 %v660, 7
        %v662 = vadd.s32 %v661, 40
        %663 = vset.pattern.permute.xlu0 %v662
        %664 = vperm.xlu0 %663, %v629
        %v665 = vpop.permute.xlu0 %664
        %v666 = vlaneseq
        %v667 = vshrl.u32 %v666, 7
        %v668 = vadd.s32 %v667, 48
        %669 = vset.pattern.permute.xlu0 %v668
        %670 = vperm.xlu0 %669, %v629
        %v671 = vpop.permute.xlu0 %670
        %v672 = vlaneseq
        %v673 = vshrl.u32 %v672, 7
        %v674 = vadd.s32 %v673, 56
        %675 = vset.pattern.permute.xlu0 %v674
        %676 = vperm.xlu0 %675, %v629
        %v677 = vpop.permute.xlu0 %676
        %v678 = vperm.slane %v605, 1
        %v679 = vlaneseq
        %v680 = vshrl.u32 %v679, 7
        %682 = vset.pattern.permute.xlu0 %v680
        %683 = vperm.xlu0 %682, %v678
        %v684 = vpop.permute.xlu0 %683
        %v685 = vlaneseq
        %v686 = vshrl.u32 %v685, 7
        %v687 = vadd.s32 %v686, 8
        %688 = vset.pattern.permute.xlu0 %v687
        %689 = vperm.xlu0 %688, %v678
        %v690 = vpop.permute.xlu0 %689
        %v691 = vlaneseq
        %v692 = vshrl.u32 %v691, 7
        %v693 = vadd.s32 %v692, 16
        %694 = vset.pattern.permute.xlu0 %v693
        %695 = vperm.xlu0 %694, %v678
        %v696 = vpop.permute.xlu0 %695
        %v697 = vlaneseq
        %v698 = vshrl.u32 %v697, 7
        %v699 = vadd.s32 %v698, 24
        %700 = vset.pattern.permute.xlu0 %v699
        %701 = vperm.xlu0 %700, %v678
        %v702 = vpop.permute.xlu0 %701
        %v703 = vlaneseq
        %v704 = vshrl.u32 %v703, 7
        %v705 = vadd.s32 %v704, 32
        %706 = vset.pattern.permute.xlu0 %v705
        %707 = vperm.xlu0 %706, %v678
        %v708 = vpop.permute.xlu0 %707
        %v709 = vlaneseq
        %v710 = vshrl.u32 %v709, 7
        %v711 = vadd.s32 %v710, 40
        %712 = vset.pattern.permute.xlu0 %v711
        %713 = vperm.xlu0 %712, %v678
        %v714 = vpop.permute.xlu0 %713
        %v715 = vlaneseq
        %v716 = vshrl.u32 %v715, 7
        %v717 = vadd.s32 %v716, 48
        %718 = vset.pattern.permute.xlu0 %v717
        %719 = vperm.xlu0 %718, %v678
        %v720 = vpop.permute.xlu0 %719
        %v721 = vlaneseq
        %v722 = vshrl.u32 %v721, 7
        %v723 = vadd.s32 %v722, 56
        %724 = vset.pattern.permute.xlu0 %v723
        %725 = vperm.xlu0 %724, %v678
        %v726 = vpop.permute.xlu0 %725
        %v727 = vperm.slane %v605, 2
        %v728 = vlaneseq
        %v729 = vshrl.u32 %v728, 7
        %731 = vset.pattern.permute.xlu0 %v729
        %732 = vperm.xlu0 %731, %v727
        %v733 = vpop.permute.xlu0 %732
        %v734 = vlaneseq
        %v735 = vshrl.u32 %v734, 7
        %v736 = vadd.s32 %v735, 8
        %737 = vset.pattern.permute.xlu0 %v736
        %738 = vperm.xlu0 %737, %v727
        %v739 = vpop.permute.xlu0 %738
        %v740 = vlaneseq
        %v741 = vshrl.u32 %v740, 7
        %v742 = vadd.s32 %v741, 16
        %743 = vset.pattern.permute.xlu0 %v742
        %744 = vperm.xlu0 %743, %v727
        %v745 = vpop.permute.xlu0 %744
        %v746 = vlaneseq
        %v747 = vshrl.u32 %v746, 7
        %v748 = vadd.s32 %v747, 24
        %749 = vset.pattern.permute.xlu0 %v748
        %750 = vperm.xlu0 %749, %v727
        %v751 = vpop.permute.xlu0 %750
        %v752 = vlaneseq
        %v753 = vshrl.u32 %v752, 7
        %v754 = vadd.s32 %v753, 32
        %755 = vset.pattern.permute.xlu0 %v754
        %756 = vperm.xlu0 %755, %v727
        %v757 = vpop.permute.xlu0 %756
        %v758 = vlaneseq
        %v759 = vshrl.u32 %v758, 7
        %v760 = vadd.s32 %v759, 40
        %761 = vset.pattern.permute.xlu0 %v760
        %762 = vperm.xlu0 %761, %v727
        %v763 = vpop.permute.xlu0 %762
        %v764 = vlaneseq
        %v765 = vshrl.u32 %v764, 7
        %v766 = vadd.s32 %v765, 48
        %767 = vset.pattern.permute.xlu0 %v766
        %768 = vperm.xlu0 %767, %v727
        %v769 = vpop.permute.xlu0 %768
        %v770 = vlaneseq
        %v771 = vshrl.u32 %v770, 7
        %v772 = vadd.s32 %v771, 56
        %773 = vset.pattern.permute.xlu0 %v772
        %774 = vperm.xlu0 %773, %v727
        %v775 = vpop.permute.xlu0 %774
        %v776 = vperm.slane %v605, 3
        %v777 = vlaneseq
        %v778 = vshrl.u32 %v777, 7
        %780 = vset.pattern.permute.xlu0 %v778
        %781 = vperm.xlu0 %780, %v776
        %v782 = vpop.permute.xlu0 %781
        %v783 = vlaneseq
        %v784 = vshrl.u32 %v783, 7
        %v785 = vadd.s32 %v784, 8
        %786 = vset.pattern.permute.xlu0 %v785
        %787 = vperm.xlu0 %786, %v776
        %v788 = vpop.permute.xlu0 %787
        %v789 = vlaneseq
        %v790 = vshrl.u32 %v789, 7
        %v791 = vadd.s32 %v790, 16
        %792 = vset.pattern.permute.xlu0 %v791
        %793 = vperm.xlu0 %792, %v776
        %v794 = vpop.permute.xlu0 %793
        %v795 = vlaneseq
        %v796 = vshrl.u32 %v795, 7
        %v797 = vadd.s32 %v796, 24
        %798 = vset.pattern.permute.xlu0 %v797
        %799 = vperm.xlu0 %798, %v776
        %v800 = vpop.permute.xlu0 %799
        %v801 = vlaneseq
        %v802 = vshrl.u32 %v801, 7
        %v803 = vadd.s32 %v802, 32
        %804 = vset.pattern.permute.xlu0 %v803
        %805 = vperm.xlu0 %804, %v776
        %v806 = vpop.permute.xlu0 %805
        %v807 = vlaneseq
        %v808 = vshrl.u32 %v807, 7
        %v809 = vadd.s32 %v808, 40
        %810 = vset.pattern.permute.xlu0 %v809
        %811 = vperm.xlu0 %810, %v776
        %v812 = vpop.permute.xlu0 %811
        %v813 = vlaneseq
        %v814 = vshrl.u32 %v813, 7
        %v815 = vadd.s32 %v814, 48
        %816 = vset.pattern.permute.xlu0 %v815
        %817 = vperm.xlu0 %816, %v776
        %v818 = vpop.permute.xlu0 %817
        %v819 = vlaneseq
        %v820 = vshrl.u32 %v819, 7
        %v821 = vadd.s32 %v820, 56
        %822 = vset.pattern.permute.xlu0 %v821
        %823 = vperm.xlu0 %822, %v776
        %v824 = vpop.permute.xlu0 %823
        %v825 = vperm.slane %v605, 4
        %v826 = vlaneseq
        %v827 = vshrl.u32 %v826, 7
        %829 = vset.pattern.permute.xlu0 %v827
        %830 = vperm.xlu0 %829, %v825
        %v831 = vpop.permute.xlu0 %830
        %v832 = vlaneseq
        %v833 = vshrl.u32 %v832, 7
        %v834 = vadd.s32 %v833, 8
        %835 = vset.pattern.permute.xlu0 %v834
        %836 = vperm.xlu0 %835, %v825
        %v837 = vpop.permute.xlu0 %836
        %v838 = vlaneseq
        %v839 = vshrl.u32 %v838, 7
        %v840 = vadd.s32 %v839, 16
        %841 = vset.pattern.permute.xlu0 %v840
        %842 = vperm.xlu0 %841, %v825
        %v843 = vpop.permute.xlu0 %842
        %v844 = vlaneseq
        %v845 = vshrl.u32 %v844, 7
        %v846 = vadd.s32 %v845, 24
        %847 = vset.pattern.permute.xlu0 %v846
        %848 = vperm.xlu0 %847, %v825
        %v849 = vpop.permute.xlu0 %848
        %v850 = vlaneseq
        %v851 = vshrl.u32 %v850, 7
        %v852 = vadd.s32 %v851, 32
        %853 = vset.pattern.permute.xlu0 %v852
        %854 = vperm.xlu0 %853, %v825
        %v855 = vpop.permute.xlu0 %854
        %v856 = vlaneseq
        %v857 = vshrl.u32 %v856, 7
        %v858 = vadd.s32 %v857, 40
        %859 = vset.pattern.permute.xlu0 %v858
        %860 = vperm.xlu0 %859, %v825
        %v861 = vpop.permute.xlu0 %860
        %v862 = vlaneseq
        %v863 = vshrl.u32 %v862, 7
        %v864 = vadd.s32 %v863, 48
        %865 = vset.pattern.permute.xlu0 %v864
        %866 = vperm.xlu0 %865, %v825
        %v867 = vpop.permute.xlu0 %866
        %v868 = vlaneseq
        %v869 = vshrl.u32 %v868, 7
        %v870 = vadd.s32 %v869, 56
        %871 = vset.pattern.permute.xlu0 %v870
        %872 = vperm.xlu0 %871, %v825
        %v873 = vpop.permute.xlu0 %872
        %v874 = vperm.slane %v605, 5
        %v875 = vlaneseq
        %v876 = vshrl.u32 %v875, 7
        %878 = vset.pattern.permute.xlu0 %v876
        %879 = vperm.xlu0 %878, %v874
        %v880 = vpop.permute.xlu0 %879
        %v881 = vlaneseq
        %v882 = vshrl.u32 %v881, 7
        %v883 = vadd.s32 %v882, 8
        %884 = vset.pattern.permute.xlu0 %v883
        %885 = vperm.xlu0 %884, %v874
        %v886 = vpop.permute.xlu0 %885
        %v887 = vlaneseq
        %v888 = vshrl.u32 %v887, 7
        %v889 = vadd.s32 %v888, 16
        %890 = vset.pattern.permute.xlu0 %v889
        %891 = vperm.xlu0 %890, %v874
        %v892 = vpop.permute.xlu0 %891
        %v893 = vlaneseq
        %v894 = vshrl.u32 %v893, 7
        %v895 = vadd.s32 %v894, 24
        %896 = vset.pattern.permute.xlu0 %v895
        %897 = vperm.xlu0 %896, %v874
        %v898 = vpop.permute.xlu0 %897
        %v899 = vlaneseq
        %v900 = vshrl.u32 %v899, 7
        %v901 = vadd.s32 %v900, 32
        %902 = vset.pattern.permute.xlu0 %v901
        %903 = vperm.xlu0 %902, %v874
        %v904 = vpop.permute.xlu0 %903
        %v905 = vlaneseq
        %v906 = vshrl.u32 %v905, 7
        %v907 = vadd.s32 %v906, 40
        %908 = vset.pattern.permute.xlu0 %v907
        %909 = vperm.xlu0 %908, %v874
        %v910 = vpop.permute.xlu0 %909
        %v911 = vlaneseq
        %v912 = vshrl.u32 %v911, 7
        %v913 = vadd.s32 %v912, 48
        %914 = vset.pattern.permute.xlu0 %v913
        %915 = vperm.xlu0 %914, %v874
        %v916 = vpop.permute.xlu0 %915
        %v917 = vlaneseq
        %v918 = vshrl.u32 %v917, 7
        %v919 = vadd.s32 %v918, 56
        %920 = vset.pattern.permute.xlu0 %v919
        %921 = vperm.xlu0 %920, %v874
        %v922 = vpop.permute.xlu0 %921
        %v923 = vperm.slane %v605, 6
        %v924 = vlaneseq
        %v925 = vshrl.u32 %v924, 7
        %927 = vset.pattern.permute.xlu0 %v925
        %928 = vperm.xlu0 %927, %v923
        %v929 = vpop.permute.xlu0 %928
        %v930 = vlaneseq
        %v931 = vshrl.u32 %v930, 7
        %v932 = vadd.s32 %v931, 8
        %933 = vset.pattern.permute.xlu0 %v932
        %934 = vperm.xlu0 %933, %v923
        %v935 = vpop.permute.xlu0 %934
        %v936 = vlaneseq
        %v937 = vshrl.u32 %v936, 7
        %v938 = vadd.s32 %v937, 16
        %939 = vset.pattern.permute.xlu0 %v938
        %940 = vperm.xlu0 %939, %v923
        %v941 = vpop.permute.xlu0 %940
        %v942 = vlaneseq
        %v943 = vshrl.u32 %v942, 7
        %v944 = vadd.s32 %v943, 24
        %945 = vset.pattern.permute.xlu0 %v944
        %946 = vperm.xlu0 %945, %v923
        %v947 = vpop.permute.xlu0 %946
        %v948 = vlaneseq
        %v949 = vshrl.u32 %v948, 7
        %v950 = vadd.s32 %v949, 32
        %951 = vset.pattern.permute.xlu0 %v950
        %952 = vperm.xlu0 %951, %v923
        %v953 = vpop.permute.xlu0 %952
        %v954 = vlaneseq
        %v955 = vshrl.u32 %v954, 7
        %v956 = vadd.s32 %v955, 40
        %957 = vset.pattern.permute.xlu0 %v956
        %958 = vperm.xlu0 %957, %v923
        %v959 = vpop.permute.xlu0 %958
        %v960 = vlaneseq
        %v961 = vshrl.u32 %v960, 7
        %v962 = vadd.s32 %v961, 48
        %963 = vset.pattern.permute.xlu0 %v962
        %964 = vperm.xlu0 %963, %v923
        %v965 = vpop.permute.xlu0 %964
        %v966 = vlaneseq
        %v967 = vshrl.u32 %v966, 7
        %v968 = vadd.s32 %v967, 56
        %969 = vset.pattern.permute.xlu0 %v968
        %970 = vperm.xlu0 %969, %v923
        %v971 = vpop.permute.xlu0 %970
        %v972 = vperm.slane %v605, 7
        %v973 = vlaneseq
        %v974 = vshrl.u32 %v973, 7
        %976 = vset.pattern.permute.xlu0 %v974
        %977 = vperm.xlu0 %976, %v972
        %v978 = vpop.permute.xlu0 %977
        %v979 = vlaneseq
        %v980 = vshrl.u32 %v979, 7
        %v981 = vadd.s32 %v980, 8
        %982 = vset.pattern.permute.xlu0 %v981
        %983 = vperm.xlu0 %982, %v972
        %v984 = vpop.permute.xlu0 %983
        %v985 = vlaneseq
        %v986 = vshrl.u32 %v985, 7
        %v987 = vadd.s32 %v986, 16
        %988 = vset.pattern.permute.xlu0 %v987
        %989 = vperm.xlu0 %988, %v972
        %v990 = vpop.permute.xlu0 %989
        %v991 = vlaneseq
        %v992 = vshrl.u32 %v991, 7
        %v993 = vadd.s32 %v992, 24
        %994 = vset.pattern.permute.xlu0 %v993
        %995 = vperm.xlu0 %994, %v972
        %v996 = vpop.permute.xlu0 %995
        %v997 = vlaneseq
        %v998 = vshrl.u32 %v997, 7
        %v999 = vadd.s32 %v998, 32
        %1000 = vset.pattern.permute.xlu0 %v999
        %1001 = vperm.xlu0 %1000, %v972
        %v1002 = vpop.permute.xlu0 %1001
        %v1003 = vlaneseq
        %v1004 = vshrl.u32 %v1003, 7
        %v1005 = vadd.s32 %v1004, 40
        %1006 = vset.pattern.permute.xlu0 %v1005
        %1007 = vperm.xlu0 %1006, %v972
        %v1008 = vpop.permute.xlu0 %1007
        %v1009 = vlaneseq
        %v1010 = vshrl.u32 %v1009, 7
        %v1011 = vadd.s32 %v1010, 48
        %1012 = vset.pattern.permute.xlu0 %v1011
        %1013 = vperm.xlu0 %1012, %v972
        %v1014 = vpop.permute.xlu0 %1013
        %v1015 = vlaneseq
        %v1016 = vshrl.u32 %v1015, 7
        %v1017 = vadd.s32 %v1016, 56
        %1018 = vset.pattern.permute.xlu0 %v1017
        %1019 = vperm.xlu0 %1018, %v972
        %v1020 = vpop.permute.xlu0 %1019
        %v1021 = vsel %vm621, 1, 0
        %v1022 = vsel %vm622, 1, 0
        %v1023 = vsel %vm623, 1, 0
        %v1024 = vsel %vm624, 1, 0
        %v1025 = vsel %vm625, 1, 0
        %v1026 = vsel %vm626, 1, 0
        %v1027 = vsel %vm627, 1, 0
        %v1028 = vsel %vm628, 1, 0
        %vm1029 = vcmp.eq.s32.totalorder %v1021, 1
        %vm1030 = vcmp.eq.s32.totalorder %v1022, 1
        %vm1031 = vcmp.eq.s32.totalorder %v1023, 1
        %vm1032 = vcmp.eq.s32.totalorder %v1024, 1
        %vm1033 = vcmp.eq.s32.totalorder %v1025, 1
        %vm1034 = vcmp.eq.s32.totalorder %v1026, 1
        %vm1035 = vcmp.eq.s32.totalorder %v1027, 1
        %vm1036 = vcmp.eq.s32.totalorder %v1028, 1
        %v1037 = vsel %vm1029, %v635, -1e+30
        %v1038 = vsel %vm1030, %v641, -1e+30
        %v1039 = vsel %vm1031, %v647, -1e+30
        %v1040 = vsel %vm1032, %v653, -1e+30
        %v1041 = vsel %vm1033, %v659, -1e+30
        %v1042 = vsel %vm1034, %v665, -1e+30
        %v1043 = vsel %vm1035, %v671, -1e+30
        %v1044 = vsel %vm1036, %v677, -1e+30
        %v1045 = vsel %vm1029, %v684, -1e+30
        %v1046 = vsel %vm1030, %v690, -1e+30
        %v1047 = vsel %vm1031, %v696, -1e+30
        %v1048 = vsel %vm1032, %v702, -1e+30
        %v1049 = vsel %vm1033, %v708, -1e+30
        %v1050 = vsel %vm1034, %v714, -1e+30
        %v1051 = vsel %vm1035, %v720, -1e+30
        %v1052 = vsel %vm1036, %v726, -1e+30
        %v1053 = vsel %vm1029, %v733, -1e+30
        %v1054 = vsel %vm1030, %v739, -1e+30
        %v1055 = vsel %vm1031, %v745, -1e+30
        %v1056 = vsel %vm1032, %v751, -1e+30
        %v1057 = vsel %vm1033, %v757, -1e+30
        %v1058 = vsel %vm1034, %v763, -1e+30
        %v1059 = vsel %vm1035, %v769, -1e+30
        %v1060 = vsel %vm1036, %v775, -1e+30
        %v1061 = vsel %vm1029, %v782, -1e+30
        %v1062 = vsel %vm1030, %v788, -1e+30
        %v1063 = vsel %vm1031, %v794, -1e+30
        %v1064 = vsel %vm1032, %v800, -1e+30
        %v1065 = vsel %vm1033, %v806, -1e+30
        %v1066 = vsel %vm1034, %v812, -1e+30
        %v1067 = vsel %vm1035, %v818, -1e+30
        %v1068 = vsel %vm1036, %v824, -1e+30
        %v1069 = vsel %vm1029, %v831, -1e+30
        %v1070 = vsel %vm1030, %v837, -1e+30
        %v1071 = vsel %vm1031, %v843, -1e+30
        %v1072 = vsel %vm1032, %v849, -1e+30
        %v1073 = vsel %vm1033, %v855, -1e+30
        %v1074 = vsel %vm1034, %v861, -1e+30
        %v1075 = vsel %vm1035, %v867, -1e+30
        %v1076 = vsel %vm1036, %v873, -1e+30
        %v1077 = vsel %vm1029, %v880, -1e+30
        %v1078 = vsel %vm1030, %v886, -1e+30
        %v1079 = vsel %vm1031, %v892, -1e+30
        %v1080 = vsel %vm1032, %v898, -1e+30
        %v1081 = vsel %vm1033, %v904, -1e+30
        %v1082 = vsel %vm1034, %v910, -1e+30
        %v1083 = vsel %vm1035, %v916, -1e+30
        %v1084 = vsel %vm1036, %v922, -1e+30
        %v1085 = vsel %vm1029, %v929, -1e+30
        %v1086 = vsel %vm1030, %v935, -1e+30
        %v1087 = vsel %vm1031, %v941, -1e+30
        %v1088 = vsel %vm1032, %v947, -1e+30
        %v1089 = vsel %vm1033, %v953, -1e+30
        %v1090 = vsel %vm1034, %v959, -1e+30
        %v1091 = vsel %vm1035, %v965, -1e+30
        %v1092 = vsel %vm1036, %v971, -1e+30
        %v1093 = vsel %vm1029, %v978, -1e+30
        %v1094 = vsel %vm1030, %v984, -1e+30
        %v1095 = vsel %vm1031, %v990, -1e+30
        %v1096 = vsel %vm1032, %v996, -1e+30
        %v1097 = vsel %vm1033, %v1002, -1e+30
        %v1098 = vsel %vm1034, %v1008, -1e+30
        %v1099 = vsel %vm1035, %v1014, -1e+30
        %v1100 = vsel %vm1036, %v1020, -1e+30
        %v1101 = vsel %vm384, %v1037, -inf
        %v1102 = vsel %vm384, %v1038, -inf
        %v1103 = vmax.f32 %v1101, %v1102
        %v1104 = vsel %vm384, %v1039, -inf
        %v1105 = vmax.f32 %v1103, %v1104
        %v1106 = vsel %vm384, %v1040, -inf
        %v1107 = vmax.f32 %v1105, %v1106
        %v1108 = vsel %vm384, %v1041, -inf
        %v1109 = vmax.f32 %v1107, %v1108
        %v1110 = vsel %vm384, %v1042, -inf
        %v1111 = vmax.f32 %v1109, %v1110
        %v1112 = vsel %vm384, %v1043, -inf
        %v1113 = vmax.f32 %v1111, %v1112
        %v1114 = vsel %vm384, %v1044, -inf
        %v1115 = vmax.f32 %v1113, %v1114
        %v1116 = vrot.slane %v1115, 4
        %v1117 = vmax.f32 %v1115, %v1116
        %v1118 = vrot.slane %v1117, 2
        %v1119 = vmax.f32 %v1117, %v1118
        %v1120 = vrot.slane %v1119, 1
        %v1121 = vmax.f32 %v1119, %v1120
        %v1122 = vsel %vm384, %v1045, -inf
        %v1123 = vsel %vm384, %v1046, -inf
        %v1124 = vmax.f32 %v1122, %v1123
        %v1125 = vsel %vm384, %v1047, -inf
        %v1126 = vmax.f32 %v1124, %v1125
        %v1127 = vsel %vm384, %v1048, -inf
        %v1128 = vmax.f32 %v1126, %v1127
        %v1129 = vsel %vm384, %v1049, -inf
        %v1130 = vmax.f32 %v1128, %v1129
        %v1131 = vsel %vm384, %v1050, -inf
        %v1132 = vmax.f32 %v1130, %v1131
        %v1133 = vsel %vm384, %v1051, -inf
        %v1134 = vmax.f32 %v1132, %v1133
        %v1135 = vsel %vm384, %v1052, -inf
        %v1136 = vmax.f32 %v1134, %v1135
        %v1137 = vrot.slane %v1136, 4
        %v1138 = vmax.f32 %v1136, %v1137
        %v1139 = vrot.slane %v1138, 2
        %v1140 = vmax.f32 %v1138, %v1139
        %v1141 = vrot.slane %v1140, 1
        %v1142 = vmax.f32 %v1140, %v1141
        %v1143 = vsel %vm384, %v1053, -inf
        %v1144 = vsel %vm384, %v1054, -inf
        %v1145 = vmax.f32 %v1143, %v1144
        %v1146 = vsel %vm384, %v1055, -inf
        %v1147 = vmax.f32 %v1145, %v1146
        %v1148 = vsel %vm384, %v1056, -inf
        %v1149 = vmax.f32 %v1147, %v1148
        %v1150 = vsel %vm384, %v1057, -inf
        %v1151 = vmax.f32 %v1149, %v1150
        %v1152 = vsel %vm384, %v1058, -inf
        %v1153 = vmax.f32 %v1151, %v1152
        %v1154 = vsel %vm384, %v1059, -inf
        %v1155 = vmax.f32 %v1153, %v1154
        %v1156 = vsel %vm384, %v1060, -inf
        %v1157 = vmax.f32 %v1155, %v1156
        %v1158 = vrot.slane %v1157, 4
        %v1159 = vmax.f32 %v1157, %v1158
        %v1160 = vrot.slane %v1159, 2
        %v1161 = vmax.f32 %v1159, %v1160
        %v1162 = vrot.slane %v1161, 1
        %v1163 = vmax.f32 %v1161, %v1162
        %v1164 = vsel %vm384, %v1061, -inf
        %v1165 = vsel %vm384, %v1062, -inf
        %v1166 = vmax.f32 %v1164, %v1165
        %v1167 = vsel %vm384, %v1063, -inf
        %v1168 = vmax.f32 %v1166, %v1167
        %v1169 = vsel %vm384, %v1064, -inf
        %v1170 = vmax.f32 %v1168, %v1169
        %v1171 = vsel %vm384, %v1065, -inf
        %v1172 = vmax.f32 %v1170, %v1171
        %v1173 = vsel %vm384, %v1066, -inf
        %v1174 = vmax.f32 %v1172, %v1173
        %v1175 = vsel %vm384, %v1067, -inf
        %v1176 = vmax.f32 %v1174, %v1175
        %v1177 = vsel %vm384, %v1068, -inf
        %v1178 = vmax.f32 %v1176, %v1177
        %v1179 = vrot.slane %v1178, 4
        %v1180 = vmax.f32 %v1178, %v1179
        %v1181 = vrot.slane %v1180, 2
        %v1182 = vmax.f32 %v1180, %v1181
        %v1183 = vrot.slane %v1182, 1
        %v1184 = vmax.f32 %v1182, %v1183
        %v1185 = vsel %vm384, %v1069, -inf
        %v1186 = vsel %vm384, %v1070, -inf
        %v1187 = vmax.f32 %v1185, %v1186
        %v1188 = vsel %vm384, %v1071, -inf
        %v1189 = vmax.f32 %v1187, %v1188
        %v1190 = vsel %vm384, %v1072, -inf
        %v1191 = vmax.f32 %v1189, %v1190
        %v1192 = vsel %vm384, %v1073, -inf
        %v1193 = vmax.f32 %v1191, %v1192
        %v1194 = vsel %vm384, %v1074, -inf
        %v1195 = vmax.f32 %v1193, %v1194
        %v1196 = vsel %vm384, %v1075, -inf
        %v1197 = vmax.f32 %v1195, %v1196
        %v1198 = vsel %vm384, %v1076, -inf
        %v1199 = vmax.f32 %v1197, %v1198
        %v1200 = vrot.slane %v1199, 4
        %v1201 = vmax.f32 %v1199, %v1200
        %v1202 = vrot.slane %v1201, 2
        %v1203 = vmax.f32 %v1201, %v1202
        %v1204 = vrot.slane %v1203, 1
        %v1205 = vmax.f32 %v1203, %v1204
        %v1206 = vsel %vm384, %v1077, -inf
        %v1207 = vsel %vm384, %v1078, -inf
        %v1208 = vmax.f32 %v1206, %v1207
        %v1209 = vsel %vm384, %v1079, -inf
        %v1210 = vmax.f32 %v1208, %v1209
        %v1211 = vsel %vm384, %v1080, -inf
        %v1212 = vmax.f32 %v1210, %v1211
        %v1213 = vsel %vm384, %v1081, -inf
        %v1214 = vmax.f32 %v1212, %v1213
        %v1215 = vsel %vm384, %v1082, -inf
        %v1216 = vmax.f32 %v1214, %v1215
        %v1217 = vsel %vm384, %v1083, -inf
        %v1218 = vmax.f32 %v1216, %v1217
        %v1219 = vsel %vm384, %v1084, -inf
        %v1220 = vmax.f32 %v1218, %v1219
        %v1221 = vrot.slane %v1220, 4
        %v1222 = vmax.f32 %v1220, %v1221
        %v1223 = vrot.slane %v1222, 2
        %v1224 = vmax.f32 %v1222, %v1223
        %v1225 = vrot.slane %v1224, 1
        %v1226 = vmax.f32 %v1224, %v1225
        %v1227 = vsel %vm384, %v1085, -inf
        %v1228 = vsel %vm384, %v1086, -inf
        %v1229 = vmax.f32 %v1227, %v1228
        %v1230 = vsel %vm384, %v1087, -inf
        %v1231 = vmax.f32 %v1229, %v1230
        %v1232 = vsel %vm384, %v1088, -inf
        %v1233 = vmax.f32 %v1231, %v1232
        %v1234 = vsel %vm384, %v1089, -inf
        %v1235 = vmax.f32 %v1233, %v1234
        %v1236 = vsel %vm384, %v1090, -inf
        %v1237 = vmax.f32 %v1235, %v1236
        %v1238 = vsel %vm384, %v1091, -inf
        %v1239 = vmax.f32 %v1237, %v1238
        %v1240 = vsel %vm384, %v1092, -inf
        %v1241 = vmax.f32 %v1239, %v1240
        %v1242 = vrot.slane %v1241, 4
        %v1243 = vmax.f32 %v1241, %v1242
        %v1244 = vrot.slane %v1243, 2
        %v1245 = vmax.f32 %v1243, %v1244
        %v1246 = vrot.slane %v1245, 1
        %v1247 = vmax.f32 %v1245, %v1246
        %v1248 = vsel %vm384, %v1093, -inf
        %v1249 = vsel %vm384, %v1094, -inf
        %v1250 = vmax.f32 %v1248, %v1249
        %v1251 = vsel %vm384, %v1095, -inf
        %v1252 = vmax.f32 %v1250, %v1251
        %v1253 = vsel %vm384, %v1096, -inf
        %v1254 = vmax.f32 %v1252, %v1253
        %v1255 = vsel %vm384, %v1097, -inf
        %v1256 = vmax.f32 %v1254, %v1255
        %v1257 = vsel %vm384, %v1098, -inf
        %v1258 = vmax.f32 %v1256, %v1257
        %v1259 = vsel %vm384, %v1099, -inf
        %v1260 = vmax.f32 %v1258, %v1259
        %v1261 = vsel %vm384, %v1100, -inf
        %v1262 = vmax.f32 %v1260, %v1261
        %v1263 = vrot.slane %v1262, 4
        %v1264 = vmax.f32 %v1262, %v1263
        %v1265 = vrot.slane %v1264, 2
        %v1266 = vmax.f32 %v1264, %v1265
        %v1267 = vrot.slane %v1266, 1
        %v1268 = vmax.f32 %v1266, %v1267
        %1270 = vset.pattern.permute.xlu0 0
        %1271 = vperm.xlu0 %1270, %v377
        %v1272 = vpop.permute.xlu0 %1271
        %vm1282 = vcmask 1041409
        %v1283 = vsel %vm1282, %v1142, %v1121
        %vm1284 = vcmask 1042434
        %v1285 = vsel %vm1284, %v1163, %v1283
        %vm1286 = vcmask 1043459
        %v1287 = vsel %vm1286, %v1184, %v1285
        %vm1288 = vcmask 1044484
        %v1289 = vsel %vm1288, %v1205, %v1287
        %vm1290 = vcmask 1045509
        %v1291 = vsel %vm1290, %v1226, %v1289
        %vm1292 = vcmask 1046534
        %v1293 = vsel %vm1292, %v1247, %v1291
        %vm1294 = vcmask 1047559
        %v1295 = vsel %vm1294, %v1268, %v1293
        %v1297 = vmul.f32 %v1272, %v1295
        %v1298 = vsel %vm384, %v1297, 0.0
        %v1299 = vrot.slane %v1298, 4
        %v1300 = vadd.f32 %v1298, %v1299
        %v1301 = vrot.slane %v1300, 2
        %v1302 = vadd.f32 %v1300, %v1301
        %v1303 = vrot.slane %v1302, 1
        %v1304 = vadd.f32 %v1302, %v1303
        %v1305 = vadd.f32 %v1304, 0.0
        %v1306 = vperm.slane %v606, 0
        %v1307 = vlaneseq
        %v1308 = vshrl.u32 %v1307, 7
        %1310 = vset.pattern.permute.xlu0 %v1308
        %1311 = vperm.xlu0 %1310, %v1306
        %v1312 = vpop.permute.xlu0 %1311
        %v1313 = vlaneseq
        %v1314 = vshrl.u32 %v1313, 7
        %v1315 = vadd.s32 %v1314, 8
        %1316 = vset.pattern.permute.xlu0 %v1315
        %1317 = vperm.xlu0 %1316, %v1306
        %v1318 = vpop.permute.xlu0 %1317
        %v1319 = vlaneseq
        %v1320 = vshrl.u32 %v1319, 7
        %v1321 = vadd.s32 %v1320, 16
        %1322 = vset.pattern.permute.xlu0 %v1321
        %1323 = vperm.xlu0 %1322, %v1306
        %v1324 = vpop.permute.xlu0 %1323
        %v1325 = vlaneseq
        %v1326 = vshrl.u32 %v1325, 7
        %v1327 = vadd.s32 %v1326, 24
        %1328 = vset.pattern.permute.xlu0 %v1327
        %1329 = vperm.xlu0 %1328, %v1306
        %v1330 = vpop.permute.xlu0 %1329
        %v1331 = vlaneseq
        %v1332 = vshrl.u32 %v1331, 7
        %v1333 = vadd.s32 %v1332, 32
        %1334 = vset.pattern.permute.xlu0 %v1333
        %1335 = vperm.xlu0 %1334, %v1306
        %v1336 = vpop.permute.xlu0 %1335
        %v1337 = vlaneseq
        %v1338 = vshrl.u32 %v1337, 7
        %v1339 = vadd.s32 %v1338, 40
        %1340 = vset.pattern.permute.xlu0 %v1339
        %1341 = vperm.xlu0 %1340, %v1306
        %v1342 = vpop.permute.xlu0 %1341
        %v1343 = vlaneseq
        %v1344 = vshrl.u32 %v1343, 7
        %v1345 = vadd.s32 %v1344, 48
        %1346 = vset.pattern.permute.xlu0 %v1345
        %1347 = vperm.xlu0 %1346, %v1306
        %v1348 = vpop.permute.xlu0 %1347
        %v1349 = vlaneseq
        %v1350 = vshrl.u32 %v1349, 7
        %v1351 = vadd.s32 %v1350, 56
        %1352 = vset.pattern.permute.xlu0 %v1351
        %1353 = vperm.xlu0 %1352, %v1306
        %v1354 = vpop.permute.xlu0 %1353
        %v1355 = vperm.slane %v606, 1
        %v1356 = vlaneseq
        %v1357 = vshrl.u32 %v1356, 7
        %1359 = vset.pattern.permute.xlu0 %v1357
        %1360 = vperm.xlu0 %1359, %v1355
        %v1361 = vpop.permute.xlu0 %1360
        %v1362 = vlaneseq
        %v1363 = vshrl.u32 %v1362, 7
        %v1364 = vadd.s32 %v1363, 8
        %1365 = vset.pattern.permute.xlu0 %v1364
        %1366 = vperm.xlu0 %1365, %v1355
        %v1367 = vpop.permute.xlu0 %1366
        %v1368 = vlaneseq
        %v1369 = vshrl.u32 %v1368, 7
        %v1370 = vadd.s32 %v1369, 16
        %1371 = vset.pattern.permute.xlu0 %v1370
        %1372 = vperm.xlu0 %1371, %v1355
        %v1373 = vpop.permute.xlu0 %1372
        %v1374 = vlaneseq
        %v1375 = vshrl.u32 %v1374, 7
        %v1376 = vadd.s32 %v1375, 24
        %1377 = vset.pattern.permute.xlu0 %v1376
        %1378 = vperm.xlu0 %1377, %v1355
        %v1379 = vpop.permute.xlu0 %1378
        %v1380 = vlaneseq
        %v1381 = vshrl.u32 %v1380, 7
        %v1382 = vadd.s32 %v1381, 32
        %1383 = vset.pattern.permute.xlu0 %v1382
        %1384 = vperm.xlu0 %1383, %v1355
        %v1385 = vpop.permute.xlu0 %1384
        %v1386 = vlaneseq
        %v1387 = vshrl.u32 %v1386, 7
        %v1388 = vadd.s32 %v1387, 40
        %1389 = vset.pattern.permute.xlu0 %v1388
        %1390 = vperm.xlu0 %1389, %v1355
        %v1391 = vpop.permute.xlu0 %1390
        %v1392 = vlaneseq
        %v1393 = vshrl.u32 %v1392, 7
        %v1394 = vadd.s32 %v1393, 48
        %1395 = vset.pattern.permute.xlu0 %v1394
        %1396 = vperm.xlu0 %1395, %v1355
        %v1397 = vpop.permute.xlu0 %1396
        %v1398 = vlaneseq
        %v1399 = vshrl.u32 %v1398, 7
        %v1400 = vadd.s32 %v1399, 56
        %1401 = vset.pattern.permute.xlu0 %v1400
        %1402 = vperm.xlu0 %1401, %v1355
        %v1403 = vpop.permute.xlu0 %1402
        %v1404 = vperm.slane %v606, 2
        %v1405 = vlaneseq
        %v1406 = vshrl.u32 %v1405, 7
        %1408 = vset.pattern.permute.xlu0 %v1406
        %1409 = vperm.xlu0 %1408, %v1404
        %v1410 = vpop.permute.xlu0 %1409
        %v1411 = vlaneseq
        %v1412 = vshrl.u32 %v1411, 7
        %v1413 = vadd.s32 %v1412, 8
        %1414 = vset.pattern.permute.xlu0 %v1413
        %1415 = vperm.xlu0 %1414, %v1404
        %v1416 = vpop.permute.xlu0 %1415
        %v1417 = vlaneseq
        %v1418 = vshrl.u32 %v1417, 7
        %v1419 = vadd.s32 %v1418, 16
        %1420 = vset.pattern.permute.xlu0 %v1419
        %1421 = vperm.xlu0 %1420, %v1404
        %v1422 = vpop.permute.xlu0 %1421
        %v1423 = vlaneseq
        %v1424 = vshrl.u32 %v1423, 7
        %v1425 = vadd.s32 %v1424, 24
        %1426 = vset.pattern.permute.xlu0 %v1425
        %1427 = vperm.xlu0 %1426, %v1404
        %v1428 = vpop.permute.xlu0 %1427
        %v1429 = vlaneseq
        %v1430 = vshrl.u32 %v1429, 7
        %v1431 = vadd.s32 %v1430, 32
        %1432 = vset.pattern.permute.xlu0 %v1431
        %1433 = vperm.xlu0 %1432, %v1404
        %v1434 = vpop.permute.xlu0 %1433
        %v1435 = vlaneseq
        %v1436 = vshrl.u32 %v1435, 7
        %v1437 = vadd.s32 %v1436, 40
        %1438 = vset.pattern.permute.xlu0 %v1437
        %1439 = vperm.xlu0 %1438, %v1404
        %v1440 = vpop.permute.xlu0 %1439
        %v1441 = vlaneseq
        %v1442 = vshrl.u32 %v1441, 7
        %v1443 = vadd.s32 %v1442, 48
        %1444 = vset.pattern.permute.xlu0 %v1443
        %1445 = vperm.xlu0 %1444, %v1404
        %v1446 = vpop.permute.xlu0 %1445
        %v1447 = vlaneseq
        %v1448 = vshrl.u32 %v1447, 7
        %v1449 = vadd.s32 %v1448, 56
        %1450 = vset.pattern.permute.xlu0 %v1449
        %1451 = vperm.xlu0 %1450, %v1404
        %v1452 = vpop.permute.xlu0 %1451
        %v1453 = vperm.slane %v606, 3
        %v1454 = vlaneseq
        %v1455 = vshrl.u32 %v1454, 7
        %1457 = vset.pattern.permute.xlu0 %v1455
        %1458 = vperm.xlu0 %1457, %v1453
        %v1459 = vpop.permute.xlu0 %1458
        %v1460 = vlaneseq
        %v1461 = vshrl.u32 %v1460, 7
        %v1462 = vadd.s32 %v1461, 8
        %1463 = vset.pattern.permute.xlu0 %v1462
        %1464 = vperm.xlu0 %1463, %v1453
        %v1465 = vpop.permute.xlu0 %1464
        %v1466 = vlaneseq
        %v1467 = vshrl.u32 %v1466, 7
        %v1468 = vadd.s32 %v1467, 16
        %1469 = vset.pattern.permute.xlu0 %v1468
        %1470 = vperm.xlu0 %1469, %v1453
        %v1471 = vpop.permute.xlu0 %1470
        %v1472 = vlaneseq
        %v1473 = vshrl.u32 %v1472, 7
        %v1474 = vadd.s32 %v1473, 24
        %1475 = vset.pattern.permute.xlu0 %v1474
        %1476 = vperm.xlu0 %1475, %v1453
        %v1477 = vpop.permute.xlu0 %1476
        %v1478 = vlaneseq
        %v1479 = vshrl.u32 %v1478, 7
        %v1480 = vadd.s32 %v1479, 32
        %1481 = vset.pattern.permute.xlu0 %v1480
        %1482 = vperm.xlu0 %1481, %v1453
        %v1483 = vpop.permute.xlu0 %1482
        %v1484 = vlaneseq
        %v1485 = vshrl.u32 %v1484, 7
        %v1486 = vadd.s32 %v1485, 40
        %1487 = vset.pattern.permute.xlu0 %v1486
        %1488 = vperm.xlu0 %1487, %v1453
        %v1489 = vpop.permute.xlu0 %1488
        %v1490 = vlaneseq
        %v1491 = vshrl.u32 %v1490, 7
        %v1492 = vadd.s32 %v1491, 48
        %1493 = vset.pattern.permute.xlu0 %v1492
        %1494 = vperm.xlu0 %1493, %v1453
        %v1495 = vpop.permute.xlu0 %1494
        %v1496 = vlaneseq
        %v1497 = vshrl.u32 %v1496, 7
        %v1498 = vadd.s32 %v1497, 56
        %1499 = vset.pattern.permute.xlu0 %v1498
        %1500 = vperm.xlu0 %1499, %v1453
        %v1501 = vpop.permute.xlu0 %1500
        %v1502 = vperm.slane %v606, 4
        %v1503 = vlaneseq
        %v1504 = vshrl.u32 %v1503, 7
        %1506 = vset.pattern.permute.xlu0 %v1504
        %1507 = vperm.xlu0 %1506, %v1502
        %v1508 = vpop.permute.xlu0 %1507
        %v1509 = vlaneseq
        %v1510 = vshrl.u32 %v1509, 7
        %v1511 = vadd.s32 %v1510, 8
        %1512 = vset.pattern.permute.xlu0 %v1511
        %1513 = vperm.xlu0 %1512, %v1502
        %v1514 = vpop.permute.xlu0 %1513
        %v1515 = vlaneseq
        %v1516 = vshrl.u32 %v1515, 7
        %v1517 = vadd.s32 %v1516, 16
        %1518 = vset.pattern.permute.xlu0 %v1517
        %1519 = vperm.xlu0 %1518, %v1502
        %v1520 = vpop.permute.xlu0 %1519
        %v1521 = vlaneseq
        %v1522 = vshrl.u32 %v1521, 7
        %v1523 = vadd.s32 %v1522, 24
        %1524 = vset.pattern.permute.xlu0 %v1523
        %1525 = vperm.xlu0 %1524, %v1502
        %v1526 = vpop.permute.xlu0 %1525
        %v1527 = vlaneseq
        %v1528 = vshrl.u32 %v1527, 7
        %v1529 = vadd.s32 %v1528, 32
        %1530 = vset.pattern.permute.xlu0 %v1529
        %1531 = vperm.xlu0 %1530, %v1502
        %v1532 = vpop.permute.xlu0 %1531
        %v1533 = vlaneseq
        %v1534 = vshrl.u32 %v1533, 7
        %v1535 = vadd.s32 %v1534, 40
        %1536 = vset.pattern.permute.xlu0 %v1535
        %1537 = vperm.xlu0 %1536, %v1502
        %v1538 = vpop.permute.xlu0 %1537
        %v1539 = vlaneseq
        %v1540 = vshrl.u32 %v1539, 7
        %v1541 = vadd.s32 %v1540, 48
        %1542 = vset.pattern.permute.xlu0 %v1541
        %1543 = vperm.xlu0 %1542, %v1502
        %v1544 = vpop.permute.xlu0 %1543
        %v1545 = vlaneseq
        %v1546 = vshrl.u32 %v1545, 7
        %v1547 = vadd.s32 %v1546, 56
        %1548 = vset.pattern.permute.xlu0 %v1547
        %1549 = vperm.xlu0 %1548, %v1502
        %v1550 = vpop.permute.xlu0 %1549
        %v1551 = vperm.slane %v606, 5
        %v1552 = vlaneseq
        %v1553 = vshrl.u32 %v1552, 7
        %1555 = vset.pattern.permute.xlu0 %v1553
        %1556 = vperm.xlu0 %1555, %v1551
        %v1557 = vpop.permute.xlu0 %1556
        %v1558 = vlaneseq
        %v1559 = vshrl.u32 %v1558, 7
        %v1560 = vadd.s32 %v1559, 8
        %1561 = vset.pattern.permute.xlu0 %v1560
        %1562 = vperm.xlu0 %1561, %v1551
        %v1563 = vpop.permute.xlu0 %1562
        %v1564 = vlaneseq
        %v1565 = vshrl.u32 %v1564, 7
        %v1566 = vadd.s32 %v1565, 16
        %1567 = vset.pattern.permute.xlu0 %v1566
        %1568 = vperm.xlu0 %1567, %v1551
        %v1569 = vpop.permute.xlu0 %1568
        %v1570 = vlaneseq
        %v1571 = vshrl.u32 %v1570, 7
        %v1572 = vadd.s32 %v1571, 24
        %1573 = vset.pattern.permute.xlu0 %v1572
        %1574 = vperm.xlu0 %1573, %v1551
        %v1575 = vpop.permute.xlu0 %1574
        %v1576 = vlaneseq
        %v1577 = vshrl.u32 %v1576, 7
        %v1578 = vadd.s32 %v1577, 32
        %1579 = vset.pattern.permute.xlu0 %v1578
        %1580 = vperm.xlu0 %1579, %v1551
        %v1581 = vpop.permute.xlu0 %1580
        %v1582 = vlaneseq
        %v1583 = vshrl.u32 %v1582, 7
        %v1584 = vadd.s32 %v1583, 40
        %1585 = vset.pattern.permute.xlu0 %v1584
        %1586 = vperm.xlu0 %1585, %v1551
        %v1587 = vpop.permute.xlu0 %1586
        %v1588 = vlaneseq
        %v1589 = vshrl.u32 %v1588, 7
        %v1590 = vadd.s32 %v1589, 48
        %1591 = vset.pattern.permute.xlu0 %v1590
        %1592 = vperm.xlu0 %1591, %v1551
        %v1593 = vpop.permute.xlu0 %1592
        %v1594 = vlaneseq
        %v1595 = vshrl.u32 %v1594, 7
        %v1596 = vadd.s32 %v1595, 56
        %1597 = vset.pattern.permute.xlu0 %v1596
        %1598 = vperm.xlu0 %1597, %v1551
        %v1599 = vpop.permute.xlu0 %1598
        %v1600 = vperm.slane %v606, 6
        %v1601 = vlaneseq
        %v1602 = vshrl.u32 %v1601, 7
        %1604 = vset.pattern.permute.xlu0 %v1602
        %1605 = vperm.xlu0 %1604, %v1600
        %v1606 = vpop.permute.xlu0 %1605
        %v1607 = vlaneseq
        %v1608 = vshrl.u32 %v1607, 7
        %v1609 = vadd.s32 %v1608, 8
        %1610 = vset.pattern.permute.xlu0 %v1609
        %1611 = vperm.xlu0 %1610, %v1600
        %v1612 = vpop.permute.xlu0 %1611
        %v1613 = vlaneseq
        %v1614 = vshrl.u32 %v1613, 7
        %v1615 = vadd.s32 %v1614, 16
        %1616 = vset.pattern.permute.xlu0 %v1615
        %1617 = vperm.xlu0 %1616, %v1600
        %v1618 = vpop.permute.xlu0 %1617
        %v1619 = vlaneseq
        %v1620 = vshrl.u32 %v1619, 7
        %v1621 = vadd.s32 %v1620, 24
        %1622 = vset.pattern.permute.xlu0 %v1621
        %1623 = vperm.xlu0 %1622, %v1600
        %v1624 = vpop.permute.xlu0 %1623
        %v1625 = vlaneseq
        %v1626 = vshrl.u32 %v1625, 7
        %v1627 = vadd.s32 %v1626, 32
        %1628 = vset.pattern.permute.xlu0 %v1627
        %1629 = vperm.xlu0 %1628, %v1600
        %v1630 = vpop.permute.xlu0 %1629
        %v1631 = vlaneseq
        %v1632 = vshrl.u32 %v1631, 7
        %v1633 = vadd.s32 %v1632, 40
        %1634 = vset.pattern.permute.xlu0 %v1633
        %1635 = vperm.xlu0 %1634, %v1600
        %v1636 = vpop.permute.xlu0 %1635
        %v1637 = vlaneseq
        %v1638 = vshrl.u32 %v1637, 7
        %v1639 = vadd.s32 %v1638, 48
        %1640 = vset.pattern.permute.xlu0 %v1639
        %1641 = vperm.xlu0 %1640, %v1600
        %v1642 = vpop.permute.xlu0 %1641
        %v1643 = vlaneseq
        %v1644 = vshrl.u32 %v1643, 7
        %v1645 = vadd.s32 %v1644, 56
        %1646 = vset.pattern.permute.xlu0 %v1645
        %1647 = vperm.xlu0 %1646, %v1600
        %v1648 = vpop.permute.xlu0 %1647
        %v1649 = vperm.slane %v606, 7
        %v1650 = vlaneseq
        %v1651 = vshrl.u32 %v1650, 7
        %1653 = vset.pattern.permute.xlu0 %v1651
        %1654 = vperm.xlu0 %1653, %v1649
        %v1655 = vpop.permute.xlu0 %1654
        %v1656 = vlaneseq
        %v1657 = vshrl.u32 %v1656, 7
        %v1658 = vadd.s32 %v1657, 8
        %1659 = vset.pattern.permute.xlu0 %v1658
        %1660 = vperm.xlu0 %1659, %v1649
        %v1661 = vpop.permute.xlu0 %1660
        %v1662 = vlaneseq
        %v1663 = vshrl.u32 %v1662, 7
        %v1664 = vadd.s32 %v1663, 16
        %1665 = vset.pattern.permute.xlu0 %v1664
        %1666 = vperm.xlu0 %1665, %v1649
        %v1667 = vpop.permute.xlu0 %1666
        %v1668 = vlaneseq
        %v1669 = vshrl.u32 %v1668, 7
        %v1670 = vadd.s32 %v1669, 24
        %1671 = vset.pattern.permute.xlu0 %v1670
        %1672 = vperm.xlu0 %1671, %v1649
        %v1673 = vpop.permute.xlu0 %1672
        %v1674 = vlaneseq
        %v1675 = vshrl.u32 %v1674, 7
        %v1676 = vadd.s32 %v1675, 32
        %1677 = vset.pattern.permute.xlu0 %v1676
        %1678 = vperm.xlu0 %1677, %v1649
        %v1679 = vpop.permute.xlu0 %1678
        %v1680 = vlaneseq
        %v1681 = vshrl.u32 %v1680, 7
        %v1682 = vadd.s32 %v1681, 40
        %1683 = vset.pattern.permute.xlu0 %v1682
        %1684 = vperm.xlu0 %1683, %v1649
        %v1685 = vpop.permute.xlu0 %1684
        %v1686 = vlaneseq
        %v1687 = vshrl.u32 %v1686, 7
        %v1688 = vadd.s32 %v1687, 48
        %1689 = vset.pattern.permute.xlu0 %v1688
        %1690 = vperm.xlu0 %1689, %v1649
        %v1691 = vpop.permute.xlu0 %1690
        %v1692 = vlaneseq
        %v1693 = vshrl.u32 %v1692, 7
        %v1694 = vadd.s32 %v1693, 56
        %1695 = vset.pattern.permute.xlu0 %v1694
        %1696 = vperm.xlu0 %1695, %v1649
        %v1697 = vpop.permute.xlu0 %1696
        %v1698 = vsel %vm1029, %v1312, -1e+30
        %v1699 = vsel %vm1030, %v1318, -1e+30
        %v1700 = vsel %vm1031, %v1324, -1e+30
        %v1701 = vsel %vm1032, %v1330, -1e+30
        %v1702 = vsel %vm1033, %v1336, -1e+30
        %v1703 = vsel %vm1034, %v1342, -1e+30
        %v1704 = vsel %vm1035, %v1348, -1e+30
        %v1705 = vsel %vm1036, %v1354, -1e+30
        %v1706 = vsel %vm1029, %v1361, -1e+30
        %v1707 = vsel %vm1030, %v1367, -1e+30
        %v1708 = vsel %vm1031, %v1373, -1e+30
        %v1709 = vsel %vm1032, %v1379, -1e+30
        %v1710 = vsel %vm1033, %v1385, -1e+30
        %v1711 = vsel %vm1034, %v1391, -1e+30
        %v1712 = vsel %vm1035, %v1397, -1e+30
        %v1713 = vsel %vm1036, %v1403, -1e+30
        %v1714 = vsel %vm1029, %v1410, -1e+30
        %v1715 = vsel %vm1030, %v1416, -1e+30
        %v1716 = vsel %vm1031, %v1422, -1e+30
        %v1717 = vsel %vm1032, %v1428, -1e+30
        %v1718 = vsel %vm1033, %v1434, -1e+30
        %v1719 = vsel %vm1034, %v1440, -1e+30
        %v1720 = vsel %vm1035, %v1446, -1e+30
        %v1721 = vsel %vm1036, %v1452, -1e+30
        %v1722 = vsel %vm1029, %v1459, -1e+30
        %v1723 = vsel %vm1030, %v1465, -1e+30
        %v1724 = vsel %vm1031, %v1471, -1e+30
        %v1725 = vsel %vm1032, %v1477, -1e+30
        %v1726 = vsel %vm1033, %v1483, -1e+30
        %v1727 = vsel %vm1034, %v1489, -1e+30
        %v1728 = vsel %vm1035, %v1495, -1e+30
        %v1729 = vsel %vm1036, %v1501, -1e+30
        %v1730 = vsel %vm1029, %v1508, -1e+30
        %v1731 = vsel %vm1030, %v1514, -1e+30
        %v1732 = vsel %vm1031, %v1520, -1e+30
        %v1733 = vsel %vm1032, %v1526, -1e+30
        %v1734 = vsel %vm1033, %v1532, -1e+30
        %v1735 = vsel %vm1034, %v1538, -1e+30
        %v1736 = vsel %vm1035, %v1544, -1e+30
        %v1737 = vsel %vm1036, %v1550, -1e+30
        %v1738 = vsel %vm1029, %v1557, -1e+30
        %v1739 = vsel %vm1030, %v1563, -1e+30
        %v1740 = vsel %vm1031, %v1569, -1e+30
        %v1741 = vsel %vm1032, %v1575, -1e+30
        %v1742 = vsel %vm1033, %v1581, -1e+30
        %v1743 = vsel %vm1034, %v1587, -1e+30
        %v1744 = vsel %vm1035, %v1593, -1e+30
        %v1745 = vsel %vm1036, %v1599, -1e+30
        %v1746 = vsel %vm1029, %v1606, -1e+30
        %v1747 = vsel %vm1030, %v1612, -1e+30
        %v1748 = vsel %vm1031, %v1618, -1e+30
        %v1749 = vsel %vm1032, %v1624, -1e+30
        %v1750 = vsel %vm1033, %v1630, -1e+30
        %v1751 = vsel %vm1034, %v1636, -1e+30
        %v1752 = vsel %vm1035, %v1642, -1e+30
        %v1753 = vsel %vm1036, %v1648, -1e+30
        %v1754 = vsel %vm1029, %v1655, -1e+30
        %v1755 = vsel %vm1030, %v1661, -1e+30
        %v1756 = vsel %vm1031, %v1667, -1e+30
        %v1757 = vsel %vm1032, %v1673, -1e+30
        %v1758 = vsel %vm1033, %v1679, -1e+30
        %v1759 = vsel %vm1034, %v1685, -1e+30
        %v1760 = vsel %vm1035, %v1691, -1e+30
        %v1761 = vsel %vm1036, %v1697, -1e+30
        %v1762 = vsel %vm384, %v1698, -inf
        %v1763 = vsel %vm384, %v1699, -inf
        %v1764 = vmax.f32 %v1762, %v1763
        %v1765 = vsel %vm384, %v1700, -inf
        %v1766 = vmax.f32 %v1764, %v1765
        %v1767 = vsel %vm384, %v1701, -inf
        %v1768 = vmax.f32 %v1766, %v1767
        %v1769 = vsel %vm384, %v1702, -inf
        %v1770 = vmax.f32 %v1768, %v1769
        %v1771 = vsel %vm384, %v1703, -inf
        %v1772 = vmax.f32 %v1770, %v1771
        %v1773 = vsel %vm384, %v1704, -inf
        %v1774 = vmax.f32 %v1772, %v1773
        %v1775 = vsel %vm384, %v1705, -inf
        %v1776 = vmax.f32 %v1774, %v1775
        %v1777 = vrot.slane %v1776, 4
        %v1778 = vmax.f32 %v1776, %v1777
        %v1779 = vrot.slane %v1778, 2
        %v1780 = vmax.f32 %v1778, %v1779
        %v1781 = vrot.slane %v1780, 1
        %v1782 = vmax.f32 %v1780, %v1781
        %v1783 = vsel %vm384, %v1706, -inf
        %v1784 = vsel %vm384, %v1707, -inf
        %v1785 = vmax.f32 %v1783, %v1784
        %v1786 = vsel %vm384, %v1708, -inf
        %v1787 = vmax.f32 %v1785, %v1786
        %v1788 = vsel %vm384, %v1709, -inf
        %v1789 = vmax.f32 %v1787, %v1788
        %v1790 = vsel %vm384, %v1710, -inf
        %v1791 = vmax.f32 %v1789, %v1790
        %v1792 = vsel %vm384, %v1711, -inf
        %v1793 = vmax.f32 %v1791, %v1792
        %v1794 = vsel %vm384, %v1712, -inf
        %v1795 = vmax.f32 %v1793, %v1794
        %v1796 = vsel %vm384, %v1713, -inf
        %v1797 = vmax.f32 %v1795, %v1796
        %v1798 = vrot.slane %v1797, 4
        %v1799 = vmax.f32 %v1797, %v1798
        %v1800 = vrot.slane %v1799, 2
        %v1801 = vmax.f32 %v1799, %v1800
        %v1802 = vrot.slane %v1801, 1
        %v1803 = vmax.f32 %v1801, %v1802
        %v1804 = vsel %vm384, %v1714, -inf
        %v1805 = vsel %vm384, %v1715, -inf
        %v1806 = vmax.f32 %v1804, %v1805
        %v1807 = vsel %vm384, %v1716, -inf
        %v1808 = vmax.f32 %v1806, %v1807
        %v1809 = vsel %vm384, %v1717, -inf
        %v1810 = vmax.f32 %v1808, %v1809
        %v1811 = vsel %vm384, %v1718, -inf
        %v1812 = vmax.f32 %v1810, %v1811
        %v1813 = vsel %vm384, %v1719, -inf
        %v1814 = vmax.f32 %v1812, %v1813
        %v1815 = vsel %vm384, %v1720, -inf
        %v1816 = vmax.f32 %v1814, %v1815
        %v1817 = vsel %vm384, %v1721, -inf
        %v1818 = vmax.f32 %v1816, %v1817
        %v1819 = vrot.slane %v1818, 4
        %v1820 = vmax.f32 %v1818, %v1819
        %v1821 = vrot.slane %v1820, 2
        %v1822 = vmax.f32 %v1820, %v1821
        %v1823 = vrot.slane %v1822, 1
        %v1824 = vmax.f32 %v1822, %v1823
        %v1825 = vsel %vm384, %v1722, -inf
        %v1826 = vsel %vm384, %v1723, -inf
        %v1827 = vmax.f32 %v1825, %v1826
        %v1828 = vsel %vm384, %v1724, -inf
        %v1829 = vmax.f32 %v1827, %v1828
        %v1830 = vsel %vm384, %v1725, -inf
        %v1831 = vmax.f32 %v1829, %v1830
        %v1832 = vsel %vm384, %v1726, -inf
        %v1833 = vmax.f32 %v1831, %v1832
        %v1834 = vsel %vm384, %v1727, -inf
        %v1835 = vmax.f32 %v1833, %v1834
        %v1836 = vsel %vm384, %v1728, -inf
        %v1837 = vmax.f32 %v1835, %v1836
        %v1838 = vsel %vm384, %v1729, -inf
        %v1839 = vmax.f32 %v1837, %v1838
        %v1840 = vrot.slane %v1839, 4
        %v1841 = vmax.f32 %v1839, %v1840
        %v1842 = vrot.slane %v1841, 2
        %v1843 = vmax.f32 %v1841, %v1842
        %v1844 = vrot.slane %v1843, 1
        %v1845 = vmax.f32 %v1843, %v1844
        %v1846 = vsel %vm384, %v1730, -inf
        %v1847 = vsel %vm384, %v1731, -inf
        %v1848 = vmax.f32 %v1846, %v1847
        %v1849 = vsel %vm384, %v1732, -inf
        %v1850 = vmax.f32 %v1848, %v1849
        %v1851 = vsel %vm384, %v1733, -inf
        %v1852 = vmax.f32 %v1850, %v1851
        %v1853 = vsel %vm384, %v1734, -inf
        %v1854 = vmax.f32 %v1852, %v1853
        %v1855 = vsel %vm384, %v1735, -inf
        %v1856 = vmax.f32 %v1854, %v1855
        %v1857 = vsel %vm384, %v1736, -inf
        %v1858 = vmax.f32 %v1856, %v1857
        %v1859 = vsel %vm384, %v1737, -inf
        %v1860 = vmax.f32 %v1858, %v1859
        %v1861 = vrot.slane %v1860, 4
        %v1862 = vmax.f32 %v1860, %v1861
        %v1863 = vrot.slane %v1862, 2
        %v1864 = vmax.f32 %v1862, %v1863
        %v1865 = vrot.slane %v1864, 1
        %v1866 = vmax.f32 %v1864, %v1865
        %v1867 = vsel %vm384, %v1738, -inf
        %v1868 = vsel %vm384, %v1739, -inf
        %v1869 = vmax.f32 %v1867, %v1868
        %v1870 = vsel %vm384, %v1740, -inf
        %v1871 = vmax.f32 %v1869, %v1870
        %v1872 = vsel %vm384, %v1741, -inf
        %v1873 = vmax.f32 %v1871, %v1872
        %v1874 = vsel %vm384, %v1742, -inf
        %v1875 = vmax.f32 %v1873, %v1874
        %v1876 = vsel %vm384, %v1743, -inf
        %v1877 = vmax.f32 %v1875, %v1876
        %v1878 = vsel %vm384, %v1744, -inf
        %v1879 = vmax.f32 %v1877, %v1878
        %v1880 = vsel %vm384, %v1745, -inf
        %v1881 = vmax.f32 %v1879, %v1880
        %v1882 = vrot.slane %v1881, 4
        %v1883 = vmax.f32 %v1881, %v1882
        %v1884 = vrot.slane %v1883, 2
        %v1885 = vmax.f32 %v1883, %v1884
        %v1886 = vrot.slane %v1885, 1
        %v1887 = vmax.f32 %v1885, %v1886
        %v1888 = vsel %vm384, %v1746, -inf
        %v1889 = vsel %vm384, %v1747, -inf
        %v1890 = vmax.f32 %v1888, %v1889
        %v1891 = vsel %vm384, %v1748, -inf
        %v1892 = vmax.f32 %v1890, %v1891
        %v1893 = vsel %vm384, %v1749, -inf
        %v1894 = vmax.f32 %v1892, %v1893
        %v1895 = vsel %vm384, %v1750, -inf
        %v1896 = vmax.f32 %v1894, %v1895
        %v1897 = vsel %vm384, %v1751, -inf
        %v1898 = vmax.f32 %v1896, %v1897
        %v1899 = vsel %vm384, %v1752, -inf
        %v1900 = vmax.f32 %v1898, %v1899
        %v1901 = vsel %vm384, %v1753, -inf
        %v1902 = vmax.f32 %v1900, %v1901
        %v1903 = vrot.slane %v1902, 4
        %v1904 = vmax.f32 %v1902, %v1903
        %v1905 = vrot.slane %v1904, 2
        %v1906 = vmax.f32 %v1904, %v1905
        %v1907 = vrot.slane %v1906, 1
        %v1908 = vmax.f32 %v1906, %v1907
        %v1909 = vsel %vm384, %v1754, -inf
        %v1910 = vsel %vm384, %v1755, -inf
        %v1911 = vmax.f32 %v1909, %v1910
        %v1912 = vsel %vm384, %v1756, -inf
        %v1913 = vmax.f32 %v1911, %v1912
        %v1914 = vsel %vm384, %v1757, -inf
        %v1915 = vmax.f32 %v1913, %v1914
        %v1916 = vsel %vm384, %v1758, -inf
        %v1917 = vmax.f32 %v1915, %v1916
        %v1918 = vsel %vm384, %v1759, -inf
        %v1919 = vmax.f32 %v1917, %v1918
        %v1920 = vsel %vm384, %v1760, -inf
        %v1921 = vmax.f32 %v1919, %v1920
        %v1922 = vsel %vm384, %v1761, -inf
        %v1923 = vmax.f32 %v1921, %v1922
        %v1924 = vrot.slane %v1923, 4
        %v1925 = vmax.f32 %v1923, %v1924
        %v1926 = vrot.slane %v1925, 2
        %v1927 = vmax.f32 %v1925, %v1926
        %v1928 = vrot.slane %v1927, 1
        %v1929 = vmax.f32 %v1927, %v1928
        %1931 = vset.pattern.permute.xlu0 0
        %1932 = vperm.xlu0 %1931, %v378
        %v1933 = vpop.permute.xlu0 %1932
        %v1943 = vsel %vm1282, %v1803, %v1782
        %v1944 = vsel %vm1284, %v1824, %v1943
        %v1945 = vsel %vm1286, %v1845, %v1944
        %v1946 = vsel %vm1288, %v1866, %v1945
        %v1947 = vsel %vm1290, %v1887, %v1946
        %v1948 = vsel %vm1292, %v1908, %v1947
        %v1949 = vsel %vm1294, %v1929, %v1948
        %v1951 = vmul.f32 %v1933, %v1949
        %v1952 = vsel %vm384, %v1951, 0.0
        %v1953 = vrot.slane %v1952, 4
        %v1954 = vadd.f32 %v1952, %v1953
        %v1955 = vrot.slane %v1954, 2
        %v1956 = vadd.f32 %v1954, %v1955
        %v1957 = vrot.slane %v1956, 1
        %v1958 = vadd.f32 %v1956, %v1957
        %v1959 = vadd.f32 %v1305, %v1958
        %v1960 = vperm.slane %v607, 0
        %v1961 = vlaneseq
        %v1962 = vshrl.u32 %v1961, 7
        %1964 = vset.pattern.permute.xlu0 %v1962
        %1965 = vperm.xlu0 %1964, %v1960
        %v1966 = vpop.permute.xlu0 %1965
        %v1967 = vlaneseq
        %v1968 = vshrl.u32 %v1967, 7
        %v1969 = vadd.s32 %v1968, 8
        %1970 = vset.pattern.permute.xlu0 %v1969
        %1971 = vperm.xlu0 %1970, %v1960
        %v1972 = vpop.permute.xlu0 %1971
        %v1973 = vlaneseq
        %v1974 = vshrl.u32 %v1973, 7
        %v1975 = vadd.s32 %v1974, 16
        %1976 = vset.pattern.permute.xlu0 %v1975
        %1977 = vperm.xlu0 %1976, %v1960
        %v1978 = vpop.permute.xlu0 %1977
        %v1979 = vlaneseq
        %v1980 = vshrl.u32 %v1979, 7
        %v1981 = vadd.s32 %v1980, 24
        %1982 = vset.pattern.permute.xlu0 %v1981
        %1983 = vperm.xlu0 %1982, %v1960
        %v1984 = vpop.permute.xlu0 %1983
        %v1985 = vlaneseq
        %v1986 = vshrl.u32 %v1985, 7
        %v1987 = vadd.s32 %v1986, 32
        %1988 = vset.pattern.permute.xlu0 %v1987
        %1989 = vperm.xlu0 %1988, %v1960
        %v1990 = vpop.permute.xlu0 %1989
        %v1991 = vlaneseq
        %v1992 = vshrl.u32 %v1991, 7
        %v1993 = vadd.s32 %v1992, 40
        %1994 = vset.pattern.permute.xlu0 %v1993
        %1995 = vperm.xlu0 %1994, %v1960
        %v1996 = vpop.permute.xlu0 %1995
        %v1997 = vlaneseq
        %v1998 = vshrl.u32 %v1997, 7
        %v1999 = vadd.s32 %v1998, 48
        %2000 = vset.pattern.permute.xlu0 %v1999
        %2001 = vperm.xlu0 %2000, %v1960
        %v2002 = vpop.permute.xlu0 %2001
        %v2003 = vlaneseq
        %v2004 = vshrl.u32 %v2003, 7
        %v2005 = vadd.s32 %v2004, 56
        %2006 = vset.pattern.permute.xlu0 %v2005
        %2007 = vperm.xlu0 %2006, %v1960
        %v2008 = vpop.permute.xlu0 %2007
        %v2009 = vperm.slane %v607, 1
        %v2010 = vlaneseq
        %v2011 = vshrl.u32 %v2010, 7
        %2013 = vset.pattern.permute.xlu0 %v2011
        %2014 = vperm.xlu0 %2013, %v2009
        %v2015 = vpop.permute.xlu0 %2014
        %v2016 = vlaneseq
        %v2017 = vshrl.u32 %v2016, 7
        %v2018 = vadd.s32 %v2017, 8
        %2019 = vset.pattern.permute.xlu0 %v2018
        %2020 = vperm.xlu0 %2019, %v2009
        %v2021 = vpop.permute.xlu0 %2020
        %v2022 = vlaneseq
        %v2023 = vshrl.u32 %v2022, 7
        %v2024 = vadd.s32 %v2023, 16
        %2025 = vset.pattern.permute.xlu0 %v2024
        %2026 = vperm.xlu0 %2025, %v2009
        %v2027 = vpop.permute.xlu0 %2026
        %v2028 = vlaneseq
        %v2029 = vshrl.u32 %v2028, 7
        %v2030 = vadd.s32 %v2029, 24
        %2031 = vset.pattern.permute.xlu0 %v2030
        %2032 = vperm.xlu0 %2031, %v2009
        %v2033 = vpop.permute.xlu0 %2032
        %v2034 = vlaneseq
        %v2035 = vshrl.u32 %v2034, 7
        %v2036 = vadd.s32 %v2035, 32
        %2037 = vset.pattern.permute.xlu0 %v2036
        %2038 = vperm.xlu0 %2037, %v2009
        %v2039 = vpop.permute.xlu0 %2038
        %v2040 = vlaneseq
        %v2041 = vshrl.u32 %v2040, 7
        %v2042 = vadd.s32 %v2041, 40
        %2043 = vset.pattern.permute.xlu0 %v2042
        %2044 = vperm.xlu0 %2043, %v2009
        %v2045 = vpop.permute.xlu0 %2044
        %v2046 = vlaneseq
        %v2047 = vshrl.u32 %v2046, 7
        %v2048 = vadd.s32 %v2047, 48
        %2049 = vset.pattern.permute.xlu0 %v2048
        %2050 = vperm.xlu0 %2049, %v2009
        %v2051 = vpop.permute.xlu0 %2050
        %v2052 = vlaneseq
        %v2053 = vshrl.u32 %v2052, 7
        %v2054 = vadd.s32 %v2053, 56
        %2055 = vset.pattern.permute.xlu0 %v2054
        %2056 = vperm.xlu0 %2055, %v2009
        %v2057 = vpop.permute.xlu0 %2056
        %v2058 = vperm.slane %v607, 2
        %v2059 = vlaneseq
        %v2060 = vshrl.u32 %v2059, 7
        %2062 = vset.pattern.permute.xlu0 %v2060
        %2063 = vperm.xlu0 %2062, %v2058
        %v2064 = vpop.permute.xlu0 %2063
        %v2065 = vlaneseq
        %v2066 = vshrl.u32 %v2065, 7
        %v2067 = vadd.s32 %v2066, 8
        %2068 = vset.pattern.permute.xlu0 %v2067
        %2069 = vperm.xlu0 %2068, %v2058
        %v2070 = vpop.permute.xlu0 %2069
        %v2071 = vlaneseq
        %v2072 = vshrl.u32 %v2071, 7
        %v2073 = vadd.s32 %v2072, 16
        %2074 = vset.pattern.permute.xlu0 %v2073
        %2075 = vperm.xlu0 %2074, %v2058
        %v2076 = vpop.permute.xlu0 %2075
        %v2077 = vlaneseq
        %v2078 = vshrl.u32 %v2077, 7
        %v2079 = vadd.s32 %v2078, 24
        %2080 = vset.pattern.permute.xlu0 %v2079
        %2081 = vperm.xlu0 %2080, %v2058
        %v2082 = vpop.permute.xlu0 %2081
        %v2083 = vlaneseq
        %v2084 = vshrl.u32 %v2083, 7
        %v2085 = vadd.s32 %v2084, 32
        %2086 = vset.pattern.permute.xlu0 %v2085
        %2087 = vperm.xlu0 %2086, %v2058
        %v2088 = vpop.permute.xlu0 %2087
        %v2089 = vlaneseq
        %v2090 = vshrl.u32 %v2089, 7
        %v2091 = vadd.s32 %v2090, 40
        %2092 = vset.pattern.permute.xlu0 %v2091
        %2093 = vperm.xlu0 %2092, %v2058
        %v2094 = vpop.permute.xlu0 %2093
        %v2095 = vlaneseq
        %v2096 = vshrl.u32 %v2095, 7
        %v2097 = vadd.s32 %v2096, 48
        %2098 = vset.pattern.permute.xlu0 %v2097
        %2099 = vperm.xlu0 %2098, %v2058
        %v2100 = vpop.permute.xlu0 %2099
        %v2101 = vlaneseq
        %v2102 = vshrl.u32 %v2101, 7
        %v2103 = vadd.s32 %v2102, 56
        %2104 = vset.pattern.permute.xlu0 %v2103
        %2105 = vperm.xlu0 %2104, %v2058
        %v2106 = vpop.permute.xlu0 %2105
        %v2107 = vperm.slane %v607, 3
        %v2108 = vlaneseq
        %v2109 = vshrl.u32 %v2108, 7
        %2111 = vset.pattern.permute.xlu0 %v2109
        %2112 = vperm.xlu0 %2111, %v2107
        %v2113 = vpop.permute.xlu0 %2112
        %v2114 = vlaneseq
        %v2115 = vshrl.u32 %v2114, 7
        %v2116 = vadd.s32 %v2115, 8
        %2117 = vset.pattern.permute.xlu0 %v2116
        %2118 = vperm.xlu0 %2117, %v2107
        %v2119 = vpop.permute.xlu0 %2118
        %v2120 = vlaneseq
        %v2121 = vshrl.u32 %v2120, 7
        %v2122 = vadd.s32 %v2121, 16
        %2123 = vset.pattern.permute.xlu0 %v2122
        %2124 = vperm.xlu0 %2123, %v2107
        %v2125 = vpop.permute.xlu0 %2124
        %v2126 = vlaneseq
        %v2127 = vshrl.u32 %v2126, 7
        %v2128 = vadd.s32 %v2127, 24
        %2129 = vset.pattern.permute.xlu0 %v2128
        %2130 = vperm.xlu0 %2129, %v2107
        %v2131 = vpop.permute.xlu0 %2130
        %v2132 = vlaneseq
        %v2133 = vshrl.u32 %v2132, 7
        %v2134 = vadd.s32 %v2133, 32
        %2135 = vset.pattern.permute.xlu0 %v2134
        %2136 = vperm.xlu0 %2135, %v2107
        %v2137 = vpop.permute.xlu0 %2136
        %v2138 = vlaneseq
        %v2139 = vshrl.u32 %v2138, 7
        %v2140 = vadd.s32 %v2139, 40
        %2141 = vset.pattern.permute.xlu0 %v2140
        %2142 = vperm.xlu0 %2141, %v2107
        %v2143 = vpop.permute.xlu0 %2142
        %v2144 = vlaneseq
        %v2145 = vshrl.u32 %v2144, 7
        %v2146 = vadd.s32 %v2145, 48
        %2147 = vset.pattern.permute.xlu0 %v2146
        %2148 = vperm.xlu0 %2147, %v2107
        %v2149 = vpop.permute.xlu0 %2148
        %v2150 = vlaneseq
        %v2151 = vshrl.u32 %v2150, 7
        %v2152 = vadd.s32 %v2151, 56
        %2153 = vset.pattern.permute.xlu0 %v2152
        %2154 = vperm.xlu0 %2153, %v2107
        %v2155 = vpop.permute.xlu0 %2154
        %v2156 = vperm.slane %v607, 4
        %v2157 = vlaneseq
        %v2158 = vshrl.u32 %v2157, 7
        %2160 = vset.pattern.permute.xlu0 %v2158
        %2161 = vperm.xlu0 %2160, %v2156
        %v2162 = vpop.permute.xlu0 %2161
        %v2163 = vlaneseq
        %v2164 = vshrl.u32 %v2163, 7
        %v2165 = vadd.s32 %v2164, 8
        %2166 = vset.pattern.permute.xlu0 %v2165
        %2167 = vperm.xlu0 %2166, %v2156
        %v2168 = vpop.permute.xlu0 %2167
        %v2169 = vlaneseq
        %v2170 = vshrl.u32 %v2169, 7
        %v2171 = vadd.s32 %v2170, 16
        %2172 = vset.pattern.permute.xlu0 %v2171
        %2173 = vperm.xlu0 %2172, %v2156
        %v2174 = vpop.permute.xlu0 %2173
        %v2175 = vlaneseq
        %v2176 = vshrl.u32 %v2175, 7
        %v2177 = vadd.s32 %v2176, 24
        %2178 = vset.pattern.permute.xlu0 %v2177
        %2179 = vperm.xlu0 %2178, %v2156
        %v2180 = vpop.permute.xlu0 %2179
        %v2181 = vlaneseq
        %v2182 = vshrl.u32 %v2181, 7
        %v2183 = vadd.s32 %v2182, 32
        %2184 = vset.pattern.permute.xlu0 %v2183
        %2185 = vperm.xlu0 %2184, %v2156
        %v2186 = vpop.permute.xlu0 %2185
        %v2187 = vlaneseq
        %v2188 = vshrl.u32 %v2187, 7
        %v2189 = vadd.s32 %v2188, 40
        %2190 = vset.pattern.permute.xlu0 %v2189
        %2191 = vperm.xlu0 %2190, %v2156
        %v2192 = vpop.permute.xlu0 %2191
        %v2193 = vlaneseq
        %v2194 = vshrl.u32 %v2193, 7
        %v2195 = vadd.s32 %v2194, 48
        %2196 = vset.pattern.permute.xlu0 %v2195
        %2197 = vperm.xlu0 %2196, %v2156
        %v2198 = vpop.permute.xlu0 %2197
        %v2199 = vlaneseq
        %v2200 = vshrl.u32 %v2199, 7
        %v2201 = vadd.s32 %v2200, 56
        %2202 = vset.pattern.permute.xlu0 %v2201
        %2203 = vperm.xlu0 %2202, %v2156
        %v2204 = vpop.permute.xlu0 %2203
        %v2205 = vperm.slane %v607, 5
        %v2206 = vlaneseq
        %v2207 = vshrl.u32 %v2206, 7
        %2209 = vset.pattern.permute.xlu0 %v2207
        %2210 = vperm.xlu0 %2209, %v2205
        %v2211 = vpop.permute.xlu0 %2210
        %v2212 = vlaneseq
        %v2213 = vshrl.u32 %v2212, 7
        %v2214 = vadd.s32 %v2213, 8
        %2215 = vset.pattern.permute.xlu0 %v2214
        %2216 = vperm.xlu0 %2215, %v2205
        %v2217 = vpop.permute.xlu0 %2216
        %v2218 = vlaneseq
        %v2219 = vshrl.u32 %v2218, 7
        %v2220 = vadd.s32 %v2219, 16
        %2221 = vset.pattern.permute.xlu0 %v2220
        %2222 = vperm.xlu0 %2221, %v2205
        %v2223 = vpop.permute.xlu0 %2222
        %v2224 = vlaneseq
        %v2225 = vshrl.u32 %v2224, 7
        %v2226 = vadd.s32 %v2225, 24
        %2227 = vset.pattern.permute.xlu0 %v2226
        %2228 = vperm.xlu0 %2227, %v2205
        %v2229 = vpop.permute.xlu0 %2228
        %v2230 = vlaneseq
        %v2231 = vshrl.u32 %v2230, 7
        %v2232 = vadd.s32 %v2231, 32
        %2233 = vset.pattern.permute.xlu0 %v2232
        %2234 = vperm.xlu0 %2233, %v2205
        %v2235 = vpop.permute.xlu0 %2234
        %v2236 = vlaneseq
        %v2237 = vshrl.u32 %v2236, 7
        %v2238 = vadd.s32 %v2237, 40
        %2239 = vset.pattern.permute.xlu0 %v2238
        %2240 = vperm.xlu0 %2239, %v2205
        %v2241 = vpop.permute.xlu0 %2240
        %v2242 = vlaneseq
        %v2243 = vshrl.u32 %v2242, 7
        %v2244 = vadd.s32 %v2243, 48
        %2245 = vset.pattern.permute.xlu0 %v2244
        %2246 = vperm.xlu0 %2245, %v2205
        %v2247 = vpop.permute.xlu0 %2246
        %v2248 = vlaneseq
        %v2249 = vshrl.u32 %v2248, 7
        %v2250 = vadd.s32 %v2249, 56
        %2251 = vset.pattern.permute.xlu0 %v2250
        %2252 = vperm.xlu0 %2251, %v2205
        %v2253 = vpop.permute.xlu0 %2252
        %v2254 = vperm.slane %v607, 6
        %v2255 = vlaneseq
        %v2256 = vshrl.u32 %v2255, 7
        %2258 = vset.pattern.permute.xlu0 %v2256
        %2259 = vperm.xlu0 %2258, %v2254
        %v2260 = vpop.permute.xlu0 %2259
        %v2261 = vlaneseq
        %v2262 = vshrl.u32 %v2261, 7
        %v2263 = vadd.s32 %v2262, 8
        %2264 = vset.pattern.permute.xlu0 %v2263
        %2265 = vperm.xlu0 %2264, %v2254
        %v2266 = vpop.permute.xlu0 %2265
        %v2267 = vlaneseq
        %v2268 = vshrl.u32 %v2267, 7
        %v2269 = vadd.s32 %v2268, 16
        %2270 = vset.pattern.permute.xlu0 %v2269
        %2271 = vperm.xlu0 %2270, %v2254
        %v2272 = vpop.permute.xlu0 %2271
        %v2273 = vlaneseq
        %v2274 = vshrl.u32 %v2273, 7
        %v2275 = vadd.s32 %v2274, 24
        %2276 = vset.pattern.permute.xlu0 %v2275
        %2277 = vperm.xlu0 %2276, %v2254
        %v2278 = vpop.permute.xlu0 %2277
        %v2279 = vlaneseq
        %v2280 = vshrl.u32 %v2279, 7
        %v2281 = vadd.s32 %v2280, 32
        %2282 = vset.pattern.permute.xlu0 %v2281
        %2283 = vperm.xlu0 %2282, %v2254
        %v2284 = vpop.permute.xlu0 %2283
        %v2285 = vlaneseq
        %v2286 = vshrl.u32 %v2285, 7
        %v2287 = vadd.s32 %v2286, 40
        %2288 = vset.pattern.permute.xlu0 %v2287
        %2289 = vperm.xlu0 %2288, %v2254
        %v2290 = vpop.permute.xlu0 %2289
        %v2291 = vlaneseq
        %v2292 = vshrl.u32 %v2291, 7
        %v2293 = vadd.s32 %v2292, 48
        %2294 = vset.pattern.permute.xlu0 %v2293
        %2295 = vperm.xlu0 %2294, %v2254
        %v2296 = vpop.permute.xlu0 %2295
        %v2297 = vlaneseq
        %v2298 = vshrl.u32 %v2297, 7
        %v2299 = vadd.s32 %v2298, 56
        %2300 = vset.pattern.permute.xlu0 %v2299
        %2301 = vperm.xlu0 %2300, %v2254
        %v2302 = vpop.permute.xlu0 %2301
        %v2303 = vperm.slane %v607, 7
        %v2304 = vlaneseq
        %v2305 = vshrl.u32 %v2304, 7
        %2307 = vset.pattern.permute.xlu0 %v2305
        %2308 = vperm.xlu0 %2307, %v2303
        %v2309 = vpop.permute.xlu0 %2308
        %v2310 = vlaneseq
        %v2311 = vshrl.u32 %v2310, 7
        %v2312 = vadd.s32 %v2311, 8
        %2313 = vset.pattern.permute.xlu0 %v2312
        %2314 = vperm.xlu0 %2313, %v2303
        %v2315 = vpop.permute.xlu0 %2314
        %v2316 = vlaneseq
        %v2317 = vshrl.u32 %v2316, 7
        %v2318 = vadd.s32 %v2317, 16
        %2319 = vset.pattern.permute.xlu0 %v2318
        %2320 = vperm.xlu0 %2319, %v2303
        %v2321 = vpop.permute.xlu0 %2320
        %v2322 = vlaneseq
        %v2323 = vshrl.u32 %v2322, 7
        %v2324 = vadd.s32 %v2323, 24
        %2325 = vset.pattern.permute.xlu0 %v2324
        %2326 = vperm.xlu0 %2325, %v2303
        %v2327 = vpop.permute.xlu0 %2326
        %v2328 = vlaneseq
        %v2329 = vshrl.u32 %v2328, 7
        %v2330 = vadd.s32 %v2329, 32
        %2331 = vset.pattern.permute.xlu0 %v2330
        %2332 = vperm.xlu0 %2331, %v2303
        %v2333 = vpop.permute.xlu0 %2332
        %v2334 = vlaneseq
        %v2335 = vshrl.u32 %v2334, 7
        %v2336 = vadd.s32 %v2335, 40
        %2337 = vset.pattern.permute.xlu0 %v2336
        %2338 = vperm.xlu0 %2337, %v2303
        %v2339 = vpop.permute.xlu0 %2338
        %v2340 = vlaneseq
        %v2341 = vshrl.u32 %v2340, 7
        %v2342 = vadd.s32 %v2341, 48
        %2343 = vset.pattern.permute.xlu0 %v2342
        %2344 = vperm.xlu0 %2343, %v2303
        %v2345 = vpop.permute.xlu0 %2344
        %v2346 = vlaneseq
        %v2347 = vshrl.u32 %v2346, 7
        %v2348 = vadd.s32 %v2347, 56
        %2349 = vset.pattern.permute.xlu0 %v2348
        %2350 = vperm.xlu0 %2349, %v2303
        %v2351 = vpop.permute.xlu0 %2350
        %v2352 = vsel %vm1029, %v1966, -1e+30
        %v2353 = vsel %vm1030, %v1972, -1e+30
        %v2354 = vsel %vm1031, %v1978, -1e+30
        %v2355 = vsel %vm1032, %v1984, -1e+30
        %v2356 = vsel %vm1033, %v1990, -1e+30
        %v2357 = vsel %vm1034, %v1996, -1e+30
        %v2358 = vsel %vm1035, %v2002, -1e+30
        %v2359 = vsel %vm1036, %v2008, -1e+30
        %v2360 = vsel %vm1029, %v2015, -1e+30
        %v2361 = vsel %vm1030, %v2021, -1e+30
        %v2362 = vsel %vm1031, %v2027, -1e+30
        %v2363 = vsel %vm1032, %v2033, -1e+30
        %v2364 = vsel %vm1033, %v2039, -1e+30
        %v2365 = vsel %vm1034, %v2045, -1e+30
        %v2366 = vsel %vm1035, %v2051, -1e+30
        %v2367 = vsel %vm1036, %v2057, -1e+30
        %v2368 = vsel %vm1029, %v2064, -1e+30
        %v2369 = vsel %vm1030, %v2070, -1e+30
        %v2370 = vsel %vm1031, %v2076, -1e+30
        %v2371 = vsel %vm1032, %v2082, -1e+30
        %v2372 = vsel %vm1033, %v2088, -1e+30
        %v2373 = vsel %vm1034, %v2094, -1e+30
        %v2374 = vsel %vm1035, %v2100, -1e+30
        %v2375 = vsel %vm1036, %v2106, -1e+30
        %v2376 = vsel %vm1029, %v2113, -1e+30
        %v2377 = vsel %vm1030, %v2119, -1e+30
        %v2378 = vsel %vm1031, %v2125, -1e+30
        %v2379 = vsel %vm1032, %v2131, -1e+30
        %v2380 = vsel %vm1033, %v2137, -1e+30
        %v2381 = vsel %vm1034, %v2143, -1e+30
        %v2382 = vsel %vm1035, %v2149, -1e+30
        %v2383 = vsel %vm1036, %v2155, -1e+30
        %v2384 = vsel %vm1029, %v2162, -1e+30
        %v2385 = vsel %vm1030, %v2168, -1e+30
        %v2386 = vsel %vm1031, %v2174, -1e+30
        %v2387 = vsel %vm1032, %v2180, -1e+30
        %v2388 = vsel %vm1033, %v2186, -1e+30
        %v2389 = vsel %vm1034, %v2192, -1e+30
        %v2390 = vsel %vm1035, %v2198, -1e+30
        %v2391 = vsel %vm1036, %v2204, -1e+30
        %v2392 = vsel %vm1029, %v2211, -1e+30
        %v2393 = vsel %vm1030, %v2217, -1e+30
        %v2394 = vsel %vm1031, %v2223, -1e+30
        %v2395 = vsel %vm1032, %v2229, -1e+30
        %v2396 = vsel %vm1033, %v2235, -1e+30
        %v2397 = vsel %vm1034, %v2241, -1e+30
        %v2398 = vsel %vm1035, %v2247, -1e+30
        %v2399 = vsel %vm1036, %v2253, -1e+30
        %v2400 = vsel %vm1029, %v2260, -1e+30
        %v2401 = vsel %vm1030, %v2266, -1e+30
        %v2402 = vsel %vm1031, %v2272, -1e+30
        %v2403 = vsel %vm1032, %v2278, -1e+30
        %v2404 = vsel %vm1033, %v2284, -1e+30
        %v2405 = vsel %vm1034, %v2290, -1e+30
        %v2406 = vsel %vm1035, %v2296, -1e+30
        %v2407 = vsel %vm1036, %v2302, -1e+30
        %v2408 = vsel %vm1029, %v2309, -1e+30
        %v2409 = vsel %vm1030, %v2315, -1e+30
        %v2410 = vsel %vm1031, %v2321, -1e+30
        %v2411 = vsel %vm1032, %v2327, -1e+30
        %v2412 = vsel %vm1033, %v2333, -1e+30
        %v2413 = vsel %vm1034, %v2339, -1e+30
        %v2414 = vsel %vm1035, %v2345, -1e+30
        %v2415 = vsel %vm1036, %v2351, -1e+30
        %v2416 = vsel %vm384, %v2352, -inf
        %v2417 = vsel %vm384, %v2353, -inf
        %v2418 = vmax.f32 %v2416, %v2417
        %v2419 = vsel %vm384, %v2354, -inf
        %v2420 = vmax.f32 %v2418, %v2419
        %v2421 = vsel %vm384, %v2355, -inf
        %v2422 = vmax.f32 %v2420, %v2421
        %v2423 = vsel %vm384, %v2356, -inf
        %v2424 = vmax.f32 %v2422, %v2423
        %v2425 = vsel %vm384, %v2357, -inf
        %v2426 = vmax.f32 %v2424, %v2425
        %v2427 = vsel %vm384, %v2358, -inf
        %v2428 = vmax.f32 %v2426, %v2427
        %v2429 = vsel %vm384, %v2359, -inf
        %v2430 = vmax.f32 %v2428, %v2429
        %v2431 = vrot.slane %v2430, 4
        %v2432 = vmax.f32 %v2430, %v2431
        %v2433 = vrot.slane %v2432, 2
        %v2434 = vmax.f32 %v2432, %v2433
        %v2435 = vrot.slane %v2434, 1
        %v2436 = vmax.f32 %v2434, %v2435
        %v2437 = vsel %vm384, %v2360, -inf
        %v2438 = vsel %vm384, %v2361, -inf
        %v2439 = vmax.f32 %v2437, %v2438
        %v2440 = vsel %vm384, %v2362, -inf
        %v2441 = vmax.f32 %v2439, %v2440
        %v2442 = vsel %vm384, %v2363, -inf
        %v2443 = vmax.f32 %v2441, %v2442
        %v2444 = vsel %vm384, %v2364, -inf
        %v2445 = vmax.f32 %v2443, %v2444
        %v2446 = vsel %vm384, %v2365, -inf
        %v2447 = vmax.f32 %v2445, %v2446
        %v2448 = vsel %vm384, %v2366, -inf
        %v2449 = vmax.f32 %v2447, %v2448
        %v2450 = vsel %vm384, %v2367, -inf
        %v2451 = vmax.f32 %v2449, %v2450
        %v2452 = vrot.slane %v2451, 4
        %v2453 = vmax.f32 %v2451, %v2452
        %v2454 = vrot.slane %v2453, 2
        %v2455 = vmax.f32 %v2453, %v2454
        %v2456 = vrot.slane %v2455, 1
        %v2457 = vmax.f32 %v2455, %v2456
        %v2458 = vsel %vm384, %v2368, -inf
        %v2459 = vsel %vm384, %v2369, -inf
        %v2460 = vmax.f32 %v2458, %v2459
        %v2461 = vsel %vm384, %v2370, -inf
        %v2462 = vmax.f32 %v2460, %v2461
        %v2463 = vsel %vm384, %v2371, -inf
        %v2464 = vmax.f32 %v2462, %v2463
        %v2465 = vsel %vm384, %v2372, -inf
        %v2466 = vmax.f32 %v2464, %v2465
        %v2467 = vsel %vm384, %v2373, -inf
        %v2468 = vmax.f32 %v2466, %v2467
        %v2469 = vsel %vm384, %v2374, -inf
        %v2470 = vmax.f32 %v2468, %v2469
        %v2471 = vsel %vm384, %v2375, -inf
        %v2472 = vmax.f32 %v2470, %v2471
        %v2473 = vrot.slane %v2472, 4
        %v2474 = vmax.f32 %v2472, %v2473
        %v2475 = vrot.slane %v2474, 2
        %v2476 = vmax.f32 %v2474, %v2475
        %v2477 = vrot.slane %v2476, 1
        %v2478 = vmax.f32 %v2476, %v2477
        %v2479 = vsel %vm384, %v2376, -inf
        %v2480 = vsel %vm384, %v2377, -inf
        %v2481 = vmax.f32 %v2479, %v2480
        %v2482 = vsel %vm384, %v2378, -inf
        %v2483 = vmax.f32 %v2481, %v2482
        %v2484 = vsel %vm384, %v2379, -inf
        %v2485 = vmax.f32 %v2483, %v2484
        %v2486 = vsel %vm384, %v2380, -inf
        %v2487 = vmax.f32 %v2485, %v2486
        %v2488 = vsel %vm384, %v2381, -inf
        %v2489 = vmax.f32 %v2487, %v2488
        %v2490 = vsel %vm384, %v2382, -inf
        %v2491 = vmax.f32 %v2489, %v2490
        %v2492 = vsel %vm384, %v2383, -inf
        %v2493 = vmax.f32 %v2491, %v2492
        %v2494 = vrot.slane %v2493, 4
        %v2495 = vmax.f32 %v2493, %v2494
        %v2496 = vrot.slane %v2495, 2
        %v2497 = vmax.f32 %v2495, %v2496
        %v2498 = vrot.slane %v2497, 1
        %v2499 = vmax.f32 %v2497, %v2498
        %v2500 = vsel %vm384, %v2384, -inf
        %v2501 = vsel %vm384, %v2385, -inf
        %v2502 = vmax.f32 %v2500, %v2501
        %v2503 = vsel %vm384, %v2386, -inf
        %v2504 = vmax.f32 %v2502, %v2503
        %v2505 = vsel %vm384, %v2387, -inf
        %v2506 = vmax.f32 %v2504, %v2505
        %v2507 = vsel %vm384, %v2388, -inf
        %v2508 = vmax.f32 %v2506, %v2507
        %v2509 = vsel %vm384, %v2389, -inf
        %v2510 = vmax.f32 %v2508, %v2509
        %v2511 = vsel %vm384, %v2390, -inf
        %v2512 = vmax.f32 %v2510, %v2511
        %v2513 = vsel %vm384, %v2391, -inf
        %v2514 = vmax.f32 %v2512, %v2513
        %v2515 = vrot.slane %v2514, 4
        %v2516 = vmax.f32 %v2514, %v2515
        %v2517 = vrot.slane %v2516, 2
        %v2518 = vmax.f32 %v2516, %v2517
        %v2519 = vrot.slane %v2518, 1
        %v2520 = vmax.f32 %v2518, %v2519
        %v2521 = vsel %vm384, %v2392, -inf
        %v2522 = vsel %vm384, %v2393, -inf
        %v2523 = vmax.f32 %v2521, %v2522
        %v2524 = vsel %vm384, %v2394, -inf
        %v2525 = vmax.f32 %v2523, %v2524
        %v2526 = vsel %vm384, %v2395, -inf
        %v2527 = vmax.f32 %v2525, %v2526
        %v2528 = vsel %vm384, %v2396, -inf
        %v2529 = vmax.f32 %v2527, %v2528
        %v2530 = vsel %vm384, %v2397, -inf
        %v2531 = vmax.f32 %v2529, %v2530
        %v2532 = vsel %vm384, %v2398, -inf
        %v2533 = vmax.f32 %v2531, %v2532
        %v2534 = vsel %vm384, %v2399, -inf
        %v2535 = vmax.f32 %v2533, %v2534
        %v2536 = vrot.slane %v2535, 4
        %v2537 = vmax.f32 %v2535, %v2536
        %v2538 = vrot.slane %v2537, 2
        %v2539 = vmax.f32 %v2537, %v2538
        %v2540 = vrot.slane %v2539, 1
        %v2541 = vmax.f32 %v2539, %v2540
        %v2542 = vsel %vm384, %v2400, -inf
        %v2543 = vsel %vm384, %v2401, -inf
        %v2544 = vmax.f32 %v2542, %v2543
        %v2545 = vsel %vm384, %v2402, -inf
        %v2546 = vmax.f32 %v2544, %v2545
        %v2547 = vsel %vm384, %v2403, -inf
        %v2548 = vmax.f32 %v2546, %v2547
        %v2549 = vsel %vm384, %v2404, -inf
        %v2550 = vmax.f32 %v2548, %v2549
        %v2551 = vsel %vm384, %v2405, -inf
        %v2552 = vmax.f32 %v2550, %v2551
        %v2553 = vsel %vm384, %v2406, -inf
        %v2554 = vmax.f32 %v2552, %v2553
        %v2555 = vsel %vm384, %v2407, -inf
        %v2556 = vmax.f32 %v2554, %v2555
        %v2557 = vrot.slane %v2556, 4
        %v2558 = vmax.f32 %v2556, %v2557
        %v2559 = vrot.slane %v2558, 2
        %v2560 = vmax.f32 %v2558, %v2559
        %v2561 = vrot.slane %v2560, 1
        %v2562 = vmax.f32 %v2560, %v2561
        %v2563 = vsel %vm384, %v2408, -inf
        %v2564 = vsel %vm384, %v2409, -inf
        %v2565 = vmax.f32 %v2563, %v2564
        %v2566 = vsel %vm384, %v2410, -inf
        %v2567 = vmax.f32 %v2565, %v2566
        %v2568 = vsel %vm384, %v2411, -inf
        %v2569 = vmax.f32 %v2567, %v2568
        %v2570 = vsel %vm384, %v2412, -inf
        %v2571 = vmax.f32 %v2569, %v2570
        %v2572 = vsel %vm384, %v2413, -inf
        %v2573 = vmax.f32 %v2571, %v2572
        %v2574 = vsel %vm384, %v2414, -inf
        %v2575 = vmax.f32 %v2573, %v2574
        %v2576 = vsel %vm384, %v2415, -inf
        %v2577 = vmax.f32 %v2575, %v2576
        %v2578 = vrot.slane %v2577, 4
        %v2579 = vmax.f32 %v2577, %v2578
        %v2580 = vrot.slane %v2579, 2
        %v2581 = vmax.f32 %v2579, %v2580
        %v2582 = vrot.slane %v2581, 1
        %v2583 = vmax.f32 %v2581, %v2582
        %2585 = vset.pattern.permute.xlu0 0
        %2586 = vperm.xlu0 %2585, %v379
        %v2587 = vpop.permute.xlu0 %2586
        %v2597 = vsel %vm1282, %v2457, %v2436
        %v2598 = vsel %vm1284, %v2478, %v2597
        %v2599 = vsel %vm1286, %v2499, %v2598
        %v2600 = vsel %vm1288, %v2520, %v2599
        %v2601 = vsel %vm1290, %v2541, %v2600
        %v2602 = vsel %vm1292, %v2562, %v2601
        %v2603 = vsel %vm1294, %v2583, %v2602
        %v2605 = vmul.f32 %v2587, %v2603
        %v2606 = vsel %vm384, %v2605, 0.0
        %v2607 = vrot.slane %v2606, 4
        %v2608 = vadd.f32 %v2606, %v2607
        %v2609 = vrot.slane %v2608, 2
        %v2610 = vadd.f32 %v2608, %v2609
        %v2611 = vrot.slane %v2610, 1
        %v2612 = vadd.f32 %v2610, %v2611
        %v2613 = vadd.f32 %v1959, %v2612
        %v2614 = vperm.slane %v608, 0
        %v2615 = vlaneseq
        %v2616 = vshrl.u32 %v2615, 7
        %2618 = vset.pattern.permute.xlu0 %v2616
        %2619 = vperm.xlu0 %2618, %v2614
        %v2620 = vpop.permute.xlu0 %2619
        %v2621 = vlaneseq
        %v2622 = vshrl.u32 %v2621, 7
        %v2623 = vadd.s32 %v2622, 8
        %2624 = vset.pattern.permute.xlu0 %v2623
        %2625 = vperm.xlu0 %2624, %v2614
        %v2626 = vpop.permute.xlu0 %2625
        %v2627 = vlaneseq
        %v2628 = vshrl.u32 %v2627, 7
        %v2629 = vadd.s32 %v2628, 16
        %2630 = vset.pattern.permute.xlu0 %v2629
        %2631 = vperm.xlu0 %2630, %v2614
        %v2632 = vpop.permute.xlu0 %2631
        %v2633 = vlaneseq
        %v2634 = vshrl.u32 %v2633, 7
        %v2635 = vadd.s32 %v2634, 24
        %2636 = vset.pattern.permute.xlu0 %v2635
        %2637 = vperm.xlu0 %2636, %v2614
        %v2638 = vpop.permute.xlu0 %2637
        %v2639 = vlaneseq
        %v2640 = vshrl.u32 %v2639, 7
        %v2641 = vadd.s32 %v2640, 32
        %2642 = vset.pattern.permute.xlu0 %v2641
        %2643 = vperm.xlu0 %2642, %v2614
        %v2644 = vpop.permute.xlu0 %2643
        %v2645 = vlaneseq
        %v2646 = vshrl.u32 %v2645, 7
        %v2647 = vadd.s32 %v2646, 40
        %2648 = vset.pattern.permute.xlu0 %v2647
        %2649 = vperm.xlu0 %2648, %v2614
        %v2650 = vpop.permute.xlu0 %2649
        %v2651 = vlaneseq
        %v2652 = vshrl.u32 %v2651, 7
        %v2653 = vadd.s32 %v2652, 48
        %2654 = vset.pattern.permute.xlu0 %v2653
        %2655 = vperm.xlu0 %2654, %v2614
        %v2656 = vpop.permute.xlu0 %2655
        %v2657 = vlaneseq
        %v2658 = vshrl.u32 %v2657, 7
        %v2659 = vadd.s32 %v2658, 56
        %2660 = vset.pattern.permute.xlu0 %v2659
        %2661 = vperm.xlu0 %2660, %v2614
        %v2662 = vpop.permute.xlu0 %2661
        %v2663 = vperm.slane %v608, 1
        %v2664 = vlaneseq
        %v2665 = vshrl.u32 %v2664, 7
        %2667 = vset.pattern.permute.xlu0 %v2665
        %2668 = vperm.xlu0 %2667, %v2663
        %v2669 = vpop.permute.xlu0 %2668
        %v2670 = vlaneseq
        %v2671 = vshrl.u32 %v2670, 7
        %v2672 = vadd.s32 %v2671, 8
        %2673 = vset.pattern.permute.xlu0 %v2672
        %2674 = vperm.xlu0 %2673, %v2663
        %v2675 = vpop.permute.xlu0 %2674
        %v2676 = vlaneseq
        %v2677 = vshrl.u32 %v2676, 7
        %v2678 = vadd.s32 %v2677, 16
        %2679 = vset.pattern.permute.xlu0 %v2678
        %2680 = vperm.xlu0 %2679, %v2663
        %v2681 = vpop.permute.xlu0 %2680
        %v2682 = vlaneseq
        %v2683 = vshrl.u32 %v2682, 7
        %v2684 = vadd.s32 %v2683, 24
        %2685 = vset.pattern.permute.xlu0 %v2684
        %2686 = vperm.xlu0 %2685, %v2663
        %v2687 = vpop.permute.xlu0 %2686
        %v2688 = vlaneseq
        %v2689 = vshrl.u32 %v2688, 7
        %v2690 = vadd.s32 %v2689, 32
        %2691 = vset.pattern.permute.xlu0 %v2690
        %2692 = vperm.xlu0 %2691, %v2663
        %v2693 = vpop.permute.xlu0 %2692
        %v2694 = vlaneseq
        %v2695 = vshrl.u32 %v2694, 7
        %v2696 = vadd.s32 %v2695, 40
        %2697 = vset.pattern.permute.xlu0 %v2696
        %2698 = vperm.xlu0 %2697, %v2663
        %v2699 = vpop.permute.xlu0 %2698
        %v2700 = vlaneseq
        %v2701 = vshrl.u32 %v2700, 7
        %v2702 = vadd.s32 %v2701, 48
        %2703 = vset.pattern.permute.xlu0 %v2702
        %2704 = vperm.xlu0 %2703, %v2663
        %v2705 = vpop.permute.xlu0 %2704
        %v2706 = vlaneseq
        %v2707 = vshrl.u32 %v2706, 7
        %v2708 = vadd.s32 %v2707, 56
        %2709 = vset.pattern.permute.xlu0 %v2708
        %2710 = vperm.xlu0 %2709, %v2663
        %v2711 = vpop.permute.xlu0 %2710
        %v2712 = vperm.slane %v608, 2
        %v2713 = vlaneseq
        %v2714 = vshrl.u32 %v2713, 7
        %2716 = vset.pattern.permute.xlu0 %v2714
        %2717 = vperm.xlu0 %2716, %v2712
        %v2718 = vpop.permute.xlu0 %2717
        %v2719 = vlaneseq
        %v2720 = vshrl.u32 %v2719, 7
        %v2721 = vadd.s32 %v2720, 8
        %2722 = vset.pattern.permute.xlu0 %v2721
        %2723 = vperm.xlu0 %2722, %v2712
        %v2724 = vpop.permute.xlu0 %2723
        %v2725 = vlaneseq
        %v2726 = vshrl.u32 %v2725, 7
        %v2727 = vadd.s32 %v2726, 16
        %2728 = vset.pattern.permute.xlu0 %v2727
        %2729 = vperm.xlu0 %2728, %v2712
        %v2730 = vpop.permute.xlu0 %2729
        %v2731 = vlaneseq
        %v2732 = vshrl.u32 %v2731, 7
        %v2733 = vadd.s32 %v2732, 24
        %2734 = vset.pattern.permute.xlu0 %v2733
        %2735 = vperm.xlu0 %2734, %v2712
        %v2736 = vpop.permute.xlu0 %2735
        %v2737 = vlaneseq
        %v2738 = vshrl.u32 %v2737, 7
        %v2739 = vadd.s32 %v2738, 32
        %2740 = vset.pattern.permute.xlu0 %v2739
        %2741 = vperm.xlu0 %2740, %v2712
        %v2742 = vpop.permute.xlu0 %2741
        %v2743 = vlaneseq
        %v2744 = vshrl.u32 %v2743, 7
        %v2745 = vadd.s32 %v2744, 40
        %2746 = vset.pattern.permute.xlu0 %v2745
        %2747 = vperm.xlu0 %2746, %v2712
        %v2748 = vpop.permute.xlu0 %2747
        %v2749 = vlaneseq
        %v2750 = vshrl.u32 %v2749, 7
        %v2751 = vadd.s32 %v2750, 48
        %2752 = vset.pattern.permute.xlu0 %v2751
        %2753 = vperm.xlu0 %2752, %v2712
        %v2754 = vpop.permute.xlu0 %2753
        %v2755 = vlaneseq
        %v2756 = vshrl.u32 %v2755, 7
        %v2757 = vadd.s32 %v2756, 56
        %2758 = vset.pattern.permute.xlu0 %v2757
        %2759 = vperm.xlu0 %2758, %v2712
        %v2760 = vpop.permute.xlu0 %2759
        %v2761 = vperm.slane %v608, 3
        %v2762 = vlaneseq
        %v2763 = vshrl.u32 %v2762, 7
        %2765 = vset.pattern.permute.xlu0 %v2763
        %2766 = vperm.xlu0 %2765, %v2761
        %v2767 = vpop.permute.xlu0 %2766
        %v2768 = vlaneseq
        %v2769 = vshrl.u32 %v2768, 7
        %v2770 = vadd.s32 %v2769, 8
        %2771 = vset.pattern.permute.xlu0 %v2770
        %2772 = vperm.xlu0 %2771, %v2761
        %v2773 = vpop.permute.xlu0 %2772
        %v2774 = vlaneseq
        %v2775 = vshrl.u32 %v2774, 7
        %v2776 = vadd.s32 %v2775, 16
        %2777 = vset.pattern.permute.xlu0 %v2776
        %2778 = vperm.xlu0 %2777, %v2761
        %v2779 = vpop.permute.xlu0 %2778
        %v2780 = vlaneseq
        %v2781 = vshrl.u32 %v2780, 7
        %v2782 = vadd.s32 %v2781, 24
        %2783 = vset.pattern.permute.xlu0 %v2782
        %2784 = vperm.xlu0 %2783, %v2761
        %v2785 = vpop.permute.xlu0 %2784
        %v2786 = vlaneseq
        %v2787 = vshrl.u32 %v2786, 7
        %v2788 = vadd.s32 %v2787, 32
        %2789 = vset.pattern.permute.xlu0 %v2788
        %2790 = vperm.xlu0 %2789, %v2761
        %v2791 = vpop.permute.xlu0 %2790
        %v2792 = vlaneseq
        %v2793 = vshrl.u32 %v2792, 7
        %v2794 = vadd.s32 %v2793, 40
        %2795 = vset.pattern.permute.xlu0 %v2794
        %2796 = vperm.xlu0 %2795, %v2761
        %v2797 = vpop.permute.xlu0 %2796
        %v2798 = vlaneseq
        %v2799 = vshrl.u32 %v2798, 7
        %v2800 = vadd.s32 %v2799, 48
        %2801 = vset.pattern.permute.xlu0 %v2800
        %2802 = vperm.xlu0 %2801, %v2761
        %v2803 = vpop.permute.xlu0 %2802
        %v2804 = vlaneseq
        %v2805 = vshrl.u32 %v2804, 7
        %v2806 = vadd.s32 %v2805, 56
        %2807 = vset.pattern.permute.xlu0 %v2806
        %2808 = vperm.xlu0 %2807, %v2761
        %v2809 = vpop.permute.xlu0 %2808
        %v2810 = vperm.slane %v608, 4
        %v2811 = vlaneseq
        %v2812 = vshrl.u32 %v2811, 7
        %2814 = vset.pattern.permute.xlu0 %v2812
        %2815 = vperm.xlu0 %2814, %v2810
        %v2816 = vpop.permute.xlu0 %2815
        %v2817 = vlaneseq
        %v2818 = vshrl.u32 %v2817, 7
        %v2819 = vadd.s32 %v2818, 8
        %2820 = vset.pattern.permute.xlu0 %v2819
        %2821 = vperm.xlu0 %2820, %v2810
        %v2822 = vpop.permute.xlu0 %2821
        %v2823 = vlaneseq
        %v2824 = vshrl.u32 %v2823, 7
        %v2825 = vadd.s32 %v2824, 16
        %2826 = vset.pattern.permute.xlu0 %v2825
        %2827 = vperm.xlu0 %2826, %v2810
        %v2828 = vpop.permute.xlu0 %2827
        %v2829 = vlaneseq
        %v2830 = vshrl.u32 %v2829, 7
        %v2831 = vadd.s32 %v2830, 24
        %2832 = vset.pattern.permute.xlu0 %v2831
        %2833 = vperm.xlu0 %2832, %v2810
        %v2834 = vpop.permute.xlu0 %2833
        %v2835 = vlaneseq
        %v2836 = vshrl.u32 %v2835, 7
        %v2837 = vadd.s32 %v2836, 32
        %2838 = vset.pattern.permute.xlu0 %v2837
        %2839 = vperm.xlu0 %2838, %v2810
        %v2840 = vpop.permute.xlu0 %2839
        %v2841 = vlaneseq
        %v2842 = vshrl.u32 %v2841, 7
        %v2843 = vadd.s32 %v2842, 40
        %2844 = vset.pattern.permute.xlu0 %v2843
        %2845 = vperm.xlu0 %2844, %v2810
        %v2846 = vpop.permute.xlu0 %2845
        %v2847 = vlaneseq
        %v2848 = vshrl.u32 %v2847, 7
        %v2849 = vadd.s32 %v2848, 48
        %2850 = vset.pattern.permute.xlu0 %v2849
        %2851 = vperm.xlu0 %2850, %v2810
        %v2852 = vpop.permute.xlu0 %2851
        %v2853 = vlaneseq
        %v2854 = vshrl.u32 %v2853, 7
        %v2855 = vadd.s32 %v2854, 56
        %2856 = vset.pattern.permute.xlu0 %v2855
        %2857 = vperm.xlu0 %2856, %v2810
        %v2858 = vpop.permute.xlu0 %2857
        %v2859 = vperm.slane %v608, 5
        %v2860 = vlaneseq
        %v2861 = vshrl.u32 %v2860, 7
        %2863 = vset.pattern.permute.xlu0 %v2861
        %2864 = vperm.xlu0 %2863, %v2859
        %v2865 = vpop.permute.xlu0 %2864
        %v2866 = vlaneseq
        %v2867 = vshrl.u32 %v2866, 7
        %v2868 = vadd.s32 %v2867, 8
        %2869 = vset.pattern.permute.xlu0 %v2868
        %2870 = vperm.xlu0 %2869, %v2859
        %v2871 = vpop.permute.xlu0 %2870
        %v2872 = vlaneseq
        %v2873 = vshrl.u32 %v2872, 7
        %v2874 = vadd.s32 %v2873, 16
        %2875 = vset.pattern.permute.xlu0 %v2874
        %2876 = vperm.xlu0 %2875, %v2859
        %v2877 = vpop.permute.xlu0 %2876
        %v2878 = vlaneseq
        %v2879 = vshrl.u32 %v2878, 7
        %v2880 = vadd.s32 %v2879, 24
        %2881 = vset.pattern.permute.xlu0 %v2880
        %2882 = vperm.xlu0 %2881, %v2859
        %v2883 = vpop.permute.xlu0 %2882
        %v2884 = vlaneseq
        %v2885 = vshrl.u32 %v2884, 7
        %v2886 = vadd.s32 %v2885, 32
        %2887 = vset.pattern.permute.xlu0 %v2886
        %2888 = vperm.xlu0 %2887, %v2859
        %v2889 = vpop.permute.xlu0 %2888
        %v2890 = vlaneseq
        %v2891 = vshrl.u32 %v2890, 7
        %v2892 = vadd.s32 %v2891, 40
        %2893 = vset.pattern.permute.xlu0 %v2892
        %2894 = vperm.xlu0 %2893, %v2859
        %v2895 = vpop.permute.xlu0 %2894
        %v2896 = vlaneseq
        %v2897 = vshrl.u32 %v2896, 7
        %v2898 = vadd.s32 %v2897, 48
        %2899 = vset.pattern.permute.xlu0 %v2898
        %2900 = vperm.xlu0 %2899, %v2859
        %v2901 = vpop.permute.xlu0 %2900
        %v2902 = vlaneseq
        %v2903 = vshrl.u32 %v2902, 7
        %v2904 = vadd.s32 %v2903, 56
        %2905 = vset.pattern.permute.xlu0 %v2904
        %2906 = vperm.xlu0 %2905, %v2859
        %v2907 = vpop.permute.xlu0 %2906
        %v2908 = vperm.slane %v608, 6
        %v2909 = vlaneseq
        %v2910 = vshrl.u32 %v2909, 7
        %2912 = vset.pattern.permute.xlu0 %v2910
        %2913 = vperm.xlu0 %2912, %v2908
        %v2914 = vpop.permute.xlu0 %2913
        %v2915 = vlaneseq
        %v2916 = vshrl.u32 %v2915, 7
        %v2917 = vadd.s32 %v2916, 8
        %2918 = vset.pattern.permute.xlu0 %v2917
        %2919 = vperm.xlu0 %2918, %v2908
        %v2920 = vpop.permute.xlu0 %2919
        %v2921 = vlaneseq
        %v2922 = vshrl.u32 %v2921, 7
        %v2923 = vadd.s32 %v2922, 16
        %2924 = vset.pattern.permute.xlu0 %v2923
        %2925 = vperm.xlu0 %2924, %v2908
        %v2926 = vpop.permute.xlu0 %2925
        %v2927 = vlaneseq
        %v2928 = vshrl.u32 %v2927, 7
        %v2929 = vadd.s32 %v2928, 24
        %2930 = vset.pattern.permute.xlu0 %v2929
        %2931 = vperm.xlu0 %2930, %v2908
        %v2932 = vpop.permute.xlu0 %2931
        %v2933 = vlaneseq
        %v2934 = vshrl.u32 %v2933, 7
        %v2935 = vadd.s32 %v2934, 32
        %2936 = vset.pattern.permute.xlu0 %v2935
        %2937 = vperm.xlu0 %2936, %v2908
        %v2938 = vpop.permute.xlu0 %2937
        %v2939 = vlaneseq
        %v2940 = vshrl.u32 %v2939, 7
        %v2941 = vadd.s32 %v2940, 40
        %2942 = vset.pattern.permute.xlu0 %v2941
        %2943 = vperm.xlu0 %2942, %v2908
        %v2944 = vpop.permute.xlu0 %2943
        %v2945 = vlaneseq
        %v2946 = vshrl.u32 %v2945, 7
        %v2947 = vadd.s32 %v2946, 48
        %2948 = vset.pattern.permute.xlu0 %v2947
        %2949 = vperm.xlu0 %2948, %v2908
        %v2950 = vpop.permute.xlu0 %2949
        %v2951 = vlaneseq
        %v2952 = vshrl.u32 %v2951, 7
        %v2953 = vadd.s32 %v2952, 56
        %2954 = vset.pattern.permute.xlu0 %v2953
        %2955 = vperm.xlu0 %2954, %v2908
        %v2956 = vpop.permute.xlu0 %2955
        %v2957 = vperm.slane %v608, 7
        %v2958 = vlaneseq
        %v2959 = vshrl.u32 %v2958, 7
        %2961 = vset.pattern.permute.xlu0 %v2959
        %2962 = vperm.xlu0 %2961, %v2957
        %v2963 = vpop.permute.xlu0 %2962
        %v2964 = vlaneseq
        %v2965 = vshrl.u32 %v2964, 7
        %v2966 = vadd.s32 %v2965, 8
        %2967 = vset.pattern.permute.xlu0 %v2966
        %2968 = vperm.xlu0 %2967, %v2957
        %v2969 = vpop.permute.xlu0 %2968
        %v2970 = vlaneseq
        %v2971 = vshrl.u32 %v2970, 7
        %v2972 = vadd.s32 %v2971, 16
        %2973 = vset.pattern.permute.xlu0 %v2972
        %2974 = vperm.xlu0 %2973, %v2957
        %v2975 = vpop.permute.xlu0 %2974
        %v2976 = vlaneseq
        %v2977 = vshrl.u32 %v2976, 7
        %v2978 = vadd.s32 %v2977, 24
        %2979 = vset.pattern.permute.xlu0 %v2978
        %2980 = vperm.xlu0 %2979, %v2957
        %v2981 = vpop.permute.xlu0 %2980
        %v2982 = vlaneseq
        %v2983 = vshrl.u32 %v2982, 7
        %v2984 = vadd.s32 %v2983, 32
        %2985 = vset.pattern.permute.xlu0 %v2984
        %2986 = vperm.xlu0 %2985, %v2957
        %v2987 = vpop.permute.xlu0 %2986
        %v2988 = vlaneseq
        %v2989 = vshrl.u32 %v2988, 7
        %v2990 = vadd.s32 %v2989, 40
        %2991 = vset.pattern.permute.xlu0 %v2990
        %2992 = vperm.xlu0 %2991, %v2957
        %v2993 = vpop.permute.xlu0 %2992
        %v2994 = vlaneseq
        %v2995 = vshrl.u32 %v2994, 7
        %v2996 = vadd.s32 %v2995, 48
        %2997 = vset.pattern.permute.xlu0 %v2996
        %2998 = vperm.xlu0 %2997, %v2957
        %v2999 = vpop.permute.xlu0 %2998
        %v3000 = vlaneseq
        %v3001 = vshrl.u32 %v3000, 7
        %v3002 = vadd.s32 %v3001, 56
        %3003 = vset.pattern.permute.xlu0 %v3002
        %3004 = vperm.xlu0 %3003, %v2957
        %v3005 = vpop.permute.xlu0 %3004
        %v3006 = vsel %vm1029, %v2620, -1e+30
        %v3007 = vsel %vm1030, %v2626, -1e+30
        %v3008 = vsel %vm1031, %v2632, -1e+30
        %v3009 = vsel %vm1032, %v2638, -1e+30
        %v3010 = vsel %vm1033, %v2644, -1e+30
        %v3011 = vsel %vm1034, %v2650, -1e+30
        %v3012 = vsel %vm1035, %v2656, -1e+30
        %v3013 = vsel %vm1036, %v2662, -1e+30
        %v3014 = vsel %vm1029, %v2669, -1e+30
        %v3015 = vsel %vm1030, %v2675, -1e+30
        %v3016 = vsel %vm1031, %v2681, -1e+30
        %v3017 = vsel %vm1032, %v2687, -1e+30
        %v3018 = vsel %vm1033, %v2693, -1e+30
        %v3019 = vsel %vm1034, %v2699, -1e+30
        %v3020 = vsel %vm1035, %v2705, -1e+30
        %v3021 = vsel %vm1036, %v2711, -1e+30
        %v3022 = vsel %vm1029, %v2718, -1e+30
        %v3023 = vsel %vm1030, %v2724, -1e+30
        %v3024 = vsel %vm1031, %v2730, -1e+30
        %v3025 = vsel %vm1032, %v2736, -1e+30
        %v3026 = vsel %vm1033, %v2742, -1e+30
        %v3027 = vsel %vm1034, %v2748, -1e+30
        %v3028 = vsel %vm1035, %v2754, -1e+30
        %v3029 = vsel %vm1036, %v2760, -1e+30
        %v3030 = vsel %vm1029, %v2767, -1e+30
        %v3031 = vsel %vm1030, %v2773, -1e+30
        %v3032 = vsel %vm1031, %v2779, -1e+30
        %v3033 = vsel %vm1032, %v2785, -1e+30
        %v3034 = vsel %vm1033, %v2791, -1e+30
        %v3035 = vsel %vm1034, %v2797, -1e+30
        %v3036 = vsel %vm1035, %v2803, -1e+30
        %v3037 = vsel %vm1036, %v2809, -1e+30
        %v3038 = vsel %vm1029, %v2816, -1e+30
        %v3039 = vsel %vm1030, %v2822, -1e+30
        %v3040 = vsel %vm1031, %v2828, -1e+30
        %v3041 = vsel %vm1032, %v2834, -1e+30
        %v3042 = vsel %vm1033, %v2840, -1e+30
        %v3043 = vsel %vm1034, %v2846, -1e+30
        %v3044 = vsel %vm1035, %v2852, -1e+30
        %v3045 = vsel %vm1036, %v2858, -1e+30
        %v3046 = vsel %vm1029, %v2865, -1e+30
        %v3047 = vsel %vm1030, %v2871, -1e+30
        %v3048 = vsel %vm1031, %v2877, -1e+30
        %v3049 = vsel %vm1032, %v2883, -1e+30
        %v3050 = vsel %vm1033, %v2889, -1e+30
        %v3051 = vsel %vm1034, %v2895, -1e+30
        %v3052 = vsel %vm1035, %v2901, -1e+30
        %v3053 = vsel %vm1036, %v2907, -1e+30
        %v3054 = vsel %vm1029, %v2914, -1e+30
        %v3055 = vsel %vm1030, %v2920, -1e+30
        %v3056 = vsel %vm1031, %v2926, -1e+30
        %v3057 = vsel %vm1032, %v2932, -1e+30
        %v3058 = vsel %vm1033, %v2938, -1e+30
        %v3059 = vsel %vm1034, %v2944, -1e+30
        %v3060 = vsel %vm1035, %v2950, -1e+30
        %v3061 = vsel %vm1036, %v2956, -1e+30
        %v3062 = vsel %vm1029, %v2963, -1e+30
        %v3063 = vsel %vm1030, %v2969, -1e+30
        %v3064 = vsel %vm1031, %v2975, -1e+30
        %v3065 = vsel %vm1032, %v2981, -1e+30
        %v3066 = vsel %vm1033, %v2987, -1e+30
        %v3067 = vsel %vm1034, %v2993, -1e+30
        %v3068 = vsel %vm1035, %v2999, -1e+30
        %v3069 = vsel %vm1036, %v3005, -1e+30
        %v3070 = vsel %vm384, %v3006, -inf
        %v3071 = vsel %vm384, %v3007, -inf
        %v3072 = vmax.f32 %v3070, %v3071
        %v3073 = vsel %vm384, %v3008, -inf
        %v3074 = vmax.f32 %v3072, %v3073
        %v3075 = vsel %vm384, %v3009, -inf
        %v3076 = vmax.f32 %v3074, %v3075
        %v3077 = vsel %vm384, %v3010, -inf
        %v3078 = vmax.f32 %v3076, %v3077
        %v3079 = vsel %vm384, %v3011, -inf
        %v3080 = vmax.f32 %v3078, %v3079
        %v3081 = vsel %vm384, %v3012, -inf
        %v3082 = vmax.f32 %v3080, %v3081
        %v3083 = vsel %vm384, %v3013, -inf
        %v3084 = vmax.f32 %v3082, %v3083
        %v3085 = vrot.slane %v3084, 4
        %v3086 = vmax.f32 %v3084, %v3085
        %v3087 = vrot.slane %v3086, 2
        %v3088 = vmax.f32 %v3086, %v3087
        %v3089 = vrot.slane %v3088, 1
        %v3090 = vmax.f32 %v3088, %v3089
        %v3091 = vsel %vm384, %v3014, -inf
        %v3092 = vsel %vm384, %v3015, -inf
        %v3093 = vmax.f32 %v3091, %v3092
        %v3094 = vsel %vm384, %v3016, -inf
        %v3095 = vmax.f32 %v3093, %v3094
        %v3096 = vsel %vm384, %v3017, -inf
        %v3097 = vmax.f32 %v3095, %v3096
        %v3098 = vsel %vm384, %v3018, -inf
        %v3099 = vmax.f32 %v3097, %v3098
        %v3100 = vsel %vm384, %v3019, -inf
        %v3101 = vmax.f32 %v3099, %v3100
        %v3102 = vsel %vm384, %v3020, -inf
        %v3103 = vmax.f32 %v3101, %v3102
        %v3104 = vsel %vm384, %v3021, -inf
        %v3105 = vmax.f32 %v3103, %v3104
        %v3106 = vrot.slane %v3105, 4
        %v3107 = vmax.f32 %v3105, %v3106
        %v3108 = vrot.slane %v3107, 2
        %v3109 = vmax.f32 %v3107, %v3108
        %v3110 = vrot.slane %v3109, 1
        %v3111 = vmax.f32 %v3109, %v3110
        %v3112 = vsel %vm384, %v3022, -inf
        %v3113 = vsel %vm384, %v3023, -inf
        %v3114 = vmax.f32 %v3112, %v3113
        %v3115 = vsel %vm384, %v3024, -inf
        %v3116 = vmax.f32 %v3114, %v3115
        %v3117 = vsel %vm384, %v3025, -inf
        %v3118 = vmax.f32 %v3116, %v3117
        %v3119 = vsel %vm384, %v3026, -inf
        %v3120 = vmax.f32 %v3118, %v3119
        %v3121 = vsel %vm384, %v3027, -inf
        %v3122 = vmax.f32 %v3120, %v3121
        %v3123 = vsel %vm384, %v3028, -inf
        %v3124 = vmax.f32 %v3122, %v3123
        %v3125 = vsel %vm384, %v3029, -inf
        %v3126 = vmax.f32 %v3124, %v3125
        %v3127 = vrot.slane %v3126, 4
        %v3128 = vmax.f32 %v3126, %v3127
        %v3129 = vrot.slane %v3128, 2
        %v3130 = vmax.f32 %v3128, %v3129
        %v3131 = vrot.slane %v3130, 1
        %v3132 = vmax.f32 %v3130, %v3131
        %v3133 = vsel %vm384, %v3030, -inf
        %v3134 = vsel %vm384, %v3031, -inf
        %v3135 = vmax.f32 %v3133, %v3134
        %v3136 = vsel %vm384, %v3032, -inf
        %v3137 = vmax.f32 %v3135, %v3136
        %v3138 = vsel %vm384, %v3033, -inf
        %v3139 = vmax.f32 %v3137, %v3138
        %v3140 = vsel %vm384, %v3034, -inf
        %v3141 = vmax.f32 %v3139, %v3140
        %v3142 = vsel %vm384, %v3035, -inf
        %v3143 = vmax.f32 %v3141, %v3142
        %v3144 = vsel %vm384, %v3036, -inf
        %v3145 = vmax.f32 %v3143, %v3144
        %v3146 = vsel %vm384, %v3037, -inf
        %v3147 = vmax.f32 %v3145, %v3146
        %v3148 = vrot.slane %v3147, 4
        %v3149 = vmax.f32 %v3147, %v3148
        %v3150 = vrot.slane %v3149, 2
        %v3151 = vmax.f32 %v3149, %v3150
        %v3152 = vrot.slane %v3151, 1
        %v3153 = vmax.f32 %v3151, %v3152
        %v3154 = vsel %vm384, %v3038, -inf
        %v3155 = vsel %vm384, %v3039, -inf
        %v3156 = vmax.f32 %v3154, %v3155
        %v3157 = vsel %vm384, %v3040, -inf
        %v3158 = vmax.f32 %v3156, %v3157
        %v3159 = vsel %vm384, %v3041, -inf
        %v3160 = vmax.f32 %v3158, %v3159
        %v3161 = vsel %vm384, %v3042, -inf
        %v3162 = vmax.f32 %v3160, %v3161
        %v3163 = vsel %vm384, %v3043, -inf
        %v3164 = vmax.f32 %v3162, %v3163
        %v3165 = vsel %vm384, %v3044, -inf
        %v3166 = vmax.f32 %v3164, %v3165
        %v3167 = vsel %vm384, %v3045, -inf
        %v3168 = vmax.f32 %v3166, %v3167
        %v3169 = vrot.slane %v3168, 4
        %v3170 = vmax.f32 %v3168, %v3169
        %v3171 = vrot.slane %v3170, 2
        %v3172 = vmax.f32 %v3170, %v3171
        %v3173 = vrot.slane %v3172, 1
        %v3174 = vmax.f32 %v3172, %v3173
        %v3175 = vsel %vm384, %v3046, -inf
        %v3176 = vsel %vm384, %v3047, -inf
        %v3177 = vmax.f32 %v3175, %v3176
        %v3178 = vsel %vm384, %v3048, -inf
        %v3179 = vmax.f32 %v3177, %v3178
        %v3180 = vsel %vm384, %v3049, -inf
        %v3181 = vmax.f32 %v3179, %v3180
        %v3182 = vsel %vm384, %v3050, -inf
        %v3183 = vmax.f32 %v3181, %v3182
        %v3184 = vsel %vm384, %v3051, -inf
        %v3185 = vmax.f32 %v3183, %v3184
        %v3186 = vsel %vm384, %v3052, -inf
        %v3187 = vmax.f32 %v3185, %v3186
        %v3188 = vsel %vm384, %v3053, -inf
        %v3189 = vmax.f32 %v3187, %v3188
        %v3190 = vrot.slane %v3189, 4
        %v3191 = vmax.f32 %v3189, %v3190
        %v3192 = vrot.slane %v3191, 2
        %v3193 = vmax.f32 %v3191, %v3192
        %v3194 = vrot.slane %v3193, 1
        %v3195 = vmax.f32 %v3193, %v3194
        %v3196 = vsel %vm384, %v3054, -inf
        %v3197 = vsel %vm384, %v3055, -inf
        %v3198 = vmax.f32 %v3196, %v3197
        %v3199 = vsel %vm384, %v3056, -inf
        %v3200 = vmax.f32 %v3198, %v3199
        %v3201 = vsel %vm384, %v3057, -inf
        %v3202 = vmax.f32 %v3200, %v3201
        %v3203 = vsel %vm384, %v3058, -inf
        %v3204 = vmax.f32 %v3202, %v3203
        %v3205 = vsel %vm384, %v3059, -inf
        %v3206 = vmax.f32 %v3204, %v3205
        %v3207 = vsel %vm384, %v3060, -inf
        %v3208 = vmax.f32 %v3206, %v3207
        %v3209 = vsel %vm384, %v3061, -inf
        %v3210 = vmax.f32 %v3208, %v3209
        %v3211 = vrot.slane %v3210, 4
        %v3212 = vmax.f32 %v3210, %v3211
        %v3213 = vrot.slane %v3212, 2
        %v3214 = vmax.f32 %v3212, %v3213
        %v3215 = vrot.slane %v3214, 1
        %v3216 = vmax.f32 %v3214, %v3215
        %v3217 = vsel %vm384, %v3062, -inf
        %v3218 = vsel %vm384, %v3063, -inf
        %v3219 = vmax.f32 %v3217, %v3218
        %v3220 = vsel %vm384, %v3064, -inf
        %v3221 = vmax.f32 %v3219, %v3220
        %v3222 = vsel %vm384, %v3065, -inf
        %v3223 = vmax.f32 %v3221, %v3222
        %v3224 = vsel %vm384, %v3066, -inf
        %v3225 = vmax.f32 %v3223, %v3224
        %v3226 = vsel %vm384, %v3067, -inf
        %v3227 = vmax.f32 %v3225, %v3226
        %v3228 = vsel %vm384, %v3068, -inf
        %v3229 = vmax.f32 %v3227, %v3228
        %v3230 = vsel %vm384, %v3069, -inf
        %v3231 = vmax.f32 %v3229, %v3230
        %v3232 = vrot.slane %v3231, 4
        %v3233 = vmax.f32 %v3231, %v3232
        %v3234 = vrot.slane %v3233, 2
        %v3235 = vmax.f32 %v3233, %v3234
        %v3236 = vrot.slane %v3235, 1
        %v3237 = vmax.f32 %v3235, %v3236
        %3239 = vset.pattern.permute.xlu0 0
        %3240 = vperm.xlu0 %3239, %v380
        %v3241 = vpop.permute.xlu0 %3240
        %v3251 = vsel %vm1282, %v3111, %v3090
        %v3252 = vsel %vm1284, %v3132, %v3251
        %v3253 = vsel %vm1286, %v3153, %v3252
        %v3254 = vsel %vm1288, %v3174, %v3253
        %v3255 = vsel %vm1290, %v3195, %v3254
        %v3256 = vsel %vm1292, %v3216, %v3255
        %v3257 = vsel %vm1294, %v3237, %v3256
        %v3259 = vmul.f32 %v3241, %v3257
        %v3260 = vsel %vm384, %v3259, 0.0
        %v3261 = vrot.slane %v3260, 4
        %v3262 = vadd.f32 %v3260, %v3261
        %v3263 = vrot.slane %v3262, 2
        %v3264 = vadd.f32 %v3262, %v3263
        %v3265 = vrot.slane %v3264, 1
        %v3266 = vadd.f32 %v3264, %v3265
        %v3267 = vadd.f32 %v2613, %v3266
        %3268 = vxpose.xlu0.b32.start [1/16] %v3267, 128
        %3269 = vxpose.xlu0.b32.cont [2/16] 0.0, 128
        %3270 = vxpose.xlu0.b32.cont [3/16] 0.0, 128
        %3271 = vxpose.xlu0.b32.cont [4/16] 0.0, 128
        %3272 = vxpose.xlu0.b32.cont [5/16] 0.0, 128
        %3273 = vxpose.xlu0.b32.cont [6/16] 0.0, 128
        %3274 = vxpose.xlu0.b32.cont [7/16] 0.0, 128
        %3275 = vxpose.xlu0.b32.cont [8/16] 0.0, 128
        %3276 = vxpose.xlu0.b32.cont [9/16] 0.0, 128
        %3277 = vxpose.xlu0.b32.cont [10/16] 0.0, 128
        %3278 = vxpose.xlu0.b32.cont [11/16] 0.0, 128
        %3279 = vxpose.xlu0.b32.cont [12/16] 0.0, 128
        %3280 = vxpose.xlu0.b32.cont [13/16] 0.0, 128
        %3281 = vxpose.xlu0.b32.cont [14/16] 0.0, 128
        %3282 = vxpose.xlu0.b32.cont [15/16] 0.0, 128
        %3283 = vxpose.xlu0.b32.end [16/16] 0.0, 128
        %v3284 = vpop.trf.xlu0
        %v3285 = vpop.trf.xlu0
        %v3286 = vpop.trf.xlu0
        %v3287 = vpop.trf.xlu0
        %v3288 = vpop.trf.xlu0
        %v3289 = vpop.trf.xlu0
        %v3290 = vpop.trf.xlu0
        %v3291 = vpop.trf.xlu0
        %v3292 = vpop.trf.xlu0
        %v3293 = vpop.trf.xlu0
        %v3294 = vpop.trf.xlu0
        %v3295 = vpop.trf.xlu0
        %v3296 = vpop.trf.xlu0
        %v3297 = vpop.trf.xlu0
        %v3298 = vpop.trf.xlu0
        %v3299 = vpop.trf.xlu0
        %v3301 = vrot.slane %v376, 1
        %v3302 = vsel %vm268, %v3301, 0
        %3304 = vmatpush.msra.mxu0 0.0
        %3305 = vmatpush.msra.mxu0 0.0
        %3306 = vmatpush.msra.mxu0 0.0
        %3307 = vmatpush.msra.mxu0 0.0
        %3308 = vmatpush.msra.mxu0 0.0
        %3309 = vmatpush.msra.mxu0 0.0
        %3310 = vmatpush.msra.mxu0 0.0
        %3311 = vmatpush.msra.mxu0 0.0
        %3312 = vmatpush.msra.mxu0 0.0
        %3313 = vmatpush.msra.mxu0 0.0
        %3314 = vmatpush.msra.mxu0 0.0
        %3315 = vmatpush.msra.mxu0 0.0
        %3316 = vmatpush.msra.mxu0 %v608
        %3317 = vmatpush.msra.mxu0 %v607
        %3318 = vmatpush.msra.mxu0 %v606
        %3319 = vmatpush.msra.mxu0 %v605
        %3320 = vmatmul.f32.gmra.mxu0 %v3302
        %v3321 = vpop.f32.mrf.mxu0
        %v3322 = vadd.f32 0.0, %v3321
        %3323 = vdwg.mxu0
        %3325 = vset.pattern.permute.xlu0 0
        %3326 = vperm.xlu0 %3325, %v3284
        %v3327 = vpop.permute.xlu0 %3326
        %3330 = vset.pattern.permute.xlu0 0
        %3331 = vperm.xlu0 %3330, %v3285
        %v3332 = vpop.permute.xlu0 %3331
        %3335 = vset.pattern.permute.xlu0 0
        %3336 = vperm.xlu0 %3335, %v3286
        %v3337 = vpop.permute.xlu0 %3336
        %3340 = vset.pattern.permute.xlu0 0
        %3341 = vperm.xlu0 %3340, %v3287
        %v3342 = vpop.permute.xlu0 %3341
        %3345 = vset.pattern.permute.xlu0 0
        %3346 = vperm.xlu0 %3345, %v3288
        %v3347 = vpop.permute.xlu0 %3346
        %3350 = vset.pattern.permute.xlu0 0
        %3351 = vperm.xlu0 %3350, %v3289
        %v3352 = vpop.permute.xlu0 %3351
        %3355 = vset.pattern.permute.xlu0 0
        %3356 = vperm.xlu0 %3355, %v3290
        %v3357 = vpop.permute.xlu0 %3356
        %3360 = vset.pattern.permute.xlu0 0
        %3361 = vperm.xlu0 %3360, %v3291
        %v3362 = vpop.permute.xlu0 %3361
        %v3364 = vperm.slane %v3322, 0
        %v3365 = vadd.f32 %v3327, %v3364
        %v3366 = vadd.f32 %v3332, %v3364
        %v3367 = vadd.f32 %v3337, %v3364
        %v3368 = vadd.f32 %v3342, %v3364
        %v3369 = vadd.f32 %v3347, %v3364
        %v3370 = vadd.f32 %v3352, %v3364
        %v3371 = vadd.f32 %v3357, %v3364
        %v3372 = vadd.f32 %v3362, %v3364
        %v3373 = vstv %s381
        %v3374 = vadd.f32 %v3365, %v3373
        %v3375 = vadd.f32 %v3366, %v3373
        %v3376 = vadd.f32 %v3367, %v3373
        %v3377 = vadd.f32 %v3368, %v3373
        %v3378 = vadd.f32 %v3369, %v3373
        %v3379 = vadd.f32 %v3370, %v3373
        %v3380 = vadd.f32 %v3371, %v3373
        %v3381 = vadd.f32 %v3372, %v3373
        %vm3382 = vcmp.gt.f32.partialorder %v3374, 0.0
        %vm3383 = vcmp.gt.f32.partialorder %v3375, 0.0
        %vm3384 = vcmp.gt.f32.partialorder %v3376, 0.0
        %vm3385 = vcmp.gt.f32.partialorder %v3377, 0.0
        %vm3386 = vcmp.gt.f32.partialorder %v3378, 0.0
        %vm3387 = vcmp.gt.f32.partialorder %v3379, 0.0
        %vm3388 = vcmp.gt.f32.partialorder %v3380, 0.0
        %vm3389 = vcmp.gt.f32.partialorder %v3381, 0.0
        %v3390 = vmul.f32 %v3374, 0.2
        %v3391 = vmul.f32 %v3375, 0.2
        %v3392 = vmul.f32 %v3376, 0.2
        %v3393 = vmul.f32 %v3377, 0.2
        %v3394 = vmul.f32 %v3378, 0.2
        %v3395 = vmul.f32 %v3379, 0.2
        %v3396 = vmul.f32 %v3380, 0.2
        %v3397 = vmul.f32 %v3381, 0.2
        %v3398 = vsel %vm3382, %v3374, %v3390
        %v3399 = vsel %vm3383, %v3375, %v3391
        %v3400 = vsel %vm3384, %v3376, %v3392
        %v3401 = vsel %vm3385, %v3377, %v3393
        %v3402 = vsel %vm3386, %v3378, %v3394
        %v3403 = vsel %vm3387, %v3379, %v3395
        %v3404 = vsel %vm3388, %v3380, %v3396
        %v3405 = vsel %vm3389, %v3381, %v3397
        %v3406 = vsel %vm621, %v3398, -1e+30
        %v3407 = vsel %vm622, %v3399, -1e+30
        %v3408 = vsel %vm623, %v3400, -1e+30
        %v3409 = vsel %vm624, %v3401, -1e+30
        %v3410 = vsel %vm625, %v3402, -1e+30
        %v3411 = vsel %vm626, %v3403, -1e+30
        %v3412 = vsel %vm627, %v3404, -1e+30
        %v3413 = vsel %vm628, %v3405, -1e+30
        %v3414 = vsel %vm384, %v3406, -inf
        %3415 = vmax.xlane.f32.xlu0 %v3414
        %v3416 = vpop.xlane.xlu0 %3415
        %v3417 = vsel %vm384, %v3407, -inf
        %3418 = vmax.xlane.f32.xlu0 %v3417
        %v3419 = vpop.xlane.xlu0 %3418
        %v3420 = vsel %vm384, %v3408, -inf
        %3421 = vmax.xlane.f32.xlu0 %v3420
        %v3422 = vpop.xlane.xlu0 %3421
        %v3423 = vsel %vm384, %v3409, -inf
        %3424 = vmax.xlane.f32.xlu0 %v3423
        %v3425 = vpop.xlane.xlu0 %3424
        %v3426 = vsel %vm384, %v3410, -inf
        %3427 = vmax.xlane.f32.xlu0 %v3426
        %v3428 = vpop.xlane.xlu0 %3427
        %v3429 = vsel %vm384, %v3411, -inf
        %3430 = vmax.xlane.f32.xlu0 %v3429
        %v3431 = vpop.xlane.xlu0 %3430
        %v3432 = vsel %vm384, %v3412, -inf
        %3433 = vmax.xlane.f32.xlu0 %v3432
        %v3434 = vpop.xlane.xlu0 %3433
        %v3435 = vsel %vm384, %v3413, -inf
        %3436 = vmax.xlane.f32.xlu0 %v3435
        %v3437 = vpop.xlane.xlu0 %3436
        %v3438 = vsub.f32 %v3406, %v3416
        %v3439 = vsub.f32 %v3407, %v3419
        %v3440 = vsub.f32 %v3408, %v3422
        %v3441 = vsub.f32 %v3409, %v3425
        %v3442 = vsub.f32 %v3410, %v3428
        %v3443 = vsub.f32 %v3411, %v3431
        %v3444 = vsub.f32 %v3412, %v3434
        %v3445 = vsub.f32 %v3413, %v3437
        %v3446 = vmul.f32 %v3438, 1.442695
        %v3447 = vpow.pop %v3446
        %v3448 = vmul.f32 %v3439, 1.442695
        %v3449 = vpow.pop %v3448
        %v3450 = vmul.f32 %v3440, 1.442695
        %v3451 = vpow.pop %v3450
        %v3452 = vmul.f32 %v3441, 1.442695
        %v3453 = vpow.pop %v3452
        %v3454 = vmul.f32 %v3442, 1.442695
        %v3455 = vpow.pop %v3454
        %v3456 = vmul.f32 %v3443, 1.442695
        %v3457 = vpow.pop %v3456
        %v3458 = vmul.f32 %v3444, 1.442695
        %v3459 = vpow.pop %v3458
        %v3460 = vmul.f32 %v3445, 1.442695
        %v3461 = vpow.pop %v3460
        %v3462 = vsel %vm621, %v3447, 0.0
        %v3463 = vsel %vm622, %v3449, 0.0
        %v3464 = vsel %vm623, %v3451, 0.0
        %v3465 = vsel %vm624, %v3453, 0.0
        %v3466 = vsel %vm625, %v3455, 0.0
        %v3467 = vsel %vm626, %v3457, 0.0
        %v3468 = vsel %vm627, %v3459, 0.0
        %v3469 = vsel %vm628, %v3461, 0.0
        %v3470 = vsel %vm384, %v3462, 0.0
        %3471 = vadd.xlane.f32.xlu0 %v3470
        %v3472 = vpop.xlane.xlu0 %3471
        %v3473 = vsel %vm384, %v3463, 0.0
        %3474 = vadd.xlane.f32.xlu0 %v3473
        %v3475 = vpop.xlane.xlu0 %3474
        %v3476 = vsel %vm384, %v3464, 0.0
        %3477 = vadd.xlane.f32.xlu0 %v3476
        %v3478 = vpop.xlane.xlu0 %3477
        %v3479 = vsel %vm384, %v3465, 0.0
        %3480 = vadd.xlane.f32.xlu0 %v3479
        %v3481 = vpop.xlane.xlu0 %3480
        %v3482 = vsel %vm384, %v3466, 0.0
        %3483 = vadd.xlane.f32.xlu0 %v3482
        %v3484 = vpop.xlane.xlu0 %3483
        %v3485 = vsel %vm384, %v3467, 0.0
        %3486 = vadd.xlane.f32.xlu0 %v3485
        %v3487 = vpop.xlane.xlu0 %3486
        %v3488 = vsel %vm384, %v3468, 0.0
        %3489 = vadd.xlane.f32.xlu0 %v3488
        %v3490 = vpop.xlane.xlu0 %3489
        %v3491 = vsel %vm384, %v3469, 0.0
        %3492 = vadd.xlane.f32.xlu0 %v3491
        %v3493 = vpop.xlane.xlu0 %3492
        %v3494 = vrcp.pop %v3472
        %v3495 = vrcp.pop %v3475
        %v3496 = vrcp.pop %v3478
        %v3497 = vrcp.pop %v3481
        %v3498 = vrcp.pop %v3484
        %v3499 = vrcp.pop %v3487
        %v3500 = vrcp.pop %v3490
        %v3501 = vrcp.pop %v3493
        %v3502 = vmul.f32 %v3462, %v3494
        %v3503 = vmul.f32 %v3463, %v3495
        %v3504 = vmul.f32 %v3464, %v3496
        %v3505 = vmul.f32 %v3465, %v3497
        %v3506 = vmul.f32 %v3466, %v3498
        %v3507 = vmul.f32 %v3467, %v3499
        %v3508 = vmul.f32 %v3468, %v3500
        %v3509 = vmul.f32 %v3469, %v3501
        %v3511 = vsel %vm384, %v3502, 0
        %v3514 = vsel %vm384, %v3503, 0
        %v3517 = vsel %vm384, %v3504, 0
        %v3520 = vsel %vm384, %v3505, 0
        %v3523 = vsel %vm384, %v3506, 0
        %v3526 = vsel %vm384, %v3507, 0
        %v3529 = vsel %vm384, %v3508, 0
        %v3532 = vsel %vm384, %v3509, 0
        %3534 = vmatpush.msra.mxu0 0.0
        %3535 = vmatpush.msra.mxu0 0.0
        %3536 = vmatpush.msra.mxu0 0.0
        %3537 = vmatpush.msra.mxu0 0.0
        %3538 = vmatpush.msra.mxu0 0.0
        %3539 = vmatpush.msra.mxu0 0.0
        %3540 = vmatpush.msra.mxu0 0.0
        %3541 = vmatpush.msra.mxu0 0.0
        %3542 = vmatpush.msra.mxu0 %v267
        %3543 = vmatpush.msra.mxu0 %v266
        %3544 = vmatpush.msra.mxu0 %v265
        %3545 = vmatpush.msra.mxu0 %v264
        %3546 = vmatpush.msra.mxu0 %v263
        %3547 = vmatpush.msra.mxu0 %v262
        %3548 = vmatpush.msra.mxu0 %v261
        %3549 = vmatpush.msra.mxu0 %v260
        %3550 = vmatmul.f32.gmra.mxu0 %v3511
        %v3551 = vpop.f32.mrf.mxu0
        %v3552 = vadd.f32 0.0, %v3551
        %3553 = vmatmul.f32.gmra.mxu0 %v3514
        %v3554 = vpop.f32.mrf.mxu0
        %v3555 = vadd.f32 0.0, %v3554
        %3556 = vmatmul.f32.gmra.mxu0 %v3517
        %v3557 = vpop.f32.mrf.mxu0
        %v3558 = vadd.f32 0.0, %v3557
        %3559 = vmatmul.f32.gmra.mxu0 %v3520
        %v3560 = vpop.f32.mrf.mxu0
        %v3561 = vadd.f32 0.0, %v3560
        %3562 = vmatmul.f32.gmra.mxu0 %v3523
        %v3563 = vpop.f32.mrf.mxu0
        %v3564 = vadd.f32 0.0, %v3563
        %3565 = vmatmul.f32.gmra.mxu0 %v3526
        %v3566 = vpop.f32.mrf.mxu0
        %v3567 = vadd.f32 0.0, %v3566
        %3568 = vmatmul.f32.gmra.mxu0 %v3529
        %v3569 = vpop.f32.mrf.mxu0
        %v3570 = vadd.f32 0.0, %v3569
        %3571 = vmatmul.f32.gmra.mxu0 %v3532
        %v3572 = vpop.f32.mrf.mxu0
        %v3573 = vadd.f32 0.0, %v3572
        %3574 = vdwg.mxu0
        %3575 = vrot.lane.b32.xlu0 %v377, 127
        %v3576 = vpop.permute.xlu0 %3575
        %3577 = vrot.lane.b32.xlu0 %v378, 127
        %v3578 = vpop.permute.xlu0 %3577
        %3579 = vrot.lane.b32.xlu0 %v379, 127
        %v3580 = vpop.permute.xlu0 %3579
        %3581 = vrot.lane.b32.xlu0 %v380, 127
        %v3582 = vpop.permute.xlu0 %3581
        %v3588 = vsel %vm268, %v3552, 0
        %v3591 = vsel %vm268, %v3555, 0
        %v3594 = vsel %vm268, %v3558, 0
        %v3597 = vsel %vm268, %v3561, 0
        %v3600 = vsel %vm268, %v3564, 0
        %v3603 = vsel %vm268, %v3567, 0
        %v3606 = vsel %vm268, %v3570, 0
        %v3609 = vsel %vm268, %v3573, 0
        %3611 = vmatpush.msra.mxu0 0.0
        %3612 = vmatpush.msra.mxu0 0.0
        %3613 = vmatpush.msra.mxu0 0.0
        %3614 = vmatpush.msra.mxu0 0.0
        %3615 = vmatpush.msra.mxu0 0.0
        %3616 = vmatpush.msra.mxu0 0.0
        %3617 = vmatpush.msra.mxu0 0.0
        %3618 = vmatpush.msra.mxu0 0.0
        %3619 = vmatpush.msra.mxu0 0.0
        %3620 = vmatpush.msra.mxu0 0.0
        %3621 = vmatpush.msra.mxu0 0.0
        %3622 = vmatpush.msra.mxu0 0.0
        %3623 = vmatpush.msra.mxu0 %v3582
        %3624 = vmatpush.msra.mxu0 %v3580
        %3625 = vmatpush.msra.mxu0 %v3578
        %3626 = vmatpush.msra.mxu0 %v3576
        %3627 = vmatmul.f32.gmra.mxu0 %v3588
        %v3628 = vpop.f32.mrf.mxu0
        %v3629 = vadd.f32 0.0, %v3628
        %3630 = vmatmul.f32.gmra.mxu0 %v3591
        %v3631 = vpop.f32.mrf.mxu0
        %v3632 = vadd.f32 0.0, %v3631
        %3633 = vmatmul.f32.gmra.mxu0 %v3594
        %v3634 = vpop.f32.mrf.mxu0
        %v3635 = vadd.f32 0.0, %v3634
        %3636 = vmatmul.f32.gmra.mxu0 %v3597
        %v3637 = vpop.f32.mrf.mxu0
        %v3638 = vadd.f32 0.0, %v3637
        %3639 = vmatmul.f32.gmra.mxu0 %v3600
        %v3640 = vpop.f32.mrf.mxu0
        %v3641 = vadd.f32 0.0, %v3640
        %3642 = vmatmul.f32.gmra.mxu0 %v3603
        %v3643 = vpop.f32.mrf.mxu0
        %v3644 = vadd.f32 0.0, %v3643
        %3645 = vmatmul.f32.gmra.mxu0 %v3606
        %v3646 = vpop.f32.mrf.mxu0
        %v3647 = vadd.f32 0.0, %v3646
        %3648 = vmatmul.f32.gmra.mxu0 %v3609
        %v3649 = vpop.f32.mrf.mxu0
        %v3650 = vadd.f32 0.0, %v3649
        %3651 = vdwg.mxu0
        %v3652 = vsel %vm384, %v360, 0.0
        %3653 = vadd.xlane.f32.xlu0 %v3652
        %v3654 = vpop.xlane.xlu0 %3653
        %v3655 = vsel %vm384, %v361, 0.0
        %3656 = vadd.xlane.f32.xlu0 %v3655
        %v3657 = vpop.xlane.xlu0 %3656
        %v3658 = vsel %vm384, %v362, 0.0
        %3659 = vadd.xlane.f32.xlu0 %v3658
        %v3660 = vpop.xlane.xlu0 %3659
        %v3661 = vsel %vm384, %v363, 0.0
        %3662 = vadd.xlane.f32.xlu0 %v3661
        %v3663 = vpop.xlane.xlu0 %3662
        %v3664 = vsel %vm384, %v364, 0.0
        %3665 = vadd.xlane.f32.xlu0 %v3664
        %v3666 = vpop.xlane.xlu0 %3665
        %v3667 = vsel %vm384, %v365, 0.0
        %3668 = vadd.xlane.f32.xlu0 %v3667
        %v3669 = vpop.xlane.xlu0 %3668
        %v3670 = vsel %vm384, %v366, 0.0
        %3671 = vadd.xlane.f32.xlu0 %v3670
        %v3672 = vpop.xlane.xlu0 %3671
        %v3673 = vsel %vm384, %v367, 0.0
        %3674 = vadd.xlane.f32.xlu0 %v3673
        %v3675 = vpop.xlane.xlu0 %3674
        %v3676 = vstv %s382
        %v3677 = vmul.f32 %v3654, %v3676
        %v3678 = vmul.f32 %v3657, %v3676
        %v3679 = vmul.f32 %v3660, %v3676
        %v3680 = vmul.f32 %v3663, %v3676
        %v3681 = vmul.f32 %v3666, %v3676
        %v3682 = vmul.f32 %v3669, %v3676
        %v3683 = vmul.f32 %v3672, %v3676
        %v3684 = vmul.f32 %v3675, %v3676
        %3685 = vmatpush.msra.mxu0 0.0
        %3686 = vmatpush.msra.mxu0 0.0
        %3687 = vmatpush.msra.mxu0 0.0
        %3688 = vmatpush.msra.mxu0 0.0
        %3689 = vmatpush.msra.mxu0 0.0
        %3690 = vmatpush.msra.mxu0 0.0
        %3691 = vmatpush.msra.mxu0 0.0
        %3692 = vmatpush.msra.mxu0 0.0
        %3693 = vmatpush.msra.mxu0 %v3650
        %3694 = vmatpush.msra.mxu0 %v3647
        %3695 = vmatpush.msra.mxu0 %v3644
        %3696 = vmatpush.msra.mxu0 %v3641
        %3697 = vmatpush.msra.mxu0 %v3638
        %3698 = vmatpush.msra.mxu0 %v3635
        %3699 = vmatpush.msra.mxu0 %v3632
        %3700 = vmatpush.msra.mxu0 %v3629
        %3701 = vmatmul.f32.gmra.mxu0 %v386
        %v3702 = vpop.f32.mrf.mxu0
        %v3703 = vadd.f32 %v3677, %v3702
        %3704 = vmatmul.f32.gmra.mxu0 %v389
        %v3705 = vpop.f32.mrf.mxu0
        %v3706 = vadd.f32 %v3678, %v3705
        %3707 = vmatmul.f32.gmra.mxu0 %v392
        %v3708 = vpop.f32.mrf.mxu0
        %v3709 = vadd.f32 %v3679, %v3708
        %3710 = vmatmul.f32.gmra.mxu0 %v395
        %v3711 = vpop.f32.mrf.mxu0
        %v3712 = vadd.f32 %v3680, %v3711
        %3713 = vmatmul.f32.gmra.mxu0 %v398
        %v3714 = vpop.f32.mrf.mxu0
        %v3715 = vadd.f32 %v3681, %v3714
        %3716 = vmatmul.f32.gmra.mxu0 %v401
        %v3717 = vpop.f32.mrf.mxu0
        %v3718 = vadd.f32 %v3682, %v3717
        %3719 = vmatmul.f32.gmra.mxu0 %v404
        %v3720 = vpop.f32.mrf.mxu0
        %v3721 = vadd.f32 %v3683, %v3720
        %3722 = vmatmul.f32.gmra.mxu0 %v407
        %v3723 = vpop.f32.mrf.mxu0
        %v3724 = vadd.f32 %v3684, %v3723
        %3725 = vdwg.mxu0
        %v3726 = vmul.f32 %v3654, %v3629
        %v3727 = vmul.f32 %v3657, %v3632
        %v3728 = vmul.f32 %v3660, %v3635
        %v3729 = vmul.f32 %v3663, %v3638
        %v3730 = vmul.f32 %v3666, %v3641
        %v3731 = vmul.f32 %v3669, %v3644
        %v3732 = vmul.f32 %v3672, %v3647
        %v3733 = vmul.f32 %v3675, %v3650
        %3742 = vrot.lane.b32.xlu0 %v3726, 127
        %v3743 = vpop.permute.xlu0 %3742
        %3744 = vrot.lane.b32.xlu0 %v3727, 127
        %v3745 = vpop.permute.xlu0 %3744
        %3746 = vrot.lane.b32.xlu0 %v3728, 127
        %v3747 = vpop.permute.xlu0 %3746
        %3748 = vrot.lane.b32.xlu0 %v3729, 127
        %v3749 = vpop.permute.xlu0 %3748
        %3750 = vrot.lane.b32.xlu0 %v3730, 127
        %v3751 = vpop.permute.xlu0 %3750
        %3752 = vrot.lane.b32.xlu0 %v3731, 127
        %v3753 = vpop.permute.xlu0 %3752
        %3754 = vrot.lane.b32.xlu0 %v3732, 127
        %v3755 = vpop.permute.xlu0 %3754
        %3756 = vrot.lane.b32.xlu0 %v3733, 127
        %v3757 = vpop.permute.xlu0 %3756
        %v3766 = vsub.f32 %v3703, %v3743
        %v3767 = vsub.f32 %v3706, %v3745
        %v3768 = vsub.f32 %v3709, %v3747
        %v3769 = vsub.f32 %v3712, %v3749
        %v3770 = vsub.f32 %v3715, %v3751
        %v3771 = vsub.f32 %v3718, %v3753
        %v3772 = vsub.f32 %v3721, %v3755
        %v3773 = vsub.f32 %v3724, %v3757
        %3782 = vrot.lane.b32.xlu0 %v3629, 126
        %v3783 = vpop.permute.xlu0 %3782
        %3784 = vrot.lane.b32.xlu0 %v3632, 126
        %v3785 = vpop.permute.xlu0 %3784
        %3786 = vrot.lane.b32.xlu0 %v3635, 126
        %v3787 = vpop.permute.xlu0 %3786
        %3788 = vrot.lane.b32.xlu0 %v3638, 126
        %v3789 = vpop.permute.xlu0 %3788
        %3790 = vrot.lane.b32.xlu0 %v3641, 126
        %v3791 = vpop.permute.xlu0 %3790
        %3792 = vrot.lane.b32.xlu0 %v3644, 126
        %v3793 = vpop.permute.xlu0 %3792
        %3794 = vrot.lane.b32.xlu0 %v3647, 126
        %v3795 = vpop.permute.xlu0 %3794
        %3796 = vrot.lane.b32.xlu0 %v3650, 126
        %v3797 = vpop.permute.xlu0 %3796
        %v3806 = vadd.f32 %v3766, %v3783
        %v3807 = vadd.f32 %v3767, %v3785
        %v3808 = vadd.f32 %v3768, %v3787
        %v3809 = vadd.f32 %v3769, %v3789
        %v3810 = vadd.f32 %v3770, %v3791
        %v3811 = vadd.f32 %v3771, %v3793
        %v3812 = vadd.f32 %v3772, %v3795
        %v3813 = vadd.f32 %v3773, %v3797
        %v3814 = vstv %s383
        %v3815 = vadd.f32 %v3806, %v3814
        %v3816 = vadd.f32 %v3807, %v3814
        %v3817 = vadd.f32 %v3808, %v3814
        %v3818 = vadd.f32 %v3809, %v3814
        %v3819 = vadd.f32 %v3810, %v3814
        %v3820 = vadd.f32 %v3811, %v3814
        %v3821 = vadd.f32 %v3812, %v3814
        %v3822 = vadd.f32 %v3813, %v3814
        %v3823 = vsub.f32 0.0, %v3815
        %v3824 = vsub.f32 0.0, %v3816
        %v3825 = vsub.f32 0.0, %v3817
        %v3826 = vsub.f32 0.0, %v3818
        %v3827 = vsub.f32 0.0, %v3819
        %v3828 = vsub.f32 0.0, %v3820
        %v3829 = vsub.f32 0.0, %v3821
        %v3830 = vsub.f32 0.0, %v3822
        %v3831 = vmul.f32 %v3823, 1.442695
        %v3832 = vpow.pop %v3831
        %v3833 = vmul.f32 %v3824, 1.442695
        %v3834 = vpow.pop %v3833
        %v3835 = vmul.f32 %v3825, 1.442695
        %v3836 = vpow.pop %v3835
        %v3837 = vmul.f32 %v3826, 1.442695
        %v3838 = vpow.pop %v3837
        %v3839 = vmul.f32 %v3827, 1.442695
        %v3840 = vpow.pop %v3839
        %v3841 = vmul.f32 %v3828, 1.442695
        %v3842 = vpow.pop %v3841
        %v3843 = vmul.f32 %v3829, 1.442695
        %v3844 = vpow.pop %v3843
        %v3845 = vmul.f32 %v3830, 1.442695
        %v3846 = vpow.pop %v3845
        %v3847 = vadd.f32 %v3832, 1.0
        %v3848 = vadd.f32 %v3834, 1.0
        %v3849 = vadd.f32 %v3836, 1.0
        %v3850 = vadd.f32 %v3838, 1.0
        %v3851 = vadd.f32 %v3840, 1.0
        %v3852 = vadd.f32 %v3842, 1.0
        %v3853 = vadd.f32 %v3844, 1.0
        %v3854 = vadd.f32 %v3846, 1.0
        %v3855 = vrcp.pop %v3847
        %v3856 = vmul.f32 %v3847, %v3855
        %v3857 = vsub.f32 1.0, %v3856
        %v3858 = vmul.f32 %v3855, %v3857
        %v3859 = vadd.f32 %v3855, %v3858
        %vm3860 = vweird.f32 %v3847
        %vm3861 = vweird.f32 %v3855
        %vm3862 = vmor %vm3860, %vm3861
        %v3863 = vsel %vm3862, %v3855, %v3859
        %v3864 = vand.u32 2147483647, %v3847
        %vm3865 = vcmp.eq.f32.partialorder %v3864, 8.507059e+37
        %v3866 = vand.u32 %v3847, 2147483648
        %v3867 = vor.u32 1.1754944e-38, %v3866
        %v3868 = vsel %vm3865, %v3867, %v3863
        %v3869 = vmul.f32 1.0, %v3868
        %v3870 = vrcp.pop %v3848
        %v3871 = vmul.f32 %v3848, %v3870
        %v3872 = vsub.f32 1.0, %v3871
        %v3873 = vmul.f32 %v3870, %v3872
        %v3874 = vadd.f32 %v3870, %v3873
        %vm3875 = vweird.f32 %v3848
        %vm3876 = vweird.f32 %v3870
        %vm3877 = vmor %vm3875, %vm3876
        %v3878 = vsel %vm3877, %v3870, %v3874
        %v3879 = vand.u32 2147483647, %v3848
        %vm3880 = vcmp.eq.f32.partialorder %v3879, 8.507059e+37
        %v3881 = vand.u32 %v3848, 2147483648
        %v3882 = vor.u32 1.1754944e-38, %v3881
        %v3883 = vsel %vm3880, %v3882, %v3878
        %v3884 = vmul.f32 1.0, %v3883
        %v3885 = vrcp.pop %v3849
        %v3886 = vmul.f32 %v3849, %v3885
        %v3887 = vsub.f32 1.0, %v3886
        %v3888 = vmul.f32 %v3885, %v3887
        %v3889 = vadd.f32 %v3885, %v3888
        %vm3890 = vweird.f32 %v3849
        %vm3891 = vweird.f32 %v3885
        %vm3892 = vmor %vm3890, %vm3891
        %v3893 = vsel %vm3892, %v3885, %v3889
        %v3894 = vand.u32 2147483647, %v3849
        %vm3895 = vcmp.eq.f32.partialorder %v3894, 8.507059e+37
        %v3896 = vand.u32 %v3849, 2147483648
        %v3897 = vor.u32 1.1754944e-38, %v3896
        %v3898 = vsel %vm3895, %v3897, %v3893
        %v3899 = vmul.f32 1.0, %v3898
        %v3900 = vrcp.pop %v3850
        %v3901 = vmul.f32 %v3850, %v3900
        %v3902 = vsub.f32 1.0, %v3901
        %v3903 = vmul.f32 %v3900, %v3902
        %v3904 = vadd.f32 %v3900, %v3903
        %vm3905 = vweird.f32 %v3850
        %vm3906 = vweird.f32 %v3900
        %vm3907 = vmor %vm3905, %vm3906
        %v3908 = vsel %vm3907, %v3900, %v3904
        %v3909 = vand.u32 2147483647, %v3850
        %vm3910 = vcmp.eq.f32.partialorder %v3909, 8.507059e+37
        %v3911 = vand.u32 %v3850, 2147483648
        %v3912 = vor.u32 1.1754944e-38, %v3911
        %v3913 = vsel %vm3910, %v3912, %v3908
        %v3914 = vmul.f32 1.0, %v3913
        %v3915 = vrcp.pop %v3851
        %v3916 = vmul.f32 %v3851, %v3915
        %v3917 = vsub.f32 1.0, %v3916
        %v3918 = vmul.f32 %v3915, %v3917
        %v3919 = vadd.f32 %v3915, %v3918
        %vm3920 = vweird.f32 %v3851
        %vm3921 = vweird.f32 %v3915
        %vm3922 = vmor %vm3920, %vm3921
        %v3923 = vsel %vm3922, %v3915, %v3919
        %v3924 = vand.u32 2147483647, %v3851
        %vm3925 = vcmp.eq.f32.partialorder %v3924, 8.507059e+37
        %v3926 = vand.u32 %v3851, 2147483648
        %v3927 = vor.u32 1.1754944e-38, %v3926
        %v3928 = vsel %vm3925, %v3927, %v3923
        %v3929 = vmul.f32 1.0, %v3928
        %v3930 = vrcp.pop %v3852
        %v3931 = vmul.f32 %v3852, %v3930
        %v3932 = vsub.f32 1.0, %v3931
        %v3933 = vmul.f32 %v3930, %v3932
        %v3934 = vadd.f32 %v3930, %v3933
        %vm3935 = vweird.f32 %v3852
        %vm3936 = vweird.f32 %v3930
        %vm3937 = vmor %vm3935, %vm3936
        %v3938 = vsel %vm3937, %v3930, %v3934
        %v3939 = vand.u32 2147483647, %v3852
        %vm3940 = vcmp.eq.f32.partialorder %v3939, 8.507059e+37
        %v3941 = vand.u32 %v3852, 2147483648
        %v3942 = vor.u32 1.1754944e-38, %v3941
        %v3943 = vsel %vm3940, %v3942, %v3938
        %v3944 = vmul.f32 1.0, %v3943
        %v3945 = vrcp.pop %v3853
        %v3946 = vmul.f32 %v3853, %v3945
        %v3947 = vsub.f32 1.0, %v3946
        %v3948 = vmul.f32 %v3945, %v3947
        %v3949 = vadd.f32 %v3945, %v3948
        %vm3950 = vweird.f32 %v3853
        %vm3951 = vweird.f32 %v3945
        %vm3952 = vmor %vm3950, %vm3951
        %v3953 = vsel %vm3952, %v3945, %v3949
        %v3954 = vand.u32 2147483647, %v3853
        %vm3955 = vcmp.eq.f32.partialorder %v3954, 8.507059e+37
        %v3956 = vand.u32 %v3853, 2147483648
        %v3957 = vor.u32 1.1754944e-38, %v3956
        %v3958 = vsel %vm3955, %v3957, %v3953
        %v3959 = vmul.f32 1.0, %v3958
        %v3960 = vrcp.pop %v3854
        %v3961 = vmul.f32 %v3854, %v3960
        %v3962 = vsub.f32 1.0, %v3961
        %v3963 = vmul.f32 %v3960, %v3962
        %v3964 = vadd.f32 %v3960, %v3963
        %vm3965 = vweird.f32 %v3854
        %vm3966 = vweird.f32 %v3960
        %vm3967 = vmor %vm3965, %vm3966
        %v3968 = vsel %vm3967, %v3960, %v3964
        %v3969 = vand.u32 2147483647, %v3854
        %vm3970 = vcmp.eq.f32.partialorder %v3969, 8.507059e+37
        %v3971 = vand.u32 %v3854, 2147483648
        %v3972 = vor.u32 1.1754944e-38, %v3971
        %v3973 = vsel %vm3970, %v3972, %v3968
        %v3974 = vmul.f32 1.0, %v3973
        %v3975 = vpack.c.bf16 %v361, %v360
        %v3976 = vpack.c.bf16 %v363, %v362
        %v3977 = vpack.c.bf16 %v365, %v364
        %v3978 = vpack.c.bf16 %v367, %v366
        %v3980 = vsel %vm384, %v3975, 0
        %v3983 = vsel %vm384, %v3976, 0
        %v3986 = vsel %vm384, %v3977, 0
        %v3989 = vsel %vm384, %v3978, 0
        %3991 = vmatpush.bf16.msra.mxu0 0
        %3992 = vmatpush.bf16.msra.mxu0 0
        %3993 = vmatpush.bf16.msra.mxu0 0
        %3994 = vmatpush.bf16.msra.mxu0 0
        %3995 = vmatpush.bf16.msra.mxu0 %v3978
        %3996 = vmatpush.bf16.msra.mxu0 %v3977
        %3997 = vmatpush.bf16.msra.mxu0 %v3976
        %3998 = vmatpush.bf16.msra.mxu0 %v3975
        %3999 = vmatmul.bf16.gmra.mxu0 %v3980
        %v4000 = vpop.f32.mrf.mxu0
        %v4001 = vadd.f32 0.0, %v4000
        %v4002 = vpop.f32.mrf.mxu0
        %v4003 = vadd.f32 0.0, %v4002
        %4004 = vmatmul.bf16.gmra.mxu0 %v3983
        %v4005 = vpop.f32.mrf.mxu0
        %v4006 = vadd.f32 0.0, %v4005
        %v4007 = vpop.f32.mrf.mxu0
        %v4008 = vadd.f32 0.0, %v4007
        %4009 = vmatmul.bf16.gmra.mxu0 %v3986
        %v4010 = vpop.f32.mrf.mxu0
        %v4011 = vadd.f32 0.0, %v4010
        %v4012 = vpop.f32.mrf.mxu0
        %v4013 = vadd.f32 0.0, %v4012
        %4014 = vmatmul.bf16.gmra.mxu0 %v3989
        %v4015 = vpop.f32.mrf.mxu0
        %v4016 = vadd.f32 0.0, %v4015
        %v4017 = vpop.f32.mrf.mxu0
        %v4018 = vadd.f32 0.0, %v4017
        %4019 = vdwg.mxu0
        %v4020 = vpack.c.bf16 %v4003, %v4001
        %v4021 = vpack.c.bf16 %v4008, %v4006
        %v4022 = vpack.c.bf16 %v4013, %v4011
        %v4023 = vpack.c.bf16 %v4018, %v4016
        %v4025 = vsel %vm384, %v4020, 0
        %v4028 = vsel %vm384, %v4021, 0
        %v4031 = vsel %vm384, %v4022, 0
        %v4034 = vsel %vm384, %v4023, 0
        %4036 = vmatpush.bf16.msra.mxu0 0
        %4037 = vmatpush.bf16.msra.mxu0 0
        %4038 = vmatpush.bf16.msra.mxu0 0
        %4039 = vmatpush.bf16.msra.mxu0 0
        %4040 = vmatpush.bf16.msra.mxu0 %v3978
        %4041 = vmatpush.bf16.msra.mxu0 %v3977
        %4042 = vmatpush.bf16.msra.mxu0 %v3976
        %4043 = vmatpush.bf16.msra.mxu0 %v3975
        %4044 = vmatmul.bf16.gmra.mxu0 %v4025
        %v4045 = vpop.f32.mrf.mxu0
        %v4046 = vadd.f32 0.0, %v4045
        %v4047 = vpop.f32.mrf.mxu0
        %v4048 = vadd.f32 0.0, %v4047
        %4049 = vmatmul.bf16.gmra.mxu0 %v4028
        %v4050 = vpop.f32.mrf.mxu0
        %v4051 = vadd.f32 0.0, %v4050
        %v4052 = vpop.f32.mrf.mxu0
        %v4053 = vadd.f32 0.0, %v4052
        %4054 = vmatmul.bf16.gmra.mxu0 %v4031
        %v4055 = vpop.f32.mrf.mxu0
        %v4056 = vadd.f32 0.0, %v4055
        %v4057 = vpop.f32.mrf.mxu0
        %v4058 = vadd.f32 0.0, %v4057
        %4059 = vmatmul.bf16.gmra.mxu0 %v4034
        %v4060 = vpop.f32.mrf.mxu0
        %v4061 = vadd.f32 0.0, %v4060
        %v4062 = vpop.f32.mrf.mxu0
        %v4063 = vadd.f32 0.0, %v4062
        %4064 = vdwg.mxu0
        %vm4065 = vcmp.gt.f32.partialorder %v4046, 0.0
        %vm4066 = vcmp.gt.f32.partialorder %v4048, 0.0
        %vm4067 = vcmp.gt.f32.partialorder %v4051, 0.0
        %vm4068 = vcmp.gt.f32.partialorder %v4053, 0.0
        %vm4069 = vcmp.gt.f32.partialorder %v4056, 0.0
        %vm4070 = vcmp.gt.f32.partialorder %v4058, 0.0
        %vm4071 = vcmp.gt.f32.partialorder %v4061, 0.0
        %vm4072 = vcmp.gt.f32.partialorder %v4063, 0.0
        %v4073 = vsel %vm4065, 1, 0
        %v4074 = vsel %vm4066, 1, 0
        %v4075 = vsel %vm4067, 1, 0
        %v4076 = vsel %vm4068, 1, 0
        %v4077 = vsel %vm4069, 1, 0
        %v4078 = vsel %vm4070, 1, 0
        %v4079 = vsel %vm4071, 1, 0
        %v4080 = vsel %vm4072, 1, 0
        %v4081 = vcvt.s32.f32 %v4073
        %v4082 = vcvt.s32.f32 %v4074
        %v4083 = vcvt.s32.f32 %v4075
        %v4084 = vcvt.s32.f32 %v4076
        %v4085 = vcvt.s32.f32 %v4077
        %v4086 = vcvt.s32.f32 %v4078
        %v4087 = vcvt.s32.f32 %v4079
        %v4088 = vcvt.s32.f32 %v4080
        %4097 = vrot.lane.b32.xlu0 %v3869, 32
        %v4098 = vpop.permute.xlu0 %4097
        %4099 = vrot.lane.b32.xlu0 %v3884, 32
        %v4100 = vpop.permute.xlu0 %4099
        %4101 = vrot.lane.b32.xlu0 %v3899, 32
        %v4102 = vpop.permute.xlu0 %4101
        %4103 = vrot.lane.b32.xlu0 %v3914, 32
        %v4104 = vpop.permute.xlu0 %4103
        %4105 = vrot.lane.b32.xlu0 %v3929, 32
        %v4106 = vpop.permute.xlu0 %4105
        %4107 = vrot.lane.b32.xlu0 %v3944, 32
        %v4108 = vpop.permute.xlu0 %4107
        %4109 = vrot.lane.b32.xlu0 %v3959, 32
        %v4110 = vpop.permute.xlu0 %4109
        %4111 = vrot.lane.b32.xlu0 %v3974, 32
        %v4112 = vpop.permute.xlu0 %4111
        %4129 = vrot.lane.b32.xlu0 %v4081, 64
        %v4130 = vpop.permute.xlu0 %4129
        %4131 = vrot.lane.b32.xlu0 %v4082, 64
        %v4132 = vpop.permute.xlu0 %4131
        %4133 = vrot.lane.b32.xlu0 %v4083, 64
        %v4134 = vpop.permute.xlu0 %4133
        %4135 = vrot.lane.b32.xlu0 %v4084, 64
        %v4136 = vpop.permute.xlu0 %4135
        %4137 = vrot.lane.b32.xlu0 %v4085, 64
        %v4138 = vpop.permute.xlu0 %4137
        %4139 = vrot.lane.b32.xlu0 %v4086, 64
        %v4140 = vpop.permute.xlu0 %4139
        %4141 = vrot.lane.b32.xlu0 %v4087, 64
        %v4142 = vpop.permute.xlu0 %4141
        %4143 = vrot.lane.b32.xlu0 %v4088, 64
        %v4144 = vpop.permute.xlu0 %4143
        %v4153 = vsel %vm268, %v3552, %v4098
        %v4154 = vsel %vm268, %v3555, %v4100
        %v4155 = vsel %vm268, %v3558, %v4102
        %v4156 = vsel %vm268, %v3561, %v4104
        %v4157 = vsel %vm268, %v3564, %v4106
        %v4158 = vsel %vm268, %v3567, %v4108
        %v4159 = vsel %vm268, %v3570, %v4110
        %v4160 = vsel %vm268, %v3573, %v4112
        %vm4161 = vcmask 269312
        %v4162 = vsel %vm4161, %v4153, 0.0
        %v4163 = vsel %vm4161, %v4154, 0.0
        %v4164 = vsel %vm4161, %v4155, 0.0
        %v4165 = vsel %vm4161, %v4156, 0.0
        %v4166 = vsel %vm4161, %v4157, 0.0
        %v4167 = vsel %vm4161, %v4158, 0.0
        %v4168 = vsel %vm4161, %v4159, 0.0
        %v4169 = vsel %vm4161, %v4160, 0.0
        %v4170 = vsel %vm384, %v4162, %v4130
        %v4171 = vsel %vm384, %v4163, %v4132
        %v4172 = vsel %vm384, %v4164, %v4134
        %v4173 = vsel %vm384, %v4165, %v4136
        %v4174 = vsel %vm384, %v4166, %v4138
        %v4175 = vsel %vm384, %v4167, %v4140
        %v4176 = vsel %vm384, %v4168, %v4142
        %v4177 = vsel %vm384, %v4169, %v4144
        %v4178 = vsel %vm384, %v316, 0.0
        %v4179 = vperm.slane %v4178, 0
        %4180 = vst [vmem:[%s258] sm:$0xff] %v4170
        %4181 = vst [vmem:[%s258 + $0x8] sm:$0xff] %v4171
        %4182 = vst [vmem:[%s258 + $0x10] sm:$0xff] %v4172
        %4183 = vst [vmem:[%s258 + $0x18] sm:$0xff] %v4173
        %4184 = vst [vmem:[%s258 + $0x20] sm:$0xff] %v4174
        %4185 = vst [vmem:[%s258 + $0x28] sm:$0xff] %v4175
        %4186 = vst [vmem:[%s258 + $0x30] sm:$0xff] %v4176
        %4187 = vst [vmem:[%s258 + $0x38] sm:$0xff] %v4177
        %4188 = vst [vmem:[%s258 + $0x40] sm:$0xff] %v4179
        %p4189 = scmp.lt.s32.totalorder %s17, 1
        %s4190 = scalar_select %p4189, %s17, 1
        %s4191 = smul.addr %s4190, 9
        %s4192 = smul.addr %s4191, 8
        %s4193 = scalar_lea.vmem %s5, %s4192
        // Predicated region
        $region45: #{mol_aggregator_forward.3} parent=39 // pred_check
          %p4194 = pneg %p150
        $region46: #{mol_aggregator_forward.3} parent=39 // pred_check_branch
          %4196 = sbr.rel (%p4194) target = $region48
        $region47: #{mol_aggregator_forward.3} parent=39 // pred_region
          _
        $region48: #{mol_aggregator_forward.3} parent=39 // pred_fallthru
          _
      $region40: #{mol_aggregator_forward.3} parent=5 // pred_fallthru
        _
      %p4197 = scmp.le.s32.totalorder 2, %s12
      // Predicated region
      $region49: #{mol_aggregator_forward.3} parent=5 // pred_check
        %p4198 = pneg %p4197
      $region50: #{mol_aggregator_forward.3} parent=5 // pred_check_branch
        %4200 = sbr.rel (%p4198) target = $region52
      $region51: #{mol_aggregator_forward.3} parent=5 // pred_region
        %s4201 = ssub.s32 %s12, 2
        // Predicated region
        $region53: #{mol_aggregator_forward.3} parent=51 // pred_check
          %p4202 = pneg %p156
        $region54: #{mol_aggregator_forward.3} parent=51 // pred_check_branch
          %4204 = sbr.rel (%p4202) target = $region56
        $region55: #{mol_aggregator_forward.3} parent=51 // pred_region
          %p4205 = scmp.lt.s32.totalorder %s18, 1
          %s4206 = scalar_select %p4205, %s18, 1
          %s4207 = smul.addr %s4206, 9
          %s4208 = smul.addr %s4207, 8
          %s4209 = scalar_lea.vmem %s5, %s4208
        $region56: #{mol_aggregator_forward.3} parent=51 // pred_fallthru
          _
      $region52: #{mol_aggregator_forward.3} parent=5 // pred_fallthru
        _
    $region6: #{mol_aggregator_forward.3} parent=1 // loop_footer
      %s16 = sadd.s32 1, %s12
    $region7: #{mol_aggregator_forward.3} parent=1 // loop_footer_branch
      %11 = sbr.rel target = $region3
    $region8: #{mol_aggregator_forward.3} parent=1 // loop_exit
      _
    %4210 = vsyncpa [#allocation3], 1
    %s4211 = scalar_lea.sflag [#allocation3], 1
    %4212 = vsyncpa %s4211, 1

// kernel: mol_aggregator_forward.4
$region0: #{mol_aggregator_forward.4}
  #allocation0 [shape = 'u32[]', space=smem, size = 0x4, offset = 0x4, fixed_abs, tag = 'smem constant byte address 0x4 - core index']
  #allocation1 [shape = 'u32[72,128]{1,0:T(1,128)}', space=vmem, size = 0x9000, scoped, tag = 'internal scratch']
  %s0 = inlined_call_operand.vmem [shape: f32[2,72,128], index: 0, kind: input, shape index: {}]
  %s1 = inlined_call_operand.vmem [shape: f32[2,64,32], index: 1, kind: input, shape index: {}]
  %s2 = inlined_call_operand.vmem [shape: f32[2,32,64], index: 2, kind: input, shape index: {}]
  %s3 = inlined_call_operand.vmem [shape: f32[32,32], index: 3, kind: input, shape index: {}]
  %s4 = inlined_call_operand.vmem [shape: f32[72,32], index: 4, kind: input, shape index: {}]
  %s5 = inlined_call_operand.vmem [shape: f32[32,8], index: 5, kind: input, shape index: {}]
  %s6 = inlined_call_operand.vmem [shape: f32[4], index: 6, kind: input, shape index: {}]
  %s7 = inlined_call_operand.vmem [shape: f32[2,40,128], index: 7, kind: output, shape index: {}]
  %s8 = sld [smem:[#allocation0]]
  $region65: #{mol_aggregator_forward.4} parent=0
    _
  %s10 = ssub.s32 1, %s8
  %s11 = scalar_select 0, %s10, %s8
  $region1: #{mol_aggregator_forward.4} parent=0
    #allocation2 [shape = 'u8[512]{0}', space=smem, size = 0x200, scoped, tag = 'input window, operand 6, single buffered']
    #allocation3 [shape = 's32[2]{0}', space=sflag, size = 0x8, scoped, tag = 'scoped memory for mol_aggregator_forward.4']
    %12 = vsyncpa [#allocation3], 0
    loop: start=0, step=1, limit=4
    $region2: #{mol_aggregator_forward.4} parent=1 // loop_pre_header
      _
    $region3: #{mol_aggregator_forward.4} parent=1 // loop_header
      %s14 = sphi 0, %s18
      %p15 = scmp.ge.s32.totalorder %s14, 4
      %s24 = sphi 0, %s26
      %s27 = sphi 0, %s24
      %s28 = sphi 0, %s27
      %s44 = sphi 0, %s28
      %s50 = sphi 0, %s52
      %s53 = sphi 0, %s50
      %s54 = sphi 0, %s53
      %s70 = sphi 0, %s54
      %s76 = sphi 0, %s78
      %s79 = sphi 0, %s76
      %s80 = sphi 0, %s79
      %s96 = sphi 0, %s80
      %s100 = sphi 0, %s100
      %s102 = sphi 0, %s100
      %s103 = sphi 0, %s102
      %s117 = sphi 0, %s103
      %s121 = sphi 0, %s121
      %s123 = sphi 0, %s121
      %s124 = sphi 0, %s123
      %s138 = sphi 0, %s124
      %s142 = sphi 0, %s142
      %s144 = sphi 0, %s142
      %s145 = sphi 0, %s144
      %s159 = sphi 0, %s145
      %s163 = sphi 0, %s163
      %s165 = sphi 0, %s163
      %s166 = sphi 0, %s165
      %s180 = sphi 0, %s166
      %s186 = sphi 0, %s188
      %s189 = sphi 0, %s186
      %s190 = sphi 0, %s189
      %s206 = sphi 0, %s190
    $region4: #{mol_aggregator_forward.4} parent=1 // loop_header_branch
      %17 = sbr.rel (%p15) target = $region8
    $region5: #{mol_aggregator_forward.4} parent=1 // loop_body
      %s19 = ssub.s32 %s14, 1
      %s20 = ssub.s32 %s14, 2
      %s21 = sadd.s32 %s14, 1
      %s22 = ssub.s32 %s14, %s21
      %p23 = scmp.eq.s32.totalorder %s22, 0
      %s25 = sadd.s32 %s24, 1
      %s26 = scalar_select %p23, %s24, %s25
      %p29 = pneg %p23
      %p30 = scmp.eq.s32.totalorder %s14, 1
      %p31 = por %p29, %p30
      %p32 = scmp.ne.s32.totalorder %s24, %s27
      %p33 = scmp.eq.s32.totalorder %s14, 0
      %p34 = por %p32, %p33
      %p35 = scmp.ne.s32.totalorder %s24, %s27
      %p36 = scmp.eq.s32.totalorder %s19, 1
      %p37 = por %p35, %p36
      %p38 = scmp.ne.s32.totalorder %s27, %s28
      %p39 = scmp.eq.s32.totalorder %s19, 0
      %p40 = por %p38, %p39
      %p41 = scmp.ne.s32.totalorder %s27, %s28
      %p42 = scmp.eq.s32.totalorder %s20, 1
      %p43 = por %p41, %p42
      %p45 = scmp.ne.s32.totalorder %s28, %s44
      %p46 = scmp.eq.s32.totalorder %s20, 0
      %p47 = por %p45, %p46
      %s48 = ssub.s32 %s14, %s21
      %p49 = scmp.eq.s32.totalorder %s48, 0
      %s51 = sadd.s32 %s50, 1
      %s52 = scalar_select %p49, %s50, %s51
      %p55 = pneg %p49
      %p56 = scmp.eq.s32.totalorder %s14, 1
      %p57 = por %p55, %p56
      %p58 = scmp.ne.s32.totalorder %s50, %s53
      %p59 = scmp.eq.s32.totalorder %s14, 0
      %p60 = por %p58, %p59
      %p61 = scmp.ne.s32.totalorder %s50, %s53
      %p62 = scmp.eq.s32.totalorder %s19, 1
      %p63 = por %p61, %p62
      %p64 = scmp.ne.s32.totalorder %s53, %s54
      %p65 = scmp.eq.s32.totalorder %s19, 0
      %p66 = por %p64, %p65
      %p67 = scmp.ne.s32.totalorder %s53, %s54
      %p68 = scmp.eq.s32.totalorder %s20, 1
      %p69 = por %p67, %p68
      %p71 = scmp.ne.s32.totalorder %s54, %s70
      %p72 = scmp.eq.s32.totalorder %s20, 0
      %p73 = por %p71, %p72
      %s74 = ssub.s32 %s14, %s21
      %p75 = scmp.eq.s32.totalorder %s74, 0
      %s77 = sadd.s32 %s76, 1
      %s78 = scalar_select %p75, %s76, %s77
      %p81 = pneg %p75
      %p82 = scmp.eq.s32.totalorder %s14, 1
      %p83 = por %p81, %p82
      %p84 = scmp.ne.s32.totalorder %s76, %s79
      %p85 = scmp.eq.s32.totalorder %s14, 0
      %p86 = por %p84, %p85
      %p87 = scmp.ne.s32.totalorder %s76, %s79
      %p88 = scmp.eq.s32.totalorder %s19, 1
      %p89 = por %p87, %p88
      %p90 = scmp.ne.s32.totalorder %s79, %s80
      %p91 = scmp.eq.s32.totalorder %s19, 0
      %p92 = por %p90, %p91
      %p93 = scmp.ne.s32.totalorder %s79, %s80
      %p94 = scmp.eq.s32.totalorder %s20, 1
      %p95 = por %p93, %p94
      %p97 = scmp.ne.s32.totalorder %s80, %s96
      %p98 = scmp.eq.s32.totalorder %s20, 0
      %p99 = por %p97, %p98
      %s101 = sadd.s32 %s100, 1
      %p104 = scmp.eq.s32.totalorder %s14, 1
      %p105 = scmp.ne.s32.totalorder %s100, %s102
      %p106 = scmp.eq.s32.totalorder %s14, 0
      %p107 = por %p105, %p106
      %p108 = scmp.ne.s32.totalorder %s100, %s102
      %p109 = scmp.eq.s32.totalorder %s19, 1
      %p110 = por %p108, %p109
      %p111 = scmp.ne.s32.totalorder %s102, %s103
      %p112 = scmp.eq.s32.totalorder %s19, 0
      %p113 = por %p111, %p112
      %p114 = scmp.ne.s32.totalorder %s102, %s103
      %p115 = scmp.eq.s32.totalorder %s20, 1
      %p116 = por %p114, %p115
      %p118 = scmp.ne.s32.totalorder %s103, %s117
      %p119 = scmp.eq.s32.totalorder %s20, 0
      %p120 = por %p118, %p119
      %s122 = sadd.s32 %s121, 1
      %p125 = scmp.eq.s32.totalorder %s14, 1
      %p126 = scmp.ne.s32.totalorder %s121, %s123
      %p127 = scmp.eq.s32.totalorder %s14, 0
      %p128 = por %p126, %p127
      %p129 = scmp.ne.s32.totalorder %s121, %s123
      %p130 = scmp.eq.s32.totalorder %s19, 1
      %p131 = por %p129, %p130
      %p132 = scmp.ne.s32.totalorder %s123, %s124
      %p133 = scmp.eq.s32.totalorder %s19, 0
      %p134 = por %p132, %p133
      %p135 = scmp.ne.s32.totalorder %s123, %s124
      %p136 = scmp.eq.s32.totalorder %s20, 1
      %p137 = por %p135, %p136
      %p139 = scmp.ne.s32.totalorder %s124, %s138
      %p140 = scmp.eq.s32.totalorder %s20, 0
      %p141 = por %p139, %p140
      %s143 = sadd.s32 %s142, 1
      %p146 = scmp.eq.s32.totalorder %s14, 1
      %p147 = scmp.ne.s32.totalorder %s142, %s144
      %p148 = scmp.eq.s32.totalorder %s14, 0
      %p149 = por %p147, %p148
      %p150 = scmp.ne.s32.totalorder %s142, %s144
      %p151 = scmp.eq.s32.totalorder %s19, 1
      %p152 = por %p150, %p151
      %p153 = scmp.ne.s32.totalorder %s144, %s145
      %p154 = scmp.eq.s32.totalorder %s19, 0
      %p155 = por %p153, %p154
      %p156 = scmp.ne.s32.totalorder %s144, %s145
      %p157 = scmp.eq.s32.totalorder %s20, 1
      %p158 = por %p156, %p157
      %p160 = scmp.ne.s32.totalorder %s145, %s159
      %p161 = scmp.eq.s32.totalorder %s20, 0
      %p162 = por %p160, %p161
      %s164 = sadd.s32 %s163, 1
      %p167 = scmp.eq.s32.totalorder %s14, 1
      %p168 = scmp.ne.s32.totalorder %s163, %s165
      %p169 = scmp.eq.s32.totalorder %s14, 0
      %p170 = por %p168, %p169
      %p171 = scmp.ne.s32.totalorder %s163, %s165
      %p172 = scmp.eq.s32.totalorder %s19, 1
      %p173 = por %p171, %p172
      %p174 = scmp.ne.s32.totalorder %s165, %s166
      %p175 = scmp.eq.s32.totalorder %s19, 0
      %p176 = por %p174, %p175
      %p177 = scmp.ne.s32.totalorder %s165, %s166
      %p178 = scmp.eq.s32.totalorder %s20, 1
      %p179 = por %p177, %p178
      %p181 = scmp.ne.s32.totalorder %s166, %s180
      %p182 = scmp.eq.s32.totalorder %s20, 0
      %p183 = por %p181, %p182
      %s184 = ssub.s32 %s14, %s21
      %p185 = scmp.eq.s32.totalorder %s184, 0
      %s187 = sadd.s32 %s186, 1
      %s188 = scalar_select %p185, %s186, %s187
      %p191 = pneg %p185
      %p192 = scmp.eq.s32.totalorder %s14, 1
      %p193 = por %p191, %p192
      %p194 = scmp.ne.s32.totalorder %s186, %s189
      %p195 = scmp.eq.s32.totalorder %s14, 0
      %p196 = por %p194, %p195
      %p197 = scmp.ne.s32.totalorder %s186, %s189
      %p198 = scmp.eq.s32.totalorder %s19, 1
      %p199 = por %p197, %p198
      %p200 = scmp.ne.s32.totalorder %s189, %s190
      %p201 = scmp.eq.s32.totalorder %s19, 0
      %p202 = por %p200, %p201
      %p203 = scmp.ne.s32.totalorder %s189, %s190
      %p204 = scmp.eq.s32.totalorder %s20, 1
      %p205 = por %p203, %p204
      %p207 = scmp.ne.s32.totalorder %s190, %s206
      %p208 = scmp.eq.s32.totalorder %s20, 0
      %p209 = por %p207, %p208
      %p210 = scmp.le.s32.totalorder 1, %s14
      %p211 = scmp.lt.s32.totalorder %s14, 3
      %p212 = pnand %p210, %p211
      %p213 = pneg %p212
      // Predicated region
      $region9: #{mol_aggregator_forward.4} parent=5 // pred_check
        _
      $region10: #{mol_aggregator_forward.4} parent=5 // pred_check_branch
        %215 = sbr.rel (%p212) target = $region12
      $region11: #{mol_aggregator_forward.4} parent=5 // pred_region
        %s216 = ssub.s32 %s14, 1
        // Predicated region
        $region13: #{mol_aggregator_forward.4} parent=11 // pred_check
          %p217 = pneg %p113
        $region14: #{mol_aggregator_forward.4} parent=11 // pred_check_branch
          %219 = sbr.rel (%p217) target = $region16
        $region15: #{mol_aggregator_forward.4} parent=11 // pred_region
          _
        $region16: #{mol_aggregator_forward.4} parent=11 // pred_fallthru
          _
        // Predicated region
        $region17: #{mol_aggregator_forward.4} parent=11 // pred_check
          %p220 = pneg %p134
        $region18: #{mol_aggregator_forward.4} parent=11 // pred_check_branch
          %222 = sbr.rel (%p220) target = $region20
        $region19: #{mol_aggregator_forward.4} parent=11 // pred_region
          _
        $region20: #{mol_aggregator_forward.4} parent=11 // pred_fallthru
          _
        // Predicated region
        $region21: #{mol_aggregator_forward.4} parent=11 // pred_check
          %p223 = pneg %p155
        $region22: #{mol_aggregator_forward.4} parent=11 // pred_check_branch
          %225 = sbr.rel (%p223) target = $region24
        $region23: #{mol_aggregator_forward.4} parent=11 // pred_region
          _
        $region24: #{mol_aggregator_forward.4} parent=11 // pred_fallthru
          _
        // Predicated region
        $region25: #{mol_aggregator_forward.4} parent=11 // pred_check
          %p226 = pneg %p176
        $region26: #{mol_aggregator_forward.4} parent=11 // pred_check_branch
          %228 = sbr.rel (%p226) target = $region28
        $region27: #{mol_aggregator_forward.4} parent=11 // pred_region
          %230 = vsyncadd [#allocation3], 0
          %s232 = sshll.u32 %s6, 4
          %s233 = int_to_ptr.vmem [resolvable:$true] %s232
          %235 = dma.vmem_to_smem %s233, 16, [#allocation2], [#allocation3]
        $region28: #{mol_aggregator_forward.4} parent=11 // pred_fallthru
          _
      $region12: #{mol_aggregator_forward.4} parent=5 // pred_fallthru
        _
      %p236 = scmp.lt.s32.totalorder %s14, 2
      // Predicated region
      $region29: #{mol_aggregator_forward.4} parent=5 // pred_check
        %p237 = pneg %p236
      $region30: #{mol_aggregator_forward.4} parent=5 // pred_check_branch
        %239 = sbr.rel (%p237) target = $region32
      $region31: #{mol_aggregator_forward.4} parent=5 // pred_region
        // Predicated region
        $region33: #{mol_aggregator_forward.4} parent=31 // pred_check
          %p240 = pneg %p34
        $region34: #{mol_aggregator_forward.4} parent=31 // pred_check_branch
          %242 = sbr.rel (%p240) target = $region36
        $region35: #{mol_aggregator_forward.4} parent=31 // pred_region
          %p243 = scmp.lt.s32.totalorder %s14, 1
          %s244 = scalar_select %p243, %s14, 1
          %s245 = smul.addr %s244, 9
          %s246 = smul.addr %s245, 8
          %s247 = scalar_lea.vmem %s0, %s246
        $region36: #{mol_aggregator_forward.4} parent=31 // pred_fallthru
          _
        // Predicated region
        $region37: #{mol_aggregator_forward.4} parent=31 // pred_check
          %p248 = pneg %p60
        $region38: #{mol_aggregator_forward.4} parent=31 // pred_check_branch
          %250 = sbr.rel (%p248) target = $region40
        $region39: #{mol_aggregator_forward.4} parent=31 // pred_region
          %p251 = scmp.lt.s32.totalorder %s14, 1
          %s252 = scalar_select %p251, %s14, 1
          %s253 = smul.addr %s252, 8
          %s254 = smul.addr %s253, 8
          %s255 = scalar_lea.vmem %s1, %s254
        $region40: #{mol_aggregator_forward.4} parent=31 // pred_fallthru
          _
        // Predicated region
        $region41: #{mol_aggregator_forward.4} parent=31 // pred_check
          %p256 = pneg %p86
        $region42: #{mol_aggregator_forward.4} parent=31 // pred_check_branch
          %258 = sbr.rel (%p256) target = $region44
        $region43: #{mol_aggregator_forward.4} parent=31 // pred_region
          %p259 = scmp.lt.s32.totalorder %s14, 1
          %s260 = scalar_select %p259, %s14, 1
          %s261 = smul.addr %s260, 4
          %s262 = smul.addr %s261, 8
          %s263 = scalar_lea.vmem %s2, %s262
        $region44: #{mol_aggregator_forward.4} parent=31 // pred_fallthru
          _
      $region32: #{mol_aggregator_forward.4} parent=5 // pred_fallthru
        _
      %p264 = scmp.le.s32.totalorder 1, %s14
      %p265 = scmp.lt.s32.totalorder %s14, 3
      %p266 = pnand %p264, %p265
      %p267 = pneg %p266
      // Predicated region
      $region45: #{mol_aggregator_forward.4} parent=5 // pred_check
        _
      $region46: #{mol_aggregator_forward.4} parent=5 // pred_check_branch
        %269 = sbr.rel (%p266) target = $region48
      $region47: #{mol_aggregator_forward.4} parent=5 // pred_region
        %s270 = ssub.s32 %s14, 1
        // Predicated region
        $region49: #{mol_aggregator_forward.4} parent=47 // pred_check
          %p271 = pneg %p176
        $region50: #{mol_aggregator_forward.4} parent=47 // pred_check_branch
          %273 = sbr.rel (%p271) target = $region52
        $region51: #{mol_aggregator_forward.4} parent=47 // pred_region
          %275 = dma.done [#allocation3], 16
        $region52: #{mol_aggregator_forward.4} parent=47 // pred_fallthru
          _
        %276 = sfence
        %p277 = scmp.lt.s32.totalorder %s19, 1
        %s278 = scalar_select %p277, %s19, 1
        %s279 = smul.addr %s278, 9
        %s280 = smul.addr %s279, 8
        %s281 = scalar_lea.vmem %s0, %s280
        %p282 = pneg %p40
        %p283 = pneg %p37
        %p284 = scmp.lt.s32.totalorder %s19, 1
        %s285 = scalar_select %p284, %s19, 1
        %s286 = smul.addr %s285, 8
        %s287 = smul.addr %s286, 8
        %s288 = scalar_lea.vmem %s1, %s287
        %p289 = pneg %p66
        %p290 = pneg %p63
        %p291 = scmp.lt.s32.totalorder %s19, 1
        %s292 = scalar_select %p291, %s19, 1
        %s293 = smul.addr %s292, 4
        %s294 = smul.addr %s293, 8
        %s295 = scalar_lea.vmem %s2, %s294
        %p296 = pneg %p92
        %p297 = pneg %p89
        %p298 = pneg %p113
        %p299 = pneg %p110
        %p300 = pneg %p134
        %p301 = pneg %p131
        %p302 = pneg %p155
        %p303 = pneg %p152
        %p304 = pneg %p176
        %p305 = pneg %p173
        %p306 = pneg %p202
        %p307 = pneg %p199
        %p308 = scmp.lt.s32.totalorder %s19, 1
        %s309 = scalar_select %p308, %s19, 1
        %s310 = smul.addr %s309, 5
        %s311 = smul.addr %s310, 8
        %s312 = scalar_lea.vmem %s7, %s311
        %p313 = scmp.lt.s32.totalorder %s19, 1
        %s314 = scalar_select %p313, %s19, 1
        %s315 = smul.addr %s314, 9
        %s316 = smul.addr %s315, 8
        %s317 = scalar_lea.vmem %s0, %s316
        %p318 = scmp.lt.s32.totalorder %s19, 1
        %s319 = scalar_select %p318, %s19, 1
        %s320 = smul.addr %s319, 8
        %s321 = smul.addr %s320, 8
        %s322 = scalar_lea.vmem %s1, %s321
        %p323 = scmp.lt.s32.totalorder %s19, 1
        %s324 = scalar_select %p323, %s19, 1
        %s325 = smul.addr %s324, 4
        %s326 = smul.addr %s325, 8
        %s327 = scalar_lea.vmem %s2, %s326
        %p328 = scmp.lt.s32.totalorder %s19, 1
        %s329 = scalar_select %p328, %s19, 1
        %s330 = smul.addr %s329, 5
        %s331 = smul.addr %s330, 8
        %s332 = scalar_lea.vmem %s7, %s331
        %v334 = vld [vmem:[%s317] sm:$0xff]
        %v335 = vld [vmem:[%s317 + $0x8] sm:$0xff]
        %v336 = vld [vmem:[%s317 + $0x10] sm:$0xff]
        %v337 = vld [vmem:[%s317 + $0x18] sm:$0xff]
        %v338 = vld [vmem:[%s317 + $0x20] sm:$0xff]
        %v339 = vld [vmem:[%s317 + $0x28] sm:$0xff]
        %v340 = vld [vmem:[%s317 + $0x30] sm:$0xff]
        %v341 = vld [vmem:[%s317 + $0x38] sm:$0xff]
        %v342 = vld [vmem:[%s322] sm:$0xff]
        %v343 = vld [vmem:[%s322 + $0x8] sm:$0xff]
        %v344 = vld [vmem:[%s322 + $0x10] sm:$0xff]
        %v345 = vld [vmem:[%s322 + $0x18] sm:$0xff]
        %v346 = vld [vmem:[%s322 + $0x20] sm:$0xff]
        %v347 = vld [vmem:[%s322 + $0x28] sm:$0xff]
        %v348 = vld [vmem:[%s322 + $0x30] sm:$0xff]
        %v349 = vld [vmem:[%s322 + $0x38] sm:$0xff]
        %v350 = vld [vmem:[%s327] sm:$0xff]
        %v351 = vld [vmem:[%s327 + $0x8] sm:$0xff]
        %v352 = vld [vmem:[%s327 + $0x10] sm:$0xff]
        %v353 = vld [vmem:[%s327 + $0x18] sm:$0xff]
        %vm354 = vcmask 523264
        %v356 = vsel %vm354, %v350, 0
        %v359 = vsel %vm354, %v351, 0
        %v362 = vsel %vm354, %v352, 0
        %v365 = vsel %vm354, %v353, 0
        %367 = vmatpush.msra.mxu0 0.0
        %368 = vmatpush.msra.mxu0 0.0
        %369 = vmatpush.msra.mxu0 0.0
        %370 = vmatpush.msra.mxu0 0.0
        %371 = vmatpush.msra.mxu0 0.0
        %372 = vmatpush.msra.mxu0 0.0
        %373 = vmatpush.msra.mxu0 0.0
        %374 = vmatpush.msra.mxu0 0.0
        %375 = vmatpush.msra.mxu0 %v341
        %376 = vmatpush.msra.mxu0 %v340
        %377 = vmatpush.msra.mxu0 %v339
        %378 = vmatpush.msra.mxu0 %v338
        %379 = vmatpush.msra.mxu0 %v337
        %380 = vmatpush.msra.mxu0 %v336
        %381 = vmatpush.msra.mxu0 %v335
        %382 = vmatpush.msra.mxu0 %v334
        %383 = vmatmul.f32.gmra.mxu0 %v356
        %v384 = vpop.f32.mrf.mxu0
        %v385 = vadd.f32 0.0, %v384
        %386 = vmatmul.f32.gmra.mxu0 %v359
        %v387 = vpop.f32.mrf.mxu0
        %v388 = vadd.f32 0.0, %v387
        %389 = vmatmul.f32.gmra.mxu0 %v362
        %v390 = vpop.f32.mrf.mxu0
        %v391 = vadd.f32 0.0, %v390
        %392 = vmatmul.f32.gmra.mxu0 %v365
        %v393 = vpop.f32.mrf.mxu0
        %v394 = vadd.f32 0.0, %v393
        %395 = vdwg.mxu0
        %404 = vrot.lane.b32.xlu0 %v334, 96
        %v405 = vpop.permute.xlu0 %404
        %406 = vrot.lane.b32.xlu0 %v335, 96
        %v407 = vpop.permute.xlu0 %406
        %408 = vrot.lane.b32.xlu0 %v336, 96
        %v409 = vpop.permute.xlu0 %408
        %410 = vrot.lane.b32.xlu0 %v337, 96
        %v411 = vpop.permute.xlu0 %410
        %412 = vrot.lane.b32.xlu0 %v338, 96
        %v413 = vpop.permute.xlu0 %412
        %414 = vrot.lane.b32.xlu0 %v339, 96
        %v415 = vpop.permute.xlu0 %414
        %416 = vrot.lane.b32.xlu0 %v340, 96
        %v417 = vpop.permute.xlu0 %416
        %418 = vrot.lane.b32.xlu0 %v341, 96
        %v419 = vpop.permute.xlu0 %418
        %428 = vmatpush.msra.mxu0 0.0
        %429 = vmatpush.msra.mxu0 0.0
        %430 = vmatpush.msra.mxu0 0.0
        %431 = vmatpush.msra.mxu0 0.0
        %432 = vmatpush.msra.mxu0 0.0
        %433 = vmatpush.msra.mxu0 0.0
        %434 = vmatpush.msra.mxu0 0.0
        %435 = vmatpush.msra.mxu0 0.0
        %436 = vmatpush.msra.mxu0 %v419
        %437 = vmatpush.msra.mxu0 %v417
        %438 = vmatpush.msra.mxu0 %v415
        %439 = vmatpush.msra.mxu0 %v413
        %440 = vmatpush.msra.mxu0 %v411
        %441 = vmatpush.msra.mxu0 %v409
        %442 = vmatpush.msra.mxu0 %v407
        %443 = vmatpush.msra.mxu0 %v405
        %444 = vmatmul.f32.gmra.mxu0 %v356
        %v445 = vpop.f32.mrf.mxu0
        %v446 = vadd.f32 0.0, %v445
        %447 = vmatmul.f32.gmra.mxu0 %v359
        %v448 = vpop.f32.mrf.mxu0
        %v449 = vadd.f32 0.0, %v448
        %450 = vmatmul.f32.gmra.mxu0 %v362
        %v451 = vpop.f32.mrf.mxu0
        %v452 = vadd.f32 0.0, %v451
        %453 = vmatmul.f32.gmra.mxu0 %v365
        %v454 = vpop.f32.mrf.mxu0
        %v455 = vadd.f32 0.0, %v454
        %456 = vdwg.mxu0
        %458 = vset.pattern.permute.xlu0 0
        %459 = vperm.xlu0 %458, %v446
        %v460 = vpop.permute.xlu0 %459
        %463 = vset.pattern.permute.xlu0 0
        %464 = vperm.xlu0 %463, %v449
        %v465 = vpop.permute.xlu0 %464
        %468 = vset.pattern.permute.xlu0 0
        %469 = vperm.xlu0 %468, %v452
        %v470 = vpop.permute.xlu0 %469
        %473 = vset.pattern.permute.xlu0 0
        %474 = vperm.xlu0 %473, %v455
        %v475 = vpop.permute.xlu0 %474
        %v477 = vmul.f32 %v385, %v460
        %v478 = vmul.f32 %v388, %v465
        %v479 = vmul.f32 %v391, %v470
        %v480 = vmul.f32 %v394, %v475
        %481 = vmatpush.msra.mxu0 0.0
        %482 = vmatpush.msra.mxu0 0.0
        %483 = vmatpush.msra.mxu0 0.0
        %484 = vmatpush.msra.mxu0 0.0
        %485 = vmatpush.msra.mxu0 0.0
        %486 = vmatpush.msra.mxu0 0.0
        %487 = vmatpush.msra.mxu0 0.0
        %488 = vmatpush.msra.mxu0 0.0
        %489 = vmatpush.msra.mxu0 %v349
        %490 = vmatpush.msra.mxu0 %v348
        %491 = vmatpush.msra.mxu0 %v347
        %492 = vmatpush.msra.mxu0 %v346
        %493 = vmatpush.msra.mxu0 %v345
        %494 = vmatpush.msra.mxu0 %v344
        %495 = vmatpush.msra.mxu0 %v343
        %496 = vmatpush.msra.mxu0 %v342
        %497 = vmatmul.f32.gmra.mxu0 %v356
        %v498 = vpop.f32.mrf.mxu0
        %v499 = vadd.f32 0.0, %v498
        %500 = vmatmul.f32.gmra.mxu0 %v359
        %v501 = vpop.f32.mrf.mxu0
        %v502 = vadd.f32 0.0, %v501
        %503 = vmatmul.f32.gmra.mxu0 %v362
        %v504 = vpop.f32.mrf.mxu0
        %v505 = vadd.f32 0.0, %v504
        %506 = vmatmul.f32.gmra.mxu0 %v365
        %v507 = vpop.f32.mrf.mxu0
        %v508 = vadd.f32 0.0, %v507
        %509 = vdwg.mxu0
        %510 = vrot.lane.b32.xlu0 %v334, 64
        %v511 = vpop.permute.xlu0 %510
        %512 = vrot.lane.b32.xlu0 %v335, 64
        %v513 = vpop.permute.xlu0 %512
        %514 = vrot.lane.b32.xlu0 %v336, 64
        %v515 = vpop.permute.xlu0 %514
        %516 = vrot.lane.b32.xlu0 %v337, 64
        %v517 = vpop.permute.xlu0 %516
        %518 = vrot.lane.b32.xlu0 %v338, 64
        %v519 = vpop.permute.xlu0 %518
        %520 = vrot.lane.b32.xlu0 %v339, 64
        %v521 = vpop.permute.xlu0 %520
        %522 = vrot.lane.b32.xlu0 %v340, 64
        %v523 = vpop.permute.xlu0 %522
        %524 = vrot.lane.b32.xlu0 %v341, 64
        %v525 = vpop.permute.xlu0 %524
        %534 = vmatpush.msra.mxu0 0.0
        %535 = vmatpush.msra.mxu0 0.0
        %536 = vmatpush.msra.mxu0 0.0
        %537 = vmatpush.msra.mxu0 0.0
        %538 = vmatpush.msra.mxu0 0.0
        %539 = vmatpush.msra.mxu0 0.0
        %540 = vmatpush.msra.mxu0 0.0
        %541 = vmatpush.msra.mxu0 0.0
        %542 = vmatpush.msra.mxu0 %v525
        %543 = vmatpush.msra.mxu0 %v523
        %544 = vmatpush.msra.mxu0 %v521
        %545 = vmatpush.msra.mxu0 %v519
        %546 = vmatpush.msra.mxu0 %v517
        %547 = vmatpush.msra.mxu0 %v515
        %548 = vmatpush.msra.mxu0 %v513
        %549 = vmatpush.msra.mxu0 %v511
        %550 = vmatmul.f32.gmra.mxu0 %v356
        %v551 = vpop.f32.mrf.mxu0
        %v552 = vadd.f32 0.0, %v551
        %553 = vmatmul.f32.gmra.mxu0 %v359
        %v554 = vpop.f32.mrf.mxu0
        %v555 = vadd.f32 0.0, %v554
        %556 = vmatmul.f32.gmra.mxu0 %v362
        %v557 = vpop.f32.mrf.mxu0
        %v558 = vadd.f32 0.0, %v557
        %559 = vmatmul.f32.gmra.mxu0 %v365
        %v560 = vpop.f32.mrf.mxu0
        %v561 = vadd.f32 0.0, %v560
        %562 = vdwg.mxu0
        %v564 = vsel %vm354, %v552, 0
        %v567 = vsel %vm354, %v555, 0
        %v570 = vsel %vm354, %v558, 0
        %v573 = vsel %vm354, %v561, 0
        %575 = vmatpush.xpose.msra.mxu0 0.0
        %576 = vmatpush.xpose.msra.mxu0 0.0
        %577 = vmatpush.xpose.msra.mxu0 0.0
        %578 = vmatpush.xpose.msra.mxu0 0.0
        %579 = vmatpush.xpose.msra.mxu0 0.0
        %580 = vmatpush.xpose.msra.mxu0 0.0
        %581 = vmatpush.xpose.msra.mxu0 0.0
        %582 = vmatpush.xpose.msra.mxu0 0.0
        %583 = vmatpush.xpose.msra.mxu0 0.0
        %584 = vmatpush.xpose.msra.mxu0 0.0
        %585 = vmatpush.xpose.msra.mxu0 0.0
        %586 = vmatpush.xpose.msra.mxu0 0.0
        %587 = vmatpush.xpose.msra.mxu0 %v365
        %588 = vmatpush.xpose.msra.mxu0 %v362
        %589 = vmatpush.xpose.msra.mxu0 %v359
        %590 = vmatpush.xpose.msra.mxu0 %v356
        %591 = vmatmul.f32.gmra.mxu0 %v564
        %v592 = vpop.f32.mrf.mxu0
        %v593 = vadd.f32 0.0, %v592
        %594 = vmatmul.f32.gmra.mxu0 %v567
        %v595 = vpop.f32.mrf.mxu0
        %v596 = vadd.f32 0.0, %v595
        %597 = vmatmul.f32.gmra.mxu0 %v570
        %v598 = vpop.f32.mrf.mxu0
        %v599 = vadd.f32 0.0, %v598
        %600 = vmatmul.f32.gmra.mxu0 %v573
        %v601 = vpop.f32.mrf.mxu0
        %v602 = vadd.f32 0.0, %v601
        %603 = vdwg.mxu0
        %v604 = vlaneseq
        %v605 = vshrl.u32 %v604, 7
        %v606 = vadd.s32 %v605, 8
        %v607 = vadd.s32 %v605, 16
        %v608 = vadd.s32 %v605, 24
        %v609 = vlaneseq
        %v610 = vand.u32 %v609, 127
        %vm611 = vcmp.eq.s32.totalorder %v605, %v610
        %vm612 = vcmp.eq.s32.totalorder %v606, %v610
        %vm613 = vcmp.eq.s32.totalorder %v607, %v610
        %vm614 = vcmp.eq.s32.totalorder %v608, %v610
        %v615 = vsel %vm611, 1, 0
        %v616 = vsel %vm612, 1, 0
        %v617 = vsel %vm613, 1, 0
        %v618 = vsel %vm614, 1, 0
        %v619 = vcvt.s32.f32 %v615
        %v620 = vcvt.s32.f32 %v616
        %v621 = vcvt.s32.f32 %v617
        %v622 = vcvt.s32.f32 %v618
        %v623 = vmax.f32 %v593, %v619
        %v624 = vmax.f32 %v596, %v620
        %v625 = vmax.f32 %v599, %v621
        %v626 = vmax.f32 %v602, %v622
        %v627 = vld [vmem:[%s3] sm:$0xff]
        %v628 = vld [vmem:[%s3 + $0x8] sm:$0xff]
        %v629 = vld [vmem:[%s3 + $0x10] sm:$0xff]
        %v630 = vld [vmem:[%s3 + $0x18] sm:$0xff]
        %vm631 = vcmask 261120
        %v632 = vsel %vm631, %v623, 0.0
        %633 = vadd.xlane.f32.xlu0 %v632
        %v634 = vpop.xlane.xlu0 %633
        %v635 = vsel %vm631, %v624, 0.0
        %636 = vadd.xlane.f32.xlu0 %v635
        %v637 = vpop.xlane.xlu0 %636
        %v638 = vsel %vm631, %v625, 0.0
        %639 = vadd.xlane.f32.xlu0 %v638
        %v640 = vpop.xlane.xlu0 %639
        %v641 = vsel %vm631, %v626, 0.0
        %642 = vadd.xlane.f32.xlu0 %v641
        %v643 = vpop.xlane.xlu0 %642
        %v644 = vadd.f32 %v632, %v635
        %v645 = vadd.f32 %v644, %v638
        %v646 = vadd.f32 %v645, %v641
        %v647 = vrot.slane %v646, 4
        %v648 = vadd.f32 %v646, %v647
        %v649 = vrot.slane %v648, 2
        %v650 = vadd.f32 %v648, %v649
        %v651 = vrot.slane %v650, 1
        %v652 = vadd.f32 %v650, %v651
        %vm653 = vcmp.gt.f32.partialorder %v634, 0.0
        %vm654 = vcmp.gt.f32.partialorder %v637, 0.0
        %vm655 = vcmp.gt.f32.partialorder %v640, 0.0
        %vm656 = vcmp.gt.f32.partialorder %v643, 0.0
        %v657 = vrsqrt.pop %v634
        %v658 = vmul.f32 %v657, %v634
        %v659 = vmul.f32 %v658, %v657
        %v660 = vmul.f32 0.5, %v659
        %v661 = vsub.f32 1.5, %v660
        %v662 = vmul.f32 %v657, %v661
        %vm663 = vweird.f32 %v634
        %vm664 = vweird.f32 %v657
        %vm665 = vmor %vm663, %vm664
        %v666 = vsel %vm665, %v657, %v662
        %v667 = vrsqrt.pop %v637
        %v668 = vmul.f32 %v667, %v637
        %v669 = vmul.f32 %v668, %v667
        %v670 = vmul.f32 0.5, %v669
        %v671 = vsub.f32 1.5, %v670
        %v672 = vmul.f32 %v667, %v671
        %vm673 = vweird.f32 %v637
        %vm674 = vweird.f32 %v667
        %vm675 = vmor %vm673, %vm674
        %v676 = vsel %vm675, %v667, %v672
        %v677 = vrsqrt.pop %v640
        %v678 = vmul.f32 %v677, %v640
        %v679 = vmul.f32 %v678, %v677
        %v680 = vmul.f32 0.5, %v679
        %v681 = vsub.f32 1.5, %v680
        %v682 = vmul.f32 %v677, %v681
        %vm683 = vweird.f32 %v640
        %vm684 = vweird.f32 %v677
        %vm685 = vmor %vm683, %vm684
        %v686 = vsel %vm685, %v677, %v682
        %v687 = vrsqrt.pop %v643
        %v688 = vmul.f32 %v687, %v643
        %v689 = vmul.f32 %v688, %v687
        %v690 = vmul.f32 0.5, %v689
        %v691 = vsub.f32 1.5, %v690
        %v692 = vmul.f32 %v687, %v691
        %vm693 = vweird.f32 %v643
        %vm694 = vweird.f32 %v687
        %vm695 = vmor %vm693, %vm694
        %v696 = vsel %vm695, %v687, %v692
        %v697 = vsel %vm653, %v666, 0.0
        %v698 = vsel %vm654, %v676, 0.0
        %v699 = vsel %vm655, %v686, 0.0
        %v700 = vsel %vm656, %v696, 0.0
        %vm701 = vcmp.gt.f32.partialorder %v652, 0.0
        %v702 = vrsqrt.pop %v652
        %v703 = vmul.f32 %v702, %v652
        %v704 = vmul.f32 %v703, %v702
        %v705 = vmul.f32 0.5, %v704
        %v706 = vsub.f32 1.5, %v705
        %v707 = vmul.f32 %v702, %v706
        %vm708 = vweird.f32 %v652
        %vm709 = vweird.f32 %v702
        %vm710 = vmor %vm708, %vm709
        %v711 = vsel %vm710, %v702, %v707
        %v712 = vsel %vm701, %v711, 0.0
        %v713 = vmul.f32 %v697, %v623
        %v714 = vmul.f32 %v698, %v624
        %v715 = vmul.f32 %v699, %v625
        %v716 = vmul.f32 %v700, %v626
        %v717 = vmul.f32 %v713, %v712
        %v718 = vmul.f32 %v714, %v712
        %v719 = vmul.f32 %v715, %v712
        %v720 = vmul.f32 %v716, %v712
        %v722 = vsel %vm631, %v717, 0
        %v725 = vsel %vm631, %v718, 0
        %v728 = vsel %vm631, %v719, 0
        %v731 = vsel %vm631, %v720, 0
        %733 = vmatpush.msra.mxu0 0.0
        %734 = vmatpush.msra.mxu0 0.0
        %735 = vmatpush.msra.mxu0 0.0
        %736 = vmatpush.msra.mxu0 0.0
        %737 = vmatpush.msra.mxu0 0.0
        %738 = vmatpush.msra.mxu0 0.0
        %739 = vmatpush.msra.mxu0 0.0
        %740 = vmatpush.msra.mxu0 0.0
        %741 = vmatpush.msra.mxu0 0.0
        %742 = vmatpush.msra.mxu0 0.0
        %743 = vmatpush.msra.mxu0 0.0
        %744 = vmatpush.msra.mxu0 0.0
        %745 = vmatpush.msra.mxu0 %v480
        %746 = vmatpush.msra.mxu0 %v479
        %747 = vmatpush.msra.mxu0 %v478
        %748 = vmatpush.msra.mxu0 %v477
        %749 = vmatmul.f32.gmra.mxu0 %v722
        %v750 = vpop.f32.mrf.mxu0
        %v751 = vadd.f32 0.0, %v750
        %752 = vmatmul.f32.gmra.mxu0 %v725
        %v753 = vpop.f32.mrf.mxu0
        %v754 = vadd.f32 0.0, %v753
        %755 = vmatmul.f32.gmra.mxu0 %v728
        %v756 = vpop.f32.mrf.mxu0
        %v757 = vadd.f32 0.0, %v756
        %758 = vmatmul.f32.gmra.mxu0 %v731
        %v759 = vpop.f32.mrf.mxu0
        %v760 = vadd.f32 0.0, %v759
        %761 = vdwg.mxu0
        %v762 = vmul.f32 %v751, 0.8
        %v763 = vmul.f32 %v754, 0.8
        %v764 = vmul.f32 %v757, 0.8
        %v765 = vmul.f32 %v760, 0.8
        %v766 = vmul.f32 %v499, 0.2
        %v767 = vmul.f32 %v502, 0.2
        %v768 = vmul.f32 %v505, 0.2
        %v769 = vmul.f32 %v508, 0.2
        %v770 = vadd.f32 %v762, %v766
        %v771 = vadd.f32 %v763, %v767
        %v772 = vadd.f32 %v764, %v768
        %v773 = vadd.f32 %v765, %v769
        %v775 = vsel %vm631, %v770, 0
        %v778 = vsel %vm631, %v771, 0
        %v781 = vsel %vm631, %v772, 0
        %v784 = vsel %vm631, %v773, 0
        %786 = vmatpush.msra.mxu0 0.0
        %787 = vmatpush.msra.mxu0 0.0
        %788 = vmatpush.msra.mxu0 0.0
        %789 = vmatpush.msra.mxu0 0.0
        %790 = vmatpush.msra.mxu0 0.0
        %791 = vmatpush.msra.mxu0 0.0
        %792 = vmatpush.msra.mxu0 0.0
        %793 = vmatpush.msra.mxu0 0.0
        %794 = vmatpush.msra.mxu0 0.0
        %795 = vmatpush.msra.mxu0 0.0
        %796 = vmatpush.msra.mxu0 0.0
        %797 = vmatpush.msra.mxu0 0.0
        %798 = vmatpush.msra.mxu0 %v630
        %799 = vmatpush.msra.mxu0 %v629
        %800 = vmatpush.msra.mxu0 %v628
        %801 = vmatpush.msra.mxu0 %v627
        %802 = vmatmul.f32.gmra.mxu0 %v775
        %v803 = vpop.f32.mrf.mxu0
        %v804 = vadd.f32 0.0, %v803
        %805 = vmatmul.f32.gmra.mxu0 %v778
        %v806 = vpop.f32.mrf.mxu0
        %v807 = vadd.f32 0.0, %v806
        %808 = vmatmul.f32.gmra.mxu0 %v781
        %v809 = vpop.f32.mrf.mxu0
        %v810 = vadd.f32 0.0, %v809
        %811 = vmatmul.f32.gmra.mxu0 %v784
        %v812 = vpop.f32.mrf.mxu0
        %v813 = vadd.f32 0.0, %v812
        %814 = vdwg.mxu0
        %v815 = vsel %vm631, %v804, 0.0
        %v816 = vsel %vm631, %v807, 0.0
        %v817 = vadd.f32 %v815, %v816
        %v818 = vsel %vm631, %v810, 0.0
        %v819 = vadd.f32 %v817, %v818
        %v820 = vsel %vm631, %v813, 0.0
        %v821 = vadd.f32 %v819, %v820
        %v822 = vrot.slane %v821, 4
        %v823 = vadd.f32 %v821, %v822
        %v824 = vrot.slane %v823, 2
        %v825 = vadd.f32 %v823, %v824
        %v826 = vrot.slane %v825, 1
        %v827 = vadd.f32 %v825, %v826
        %v828 = vmul.f32 %v827, 0.03125
        %v829 = vsub.f32 %v804, %v828
        %v830 = vsub.f32 %v807, %v828
        %v831 = vsub.f32 %v810, %v828
        %v832 = vsub.f32 %v813, %v828
        %v833 = vmul.f32 %v829, %v829
        %v834 = vmul.f32 %v830, %v830
        %v835 = vmul.f32 %v831, %v831
        %v836 = vmul.f32 %v832, %v832
        %v837 = vsel %vm631, %v833, 0.0
        %v838 = vsel %vm631, %v834, 0.0
        %v839 = vadd.f32 %v837, %v838
        %v840 = vsel %vm631, %v835, 0.0
        %v841 = vadd.f32 %v839, %v840
        %v842 = vsel %vm631, %v836, 0.0
        %v843 = vadd.f32 %v841, %v842
        %v844 = vrot.slane %v843, 4
        %v845 = vadd.f32 %v843, %v844
        %v846 = vrot.slane %v845, 2
        %v847 = vadd.f32 %v845, %v846
        %v848 = vrot.slane %v847, 1
        %v849 = vadd.f32 %v847, %v848
        %v850 = vmul.f32 %v849, 0.03125
        %v851 = vadd.f32 %v850, 1e-05
        %v852 = vrsqrt.pop %v851
        %v853 = vmul.f32 %v852, %v851
        %v854 = vmul.f32 %v853, %v852
        %v855 = vmul.f32 0.5, %v854
        %v856 = vsub.f32 1.5, %v855
        %v857 = vmul.f32 %v852, %v856
        %vm858 = vweird.f32 %v851
        %vm859 = vweird.f32 %v852
        %vm860 = vmor %vm858, %vm859
        %v861 = vsel %vm860, %v852, %v857
        %v862 = vmul.f32 %v829, %v861
        %v863 = vmul.f32 %v830, %v861
        %v864 = vmul.f32 %v831, %v861
        %v865 = vmul.f32 %v832, %v861
        %v866 = vmax.f32 %v862, 0.0
        %v867 = vmax.f32 %v863, 0.0
        %v868 = vmax.f32 %v864, 0.0
        %v869 = vmax.f32 %v865, 0.0
        %v870 = vsel %vm631, %v866, 0.0
        %v871 = vsel %vm631, %v867, 0.0
        %v872 = vadd.f32 %v870, %v871
        %v873 = vsel %vm631, %v868, 0.0
        %v874 = vadd.f32 %v872, %v873
        %v875 = vsel %vm631, %v869, 0.0
        %v876 = vadd.f32 %v874, %v875
        %v877 = vrot.slane %v876, 4
        %v878 = vadd.f32 %v876, %v877
        %v879 = vrot.slane %v878, 2
        %v880 = vadd.f32 %v878, %v879
        %v881 = vrot.slane %v880, 1
        %v882 = vadd.f32 %v880, %v881
        %v883 = vmul.f32 %v882, 0.03125
        %v884 = vsel %vm631, %v866, -inf
        %v885 = vsel %vm631, %v867, -inf
        %v886 = vsel %vm631, %v868, -inf
        %v887 = vsel %vm631, %v869, -inf
        %v888 = vmax.f32 %v884, %v885
        %v889 = vmax.f32 %v886, %v887
        %v890 = vmax.f32 %v888, %v889
        %v891 = vrot.slane %v890, 4
        %v892 = vmax.f32 %v890, %v891
        %v893 = vrot.slane %v892, 2
        %v894 = vmax.f32 %v892, %v893
        %v895 = vrot.slane %v894, 1
        %v896 = vmax.f32 %v894, %v895
        %898 = vrot.lane.b32.xlu0 %v896, 32
        %v899 = vpop.permute.xlu0 %898
        %v901 = vsel %vm631, %v883, %v899
        %v902 = vld [vmem:[%s4] sm:$0xff]
        %v903 = vld [vmem:[%s4 + $0x8] sm:$0xff]
        %v904 = vld [vmem:[%s4 + $0x10] sm:$0xff]
        %v905 = vld [vmem:[%s4 + $0x18] sm:$0xff]
        %v906 = vld [vmem:[%s4 + $0x20] sm:$0xff]
        %v907 = vld [vmem:[%s4 + $0x28] sm:$0xff]
        %v908 = vld [vmem:[%s4 + $0x30] sm:$0xff]
        %v909 = vld [vmem:[%s4 + $0x38] sm:$0xff]
        %v910 = vld [vmem:[%s4 + $0x40] sm:$0xff]
        %v911 = vld [vmem:[%s5] sm:$0xff]
        %v912 = vld [vmem:[%s5 + $0x8] sm:$0xff]
        %v913 = vld [vmem:[%s5 + $0x10] sm:$0xff]
        %v914 = vld [vmem:[%s5 + $0x18] sm:$0xff]
        %s915 = sld [smem:[#allocation2]]
        %s916 = sld [smem:[#allocation2 + $0x1]]
        %s917 = sld [smem:[#allocation2 + $0x2]]
        %v919 = vsel %vm631, %v623, 0
        %v922 = vsel %vm631, %v624, 0
        %v925 = vsel %vm631, %v625, 0
        %v928 = vsel %vm631, %v626, 0
        %930 = vmatpush.msra.mxu0 0.0
        %931 = vmatpush.msra.mxu0 0.0
        %932 = vmatpush.msra.mxu0 0.0
        %933 = vmatpush.msra.mxu0 0.0
        %934 = vmatpush.msra.mxu0 0.0
        %935 = vmatpush.msra.mxu0 0.0
        %936 = vmatpush.msra.mxu0 0.0
        %937 = vmatpush.msra.mxu0 0.0
        %938 = vmatpush.msra.mxu0 0.0
        %939 = vmatpush.msra.mxu0 0.0
        %940 = vmatpush.msra.mxu0 0.0
        %941 = vmatpush.msra.mxu0 0.0
        %942 = vmatpush.msra.mxu0 %v869
        %943 = vmatpush.msra.mxu0 %v868
        %944 = vmatpush.msra.mxu0 %v867
        %945 = vmatpush.msra.mxu0 %v866
        %946 = vmatmul.f32.gmra.mxu0 %v919
        %v947 = vpop.f32.mrf.mxu0
        %v948 = vadd.f32 0.0, %v947
        %949 = vmatmul.f32.gmra.mxu0 %v922
        %v950 = vpop.f32.mrf.mxu0
        %v951 = vadd.f32 0.0, %v950
        %952 = vmatmul.f32.gmra.mxu0 %v925
        %v953 = vpop.f32.mrf.mxu0
        %v954 = vadd.f32 0.0, %v953
        %955 = vmatmul.f32.gmra.mxu0 %v928
        %v956 = vpop.f32.mrf.mxu0
        %v957 = vadd.f32 0.0, %v956
        %958 = vdwg.mxu0
        %v960 = vsel %vm631, %v948, 0
        %v963 = vsel %vm631, %v951, 0
        %v966 = vsel %vm631, %v954, 0
        %v969 = vsel %vm631, %v957, 0
        %971 = vmatpush.msra.mxu0 0.0
        %972 = vmatpush.msra.mxu0 0.0
        %973 = vmatpush.msra.mxu0 0.0
        %974 = vmatpush.msra.mxu0 0.0
        %975 = vmatpush.msra.mxu0 0.0
        %976 = vmatpush.msra.mxu0 0.0
        %977 = vmatpush.msra.mxu0 0.0
        %978 = vmatpush.msra.mxu0 0.0
        %979 = vmatpush.msra.mxu0 0.0
        %980 = vmatpush.msra.mxu0 0.0
        %981 = vmatpush.msra.mxu0 0.0
        %982 = vmatpush.msra.mxu0 0.0
        %983 = vmatpush.msra.mxu0 %v909
        %984 = vmatpush.msra.mxu0 %v908
        %985 = vmatpush.msra.mxu0 %v907
        %986 = vmatpush.msra.mxu0 %v906
        %987 = vmatmul.f32.gmra.mxu0 %v960
        %v988 = vpop.f32.mrf.mxu0
        %v989 = vadd.f32 0.0, %v988
        %990 = vmatmul.f32.gmra.mxu0 %v963
        %v991 = vpop.f32.mrf.mxu0
        %v992 = vadd.f32 0.0, %v991
        %993 = vmatmul.f32.gmra.mxu0 %v966
        %v994 = vpop.f32.mrf.mxu0
        %v995 = vadd.f32 0.0, %v994
        %996 = vmatmul.f32.gmra.mxu0 %v969
        %v997 = vpop.f32.mrf.mxu0
        %v998 = vadd.f32 0.0, %v997
        %999 = vdwg.mxu0
        %v1001 = vsel %vm631, %v866, 0
        %v1004 = vsel %vm631, %v867, 0
        %v1007 = vsel %vm631, %v868, 0
        %v1010 = vsel %vm631, %v869, 0
        %1012 = vmatpush.msra.mxu0 0.0
        %1013 = vmatpush.msra.mxu0 0.0
        %1014 = vmatpush.msra.mxu0 0.0
        %1015 = vmatpush.msra.mxu0 0.0
        %1016 = vmatpush.msra.mxu0 0.0
        %1017 = vmatpush.msra.mxu0 0.0
        %1018 = vmatpush.msra.mxu0 0.0
        %1019 = vmatpush.msra.mxu0 0.0
        %1020 = vmatpush.msra.mxu0 0.0
        %1021 = vmatpush.msra.mxu0 0.0
        %1022 = vmatpush.msra.mxu0 0.0
        %1023 = vmatpush.msra.mxu0 0.0
        %1024 = vmatpush.msra.mxu0 %v905
        %1025 = vmatpush.msra.mxu0 %v904
        %1026 = vmatpush.msra.mxu0 %v903
        %1027 = vmatpush.msra.mxu0 %v902
        %1028 = vmatmul.f32.gmra.mxu0 %v1001
        %v1029 = vpop.f32.mrf.mxu0
        %v1030 = vadd.f32 %v989, %v1029
        %1031 = vmatmul.f32.gmra.mxu0 %v1004
        %v1032 = vpop.f32.mrf.mxu0
        %v1033 = vadd.f32 %v992, %v1032
        %1034 = vmatmul.f32.gmra.mxu0 %v1007
        %v1035 = vpop.f32.mrf.mxu0
        %v1036 = vadd.f32 %v995, %v1035
        %1037 = vmatmul.f32.gmra.mxu0 %v1010
        %v1038 = vpop.f32.mrf.mxu0
        %v1039 = vadd.f32 %v998, %v1038
        %1040 = vdwg.mxu0
        %v1041 = vperm.slane %v910, 0
        %v1042 = vadd.f32 %v1030, %v1041
        %v1043 = vadd.f32 %v1033, %v1041
        %v1044 = vadd.f32 %v1036, %v1041
        %v1045 = vadd.f32 %v1039, %v1041
        %1046 = vxpose.xlu0.b32.start [1/16] %v1042, 128
        %1047 = vxpose.xlu0.b32.cont [2/16] %v1043, 128
        %1048 = vxpose.xlu0.b32.cont [3/16] %v1044, 128
        %1049 = vxpose.xlu0.b32.cont [4/16] %v1045, 128
        %1050 = vxpose.xlu0.b32.cont [5/16] 0.0, 128
        %1051 = vxpose.xlu0.b32.cont [6/16] 0.0, 128
        %1052 = vxpose.xlu0.b32.cont [7/16] 0.0, 128
        %1053 = vxpose.xlu0.b32.cont [8/16] 0.0, 128
        %1054 = vxpose.xlu0.b32.cont [9/16] 0.0, 128
        %1055 = vxpose.xlu0.b32.cont [10/16] 0.0, 128
        %1056 = vxpose.xlu0.b32.cont [11/16] 0.0, 128
        %1057 = vxpose.xlu0.b32.cont [12/16] 0.0, 128
        %1058 = vxpose.xlu0.b32.cont [13/16] 0.0, 128
        %1059 = vxpose.xlu0.b32.cont [14/16] 0.0, 128
        %1060 = vxpose.xlu0.b32.cont [15/16] 0.0, 128
        %1061 = vxpose.xlu0.b32.end [16/16] 0.0, 128
        %v1062 = vpop.trf.xlu0
        %v1063 = vpop.trf.xlu0
        %v1064 = vpop.trf.xlu0
        %v1065 = vpop.trf.xlu0
        %v1066 = vpop.trf.xlu0
        %v1067 = vpop.trf.xlu0
        %v1068 = vpop.trf.xlu0
        %v1069 = vpop.trf.xlu0
        %v1070 = vpop.trf.xlu0
        %v1071 = vpop.trf.xlu0
        %v1072 = vpop.trf.xlu0
        %v1073 = vpop.trf.xlu0
        %v1074 = vpop.trf.xlu0
        %v1075 = vpop.trf.xlu0
        %v1076 = vpop.trf.xlu0
        %v1077 = vpop.trf.xlu0
        %vm1078 = vcmp.gt.f32.partialorder %v623, 0.0
        %vm1079 = vcmp.gt.f32.partialorder %v624, 0.0
        %vm1080 = vcmp.gt.f32.partialorder %v625, 0.0
        %vm1081 = vcmp.gt.f32.partialorder %v626, 0.0
        %v1082 = vperm.slane %v1062, 0
        %v1083 = vlaneseq
        %v1084 = vshrl.u32 %v1083, 7
        %1086 = vset.pattern.permute.xlu0 %v1084
        %1087 = vperm.xlu0 %1086, %v1082
        %v1088 = vpop.permute.xlu0 %1087
        %v1089 = vlaneseq
        %v1090 = vshrl.u32 %v1089, 7
        %v1091 = vadd.s32 %v1090, 8
        %1092 = vset.pattern.permute.xlu0 %v1091
        %1093 = vperm.xlu0 %1092, %v1082
        %v1094 = vpop.permute.xlu0 %1093
        %v1095 = vlaneseq
        %v1096 = vshrl.u32 %v1095, 7
        %v1097 = vadd.s32 %v1096, 16
        %1098 = vset.pattern.permute.xlu0 %v1097
        %1099 = vperm.xlu0 %1098, %v1082
        %v1100 = vpop.permute.xlu0 %1099
        %v1101 = vlaneseq
        %v1102 = vshrl.u32 %v1101, 7
        %v1103 = vadd.s32 %v1102, 24
        %1104 = vset.pattern.permute.xlu0 %v1103
        %1105 = vperm.xlu0 %1104, %v1082
        %v1106 = vpop.permute.xlu0 %1105
        %v1107 = vperm.slane %v1062, 1
        %v1108 = vlaneseq
        %v1109 = vshrl.u32 %v1108, 7
        %1111 = vset.pattern.permute.xlu0 %v1109
        %1112 = vperm.xlu0 %1111, %v1107
        %v1113 = vpop.permute.xlu0 %1112
        %v1114 = vlaneseq
        %v1115 = vshrl.u32 %v1114, 7
        %v1116 = vadd.s32 %v1115, 8
        %1117 = vset.pattern.permute.xlu0 %v1116
        %1118 = vperm.xlu0 %1117, %v1107
        %v1119 = vpop.permute.xlu0 %1118
        %v1120 = vlaneseq
        %v1121 = vshrl.u32 %v1120, 7
        %v1122 = vadd.s32 %v1121, 16
        %1123 = vset.pattern.permute.xlu0 %v1122
        %1124 = vperm.xlu0 %1123, %v1107
        %v1125 = vpop.permute.xlu0 %1124
        %v1126 = vlaneseq
        %v1127 = vshrl.u32 %v1126, 7
        %v1128 = vadd.s32 %v1127, 24
        %1129 = vset.pattern.permute.xlu0 %v1128
        %1130 = vperm.xlu0 %1129, %v1107
        %v1131 = vpop.permute.xlu0 %1130
        %v1132 = vperm.slane %v1062, 2
        %v1133 = vlaneseq
        %v1134 = vshrl.u32 %v1133, 7
        %1136 = vset.pattern.permute.xlu0 %v1134
        %1137 = vperm.xlu0 %1136, %v1132
        %v1138 = vpop.permute.xlu0 %1137
        %v1139 = vlaneseq
        %v1140 = vshrl.u32 %v1139, 7
        %v1141 = vadd.s32 %v1140, 8
        %1142 = vset.pattern.permute.xlu0 %v1141
        %1143 = vperm.xlu0 %1142, %v1132
        %v1144 = vpop.permute.xlu0 %1143
        %v1145 = vlaneseq
        %v1146 = vshrl.u32 %v1145, 7
        %v1147 = vadd.s32 %v1146, 16
        %1148 = vset.pattern.permute.xlu0 %v1147
        %1149 = vperm.xlu0 %1148, %v1132
        %v1150 = vpop.permute.xlu0 %1149
        %v1151 = vlaneseq
        %v1152 = vshrl.u32 %v1151, 7
        %v1153 = vadd.s32 %v1152, 24
        %1154 = vset.pattern.permute.xlu0 %v1153
        %1155 = vperm.xlu0 %1154, %v1132
        %v1156 = vpop.permute.xlu0 %1155
        %v1157 = vperm.slane %v1062, 3
        %v1158 = vlaneseq
        %v1159 = vshrl.u32 %v1158, 7
        %1161 = vset.pattern.permute.xlu0 %v1159
        %1162 = vperm.xlu0 %1161, %v1157
        %v1163 = vpop.permute.xlu0 %1162
        %v1164 = vlaneseq
        %v1165 = vshrl.u32 %v1164, 7
        %v1166 = vadd.s32 %v1165, 8
        %1167 = vset.pattern.permute.xlu0 %v1166
        %1168 = vperm.xlu0 %1167, %v1157
        %v1169 = vpop.permute.xlu0 %1168
        %v1170 = vlaneseq
        %v1171 = vshrl.u32 %v1170, 7
        %v1172 = vadd.s32 %v1171, 16
        %1173 = vset.pattern.permute.xlu0 %v1172
        %1174 = vperm.xlu0 %1173, %v1157
        %v1175 = vpop.permute.xlu0 %1174
        %v1176 = vlaneseq
        %v1177 = vshrl.u32 %v1176, 7
        %v1178 = vadd.s32 %v1177, 24
        %1179 = vset.pattern.permute.xlu0 %v1178
        %1180 = vperm.xlu0 %1179, %v1157
        %v1181 = vpop.permute.xlu0 %1180
        %v1182 = vperm.slane %v1062, 4
        %v1183 = vlaneseq
        %v1184 = vshrl.u32 %v1183, 7
        %1186 = vset.pattern.permute.xlu0 %v1184
        %1187 = vperm.xlu0 %1186, %v1182
        %v1188 = vpop.permute.xlu0 %1187
        %v1189 = vlaneseq
        %v1190 = vshrl.u32 %v1189, 7
        %v1191 = vadd.s32 %v1190, 8
        %1192 = vset.pattern.permute.xlu0 %v1191
        %1193 = vperm.xlu0 %1192, %v1182
        %v1194 = vpop.permute.xlu0 %1193
        %v1195 = vlaneseq
        %v1196 = vshrl.u32 %v1195, 7
        %v1197 = vadd.s32 %v1196, 16
        %1198 = vset.pattern.permute.xlu0 %v1197
        %1199 = vperm.xlu0 %1198, %v1182
        %v1200 = vpop.permute.xlu0 %1199
        %v1201 = vlaneseq
        %v1202 = vshrl.u32 %v1201, 7
        %v1203 = vadd.s32 %v1202, 24
        %1204 = vset.pattern.permute.xlu0 %v1203
        %1205 = vperm.xlu0 %1204, %v1182
        %v1206 = vpop.permute.xlu0 %1205
        %v1207 = vperm.slane %v1062, 5
        %v1208 = vlaneseq
        %v1209 = vshrl.u32 %v1208, 7
        %1211 = vset.pattern.permute.xlu0 %v1209
        %1212 = vperm.xlu0 %1211, %v1207
        %v1213 = vpop.permute.xlu0 %1212
        %v1214 = vlaneseq
        %v1215 = vshrl.u32 %v1214, 7
        %v1216 = vadd.s32 %v1215, 8
        %1217 = vset.pattern.permute.xlu0 %v1216
        %1218 = vperm.xlu0 %1217, %v1207
        %v1219 = vpop.permute.xlu0 %1218
        %v1220 = vlaneseq
        %v1221 = vshrl.u32 %v1220, 7
        %v1222 = vadd.s32 %v1221, 16
        %1223 = vset.pattern.permute.xlu0 %v1222
        %1224 = vperm.xlu0 %1223, %v1207
        %v1225 = vpop.permute.xlu0 %1224
        %v1226 = vlaneseq
        %v1227 = vshrl.u32 %v1226, 7
        %v1228 = vadd.s32 %v1227, 24
        %1229 = vset.pattern.permute.xlu0 %v1228
        %1230 = vperm.xlu0 %1229, %v1207
        %v1231 = vpop.permute.xlu0 %1230
        %v1232 = vperm.slane %v1062, 6
        %v1233 = vlaneseq
        %v1234 = vshrl.u32 %v1233, 7
        %1236 = vset.pattern.permute.xlu0 %v1234
        %1237 = vperm.xlu0 %1236, %v1232
        %v1238 = vpop.permute.xlu0 %1237
        %v1239 = vlaneseq
        %v1240 = vshrl.u32 %v1239, 7
        %v1241 = vadd.s32 %v1240, 8
        %1242 = vset.pattern.permute.xlu0 %v1241
        %1243 = vperm.xlu0 %1242, %v1232
        %v1244 = vpop.permute.xlu0 %1243
        %v1245 = vlaneseq
        %v1246 = vshrl.u32 %v1245, 7
        %v1247 = vadd.s32 %v1246, 16
        %1248 = vset.pattern.permute.xlu0 %v1247
        %1249 = vperm.xlu0 %1248, %v1232
        %v1250 = vpop.permute.xlu0 %1249
        %v1251 = vlaneseq
        %v1252 = vshrl.u32 %v1251, 7
        %v1253 = vadd.s32 %v1252, 24
        %1254 = vset.pattern.permute.xlu0 %v1253
        %1255 = vperm.xlu0 %1254, %v1232
        %v1256 = vpop.permute.xlu0 %1255
        %v1257 = vperm.slane %v1062, 7
        %v1258 = vlaneseq
        %v1259 = vshrl.u32 %v1258, 7
        %1261 = vset.pattern.permute.xlu0 %v1259
        %1262 = vperm.xlu0 %1261, %v1257
        %v1263 = vpop.permute.xlu0 %1262
        %v1264 = vlaneseq
        %v1265 = vshrl.u32 %v1264, 7
        %v1266 = vadd.s32 %v1265, 8
        %1267 = vset.pattern.permute.xlu0 %v1266
        %1268 = vperm.xlu0 %1267, %v1257
        %v1269 = vpop.permute.xlu0 %1268
        %v1270 = vlaneseq
        %v1271 = vshrl.u32 %v1270, 7
        %v1272 = vadd.s32 %v1271, 16
        %1273 = vset.pattern.permute.xlu0 %v1272
        %1274 = vperm.xlu0 %1273, %v1257
        %v1275 = vpop.permute.xlu0 %1274
        %v1276 = vlaneseq
        %v1277 = vshrl.u32 %v1276, 7
        %v1278 = vadd.s32 %v1277, 24
        %1279 = vset.pattern.permute.xlu0 %v1278
        %1280 = vperm.xlu0 %1279, %v1257
        %v1281 = vpop.permute.xlu0 %1280
        %v1282 = vsel %vm1078, 1, 0
        %v1283 = vsel %vm1079, 1, 0
        %v1284 = vsel %vm1080, 1, 0
        %v1285 = vsel %vm1081, 1, 0
        %vm1286 = vcmp.eq.s32.totalorder %v1282, 1
        %vm1287 = vcmp.eq.s32.totalorder %v1283, 1
        %vm1288 = vcmp.eq.s32.totalorder %v1284, 1
        %vm1289 = vcmp.eq.s32.totalorder %v1285, 1
        %v1290 = vsel %vm1286, %v1088, -1e+30
        %v1291 = vsel %vm1287, %v1094, -1e+30
        %v1292 = vsel %vm1288, %v1100, -1e+30
        %v1293 = vsel %vm1289, %v1106, -1e+30
        %v1294 = vsel %vm1286, %v1113, -1e+30
        %v1295 = vsel %vm1287, %v1119, -1e+30
        %v1296 = vsel %vm1288, %v1125, -1e+30
        %v1297 = vsel %vm1289, %v1131, -1e+30
        %v1298 = vsel %vm1286, %v1138, -1e+30
        %v1299 = vsel %vm1287, %v1144, -1e+30
        %v1300 = vsel %vm1288, %v1150, -1e+30
        %v1301 = vsel %vm1289, %v1156, -1e+30
        %v1302 = vsel %vm1286, %v1163, -1e+30
        %v1303 = vsel %vm1287, %v1169, -1e+30
        %v1304 = vsel %vm1288, %v1175, -1e+30
        %v1305 = vsel %vm1289, %v1181, -1e+30
        %v1306 = vsel %vm1286, %v1188, -1e+30
        %v1307 = vsel %vm1287, %v1194, -1e+30
        %v1308 = vsel %vm1288, %v1200, -1e+30
        %v1309 = vsel %vm1289, %v1206, -1e+30
        %v1310 = vsel %vm1286, %v1213, -1e+30
        %v1311 = vsel %vm1287, %v1219, -1e+30
        %v1312 = vsel %vm1288, %v1225, -1e+30
        %v1313 = vsel %vm1289, %v1231, -1e+30
        %v1314 = vsel %vm1286, %v1238, -1e+30
        %v1315 = vsel %vm1287, %v1244, -1e+30
        %v1316 = vsel %vm1288, %v1250, -1e+30
        %v1317 = vsel %vm1289, %v1256, -1e+30
        %v1318 = vsel %vm1286, %v1263, -1e+30
        %v1319 = vsel %vm1287, %v1269, -1e+30
        %v1320 = vsel %vm1288, %v1275, -1e+30
        %v1321 = vsel %vm1289, %v1281, -1e+30
        %v1322 = vsel %vm631, %v1290, -inf
        %v1323 = vsel %vm631, %v1291, -inf
        %v1324 = vmax.f32 %v1322, %v1323
        %v1325 = vsel %vm631, %v1292, -inf
        %v1326 = vmax.f32 %v1324, %v1325
        %v1327 = vsel %vm631, %v1293, -inf
        %v1328 = vmax.f32 %v1326, %v1327
        %v1329 = vrot.slane %v1328, 4
        %v1330 = vmax.f32 %v1328, %v1329
        %v1331 = vrot.slane %v1330, 2
        %v1332 = vmax.f32 %v1330, %v1331
        %v1333 = vrot.slane %v1332, 1
        %v1334 = vmax.f32 %v1332, %v1333
        %v1335 = vsel %vm631, %v1294, -inf
        %v1336 = vsel %vm631, %v1295, -inf
        %v1337 = vmax.f32 %v1335, %v1336
        %v1338 = vsel %vm631, %v1296, -inf
        %v1339 = vmax.f32 %v1337, %v1338
        %v1340 = vsel %vm631, %v1297, -inf
        %v1341 = vmax.f32 %v1339, %v1340
        %v1342 = vrot.slane %v1341, 4
        %v1343 = vmax.f32 %v1341, %v1342
        %v1344 = vrot.slane %v1343, 2
        %v1345 = vmax.f32 %v1343, %v1344
        %v1346 = vrot.slane %v1345, 1
        %v1347 = vmax.f32 %v1345, %v1346
        %v1348 = vsel %vm631, %v1298, -inf
        %v1349 = vsel %vm631, %v1299, -inf
        %v1350 = vmax.f32 %v1348, %v1349
        %v1351 = vsel %vm631, %v1300, -inf
        %v1352 = vmax.f32 %v1350, %v1351
        %v1353 = vsel %vm631, %v1301, -inf
        %v1354 = vmax.f32 %v1352, %v1353
        %v1355 = vrot.slane %v1354, 4
        %v1356 = vmax.f32 %v1354, %v1355
        %v1357 = vrot.slane %v1356, 2
        %v1358 = vmax.f32 %v1356, %v1357
        %v1359 = vrot.slane %v1358, 1
        %v1360 = vmax.f32 %v1358, %v1359
        %v1361 = vsel %vm631, %v1302, -inf
        %v1362 = vsel %vm631, %v1303, -inf
        %v1363 = vmax.f32 %v1361, %v1362
        %v1364 = vsel %vm631, %v1304, -inf
        %v1365 = vmax.f32 %v1363, %v1364
        %v1366 = vsel %vm631, %v1305, -inf
        %v1367 = vmax.f32 %v1365, %v1366
        %v1368 = vrot.slane %v1367, 4
        %v1369 = vmax.f32 %v1367, %v1368
        %v1370 = vrot.slane %v1369, 2
        %v1371 = vmax.f32 %v1369, %v1370
        %v1372 = vrot.slane %v1371, 1
        %v1373 = vmax.f32 %v1371, %v1372
        %v1374 = vsel %vm631, %v1306, -inf
        %v1375 = vsel %vm631, %v1307, -inf
        %v1376 = vmax.f32 %v1374, %v1375
        %v1377 = vsel %vm631, %v1308, -inf
        %v1378 = vmax.f32 %v1376, %v1377
        %v1379 = vsel %vm631, %v1309, -inf
        %v1380 = vmax.f32 %v1378, %v1379
        %v1381 = vrot.slane %v1380, 4
        %v1382 = vmax.f32 %v1380, %v1381
        %v1383 = vrot.slane %v1382, 2
        %v1384 = vmax.f32 %v1382, %v1383
        %v1385 = vrot.slane %v1384, 1
        %v1386 = vmax.f32 %v1384, %v1385
        %v1387 = vsel %vm631, %v1310, -inf
        %v1388 = vsel %vm631, %v1311, -inf
        %v1389 = vmax.f32 %v1387, %v1388
        %v1390 = vsel %vm631, %v1312, -inf
        %v1391 = vmax.f32 %v1389, %v1390
        %v1392 = vsel %vm631, %v1313, -inf
        %v1393 = vmax.f32 %v1391, %v1392
        %v1394 = vrot.slane %v1393, 4
        %v1395 = vmax.f32 %v1393, %v1394
        %v1396 = vrot.slane %v1395, 2
        %v1397 = vmax.f32 %v1395, %v1396
        %v1398 = vrot.slane %v1397, 1
        %v1399 = vmax.f32 %v1397, %v1398
        %v1400 = vsel %vm631, %v1314, -inf
        %v1401 = vsel %vm631, %v1315, -inf
        %v1402 = vmax.f32 %v1400, %v1401
        %v1403 = vsel %vm631, %v1316, -inf
        %v1404 = vmax.f32 %v1402, %v1403
        %v1405 = vsel %vm631, %v1317, -inf
        %v1406 = vmax.f32 %v1404, %v1405
        %v1407 = vrot.slane %v1406, 4
        %v1408 = vmax.f32 %v1406, %v1407
        %v1409 = vrot.slane %v1408, 2
        %v1410 = vmax.f32 %v1408, %v1409
        %v1411 = vrot.slane %v1410, 1
        %v1412 = vmax.f32 %v1410, %v1411
        %v1413 = vsel %vm631, %v1318, -inf
        %v1414 = vsel %vm631, %v1319, -inf
        %v1415 = vmax.f32 %v1413, %v1414
        %v1416 = vsel %vm631, %v1320, -inf
        %v1417 = vmax.f32 %v1415, %v1416
        %v1418 = vsel %vm631, %v1321, -inf
        %v1419 = vmax.f32 %v1417, %v1418
        %v1420 = vrot.slane %v1419, 4
        %v1421 = vmax.f32 %v1419, %v1420
        %v1422 = vrot.slane %v1421, 2
        %v1423 = vmax.f32 %v1421, %v1422
        %v1424 = vrot.slane %v1423, 1
        %v1425 = vmax.f32 %v1423, %v1424
        %1427 = vset.pattern.permute.xlu0 0
        %1428 = vperm.xlu0 %1427, %v911
        %v1429 = vpop.permute.xlu0 %1428
        %vm1439 = vcmask 1041409
        %v1440 = vsel %vm1439, %v1347, %v1334
        %vm1441 = vcmask 1042434
        %v1442 = vsel %vm1441, %v1360, %v1440
        %vm1443 = vcmask 1043459
        %v1444 = vsel %vm1443, %v1373, %v1442
        %vm1445 = vcmask 1044484
        %v1446 = vsel %vm1445, %v1386, %v1444
        %vm1447 = vcmask 1045509
        %v1448 = vsel %vm1447, %v1399, %v1446
        %vm1449 = vcmask 1046534
        %v1450 = vsel %vm1449, %v1412, %v1448
        %vm1451 = vcmask 1047559
        %v1452 = vsel %vm1451, %v1425, %v1450
        %v1454 = vmul.f32 %v1429, %v1452
        %v1455 = vsel %vm631, %v1454, 0.0
        %v1456 = vrot.slane %v1455, 4
        %v1457 = vadd.f32 %v1455, %v1456
        %v1458 = vrot.slane %v1457, 2
        %v1459 = vadd.f32 %v1457, %v1458
        %v1460 = vrot.slane %v1459, 1
        %v1461 = vadd.f32 %v1459, %v1460
        %v1462 = vadd.f32 %v1461, 0.0
        %v1463 = vperm.slane %v1063, 0
        %v1464 = vlaneseq
        %v1465 = vshrl.u32 %v1464, 7
        %1467 = vset.pattern.permute.xlu0 %v1465
        %1468 = vperm.xlu0 %1467, %v1463
        %v1469 = vpop.permute.xlu0 %1468
        %v1470 = vlaneseq
        %v1471 = vshrl.u32 %v1470, 7
        %v1472 = vadd.s32 %v1471, 8
        %1473 = vset.pattern.permute.xlu0 %v1472
        %1474 = vperm.xlu0 %1473, %v1463
        %v1475 = vpop.permute.xlu0 %1474
        %v1476 = vlaneseq
        %v1477 = vshrl.u32 %v1476, 7
        %v1478 = vadd.s32 %v1477, 16
        %1479 = vset.pattern.permute.xlu0 %v1478
        %1480 = vperm.xlu0 %1479, %v1463
        %v1481 = vpop.permute.xlu0 %1480
        %v1482 = vlaneseq
        %v1483 = vshrl.u32 %v1482, 7
        %v1484 = vadd.s32 %v1483, 24
        %1485 = vset.pattern.permute.xlu0 %v1484
        %1486 = vperm.xlu0 %1485, %v1463
        %v1487 = vpop.permute.xlu0 %1486
        %v1488 = vperm.slane %v1063, 1
        %v1489 = vlaneseq
        %v1490 = vshrl.u32 %v1489, 7
        %1492 = vset.pattern.permute.xlu0 %v1490
        %1493 = vperm.xlu0 %1492, %v1488
        %v1494 = vpop.permute.xlu0 %1493
        %v1495 = vlaneseq
        %v1496 = vshrl.u32 %v1495, 7
        %v1497 = vadd.s32 %v1496, 8
        %1498 = vset.pattern.permute.xlu0 %v1497
        %1499 = vperm.xlu0 %1498, %v1488
        %v1500 = vpop.permute.xlu0 %1499
        %v1501 = vlaneseq
        %v1502 = vshrl.u32 %v1501, 7
        %v1503 = vadd.s32 %v1502, 16
        %1504 = vset.pattern.permute.xlu0 %v1503
        %1505 = vperm.xlu0 %1504, %v1488
        %v1506 = vpop.permute.xlu0 %1505
        %v1507 = vlaneseq
        %v1508 = vshrl.u32 %v1507, 7
        %v1509 = vadd.s32 %v1508, 24
        %1510 = vset.pattern.permute.xlu0 %v1509
        %1511 = vperm.xlu0 %1510, %v1488
        %v1512 = vpop.permute.xlu0 %1511
        %v1513 = vperm.slane %v1063, 2
        %v1514 = vlaneseq
        %v1515 = vshrl.u32 %v1514, 7
        %1517 = vset.pattern.permute.xlu0 %v1515
        %1518 = vperm.xlu0 %1517, %v1513
        %v1519 = vpop.permute.xlu0 %1518
        %v1520 = vlaneseq
        %v1521 = vshrl.u32 %v1520, 7
        %v1522 = vadd.s32 %v1521, 8
        %1523 = vset.pattern.permute.xlu0 %v1522
        %1524 = vperm.xlu0 %1523, %v1513
        %v1525 = vpop.permute.xlu0 %1524
        %v1526 = vlaneseq
        %v1527 = vshrl.u32 %v1526, 7
        %v1528 = vadd.s32 %v1527, 16
        %1529 = vset.pattern.permute.xlu0 %v1528
        %1530 = vperm.xlu0 %1529, %v1513
        %v1531 = vpop.permute.xlu0 %1530
        %v1532 = vlaneseq
        %v1533 = vshrl.u32 %v1532, 7
        %v1534 = vadd.s32 %v1533, 24
        %1535 = vset.pattern.permute.xlu0 %v1534
        %1536 = vperm.xlu0 %1535, %v1513
        %v1537 = vpop.permute.xlu0 %1536
        %v1538 = vperm.slane %v1063, 3
        %v1539 = vlaneseq
        %v1540 = vshrl.u32 %v1539, 7
        %1542 = vset.pattern.permute.xlu0 %v1540
        %1543 = vperm.xlu0 %1542, %v1538
        %v1544 = vpop.permute.xlu0 %1543
        %v1545 = vlaneseq
        %v1546 = vshrl.u32 %v1545, 7
        %v1547 = vadd.s32 %v1546, 8
        %1548 = vset.pattern.permute.xlu0 %v1547
        %1549 = vperm.xlu0 %1548, %v1538
        %v1550 = vpop.permute.xlu0 %1549
        %v1551 = vlaneseq
        %v1552 = vshrl.u32 %v1551, 7
        %v1553 = vadd.s32 %v1552, 16
        %1554 = vset.pattern.permute.xlu0 %v1553
        %1555 = vperm.xlu0 %1554, %v1538
        %v1556 = vpop.permute.xlu0 %1555
        %v1557 = vlaneseq
        %v1558 = vshrl.u32 %v1557, 7
        %v1559 = vadd.s32 %v1558, 24
        %1560 = vset.pattern.permute.xlu0 %v1559
        %1561 = vperm.xlu0 %1560, %v1538
        %v1562 = vpop.permute.xlu0 %1561
        %v1563 = vperm.slane %v1063, 4
        %v1564 = vlaneseq
        %v1565 = vshrl.u32 %v1564, 7
        %1567 = vset.pattern.permute.xlu0 %v1565
        %1568 = vperm.xlu0 %1567, %v1563
        %v1569 = vpop.permute.xlu0 %1568
        %v1570 = vlaneseq
        %v1571 = vshrl.u32 %v1570, 7
        %v1572 = vadd.s32 %v1571, 8
        %1573 = vset.pattern.permute.xlu0 %v1572
        %1574 = vperm.xlu0 %1573, %v1563
        %v1575 = vpop.permute.xlu0 %1574
        %v1576 = vlaneseq
        %v1577 = vshrl.u32 %v1576, 7
        %v1578 = vadd.s32 %v1577, 16
        %1579 = vset.pattern.permute.xlu0 %v1578
        %1580 = vperm.xlu0 %1579, %v1563
        %v1581 = vpop.permute.xlu0 %1580
        %v1582 = vlaneseq
        %v1583 = vshrl.u32 %v1582, 7
        %v1584 = vadd.s32 %v1583, 24
        %1585 = vset.pattern.permute.xlu0 %v1584
        %1586 = vperm.xlu0 %1585, %v1563
        %v1587 = vpop.permute.xlu0 %1586
        %v1588 = vperm.slane %v1063, 5
        %v1589 = vlaneseq
        %v1590 = vshrl.u32 %v1589, 7
        %1592 = vset.pattern.permute.xlu0 %v1590
        %1593 = vperm.xlu0 %1592, %v1588
        %v1594 = vpop.permute.xlu0 %1593
        %v1595 = vlaneseq
        %v1596 = vshrl.u32 %v1595, 7
        %v1597 = vadd.s32 %v1596, 8
        %1598 = vset.pattern.permute.xlu0 %v1597
        %1599 = vperm.xlu0 %1598, %v1588
        %v1600 = vpop.permute.xlu0 %1599
        %v1601 = vlaneseq
        %v1602 = vshrl.u32 %v1601, 7
        %v1603 = vadd.s32 %v1602, 16
        %1604 = vset.pattern.permute.xlu0 %v1603
        %1605 = vperm.xlu0 %1604, %v1588
        %v1606 = vpop.permute.xlu0 %1605
        %v1607 = vlaneseq
        %v1608 = vshrl.u32 %v1607, 7
        %v1609 = vadd.s32 %v1608, 24
        %1610 = vset.pattern.permute.xlu0 %v1609
        %1611 = vperm.xlu0 %1610, %v1588
        %v1612 = vpop.permute.xlu0 %1611
        %v1613 = vperm.slane %v1063, 6
        %v1614 = vlaneseq
        %v1615 = vshrl.u32 %v1614, 7
        %1617 = vset.pattern.permute.xlu0 %v1615
        %1618 = vperm.xlu0 %1617, %v1613
        %v1619 = vpop.permute.xlu0 %1618
        %v1620 = vlaneseq
        %v1621 = vshrl.u32 %v1620, 7
        %v1622 = vadd.s32 %v1621, 8
        %1623 = vset.pattern.permute.xlu0 %v1622
        %1624 = vperm.xlu0 %1623, %v1613
        %v1625 = vpop.permute.xlu0 %1624
        %v1626 = vlaneseq
        %v1627 = vshrl.u32 %v1626, 7
        %v1628 = vadd.s32 %v1627, 16
        %1629 = vset.pattern.permute.xlu0 %v1628
        %1630 = vperm.xlu0 %1629, %v1613
        %v1631 = vpop.permute.xlu0 %1630
        %v1632 = vlaneseq
        %v1633 = vshrl.u32 %v1632, 7
        %v1634 = vadd.s32 %v1633, 24
        %1635 = vset.pattern.permute.xlu0 %v1634
        %1636 = vperm.xlu0 %1635, %v1613
        %v1637 = vpop.permute.xlu0 %1636
        %v1638 = vperm.slane %v1063, 7
        %v1639 = vlaneseq
        %v1640 = vshrl.u32 %v1639, 7
        %1642 = vset.pattern.permute.xlu0 %v1640
        %1643 = vperm.xlu0 %1642, %v1638
        %v1644 = vpop.permute.xlu0 %1643
        %v1645 = vlaneseq
        %v1646 = vshrl.u32 %v1645, 7
        %v1647 = vadd.s32 %v1646, 8
        %1648 = vset.pattern.permute.xlu0 %v1647
        %1649 = vperm.xlu0 %1648, %v1638
        %v1650 = vpop.permute.xlu0 %1649
        %v1651 = vlaneseq
        %v1652 = vshrl.u32 %v1651, 7
        %v1653 = vadd.s32 %v1652, 16
        %1654 = vset.pattern.permute.xlu0 %v1653
        %1655 = vperm.xlu0 %1654, %v1638
        %v1656 = vpop.permute.xlu0 %1655
        %v1657 = vlaneseq
        %v1658 = vshrl.u32 %v1657, 7
        %v1659 = vadd.s32 %v1658, 24
        %1660 = vset.pattern.permute.xlu0 %v1659
        %1661 = vperm.xlu0 %1660, %v1638
        %v1662 = vpop.permute.xlu0 %1661
        %v1663 = vsel %vm1286, %v1469, -1e+30
        %v1664 = vsel %vm1287, %v1475, -1e+30
        %v1665 = vsel %vm1288, %v1481, -1e+30
        %v1666 = vsel %vm1289, %v1487, -1e+30
        %v1667 = vsel %vm1286, %v1494, -1e+30
        %v1668 = vsel %vm1287, %v1500, -1e+30
        %v1669 = vsel %vm1288, %v1506, -1e+30
        %v1670 = vsel %vm1289, %v1512, -1e+30
        %v1671 = vsel %vm1286, %v1519, -1e+30
        %v1672 = vsel %vm1287, %v1525, -1e+30
        %v1673 = vsel %vm1288, %v1531, -1e+30
        %v1674 = vsel %vm1289, %v1537, -1e+30
        %v1675 = vsel %vm1286, %v1544, -1e+30
        %v1676 = vsel %vm1287, %v1550, -1e+30
        %v1677 = vsel %vm1288, %v1556, -1e+30
        %v1678 = vsel %vm1289, %v1562, -1e+30
        %v1679 = vsel %vm1286, %v1569, -1e+30
        %v1680 = vsel %vm1287, %v1575, -1e+30
        %v1681 = vsel %vm1288, %v1581, -1e+30
        %v1682 = vsel %vm1289, %v1587, -1e+30
        %v1683 = vsel %vm1286, %v1594, -1e+30
        %v1684 = vsel %vm1287, %v1600, -1e+30
        %v1685 = vsel %vm1288, %v1606, -1e+30
        %v1686 = vsel %vm1289, %v1612, -1e+30
        %v1687 = vsel %vm1286, %v1619, -1e+30
        %v1688 = vsel %vm1287, %v1625, -1e+30
        %v1689 = vsel %vm1288, %v1631, -1e+30
        %v1690 = vsel %vm1289, %v1637, -1e+30
        %v1691 = vsel %vm1286, %v1644, -1e+30
        %v1692 = vsel %vm1287, %v1650, -1e+30
        %v1693 = vsel %vm1288, %v1656, -1e+30
        %v1694 = vsel %vm1289, %v1662, -1e+30
        %v1695 = vsel %vm631, %v1663, -inf
        %v1696 = vsel %vm631, %v1664, -inf
        %v1697 = vmax.f32 %v1695, %v1696
        %v1698 = vsel %vm631, %v1665, -inf
        %v1699 = vmax.f32 %v1697, %v1698
        %v1700 = vsel %vm631, %v1666, -inf
        %v1701 = vmax.f32 %v1699, %v1700
        %v1702 = vrot.slane %v1701, 4
        %v1703 = vmax.f32 %v1701, %v1702
        %v1704 = vrot.slane %v1703, 2
        %v1705 = vmax.f32 %v1703, %v1704
        %v1706 = vrot.slane %v1705, 1
        %v1707 = vmax.f32 %v1705, %v1706
        %v1708 = vsel %vm631, %v1667, -inf
        %v1709 = vsel %vm631, %v1668, -inf
        %v1710 = vmax.f32 %v1708, %v1709
        %v1711 = vsel %vm631, %v1669, -inf
        %v1712 = vmax.f32 %v1710, %v1711
        %v1713 = vsel %vm631, %v1670, -inf
        %v1714 = vmax.f32 %v1712, %v1713
        %v1715 = vrot.slane %v1714, 4
        %v1716 = vmax.f32 %v1714, %v1715
        %v1717 = vrot.slane %v1716, 2
        %v1718 = vmax.f32 %v1716, %v1717
        %v1719 = vrot.slane %v1718, 1
        %v1720 = vmax.f32 %v1718, %v1719
        %v1721 = vsel %vm631, %v1671, -inf
        %v1722 = vsel %vm631, %v1672, -inf
        %v1723 = vmax.f32 %v1721, %v1722
        %v1724 = vsel %vm631, %v1673, -inf
        %v1725 = vmax.f32 %v1723, %v1724
        %v1726 = vsel %vm631, %v1674, -inf
        %v1727 = vmax.f32 %v1725, %v1726
        %v1728 = vrot.slane %v1727, 4
        %v1729 = vmax.f32 %v1727, %v1728
        %v1730 = vrot.slane %v1729, 2
        %v1731 = vmax.f32 %v1729, %v1730
        %v1732 = vrot.slane %v1731, 1
        %v1733 = vmax.f32 %v1731, %v1732
        %v1734 = vsel %vm631, %v1675, -inf
        %v1735 = vsel %vm631, %v1676, -inf
        %v1736 = vmax.f32 %v1734, %v1735
        %v1737 = vsel %vm631, %v1677, -inf
        %v1738 = vmax.f32 %v1736, %v1737
        %v1739 = vsel %vm631, %v1678, -inf
        %v1740 = vmax.f32 %v1738, %v1739
        %v1741 = vrot.slane %v1740, 4
        %v1742 = vmax.f32 %v1740, %v1741
        %v1743 = vrot.slane %v1742, 2
        %v1744 = vmax.f32 %v1742, %v1743
        %v1745 = vrot.slane %v1744, 1
        %v1746 = vmax.f32 %v1744, %v1745
        %v1747 = vsel %vm631, %v1679, -inf
        %v1748 = vsel %vm631, %v1680, -inf
        %v1749 = vmax.f32 %v1747, %v1748
        %v1750 = vsel %vm631, %v1681, -inf
        %v1751 = vmax.f32 %v1749, %v1750
        %v1752 = vsel %vm631, %v1682, -inf
        %v1753 = vmax.f32 %v1751, %v1752
        %v1754 = vrot.slane %v1753, 4
        %v1755 = vmax.f32 %v1753, %v1754
        %v1756 = vrot.slane %v1755, 2
        %v1757 = vmax.f32 %v1755, %v1756
        %v1758 = vrot.slane %v1757, 1
        %v1759 = vmax.f32 %v1757, %v1758
        %v1760 = vsel %vm631, %v1683, -inf
        %v1761 = vsel %vm631, %v1684, -inf
        %v1762 = vmax.f32 %v1760, %v1761
        %v1763 = vsel %vm631, %v1685, -inf
        %v1764 = vmax.f32 %v1762, %v1763
        %v1765 = vsel %vm631, %v1686, -inf
        %v1766 = vmax.f32 %v1764, %v1765
        %v1767 = vrot.slane %v1766, 4
        %v1768 = vmax.f32 %v1766, %v1767
        %v1769 = vrot.slane %v1768, 2
        %v1770 = vmax.f32 %v1768, %v1769
        %v1771 = vrot.slane %v1770, 1
        %v1772 = vmax.f32 %v1770, %v1771
        %v1773 = vsel %vm631, %v1687, -inf
        %v1774 = vsel %vm631, %v1688, -inf
        %v1775 = vmax.f32 %v1773, %v1774
        %v1776 = vsel %vm631, %v1689, -inf
        %v1777 = vmax.f32 %v1775, %v1776
        %v1778 = vsel %vm631, %v1690, -inf
        %v1779 = vmax.f32 %v1777, %v1778
        %v1780 = vrot.slane %v1779, 4
        %v1781 = vmax.f32 %v1779, %v1780
        %v1782 = vrot.slane %v1781, 2
        %v1783 = vmax.f32 %v1781, %v1782
        %v1784 = vrot.slane %v1783, 1
        %v1785 = vmax.f32 %v1783, %v1784
        %v1786 = vsel %vm631, %v1691, -inf
        %v1787 = vsel %vm631, %v1692, -inf
        %v1788 = vmax.f32 %v1786, %v1787
        %v1789 = vsel %vm631, %v1693, -inf
        %v1790 = vmax.f32 %v1788, %v1789
        %v1791 = vsel %vm631, %v1694, -inf
        %v1792 = vmax.f32 %v1790, %v1791
        %v1793 = vrot.slane %v1792, 4
        %v1794 = vmax.f32 %v1792, %v1793
        %v1795 = vrot.slane %v1794, 2
        %v1796 = vmax.f32 %v1794, %v1795
        %v1797 = vrot.slane %v1796, 1
        %v1798 = vmax.f32 %v1796, %v1797
        %1800 = vset.pattern.permute.xlu0 0
        %1801 = vperm.xlu0 %1800, %v912
        %v1802 = vpop.permute.xlu0 %1801
        %v1812 = vsel %vm1439, %v1720, %v1707
        %v1813 = vsel %vm1441, %v1733, %v1812
        %v1814 = vsel %vm1443, %v1746, %v1813
        %v1815 = vsel %vm1445, %v1759, %v1814
        %v1816 = vsel %vm1447, %v1772, %v1815
        %v1817 = vsel %vm1449, %v1785, %v1816
        %v1818 = vsel %vm1451, %v1798, %v1817
        %v1820 = vmul.f32 %v1802, %v1818
        %v1821 = vsel %vm631, %v1820, 0.0
        %v1822 = vrot.slane %v1821, 4
        %v1823 = vadd.f32 %v1821, %v1822
        %v1824 = vrot.slane %v1823, 2
        %v1825 = vadd.f32 %v1823, %v1824
        %v1826 = vrot.slane %v1825, 1
        %v1827 = vadd.f32 %v1825, %v1826
        %v1828 = vadd.f32 %v1462, %v1827
        %v1829 = vperm.slane %v1064, 0
        %v1830 = vlaneseq
        %v1831 = vshrl.u32 %v1830, 7
        %1833 = vset.pattern.permute.xlu0 %v1831
        %1834 = vperm.xlu0 %1833, %v1829
        %v1835 = vpop.permute.xlu0 %1834
        %v1836 = vlaneseq
        %v1837 = vshrl.u32 %v1836, 7
        %v1838 = vadd.s32 %v1837, 8
        %1839 = vset.pattern.permute.xlu0 %v1838
        %1840 = vperm.xlu0 %1839, %v1829
        %v1841 = vpop.permute.xlu0 %1840
        %v1842 = vlaneseq
        %v1843 = vshrl.u32 %v1842, 7
        %v1844 = vadd.s32 %v1843, 16
        %1845 = vset.pattern.permute.xlu0 %v1844
        %1846 = vperm.xlu0 %1845, %v1829
        %v1847 = vpop.permute.xlu0 %1846
        %v1848 = vlaneseq
        %v1849 = vshrl.u32 %v1848, 7
        %v1850 = vadd.s32 %v1849, 24
        %1851 = vset.pattern.permute.xlu0 %v1850
        %1852 = vperm.xlu0 %1851, %v1829
        %v1853 = vpop.permute.xlu0 %1852
        %v1854 = vperm.slane %v1064, 1
        %v1855 = vlaneseq
        %v1856 = vshrl.u32 %v1855, 7
        %1858 = vset.pattern.permute.xlu0 %v1856
        %1859 = vperm.xlu0 %1858, %v1854
        %v1860 = vpop.permute.xlu0 %1859
        %v1861 = vlaneseq
        %v1862 = vshrl.u32 %v1861, 7
        %v1863 = vadd.s32 %v1862, 8
        %1864 = vset.pattern.permute.xlu0 %v1863
        %1865 = vperm.xlu0 %1864, %v1854
        %v1866 = vpop.permute.xlu0 %1865
        %v1867 = vlaneseq
        %v1868 = vshrl.u32 %v1867, 7
        %v1869 = vadd.s32 %v1868, 16
        %1870 = vset.pattern.permute.xlu0 %v1869
        %1871 = vperm.xlu0 %1870, %v1854
        %v1872 = vpop.permute.xlu0 %1871
        %v1873 = vlaneseq
        %v1874 = vshrl.u32 %v1873, 7
        %v1875 = vadd.s32 %v1874, 24
        %1876 = vset.pattern.permute.xlu0 %v1875
        %1877 = vperm.xlu0 %1876, %v1854
        %v1878 = vpop.permute.xlu0 %1877
        %v1879 = vperm.slane %v1064, 2
        %v1880 = vlaneseq
        %v1881 = vshrl.u32 %v1880, 7
        %1883 = vset.pattern.permute.xlu0 %v1881
        %1884 = vperm.xlu0 %1883, %v1879
        %v1885 = vpop.permute.xlu0 %1884
        %v1886 = vlaneseq
        %v1887 = vshrl.u32 %v1886, 7
        %v1888 = vadd.s32 %v1887, 8
        %1889 = vset.pattern.permute.xlu0 %v1888
        %1890 = vperm.xlu0 %1889, %v1879
        %v1891 = vpop.permute.xlu0 %1890
        %v1892 = vlaneseq
        %v1893 = vshrl.u32 %v1892, 7
        %v1894 = vadd.s32 %v1893, 16
        %1895 = vset.pattern.permute.xlu0 %v1894
        %1896 = vperm.xlu0 %1895, %v1879
        %v1897 = vpop.permute.xlu0 %1896
        %v1898 = vlaneseq
        %v1899 = vshrl.u32 %v1898, 7
        %v1900 = vadd.s32 %v1899, 24
        %1901 = vset.pattern.permute.xlu0 %v1900
        %1902 = vperm.xlu0 %1901, %v1879
        %v1903 = vpop.permute.xlu0 %1902
        %v1904 = vperm.slane %v1064, 3
        %v1905 = vlaneseq
        %v1906 = vshrl.u32 %v1905, 7
        %1908 = vset.pattern.permute.xlu0 %v1906
        %1909 = vperm.xlu0 %1908, %v1904
        %v1910 = vpop.permute.xlu0 %1909
        %v1911 = vlaneseq
        %v1912 = vshrl.u32 %v1911, 7
        %v1913 = vadd.s32 %v1912, 8
        %1914 = vset.pattern.permute.xlu0 %v1913
        %1915 = vperm.xlu0 %1914, %v1904
        %v1916 = vpop.permute.xlu0 %1915
        %v1917 = vlaneseq
        %v1918 = vshrl.u32 %v1917, 7
        %v1919 = vadd.s32 %v1918, 16
        %1920 = vset.pattern.permute.xlu0 %v1919
        %1921 = vperm.xlu0 %1920, %v1904
        %v1922 = vpop.permute.xlu0 %1921
        %v1923 = vlaneseq
        %v1924 = vshrl.u32 %v1923, 7
        %v1925 = vadd.s32 %v1924, 24
        %1926 = vset.pattern.permute.xlu0 %v1925
        %1927 = vperm.xlu0 %1926, %v1904
        %v1928 = vpop.permute.xlu0 %1927
        %v1929 = vperm.slane %v1064, 4
        %v1930 = vlaneseq
        %v1931 = vshrl.u32 %v1930, 7
        %1933 = vset.pattern.permute.xlu0 %v1931
        %1934 = vperm.xlu0 %1933, %v1929
        %v1935 = vpop.permute.xlu0 %1934
        %v1936 = vlaneseq
        %v1937 = vshrl.u32 %v1936, 7
        %v1938 = vadd.s32 %v1937, 8
        %1939 = vset.pattern.permute.xlu0 %v1938
        %1940 = vperm.xlu0 %1939, %v1929
        %v1941 = vpop.permute.xlu0 %1940
        %v1942 = vlaneseq
        %v1943 = vshrl.u32 %v1942, 7
        %v1944 = vadd.s32 %v1943, 16
        %1945 = vset.pattern.permute.xlu0 %v1944
        %1946 = vperm.xlu0 %1945, %v1929
        %v1947 = vpop.permute.xlu0 %1946
        %v1948 = vlaneseq
        %v1949 = vshrl.u32 %v1948, 7
        %v1950 = vadd.s32 %v1949, 24
        %1951 = vset.pattern.permute.xlu0 %v1950
        %1952 = vperm.xlu0 %1951, %v1929
        %v1953 = vpop.permute.xlu0 %1952
        %v1954 = vperm.slane %v1064, 5
        %v1955 = vlaneseq
        %v1956 = vshrl.u32 %v1955, 7
        %1958 = vset.pattern.permute.xlu0 %v1956
        %1959 = vperm.xlu0 %1958, %v1954
        %v1960 = vpop.permute.xlu0 %1959
        %v1961 = vlaneseq
        %v1962 = vshrl.u32 %v1961, 7
        %v1963 = vadd.s32 %v1962, 8
        %1964 = vset.pattern.permute.xlu0 %v1963
        %1965 = vperm.xlu0 %1964, %v1954
        %v1966 = vpop.permute.xlu0 %1965
        %v1967 = vlaneseq
        %v1968 = vshrl.u32 %v1967, 7
        %v1969 = vadd.s32 %v1968, 16
        %1970 = vset.pattern.permute.xlu0 %v1969
        %1971 = vperm.xlu0 %1970, %v1954
        %v1972 = vpop.permute.xlu0 %1971
        %v1973 = vlaneseq
        %v1974 = vshrl.u32 %v1973, 7
        %v1975 = vadd.s32 %v1974, 24
        %1976 = vset.pattern.permute.xlu0 %v1975
        %1977 = vperm.xlu0 %1976, %v1954
        %v1978 = vpop.permute.xlu0 %1977
        %v1979 = vperm.slane %v1064, 6
        %v1980 = vlaneseq
        %v1981 = vshrl.u32 %v1980, 7
        %1983 = vset.pattern.permute.xlu0 %v1981
        %1984 = vperm.xlu0 %1983, %v1979
        %v1985 = vpop.permute.xlu0 %1984
        %v1986 = vlaneseq
        %v1987 = vshrl.u32 %v1986, 7
        %v1988 = vadd.s32 %v1987, 8
        %1989 = vset.pattern.permute.xlu0 %v1988
        %1990 = vperm.xlu0 %1989, %v1979
        %v1991 = vpop.permute.xlu0 %1990
        %v1992 = vlaneseq
        %v1993 = vshrl.u32 %v1992, 7
        %v1994 = vadd.s32 %v1993, 16
        %1995 = vset.pattern.permute.xlu0 %v1994
        %1996 = vperm.xlu0 %1995, %v1979
        %v1997 = vpop.permute.xlu0 %1996
        %v1998 = vlaneseq
        %v1999 = vshrl.u32 %v1998, 7
        %v2000 = vadd.s32 %v1999, 24
        %2001 = vset.pattern.permute.xlu0 %v2000
        %2002 = vperm.xlu0 %2001, %v1979
        %v2003 = vpop.permute.xlu0 %2002
        %v2004 = vperm.slane %v1064, 7
        %v2005 = vlaneseq
        %v2006 = vshrl.u32 %v2005, 7
        %2008 = vset.pattern.permute.xlu0 %v2006
        %2009 = vperm.xlu0 %2008, %v2004
        %v2010 = vpop.permute.xlu0 %2009
        %v2011 = vlaneseq
        %v2012 = vshrl.u32 %v2011, 7
        %v2013 = vadd.s32 %v2012, 8
        %2014 = vset.pattern.permute.xlu0 %v2013
        %2015 = vperm.xlu0 %2014, %v2004
        %v2016 = vpop.permute.xlu0 %2015
        %v2017 = vlaneseq
        %v2018 = vshrl.u32 %v2017, 7
        %v2019 = vadd.s32 %v2018, 16
        %2020 = vset.pattern.permute.xlu0 %v2019
        %2021 = vperm.xlu0 %2020, %v2004
        %v2022 = vpop.permute.xlu0 %2021
        %v2023 = vlaneseq
        %v2024 = vshrl.u32 %v2023, 7
        %v2025 = vadd.s32 %v2024, 24
        %2026 = vset.pattern.permute.xlu0 %v2025
        %2027 = vperm.xlu0 %2026, %v2004
        %v2028 = vpop.permute.xlu0 %2027
        %v2029 = vsel %vm1286, %v1835, -1e+30
        %v2030 = vsel %vm1287, %v1841, -1e+30
        %v2031 = vsel %vm1288, %v1847, -1e+30
        %v2032 = vsel %vm1289, %v1853, -1e+30
        %v2033 = vsel %vm1286, %v1860, -1e+30
        %v2034 = vsel %vm1287, %v1866, -1e+30
        %v2035 = vsel %vm1288, %v1872, -1e+30
        %v2036 = vsel %vm1289, %v1878, -1e+30
        %v2037 = vsel %vm1286, %v1885, -1e+30
        %v2038 = vsel %vm1287, %v1891, -1e+30
        %v2039 = vsel %vm1288, %v1897, -1e+30
        %v2040 = vsel %vm1289, %v1903, -1e+30
        %v2041 = vsel %vm1286, %v1910, -1e+30
        %v2042 = vsel %vm1287, %v1916, -1e+30
        %v2043 = vsel %vm1288, %v1922, -1e+30
        %v2044 = vsel %vm1289, %v1928, -1e+30
        %v2045 = vsel %vm1286, %v1935, -1e+30
        %v2046 = vsel %vm1287, %v1941, -1e+30
        %v2047 = vsel %vm1288, %v1947, -1e+30
        %v2048 = vsel %vm1289, %v1953, -1e+30
        %v2049 = vsel %vm1286, %v1960, -1e+30
        %v2050 = vsel %vm1287, %v1966, -1e+30
        %v2051 = vsel %vm1288, %v1972, -1e+30
        %v2052 = vsel %vm1289, %v1978, -1e+30
        %v2053 = vsel %vm1286, %v1985, -1e+30
        %v2054 = vsel %vm1287, %v1991, -1e+30
        %v2055 = vsel %vm1288, %v1997, -1e+30
        %v2056 = vsel %vm1289, %v2003, -1e+30
        %v2057 = vsel %vm1286, %v2010, -1e+30
        %v2058 = vsel %vm1287, %v2016, -1e+30
        %v2059 = vsel %vm1288, %v2022, -1e+30
        %v2060 = vsel %vm1289, %v2028, -1e+30
        %v2061 = vsel %vm631, %v2029, -inf
        %v2062 = vsel %vm631, %v2030, -inf
        %v2063 = vmax.f32 %v2061, %v2062
        %v2064 = vsel %vm631, %v2031, -inf
        %v2065 = vmax.f32 %v2063, %v2064
        %v2066 = vsel %vm631, %v2032, -inf
        %v2067 = vmax.f32 %v2065, %v2066
        %v2068 = vrot.slane %v2067, 4
        %v2069 = vmax.f32 %v2067, %v2068
        %v2070 = vrot.slane %v2069, 2
        %v2071 = vmax.f32 %v2069, %v2070
        %v2072 = vrot.slane %v2071, 1
        %v2073 = vmax.f32 %v2071, %v2072
        %v2074 = vsel %vm631, %v2033, -inf
        %v2075 = vsel %vm631, %v2034, -inf
        %v2076 = vmax.f32 %v2074, %v2075
        %v2077 = vsel %vm631, %v2035, -inf
        %v2078 = vmax.f32 %v2076, %v2077
        %v2079 = vsel %vm631, %v2036, -inf
        %v2080 = vmax.f32 %v2078, %v2079
        %v2081 = vrot.slane %v2080, 4
        %v2082 = vmax.f32 %v2080, %v2081
        %v2083 = vrot.slane %v2082, 2
        %v2084 = vmax.f32 %v2082, %v2083
        %v2085 = vrot.slane %v2084, 1
        %v2086 = vmax.f32 %v2084, %v2085
        %v2087 = vsel %vm631, %v2037, -inf
        %v2088 = vsel %vm631, %v2038, -inf
        %v2089 = vmax.f32 %v2087, %v2088
        %v2090 = vsel %vm631, %v2039, -inf
        %v2091 = vmax.f32 %v2089, %v2090
        %v2092 = vsel %vm631, %v2040, -inf
        %v2093 = vmax.f32 %v2091, %v2092
        %v2094 = vrot.slane %v2093, 4
        %v2095 = vmax.f32 %v2093, %v2094
        %v2096 = vrot.slane %v2095, 2
        %v2097 = vmax.f32 %v2095, %v2096
        %v2098 = vrot.slane %v2097, 1
        %v2099 = vmax.f32 %v2097, %v2098
        %v2100 = vsel %vm631, %v2041, -inf
        %v2101 = vsel %vm631, %v2042, -inf
        %v2102 = vmax.f32 %v2100, %v2101
        %v2103 = vsel %vm631, %v2043, -inf
        %v2104 = vmax.f32 %v2102, %v2103
        %v2105 = vsel %vm631, %v2044, -inf
        %v2106 = vmax.f32 %v2104, %v2105
        %v2107 = vrot.slane %v2106, 4
        %v2108 = vmax.f32 %v2106, %v2107
        %v2109 = vrot.slane %v2108, 2
        %v2110 = vmax.f32 %v2108, %v2109
        %v2111 = vrot.slane %v2110, 1
        %v2112 = vmax.f32 %v2110, %v2111
        %v2113 = vsel %vm631, %v2045, -inf
        %v2114 = vsel %vm631, %v2046, -inf
        %v2115 = vmax.f32 %v2113, %v2114
        %v2116 = vsel %vm631, %v2047, -inf
        %v2117 = vmax.f32 %v2115, %v2116
        %v2118 = vsel %vm631, %v2048, -inf
        %v2119 = vmax.f32 %v2117, %v2118
        %v2120 = vrot.slane %v2119, 4
        %v2121 = vmax.f32 %v2119, %v2120
        %v2122 = vrot.slane %v2121, 2
        %v2123 = vmax.f32 %v2121, %v2122
        %v2124 = vrot.slane %v2123, 1
        %v2125 = vmax.f32 %v2123, %v2124
        %v2126 = vsel %vm631, %v2049, -inf
        %v2127 = vsel %vm631, %v2050, -inf
        %v2128 = vmax.f32 %v2126, %v2127
        %v2129 = vsel %vm631, %v2051, -inf
        %v2130 = vmax.f32 %v2128, %v2129
        %v2131 = vsel %vm631, %v2052, -inf
        %v2132 = vmax.f32 %v2130, %v2131
        %v2133 = vrot.slane %v2132, 4
        %v2134 = vmax.f32 %v2132, %v2133
        %v2135 = vrot.slane %v2134, 2
        %v2136 = vmax.f32 %v2134, %v2135
        %v2137 = vrot.slane %v2136, 1
        %v2138 = vmax.f32 %v2136, %v2137
        %v2139 = vsel %vm631, %v2053, -inf
        %v2140 = vsel %vm631, %v2054, -inf
        %v2141 = vmax.f32 %v2139, %v2140
        %v2142 = vsel %vm631, %v2055, -inf
        %v2143 = vmax.f32 %v2141, %v2142
        %v2144 = vsel %vm631, %v2056, -inf
        %v2145 = vmax.f32 %v2143, %v2144
        %v2146 = vrot.slane %v2145, 4
        %v2147 = vmax.f32 %v2145, %v2146
        %v2148 = vrot.slane %v2147, 2
        %v2149 = vmax.f32 %v2147, %v2148
        %v2150 = vrot.slane %v2149, 1
        %v2151 = vmax.f32 %v2149, %v2150
        %v2152 = vsel %vm631, %v2057, -inf
        %v2153 = vsel %vm631, %v2058, -inf
        %v2154 = vmax.f32 %v2152, %v2153
        %v2155 = vsel %vm631, %v2059, -inf
        %v2156 = vmax.f32 %v2154, %v2155
        %v2157 = vsel %vm631, %v2060, -inf
        %v2158 = vmax.f32 %v2156, %v2157
        %v2159 = vrot.slane %v2158, 4
        %v2160 = vmax.f32 %v2158, %v2159
        %v2161 = vrot.slane %v2160, 2
        %v2162 = vmax.f32 %v2160, %v2161
        %v2163 = vrot.slane %v2162, 1
        %v2164 = vmax.f32 %v2162, %v2163
        %2166 = vset.pattern.permute.xlu0 0
        %2167 = vperm.xlu0 %2166, %v913
        %v2168 = vpop.permute.xlu0 %2167
        %v2178 = vsel %vm1439, %v2086, %v2073
        %v2179 = vsel %vm1441, %v2099, %v2178
        %v2180 = vsel %vm1443, %v2112, %v2179
        %v2181 = vsel %vm1445, %v2125, %v2180
        %v2182 = vsel %vm1447, %v2138, %v2181
        %v2183 = vsel %vm1449, %v2151, %v2182
        %v2184 = vsel %vm1451, %v2164, %v2183
        %v2186 = vmul.f32 %v2168, %v2184
        %v2187 = vsel %vm631, %v2186, 0.0
        %v2188 = vrot.slane %v2187, 4
        %v2189 = vadd.f32 %v2187, %v2188
        %v2190 = vrot.slane %v2189, 2
        %v2191 = vadd.f32 %v2189, %v2190
        %v2192 = vrot.slane %v2191, 1
        %v2193 = vadd.f32 %v2191, %v2192
        %v2194 = vadd.f32 %v1828, %v2193
        %v2195 = vperm.slane %v1065, 0
        %v2196 = vlaneseq
        %v2197 = vshrl.u32 %v2196, 7
        %2199 = vset.pattern.permute.xlu0 %v2197
        %2200 = vperm.xlu0 %2199, %v2195
        %v2201 = vpop.permute.xlu0 %2200
        %v2202 = vlaneseq
        %v2203 = vshrl.u32 %v2202, 7
        %v2204 = vadd.s32 %v2203, 8
        %2205 = vset.pattern.permute.xlu0 %v2204
        %2206 = vperm.xlu0 %2205, %v2195
        %v2207 = vpop.permute.xlu0 %2206
        %v2208 = vlaneseq
        %v2209 = vshrl.u32 %v2208, 7
        %v2210 = vadd.s32 %v2209, 16
        %2211 = vset.pattern.permute.xlu0 %v2210
        %2212 = vperm.xlu0 %2211, %v2195
        %v2213 = vpop.permute.xlu0 %2212
        %v2214 = vlaneseq
        %v2215 = vshrl.u32 %v2214, 7
        %v2216 = vadd.s32 %v2215, 24
        %2217 = vset.pattern.permute.xlu0 %v2216
        %2218 = vperm.xlu0 %2217, %v2195
        %v2219 = vpop.permute.xlu0 %2218
        %v2220 = vperm.slane %v1065, 1
        %v2221 = vlaneseq
        %v2222 = vshrl.u32 %v2221, 7
        %2224 = vset.pattern.permute.xlu0 %v2222
        %2225 = vperm.xlu0 %2224, %v2220
        %v2226 = vpop.permute.xlu0 %2225
        %v2227 = vlaneseq
        %v2228 = vshrl.u32 %v2227, 7
        %v2229 = vadd.s32 %v2228, 8
        %2230 = vset.pattern.permute.xlu0 %v2229
        %2231 = vperm.xlu0 %2230, %v2220
        %v2232 = vpop.permute.xlu0 %2231
        %v2233 = vlaneseq
        %v2234 = vshrl.u32 %v2233, 7
        %v2235 = vadd.s32 %v2234, 16
        %2236 = vset.pattern.permute.xlu0 %v2235
        %2237 = vperm.xlu0 %2236, %v2220
        %v2238 = vpop.permute.xlu0 %2237
        %v2239 = vlaneseq
        %v2240 = vshrl.u32 %v2239, 7
        %v2241 = vadd.s32 %v2240, 24
        %2242 = vset.pattern.permute.xlu0 %v2241
        %2243 = vperm.xlu0 %2242, %v2220
        %v2244 = vpop.permute.xlu0 %2243
        %v2245 = vperm.slane %v1065, 2
        %v2246 = vlaneseq
        %v2247 = vshrl.u32 %v2246, 7
        %2249 = vset.pattern.permute.xlu0 %v2247
        %2250 = vperm.xlu0 %2249, %v2245
        %v2251 = vpop.permute.xlu0 %2250
        %v2252 = vlaneseq
        %v2253 = vshrl.u32 %v2252, 7
        %v2254 = vadd.s32 %v2253, 8
        %2255 = vset.pattern.permute.xlu0 %v2254
        %2256 = vperm.xlu0 %2255, %v2245
        %v2257 = vpop.permute.xlu0 %2256
        %v2258 = vlaneseq
        %v2259 = vshrl.u32 %v2258, 7
        %v2260 = vadd.s32 %v2259, 16
        %2261 = vset.pattern.permute.xlu0 %v2260
        %2262 = vperm.xlu0 %2261, %v2245
        %v2263 = vpop.permute.xlu0 %2262
        %v2264 = vlaneseq
        %v2265 = vshrl.u32 %v2264, 7
        %v2266 = vadd.s32 %v2265, 24
        %2267 = vset.pattern.permute.xlu0 %v2266
        %2268 = vperm.xlu0 %2267, %v2245
        %v2269 = vpop.permute.xlu0 %2268
        %v2270 = vperm.slane %v1065, 3
        %v2271 = vlaneseq
        %v2272 = vshrl.u32 %v2271, 7
        %2274 = vset.pattern.permute.xlu0 %v2272
        %2275 = vperm.xlu0 %2274, %v2270
        %v2276 = vpop.permute.xlu0 %2275
        %v2277 = vlaneseq
        %v2278 = vshrl.u32 %v2277, 7
        %v2279 = vadd.s32 %v2278, 8
        %2280 = vset.pattern.permute.xlu0 %v2279
        %2281 = vperm.xlu0 %2280, %v2270
        %v2282 = vpop.permute.xlu0 %2281
        %v2283 = vlaneseq
        %v2284 = vshrl.u32 %v2283, 7
        %v2285 = vadd.s32 %v2284, 16
        %2286 = vset.pattern.permute.xlu0 %v2285
        %2287 = vperm.xlu0 %2286, %v2270
        %v2288 = vpop.permute.xlu0 %2287
        %v2289 = vlaneseq
        %v2290 = vshrl.u32 %v2289, 7
        %v2291 = vadd.s32 %v2290, 24
        %2292 = vset.pattern.permute.xlu0 %v2291
        %2293 = vperm.xlu0 %2292, %v2270
        %v2294 = vpop.permute.xlu0 %2293
        %v2295 = vperm.slane %v1065, 4
        %v2296 = vlaneseq
        %v2297 = vshrl.u32 %v2296, 7
        %2299 = vset.pattern.permute.xlu0 %v2297
        %2300 = vperm.xlu0 %2299, %v2295
        %v2301 = vpop.permute.xlu0 %2300
        %v2302 = vlaneseq
        %v2303 = vshrl.u32 %v2302, 7
        %v2304 = vadd.s32 %v2303, 8
        %2305 = vset.pattern.permute.xlu0 %v2304
        %2306 = vperm.xlu0 %2305, %v2295
        %v2307 = vpop.permute.xlu0 %2306
        %v2308 = vlaneseq
        %v2309 = vshrl.u32 %v2308, 7
        %v2310 = vadd.s32 %v2309, 16
        %2311 = vset.pattern.permute.xlu0 %v2310
        %2312 = vperm.xlu0 %2311, %v2295
        %v2313 = vpop.permute.xlu0 %2312
        %v2314 = vlaneseq
        %v2315 = vshrl.u32 %v2314, 7
        %v2316 = vadd.s32 %v2315, 24
        %2317 = vset.pattern.permute.xlu0 %v2316
        %2318 = vperm.xlu0 %2317, %v2295
        %v2319 = vpop.permute.xlu0 %2318
        %v2320 = vperm.slane %v1065, 5
        %v2321 = vlaneseq
        %v2322 = vshrl.u32 %v2321, 7
        %2324 = vset.pattern.permute.xlu0 %v2322
        %2325 = vperm.xlu0 %2324, %v2320
        %v2326 = vpop.permute.xlu0 %2325
        %v2327 = vlaneseq
        %v2328 = vshrl.u32 %v2327, 7
        %v2329 = vadd.s32 %v2328, 8
        %2330 = vset.pattern.permute.xlu0 %v2329
        %2331 = vperm.xlu0 %2330, %v2320
        %v2332 = vpop.permute.xlu0 %2331
        %v2333 = vlaneseq
        %v2334 = vshrl.u32 %v2333, 7
        %v2335 = vadd.s32 %v2334, 16
        %2336 = vset.pattern.permute.xlu0 %v2335
        %2337 = vperm.xlu0 %2336, %v2320
        %v2338 = vpop.permute.xlu0 %2337
        %v2339 = vlaneseq
        %v2340 = vshrl.u32 %v2339, 7
        %v2341 = vadd.s32 %v2340, 24
        %2342 = vset.pattern.permute.xlu0 %v2341
        %2343 = vperm.xlu0 %2342, %v2320
        %v2344 = vpop.permute.xlu0 %2343
        %v2345 = vperm.slane %v1065, 6
        %v2346 = vlaneseq
        %v2347 = vshrl.u32 %v2346, 7
        %2349 = vset.pattern.permute.xlu0 %v2347
        %2350 = vperm.xlu0 %2349, %v2345
        %v2351 = vpop.permute.xlu0 %2350
        %v2352 = vlaneseq
        %v2353 = vshrl.u32 %v2352, 7
        %v2354 = vadd.s32 %v2353, 8
        %2355 = vset.pattern.permute.xlu0 %v2354
        %2356 = vperm.xlu0 %2355, %v2345
        %v2357 = vpop.permute.xlu0 %2356
        %v2358 = vlaneseq
        %v2359 = vshrl.u32 %v2358, 7
        %v2360 = vadd.s32 %v2359, 16
        %2361 = vset.pattern.permute.xlu0 %v2360
        %2362 = vperm.xlu0 %2361, %v2345
        %v2363 = vpop.permute.xlu0 %2362
        %v2364 = vlaneseq
        %v2365 = vshrl.u32 %v2364, 7
        %v2366 = vadd.s32 %v2365, 24
        %2367 = vset.pattern.permute.xlu0 %v2366
        %2368 = vperm.xlu0 %2367, %v2345
        %v2369 = vpop.permute.xlu0 %2368
        %v2370 = vperm.slane %v1065, 7
        %v2371 = vlaneseq
        %v2372 = vshrl.u32 %v2371, 7
        %2374 = vset.pattern.permute.xlu0 %v2372
        %2375 = vperm.xlu0 %2374, %v2370
        %v2376 = vpop.permute.xlu0 %2375
        %v2377 = vlaneseq
        %v2378 = vshrl.u32 %v2377, 7
        %v2379 = vadd.s32 %v2378, 8
        %2380 = vset.pattern.permute.xlu0 %v2379
        %2381 = vperm.xlu0 %2380, %v2370
        %v2382 = vpop.permute.xlu0 %2381
        %v2383 = vlaneseq
        %v2384 = vshrl.u32 %v2383, 7
        %v2385 = vadd.s32 %v2384, 16
        %2386 = vset.pattern.permute.xlu0 %v2385
        %2387 = vperm.xlu0 %2386, %v2370
        %v2388 = vpop.permute.xlu0 %2387
        %v2389 = vlaneseq
        %v2390 = vshrl.u32 %v2389, 7
        %v2391 = vadd.s32 %v2390, 24
        %2392 = vset.pattern.permute.xlu0 %v2391
        %2393 = vperm.xlu0 %2392, %v2370
        %v2394 = vpop.permute.xlu0 %2393
        %v2395 = vsel %vm1286, %v2201, -1e+30
        %v2396 = vsel %vm1287, %v2207, -1e+30
        %v2397 = vsel %vm1288, %v2213, -1e+30
        %v2398 = vsel %vm1289, %v2219, -1e+30
        %v2399 = vsel %vm1286, %v2226, -1e+30
        %v2400 = vsel %vm1287, %v2232, -1e+30
        %v2401 = vsel %vm1288, %v2238, -1e+30
        %v2402 = vsel %vm1289, %v2244, -1e+30
        %v2403 = vsel %vm1286, %v2251, -1e+30
        %v2404 = vsel %vm1287, %v2257, -1e+30
        %v2405 = vsel %vm1288, %v2263, -1e+30
        %v2406 = vsel %vm1289, %v2269, -1e+30
        %v2407 = vsel %vm1286, %v2276, -1e+30
        %v2408 = vsel %vm1287, %v2282, -1e+30
        %v2409 = vsel %vm1288, %v2288, -1e+30
        %v2410 = vsel %vm1289, %v2294, -1e+30
        %v2411 = vsel %vm1286, %v2301, -1e+30
        %v2412 = vsel %vm1287, %v2307, -1e+30
        %v2413 = vsel %vm1288, %v2313, -1e+30
        %v2414 = vsel %vm1289, %v2319, -1e+30
        %v2415 = vsel %vm1286, %v2326, -1e+30
        %v2416 = vsel %vm1287, %v2332, -1e+30
        %v2417 = vsel %vm1288, %v2338, -1e+30
        %v2418 = vsel %vm1289, %v2344, -1e+30
        %v2419 = vsel %vm1286, %v2351, -1e+30
        %v2420 = vsel %vm1287, %v2357, -1e+30
        %v2421 = vsel %vm1288, %v2363, -1e+30
        %v2422 = vsel %vm1289, %v2369, -1e+30
        %v2423 = vsel %vm1286, %v2376, -1e+30
        %v2424 = vsel %vm1287, %v2382, -1e+30
        %v2425 = vsel %vm1288, %v2388, -1e+30
        %v2426 = vsel %vm1289, %v2394, -1e+30
        %v2427 = vsel %vm631, %v2395, -inf
        %v2428 = vsel %vm631, %v2396, -inf
        %v2429 = vmax.f32 %v2427, %v2428
        %v2430 = vsel %vm631, %v2397, -inf
        %v2431 = vmax.f32 %v2429, %v2430
        %v2432 = vsel %vm631, %v2398, -inf
        %v2433 = vmax.f32 %v2431, %v2432
        %v2434 = vrot.slane %v2433, 4
        %v2435 = vmax.f32 %v2433, %v2434
        %v2436 = vrot.slane %v2435, 2
        %v2437 = vmax.f32 %v2435, %v2436
        %v2438 = vrot.slane %v2437, 1
        %v2439 = vmax.f32 %v2437, %v2438
        %v2440 = vsel %vm631, %v2399, -inf
        %v2441 = vsel %vm631, %v2400, -inf
        %v2442 = vmax.f32 %v2440, %v2441
        %v2443 = vsel %vm631, %v2401, -inf
        %v2444 = vmax.f32 %v2442, %v2443
        %v2445 = vsel %vm631, %v2402, -inf
        %v2446 = vmax.f32 %v2444, %v2445
        %v2447 = vrot.slane %v2446, 4
        %v2448 = vmax.f32 %v2446, %v2447
        %v2449 = vrot.slane %v2448, 2
        %v2450 = vmax.f32 %v2448, %v2449
        %v2451 = vrot.slane %v2450, 1
        %v2452 = vmax.f32 %v2450, %v2451
        %v2453 = vsel %vm631, %v2403, -inf
        %v2454 = vsel %vm631, %v2404, -inf
        %v2455 = vmax.f32 %v2453, %v2454
        %v2456 = vsel %vm631, %v2405, -inf
        %v2457 = vmax.f32 %v2455, %v2456
        %v2458 = vsel %vm631, %v2406, -inf
        %v2459 = vmax.f32 %v2457, %v2458
        %v2460 = vrot.slane %v2459, 4
        %v2461 = vmax.f32 %v2459, %v2460
        %v2462 = vrot.slane %v2461, 2
        %v2463 = vmax.f32 %v2461, %v2462
        %v2464 = vrot.slane %v2463, 1
        %v2465 = vmax.f32 %v2463, %v2464
        %v2466 = vsel %vm631, %v2407, -inf
        %v2467 = vsel %vm631, %v2408, -inf
        %v2468 = vmax.f32 %v2466, %v2467
        %v2469 = vsel %vm631, %v2409, -inf
        %v2470 = vmax.f32 %v2468, %v2469
        %v2471 = vsel %vm631, %v2410, -inf
        %v2472 = vmax.f32 %v2470, %v2471
        %v2473 = vrot.slane %v2472, 4
        %v2474 = vmax.f32 %v2472, %v2473
        %v2475 = vrot.slane %v2474, 2
        %v2476 = vmax.f32 %v2474, %v2475
        %v2477 = vrot.slane %v2476, 1
        %v2478 = vmax.f32 %v2476, %v2477
        %v2479 = vsel %vm631, %v2411, -inf
        %v2480 = vsel %vm631, %v2412, -inf
        %v2481 = vmax.f32 %v2479, %v2480
        %v2482 = vsel %vm631, %v2413, -inf
        %v2483 = vmax.f32 %v2481, %v2482
        %v2484 = vsel %vm631, %v2414, -inf
        %v2485 = vmax.f32 %v2483, %v2484
        %v2486 = vrot.slane %v2485, 4
        %v2487 = vmax.f32 %v2485, %v2486
        %v2488 = vrot.slane %v2487, 2
        %v2489 = vmax.f32 %v2487, %v2488
        %v2490 = vrot.slane %v2489, 1
        %v2491 = vmax.f32 %v2489, %v2490
        %v2492 = vsel %vm631, %v2415, -inf
        %v2493 = vsel %vm631, %v2416, -inf
        %v2494 = vmax.f32 %v2492, %v2493
        %v2495 = vsel %vm631, %v2417, -inf
        %v2496 = vmax.f32 %v2494, %v2495
        %v2497 = vsel %vm631, %v2418, -inf
        %v2498 = vmax.f32 %v2496, %v2497
        %v2499 = vrot.slane %v2498, 4
        %v2500 = vmax.f32 %v2498, %v2499
        %v2501 = vrot.slane %v2500, 2
        %v2502 = vmax.f32 %v2500, %v2501
        %v2503 = vrot.slane %v2502, 1
        %v2504 = vmax.f32 %v2502, %v2503
        %v2505 = vsel %vm631, %v2419, -inf
        %v2506 = vsel %vm631, %v2420, -inf
        %v2507 = vmax.f32 %v2505, %v2506
        %v2508 = vsel %vm631, %v2421, -inf
        %v2509 = vmax.f32 %v2507, %v2508
        %v2510 = vsel %vm631, %v2422, -inf
        %v2511 = vmax.f32 %v2509, %v2510
        %v2512 = vrot.slane %v2511, 4
        %v2513 = vmax.f32 %v2511, %v2512
        %v2514 = vrot.slane %v2513, 2
        %v2515 = vmax.f32 %v2513, %v2514
        %v2516 = vrot.slane %v2515, 1
        %v2517 = vmax.f32 %v2515, %v2516
        %v2518 = vsel %vm631, %v2423, -inf
        %v2519 = vsel %vm631, %v2424, -inf
        %v2520 = vmax.f32 %v2518, %v2519
        %v2521 = vsel %vm631, %v2425, -inf
        %v2522 = vmax.f32 %v2520, %v2521
        %v2523 = vsel %vm631, %v2426, -inf
        %v2524 = vmax.f32 %v2522, %v2523
        %v2525 = vrot.slane %v2524, 4
        %v2526 = vmax.f32 %v2524, %v2525
        %v2527 = vrot.slane %v2526, 2
        %v2528 = vmax.f32 %v2526, %v2527
        %v2529 = vrot.slane %v2528, 1
        %v2530 = vmax.f32 %v2528, %v2529
        %2532 = vset.pattern.permute.xlu0 0
        %2533 = vperm.xlu0 %2532, %v914
        %v2534 = vpop.permute.xlu0 %2533
        %v2544 = vsel %vm1439, %v2452, %v2439
        %v2545 = vsel %vm1441, %v2465, %v2544
        %v2546 = vsel %vm1443, %v2478, %v2545
        %v2547 = vsel %vm1445, %v2491, %v2546
        %v2548 = vsel %vm1447, %v2504, %v2547
        %v2549 = vsel %vm1449, %v2517, %v2548
        %v2550 = vsel %vm1451, %v2530, %v2549
        %v2552 = vmul.f32 %v2534, %v2550
        %v2553 = vsel %vm631, %v2552, 0.0
        %v2554 = vrot.slane %v2553, 4
        %v2555 = vadd.f32 %v2553, %v2554
        %v2556 = vrot.slane %v2555, 2
        %v2557 = vadd.f32 %v2555, %v2556
        %v2558 = vrot.slane %v2557, 1
        %v2559 = vadd.f32 %v2557, %v2558
        %v2560 = vadd.f32 %v2194, %v2559
        %2561 = vxpose.xlu0.b32.start [1/16] %v2560, 128
        %2562 = vxpose.xlu0.b32.cont [2/16] 0.0, 128
        %2563 = vxpose.xlu0.b32.cont [3/16] 0.0, 128
        %2564 = vxpose.xlu0.b32.cont [4/16] 0.0, 128
        %2565 = vxpose.xlu0.b32.cont [5/16] 0.0, 128
        %2566 = vxpose.xlu0.b32.cont [6/16] 0.0, 128
        %2567 = vxpose.xlu0.b32.cont [7/16] 0.0, 128
        %2568 = vxpose.xlu0.b32.cont [8/16] 0.0, 128
        %2569 = vxpose.xlu0.b32.cont [9/16] 0.0, 128
        %2570 = vxpose.xlu0.b32.cont [10/16] 0.0, 128
        %2571 = vxpose.xlu0.b32.cont [11/16] 0.0, 128
        %2572 = vxpose.xlu0.b32.cont [12/16] 0.0, 128
        %2573 = vxpose.xlu0.b32.cont [13/16] 0.0, 128
        %2574 = vxpose.xlu0.b32.cont [14/16] 0.0, 128
        %2575 = vxpose.xlu0.b32.cont [15/16] 0.0, 128
        %2576 = vxpose.xlu0.b32.end [16/16] 0.0, 128
        %v2577 = vpop.trf.xlu0
        %v2578 = vpop.trf.xlu0
        %v2579 = vpop.trf.xlu0
        %v2580 = vpop.trf.xlu0
        %v2581 = vpop.trf.xlu0
        %v2582 = vpop.trf.xlu0
        %v2583 = vpop.trf.xlu0
        %v2584 = vpop.trf.xlu0
        %v2585 = vpop.trf.xlu0
        %v2586 = vpop.trf.xlu0
        %v2587 = vpop.trf.xlu0
        %v2588 = vpop.trf.xlu0
        %v2589 = vpop.trf.xlu0
        %v2590 = vpop.trf.xlu0
        %v2591 = vpop.trf.xlu0
        %v2592 = vpop.trf.xlu0
        %v2594 = vrot.slane %v910, 1
        %v2595 = vsel %vm631, %v2594, 0
        %2597 = vmatpush.msra.mxu0 0.0
        %2598 = vmatpush.msra.mxu0 0.0
        %2599 = vmatpush.msra.mxu0 0.0
        %2600 = vmatpush.msra.mxu0 0.0
        %2601 = vmatpush.msra.mxu0 0.0
        %2602 = vmatpush.msra.mxu0 0.0
        %2603 = vmatpush.msra.mxu0 0.0
        %2604 = vmatpush.msra.mxu0 0.0
        %2605 = vmatpush.msra.mxu0 0.0
        %2606 = vmatpush.msra.mxu0 0.0
        %2607 = vmatpush.msra.mxu0 0.0
        %2608 = vmatpush.msra.mxu0 0.0
        %2609 = vmatpush.msra.mxu0 %v1065
        %2610 = vmatpush.msra.mxu0 %v1064
        %2611 = vmatpush.msra.mxu0 %v1063
        %2612 = vmatpush.msra.mxu0 %v1062
        %2613 = vmatmul.f32.gmra.mxu0 %v2595
        %v2614 = vpop.f32.mrf.mxu0
        %v2615 = vadd.f32 0.0, %v2614
        %2616 = vdwg.mxu0
        %2618 = vset.pattern.permute.xlu0 0
        %2619 = vperm.xlu0 %2618, %v2577
        %v2620 = vpop.permute.xlu0 %2619
        %2623 = vset.pattern.permute.xlu0 0
        %2624 = vperm.xlu0 %2623, %v2578
        %v2625 = vpop.permute.xlu0 %2624
        %2628 = vset.pattern.permute.xlu0 0
        %2629 = vperm.xlu0 %2628, %v2579
        %v2630 = vpop.permute.xlu0 %2629
        %2633 = vset.pattern.permute.xlu0 0
        %2634 = vperm.xlu0 %2633, %v2580
        %v2635 = vpop.permute.xlu0 %2634
        %v2637 = vperm.slane %v2615, 0
        %v2638 = vadd.f32 %v2620, %v2637
        %v2639 = vadd.f32 %v2625, %v2637
        %v2640 = vadd.f32 %v2630, %v2637
        %v2641 = vadd.f32 %v2635, %v2637
        %v2642 = vstv %s915
        %v2643 = vadd.f32 %v2638, %v2642
        %v2644 = vadd.f32 %v2639, %v2642
        %v2645 = vadd.f32 %v2640, %v2642
        %v2646 = vadd.f32 %v2641, %v2642
        %vm2647 = vcmp.gt.f32.partialorder %v2643, 0.0
        %vm2648 = vcmp.gt.f32.partialorder %v2644, 0.0
        %vm2649 = vcmp.gt.f32.partialorder %v2645, 0.0
        %vm2650 = vcmp.gt.f32.partialorder %v2646, 0.0
        %v2651 = vmul.f32 %v2643, 0.2
        %v2652 = vmul.f32 %v2644, 0.2
        %v2653 = vmul.f32 %v2645, 0.2
        %v2654 = vmul.f32 %v2646, 0.2
        %v2655 = vsel %vm2647, %v2643, %v2651
        %v2656 = vsel %vm2648, %v2644, %v2652
        %v2657 = vsel %vm2649, %v2645, %v2653
        %v2658 = vsel %vm2650, %v2646, %v2654
        %v2659 = vsel %vm1078, %v2655, -1e+30
        %v2660 = vsel %vm1079, %v2656, -1e+30
        %v2661 = vsel %vm1080, %v2657, -1e+30
        %v2662 = vsel %vm1081, %v2658, -1e+30
        %v2663 = vsel %vm631, %v2659, -inf
        %2664 = vmax.xlane.f32.xlu0 %v2663
        %v2665 = vpop.xlane.xlu0 %2664
        %v2666 = vsel %vm631, %v2660, -inf
        %2667 = vmax.xlane.f32.xlu0 %v2666
        %v2668 = vpop.xlane.xlu0 %2667
        %v2669 = vsel %vm631, %v2661, -inf
        %2670 = vmax.xlane.f32.xlu0 %v2669
        %v2671 = vpop.xlane.xlu0 %2670
        %v2672 = vsel %vm631, %v2662, -inf
        %2673 = vmax.xlane.f32.xlu0 %v2672
        %v2674 = vpop.xlane.xlu0 %2673
        %v2675 = vsub.f32 %v2659, %v2665
        %v2676 = vsub.f32 %v2660, %v2668
        %v2677 = vsub.f32 %v2661, %v2671
        %v2678 = vsub.f32 %v2662, %v2674
        %v2679 = vmul.f32 %v2675, 1.442695
        %v2680 = vpow.pop %v2679
        %v2681 = vmul.f32 %v2676, 1.442695
        %v2682 = vpow.pop %v2681
        %v2683 = vmul.f32 %v2677, 1.442695
        %v2684 = vpow.pop %v2683
        %v2685 = vmul.f32 %v2678, 1.442695
        %v2686 = vpow.pop %v2685
        %v2687 = vsel %vm1078, %v2680, 0.0
        %v2688 = vsel %vm1079, %v2682, 0.0
        %v2689 = vsel %vm1080, %v2684, 0.0
        %v2690 = vsel %vm1081, %v2686, 0.0
        %v2691 = vsel %vm631, %v2687, 0.0
        %2692 = vadd.xlane.f32.xlu0 %v2691
        %v2693 = vpop.xlane.xlu0 %2692
        %v2694 = vsel %vm631, %v2688, 0.0
        %2695 = vadd.xlane.f32.xlu0 %v2694
        %v2696 = vpop.xlane.xlu0 %2695
        %v2697 = vsel %vm631, %v2689, 0.0
        %2698 = vadd.xlane.f32.xlu0 %v2697
        %v2699 = vpop.xlane.xlu0 %2698
        %v2700 = vsel %vm631, %v2690, 0.0
        %2701 = vadd.xlane.f32.xlu0 %v2700
        %v2702 = vpop.xlane.xlu0 %2701
        %v2703 = vrcp.pop %v2693
        %v2704 = vrcp.pop %v2696
        %v2705 = vrcp.pop %v2699
        %v2706 = vrcp.pop %v2702
        %v2707 = vmul.f32 %v2687, %v2703
        %v2708 = vmul.f32 %v2688, %v2704
        %v2709 = vmul.f32 %v2689, %v2705
        %v2710 = vmul.f32 %v2690, %v2706
        %v2712 = vsel %vm631, %v2707, 0
        %v2715 = vsel %vm631, %v2708, 0
        %v2718 = vsel %vm631, %v2709, 0
        %v2721 = vsel %vm631, %v2710, 0
        %2723 = vmatpush.msra.mxu0 0.0
        %2724 = vmatpush.msra.mxu0 0.0
        %2725 = vmatpush.msra.mxu0 0.0
        %2726 = vmatpush.msra.mxu0 0.0
        %2727 = vmatpush.msra.mxu0 0.0
        %2728 = vmatpush.msra.mxu0 0.0
        %2729 = vmatpush.msra.mxu0 0.0
        %2730 = vmatpush.msra.mxu0 0.0
        %2731 = vmatpush.msra.mxu0 0.0
        %2732 = vmatpush.msra.mxu0 0.0
        %2733 = vmatpush.msra.mxu0 0.0
        %2734 = vmatpush.msra.mxu0 0.0
        %2735 = vmatpush.msra.mxu0 %v869
        %2736 = vmatpush.msra.mxu0 %v868
        %2737 = vmatpush.msra.mxu0 %v867
        %2738 = vmatpush.msra.mxu0 %v866
        %2739 = vmatmul.f32.gmra.mxu0 %v2712
        %v2740 = vpop.f32.mrf.mxu0
        %v2741 = vadd.f32 0.0, %v2740
        %2742 = vmatmul.f32.gmra.mxu0 %v2715
        %v2743 = vpop.f32.mrf.mxu0
        %v2744 = vadd.f32 0.0, %v2743
        %2745 = vmatmul.f32.gmra.mxu0 %v2718
        %v2746 = vpop.f32.mrf.mxu0
        %v2747 = vadd.f32 0.0, %v2746
        %2748 = vmatmul.f32.gmra.mxu0 %v2721
        %v2749 = vpop.f32.mrf.mxu0
        %v2750 = vadd.f32 0.0, %v2749
        %2751 = vdwg.mxu0
        %2752 = vrot.lane.b32.xlu0 %v911, 127
        %v2753 = vpop.permute.xlu0 %2752
        %2754 = vrot.lane.b32.xlu0 %v912, 127
        %v2755 = vpop.permute.xlu0 %2754
        %2756 = vrot.lane.b32.xlu0 %v913, 127
        %v2757 = vpop.permute.xlu0 %2756
        %2758 = vrot.lane.b32.xlu0 %v914, 127
        %v2759 = vpop.permute.xlu0 %2758
        %v2765 = vsel %vm631, %v2741, 0
        %v2768 = vsel %vm631, %v2744, 0
        %v2771 = vsel %vm631, %v2747, 0
        %v2774 = vsel %vm631, %v2750, 0
        %2776 = vmatpush.msra.mxu0 0.0
        %2777 = vmatpush.msra.mxu0 0.0
        %2778 = vmatpush.msra.mxu0 0.0
        %2779 = vmatpush.msra.mxu0 0.0
        %2780 = vmatpush.msra.mxu0 0.0
        %2781 = vmatpush.msra.mxu0 0.0
        %2782 = vmatpush.msra.mxu0 0.0
        %2783 = vmatpush.msra.mxu0 0.0
        %2784 = vmatpush.msra.mxu0 0.0
        %2785 = vmatpush.msra.mxu0 0.0
        %2786 = vmatpush.msra.mxu0 0.0
        %2787 = vmatpush.msra.mxu0 0.0
        %2788 = vmatpush.msra.mxu0 %v2759
        %2789 = vmatpush.msra.mxu0 %v2757
        %2790 = vmatpush.msra.mxu0 %v2755
        %2791 = vmatpush.msra.mxu0 %v2753
        %2792 = vmatmul.f32.gmra.mxu0 %v2765
        %v2793 = vpop.f32.mrf.mxu0
        %v2794 = vadd.f32 0.0, %v2793
        %2795 = vmatmul.f32.gmra.mxu0 %v2768
        %v2796 = vpop.f32.mrf.mxu0
        %v2797 = vadd.f32 0.0, %v2796
        %2798 = vmatmul.f32.gmra.mxu0 %v2771
        %v2799 = vpop.f32.mrf.mxu0
        %v2800 = vadd.f32 0.0, %v2799
        %2801 = vmatmul.f32.gmra.mxu0 %v2774
        %v2802 = vpop.f32.mrf.mxu0
        %v2803 = vadd.f32 0.0, %v2802
        %2804 = vdwg.mxu0
        %v2805 = vstv %s916
        %v2806 = vmul.f32 %v634, %v2805
        %v2807 = vmul.f32 %v637, %v2805
        %v2808 = vmul.f32 %v640, %v2805
        %v2809 = vmul.f32 %v643, %v2805
        %2810 = vmatpush.msra.mxu0 0.0
        %2811 = vmatpush.msra.mxu0 0.0
        %2812 = vmatpush.msra.mxu0 0.0
        %2813 = vmatpush.msra.mxu0 0.0
        %2814 = vmatpush.msra.mxu0 0.0
        %2815 = vmatpush.msra.mxu0 0.0
        %2816 = vmatpush.msra.mxu0 0.0
        %2817 = vmatpush.msra.mxu0 0.0
        %2818 = vmatpush.msra.mxu0 0.0
        %2819 = vmatpush.msra.mxu0 0.0
        %2820 = vmatpush.msra.mxu0 0.0
        %2821 = vmatpush.msra.mxu0 0.0
        %2822 = vmatpush.msra.mxu0 %v2803
        %2823 = vmatpush.msra.mxu0 %v2800
        %2824 = vmatpush.msra.mxu0 %v2797
        %2825 = vmatpush.msra.mxu0 %v2794
        %2826 = vmatmul.f32.gmra.mxu0 %v919
        %v2827 = vpop.f32.mrf.mxu0
        %v2828 = vadd.f32 %v2806, %v2827
        %2829 = vmatmul.f32.gmra.mxu0 %v922
        %v2830 = vpop.f32.mrf.mxu0
        %v2831 = vadd.f32 %v2807, %v2830
        %2832 = vmatmul.f32.gmra.mxu0 %v925
        %v2833 = vpop.f32.mrf.mxu0
        %v2834 = vadd.f32 %v2808, %v2833
        %2835 = vmatmul.f32.gmra.mxu0 %v928
        %v2836 = vpop.f32.mrf.mxu0
        %v2837 = vadd.f32 %v2809, %v2836
        %2838 = vdwg.mxu0
        %v2839 = vmul.f32 %v634, %v2794
        %v2840 = vmul.f32 %v637, %v2797
        %v2841 = vmul.f32 %v640, %v2800
        %v2842 = vmul.f32 %v643, %v2803
        %2847 = vrot.lane.b32.xlu0 %v2839, 127
        %v2848 = vpop.permute.xlu0 %2847
        %2849 = vrot.lane.b32.xlu0 %v2840, 127
        %v2850 = vpop.permute.xlu0 %2849
        %2851 = vrot.lane.b32.xlu0 %v2841, 127
        %v2852 = vpop.permute.xlu0 %2851
        %2853 = vrot.lane.b32.xlu0 %v2842, 127
        %v2854 = vpop.permute.xlu0 %2853
        %v2859 = vsub.f32 %v2828, %v2848
        %v2860 = vsub.f32 %v2831, %v2850
        %v2861 = vsub.f32 %v2834, %v2852
        %v2862 = vsub.f32 %v2837, %v2854
        %2867 = vrot.lane.b32.xlu0 %v2794, 126
        %v2868 = vpop.permute.xlu0 %2867
        %2869 = vrot.lane.b32.xlu0 %v2797, 126
        %v2870 = vpop.permute.xlu0 %2869
        %2871 = vrot.lane.b32.xlu0 %v2800, 126
        %v2872 = vpop.permute.xlu0 %2871
        %2873 = vrot.lane.b32.xlu0 %v2803, 126
        %v2874 = vpop.permute.xlu0 %2873
        %v2879 = vadd.f32 %v2859, %v2868
        %v2880 = vadd.f32 %v2860, %v2870
        %v2881 = vadd.f32 %v2861, %v2872
        %v2882 = vadd.f32 %v2862, %v2874
        %v2883 = vstv %s917
        %v2884 = vadd.f32 %v2879, %v2883
        %v2885 = vadd.f32 %v2880, %v2883
        %v2886 = vadd.f32 %v2881, %v2883
        %v2887 = vadd.f32 %v2882, %v2883
        %v2888 = vsub.f32 0.0, %v2884
        %v2889 = vsub.f32 0.0, %v2885
        %v2890 = vsub.f32 0.0, %v2886
        %v2891 = vsub.f32 0.0, %v2887
        %v2892 = vmul.f32 %v2888, 1.442695
        %v2893 = vpow.pop %v2892
        %v2894 = vmul.f32 %v2889, 1.442695
        %v2895 = vpow.pop %v2894
        %v2896 = vmul.f32 %v2890, 1.442695
        %v2897 = vpow.pop %v2896
        %v2898 = vmul.f32 %v2891, 1.442695
        %v2899 = vpow.pop %v2898
        %v2900 = vadd.f32 %v2893, 1.0
        %v2901 = vadd.f32 %v2895, 1.0
        %v2902 = vadd.f32 %v2897, 1.0
        %v2903 = vadd.f32 %v2899, 1.0
        %v2904 = vrcp.pop %v2900
        %v2905 = vmul.f32 %v2900, %v2904
        %v2906 = vsub.f32 1.0, %v2905
        %v2907 = vmul.f32 %v2904, %v2906
        %v2908 = vadd.f32 %v2904, %v2907
        %vm2909 = vweird.f32 %v2900
        %vm2910 = vweird.f32 %v2904
        %vm2911 = vmor %vm2909, %vm2910
        %v2912 = vsel %vm2911, %v2904, %v2908
        %v2913 = vand.u32 2147483647, %v2900
        %vm2914 = vcmp.eq.f32.partialorder %v2913, 8.507059e+37
        %v2915 = vand.u32 %v2900, 2147483648
        %v2916 = vor.u32 1.1754944e-38, %v2915
        %v2917 = vsel %vm2914, %v2916, %v2912
        %v2918 = vmul.f32 1.0, %v2917
        %v2919 = vrcp.pop %v2901
        %v2920 = vmul.f32 %v2901, %v2919
        %v2921 = vsub.f32 1.0, %v2920
        %v2922 = vmul.f32 %v2919, %v2921
        %v2923 = vadd.f32 %v2919, %v2922
        %vm2924 = vweird.f32 %v2901
        %vm2925 = vweird.f32 %v2919
        %vm2926 = vmor %vm2924, %vm2925
        %v2927 = vsel %vm2926, %v2919, %v2923
        %v2928 = vand.u32 2147483647, %v2901
        %vm2929 = vcmp.eq.f32.partialorder %v2928, 8.507059e+37
        %v2930 = vand.u32 %v2901, 2147483648
        %v2931 = vor.u32 1.1754944e-38, %v2930
        %v2932 = vsel %vm2929, %v2931, %v2927
        %v2933 = vmul.f32 1.0, %v2932
        %v2934 = vrcp.pop %v2902
        %v2935 = vmul.f32 %v2902, %v2934
        %v2936 = vsub.f32 1.0, %v2935
        %v2937 = vmul.f32 %v2934, %v2936
        %v2938 = vadd.f32 %v2934, %v2937
        %vm2939 = vweird.f32 %v2902
        %vm2940 = vweird.f32 %v2934
        %vm2941 = vmor %vm2939, %vm2940
        %v2942 = vsel %vm2941, %v2934, %v2938
        %v2943 = vand.u32 2147483647, %v2902
        %vm2944 = vcmp.eq.f32.partialorder %v2943, 8.507059e+37
        %v2945 = vand.u32 %v2902, 2147483648
        %v2946 = vor.u32 1.1754944e-38, %v2945
        %v2947 = vsel %vm2944, %v2946, %v2942
        %v2948 = vmul.f32 1.0, %v2947
        %v2949 = vrcp.pop %v2903
        %v2950 = vmul.f32 %v2903, %v2949
        %v2951 = vsub.f32 1.0, %v2950
        %v2952 = vmul.f32 %v2949, %v2951
        %v2953 = vadd.f32 %v2949, %v2952
        %vm2954 = vweird.f32 %v2903
        %vm2955 = vweird.f32 %v2949
        %vm2956 = vmor %vm2954, %vm2955
        %v2957 = vsel %vm2956, %v2949, %v2953
        %v2958 = vand.u32 2147483647, %v2903
        %vm2959 = vcmp.eq.f32.partialorder %v2958, 8.507059e+37
        %v2960 = vand.u32 %v2903, 2147483648
        %v2961 = vor.u32 1.1754944e-38, %v2960
        %v2962 = vsel %vm2959, %v2961, %v2957
        %v2963 = vmul.f32 1.0, %v2962
        %v2964 = vpack.c.bf16 %v624, %v623
        %v2965 = vpack.c.bf16 %v626, %v625
        %v2967 = vsel %vm631, %v2964, 0
        %v2970 = vsel %vm631, %v2965, 0
        %2972 = vmatpush.bf16.msra.mxu0 0
        %2973 = vmatpush.bf16.msra.mxu0 0
        %2974 = vmatpush.bf16.msra.mxu0 0
        %2975 = vmatpush.bf16.msra.mxu0 0
        %2976 = vmatpush.bf16.msra.mxu0 0
        %2977 = vmatpush.bf16.msra.mxu0 0
        %2978 = vmatpush.bf16.msra.mxu0 %v2965
        %2979 = vmatpush.bf16.msra.mxu0 %v2964
        %2980 = vmatmul.bf16.gmra.mxu0 %v2967
        %v2981 = vpop.f32.mrf.mxu0
        %v2982 = vadd.f32 0.0, %v2981
        %v2983 = vpop.f32.mrf.mxu0
        %v2984 = vadd.f32 0.0, %v2983
        %2985 = vmatmul.bf16.gmra.mxu0 %v2970
        %v2986 = vpop.f32.mrf.mxu0
        %v2987 = vadd.f32 0.0, %v2986
        %v2988 = vpop.f32.mrf.mxu0
        %v2989 = vadd.f32 0.0, %v2988
        %2990 = vdwg.mxu0
        %v2991 = vpack.c.bf16 %v2984, %v2982
        %v2992 = vpack.c.bf16 %v2989, %v2987
        %v2994 = vsel %vm631, %v2991, 0
        %v2997 = vsel %vm631, %v2992, 0
        %2999 = vmatpush.bf16.msra.mxu0 0
        %3000 = vmatpush.bf16.msra.mxu0 0
        %3001 = vmatpush.bf16.msra.mxu0 0
        %3002 = vmatpush.bf16.msra.mxu0 0
        %3003 = vmatpush.bf16.msra.mxu0 0
        %3004 = vmatpush.bf16.msra.mxu0 0
        %3005 = vmatpush.bf16.msra.mxu0 %v2965
        %3006 = vmatpush.bf16.msra.mxu0 %v2964
        %3007 = vmatmul.bf16.gmra.mxu0 %v2994
        %v3008 = vpop.f32.mrf.mxu0
        %v3009 = vadd.f32 0.0, %v3008
        %v3010 = vpop.f32.mrf.mxu0
        %v3011 = vadd.f32 0.0, %v3010
        %3012 = vmatmul.bf16.gmra.mxu0 %v2997
        %v3013 = vpop.f32.mrf.mxu0
        %v3014 = vadd.f32 0.0, %v3013
        %v3015 = vpop.f32.mrf.mxu0
        %v3016 = vadd.f32 0.0, %v3015
        %3017 = vdwg.mxu0
        %vm3018 = vcmp.gt.f32.partialorder %v3009, 0.0
        %vm3019 = vcmp.gt.f32.partialorder %v3011, 0.0
        %vm3020 = vcmp.gt.f32.partialorder %v3014, 0.0
        %vm3021 = vcmp.gt.f32.partialorder %v3016, 0.0
        %v3022 = vsel %vm3018, 1, 0
        %v3023 = vsel %vm3019, 1, 0
        %v3024 = vsel %vm3020, 1, 0
        %v3025 = vsel %vm3021, 1, 0
        %v3026 = vcvt.s32.f32 %v3022
        %v3027 = vcvt.s32.f32 %v3023
        %v3028 = vcvt.s32.f32 %v3024
        %v3029 = vcvt.s32.f32 %v3025
        %3034 = vrot.lane.b32.xlu0 %v2918, 32
        %v3035 = vpop.permute.xlu0 %3034
        %3036 = vrot.lane.b32.xlu0 %v2933, 32
        %v3037 = vpop.permute.xlu0 %3036
        %3038 = vrot.lane.b32.xlu0 %v2948, 32
        %v3039 = vpop.permute.xlu0 %3038
        %3040 = vrot.lane.b32.xlu0 %v2963, 32
        %v3041 = vpop.permute.xlu0 %3040
        %3050 = vrot.lane.b32.xlu0 %v3026, 64
        %v3051 = vpop.permute.xlu0 %3050
        %3052 = vrot.lane.b32.xlu0 %v3027, 64
        %v3053 = vpop.permute.xlu0 %3052
        %3054 = vrot.lane.b32.xlu0 %v3028, 64
        %v3055 = vpop.permute.xlu0 %3054
        %3056 = vrot.lane.b32.xlu0 %v3029, 64
        %v3057 = vpop.permute.xlu0 %3056
        %3066 = vrot.lane.b32.xlu0 %v499, 96
        %v3067 = vpop.permute.xlu0 %3066
        %3068 = vrot.lane.b32.xlu0 %v502, 96
        %v3069 = vpop.permute.xlu0 %3068
        %3070 = vrot.lane.b32.xlu0 %v505, 96
        %v3071 = vpop.permute.xlu0 %3070
        %3072 = vrot.lane.b32.xlu0 %v508, 96
        %v3073 = vpop.permute.xlu0 %3072
        %v3078 = vsel %vm631, %v2741, %v3035
        %v3079 = vsel %vm631, %v2744, %v3037
        %v3080 = vsel %vm631, %v2747, %v3039
        %v3081 = vsel %vm631, %v2750, %v3041
        %vm3082 = vcmask 269312
        %v3083 = vsel %vm3082, %v3078, 0.0
        %v3084 = vsel %vm3082, %v3079, 0.0
        %v3085 = vsel %vm3082, %v3080, 0.0
        %v3086 = vsel %vm3082, %v3081, 0.0
        %v3087 = vsel %vm354, %v3083, %v3051
        %v3088 = vsel %vm354, %v3084, %v3053
        %v3089 = vsel %vm354, %v3085, %v3055
        %v3090 = vsel %vm354, %v3086, %v3057
        %vm3091 = vcmask 785408
        %v3092 = vsel %vm3091, %v3087, %v3067
        %v3093 = vsel %vm3091, %v3088, %v3069
        %v3094 = vsel %vm3091, %v3089, %v3071
        %v3095 = vsel %vm3091, %v3090, %v3073
        %v3096 = vsel %vm354, %v901, 0.0
        %v3097 = vperm.slane %v3096, 0
        %3098 = vst [vmem:[%s332] sm:$0xff] %v3092
        %3099 = vst [vmem:[%s332 + $0x8] sm:$0xff] %v3093
        %3100 = vst [vmem:[%s332 + $0x10] sm:$0xff] %v3094
        %3101 = vst [vmem:[%s332 + $0x18] sm:$0xff] %v3095
        %3102 = vst [vmem:[%s332 + $0x20] sm:$0xff] %v3097
        %p3103 = scmp.lt.s32.totalorder %s19, 1
        %s3104 = scalar_select %p3103, %s19, 1
        %s3105 = smul.addr %s3104, 5
        %s3106 = smul.addr %s3105, 8
        %s3107 = scalar_lea.vmem %s7, %s3106
        // Predicated region
        $region53: #{mol_aggregator_forward.4} parent=47 // pred_check
          %p3108 = pneg %p199
        $region54: #{mol_aggregator_forward.4} parent=47 // pred_check_branch
          %3110 = sbr.rel (%p3108) target = $region56
        $region55: #{mol_aggregator_forward.4} parent=47 // pred_region
          _
        $region56: #{mol_aggregator_forward.4} parent=47 // pred_fallthru
          _
      $region48: #{mol_aggregator_forward.4} parent=5 // pred_fallthru
        _
      %p3111 = scmp.le.s32.totalorder 2, %s14
      // Predicated region
      $region57: #{mol_aggregator_forward.4} parent=5 // pred_check
        %p3112 = pneg %p3111
      $region58: #{mol_aggregator_forward.4} parent=5 // pred_check_branch
        %3114 = sbr.rel (%p3112) target = $region60
      $region59: #{mol_aggregator_forward.4} parent=5 // pred_region
        %s3115 = ssub.s32 %s14, 2
        // Predicated region
        $region61: #{mol_aggregator_forward.4} parent=59 // pred_check
          %p3116 = pneg %p205
        $region62: #{mol_aggregator_forward.4} parent=59 // pred_check_branch
          %3118 = sbr.rel (%p3116) target = $region64
        $region63: #{mol_aggregator_forward.4} parent=59 // pred_region
          %p3119 = scmp.lt.s32.totalorder %s20, 1
          %s3120 = scalar_select %p3119, %s20, 1
          %s3121 = smul.addr %s3120, 5
          %s3122 = smul.addr %s3121, 8
          %s3123 = scalar_lea.vmem %s7, %s3122
        $region64: #{mol_aggregator_forward.4} parent=59 // pred_fallthru
          _
      $region60: #{mol_aggregator_forward.4} parent=5 // pred_fallthru
        _
    $region6: #{mol_aggregator_forward.4} parent=1 // loop_footer
      %s18 = sadd.s32 1, %s14
    $region7: #{mol_aggregator_forward.4} parent=1 // loop_footer_branch
      %13 = sbr.rel target = $region3
    $region8: #{mol_aggregator_forward.4} parent=1 // loop_exit
      _
    %3124 = vsyncpa [#allocation3], 1
    %s3125 = scalar_lea.sflag [#allocation3], 1
    %3126 = vsyncpa %s3125, 1

// kernel: mol_aggregator_forward.5
$region0: #{mol_aggregator_forward.5}
  #allocation0 [shape = 'u32[]', space=smem, size = 0x4, offset = 0x4, fixed_abs, tag = 'smem constant byte address 0x4 - core index']
  #allocation1 [shape = 'u32[72,128]{1,0:T(1,128)}', space=vmem, size = 0x9000, scoped, tag = 'internal scratch']
  %s0 = inlined_call_operand.vmem [shape: f32[2,40,128], index: 0, kind: input, shape index: {}]
  %s1 = inlined_call_operand.vmem [shape: f32[2,16,32], index: 1, kind: input, shape index: {}]
  %s2 = inlined_call_operand.vmem [shape: f32[32,32], index: 2, kind: input, shape index: {}]
  %s3 = inlined_call_operand.vmem [shape: f32[40,32], index: 3, kind: input, shape index: {}]
  %s4 = inlined_call_operand.vmem [shape: f32[32,8], index: 4, kind: input, shape index: {}]
  %s5 = inlined_call_operand.vmem [shape: f32[4], index: 5, kind: input, shape index: {}]
  %s6 = inlined_call_operand.vmem [shape: f32[2,1,128], index: 6, kind: output, shape index: {}]
  %s7 = sld [smem:[#allocation0]]
  $region61: #{mol_aggregator_forward.5} parent=0
    _
  %s9 = ssub.s32 1, %s7
  %s10 = scalar_select 0, %s9, %s7
  $region1: #{mol_aggregator_forward.5} parent=0
    #allocation2 [shape = 'u8[512]{0}', space=smem, size = 0x200, scoped, tag = 'input window, operand 5, single buffered']
    #allocation3 [shape = 's32[2]{0}', space=sflag, size = 0x8, scoped, tag = 'scoped memory for mol_aggregator_forward.5']
    %11 = vsyncpa [#allocation3], 0
    loop: start=0, step=1, limit=4
    $region2: #{mol_aggregator_forward.5} parent=1 // loop_pre_header
      _
    $region3: #{mol_aggregator_forward.5} parent=1 // loop_header
      %s13 = sphi 0, %s17
      %p14 = scmp.ge.s32.totalorder %s13, 4
      %s23 = sphi 0, %s25
      %s26 = sphi 0, %s23
      %s27 = sphi 0, %s26
      %s43 = sphi 0, %s27
      %s49 = sphi 0, %s51
      %s52 = sphi 0, %s49
      %s53 = sphi 0, %s52
      %s69 = sphi 0, %s53
      %s73 = sphi 0, %s73
      %s75 = sphi 0, %s73
      %s76 = sphi 0, %s75
      %s90 = sphi 0, %s76
      %s94 = sphi 0, %s94
      %s96 = sphi 0, %s94
      %s97 = sphi 0, %s96
      %s111 = sphi 0, %s97
      %s115 = sphi 0, %s115
      %s117 = sphi 0, %s115
      %s118 = sphi 0, %s117
      %s132 = sphi 0, %s118
      %s136 = sphi 0, %s136
      %s138 = sphi 0, %s136
      %s139 = sphi 0, %s138
      %s153 = sphi 0, %s139
      %s159 = sphi 0, %s161
      %s162 = sphi 0, %s159
      %s163 = sphi 0, %s162
      %s179 = sphi 0, %s163
    $region4: #{mol_aggregator_forward.5} parent=1 // loop_header_branch
      %16 = sbr.rel (%p14) target = $region8
    $region5: #{mol_aggregator_forward.5} parent=1 // loop_body
      %s18 = ssub.s32 %s13, 1
      %s19 = ssub.s32 %s13, 2
      %s20 = sadd.s32 %s13, 1
      %s21 = ssub.s32 %s13, %s20
      %p22 = scmp.eq.s32.totalorder %s21, 0
      %s24 = sadd.s32 %s23, 1
      %s25 = scalar_select %p22, %s23, %s24
      %p28 = pneg %p22
      %p29 = scmp.eq.s32.totalorder %s13, 1
      %p30 = por %p28, %p29
      %p31 = scmp.ne.s32.totalorder %s23, %s26
      %p32 = scmp.eq.s32.totalorder %s13, 0
      %p33 = por %p31, %p32
      %p34 = scmp.ne.s32.totalorder %s23, %s26
      %p35 = scmp.eq.s32.totalorder %s18, 1
      %p36 = por %p34, %p35
      %p37 = scmp.ne.s32.totalorder %s26, %s27
      %p38 = scmp.eq.s32.totalorder %s18, 0
      %p39 = por %p37, %p38
      %p40 = scmp.ne.s32.totalorder %s26, %s27
      %p41 = scmp.eq.s32.totalorder %s19, 1
      %p42 = por %p40, %p41
      %p44 = scmp.ne.s32.totalorder %s27, %s43
      %p45 = scmp.eq.s32.totalorder %s19, 0
      %p46 = por %p44, %p45
      %s47 = ssub.s32 %s13, %s20
      %p48 = scmp.eq.s32.totalorder %s47, 0
      %s50 = sadd.s32 %s49, 1
      %s51 = scalar_select %p48, %s49, %s50
      %p54 = pneg %p48
      %p55 = scmp.eq.s32.totalorder %s13, 1
      %p56 = por %p54, %p55
      %p57 = scmp.ne.s32.totalorder %s49, %s52
      %p58 = scmp.eq.s32.totalorder %s13, 0
      %p59 = por %p57, %p58
      %p60 = scmp.ne.s32.totalorder %s49, %s52
      %p61 = scmp.eq.s32.totalorder %s18, 1
      %p62 = por %p60, %p61
      %p63 = scmp.ne.s32.totalorder %s52, %s53
      %p64 = scmp.eq.s32.totalorder %s18, 0
      %p65 = por %p63, %p64
      %p66 = scmp.ne.s32.totalorder %s52, %s53
      %p67 = scmp.eq.s32.totalorder %s19, 1
      %p68 = por %p66, %p67
      %p70 = scmp.ne.s32.totalorder %s53, %s69
      %p71 = scmp.eq.s32.totalorder %s19, 0
      %p72 = por %p70, %p71
      %s74 = sadd.s32 %s73, 1
      %p77 = scmp.eq.s32.totalorder %s13, 1
      %p78 = scmp.ne.s32.totalorder %s73, %s75
      %p79 = scmp.eq.s32.totalorder %s13, 0
      %p80 = por %p78, %p79
      %p81 = scmp.ne.s32.totalorder %s73, %s75
      %p82 = scmp.eq.s32.totalorder %s18, 1
      %p83 = por %p81, %p82
      %p84 = scmp.ne.s32.totalorder %s75, %s76
      %p85 = scmp.eq.s32.totalorder %s18, 0
      %p86 = por %p84, %p85
      %p87 = scmp.ne.s32.totalorder %s75, %s76
      %p88 = scmp.eq.s32.totalorder %s19, 1
      %p89 = por %p87, %p88
      %p91 = scmp.ne.s32.totalorder %s76, %s90
      %p92 = scmp.eq.s32.totalorder %s19, 0
      %p93 = por %p91, %p92
      %s95 = sadd.s32 %s94, 1
      %p98 = scmp.eq.s32.totalorder %s13, 1
      %p99 = scmp.ne.s32.totalorder %s94, %s96
      %p100 = scmp.eq.s32.totalorder %s13, 0
      %p101 = por %p99, %p100
      %p102 = scmp.ne.s32.totalorder %s94, %s96
      %p103 = scmp.eq.s32.totalorder %s18, 1
      %p104 = por %p102, %p103
      %p105 = scmp.ne.s32.totalorder %s96, %s97
      %p106 = scmp.eq.s32.totalorder %s18, 0
      %p107 = por %p105, %p106
      %p108 = scmp.ne.s32.totalorder %s96, %s97
      %p109 = scmp.eq.s32.totalorder %s19, 1
      %p110 = por %p108, %p109
      %p112 = scmp.ne.s32.totalorder %s97, %s111
      %p113 = scmp.eq.s32.totalorder %s19, 0
      %p114 = por %p112, %p113
      %s116 = sadd.s32 %s115, 1
      %p119 = scmp.eq.s32.totalorder %s13, 1
      %p120 = scmp.ne.s32.totalorder %s115, %s117
      %p121 = scmp.eq.s32.totalorder %s13, 0
      %p122 = por %p120, %p121
      %p123 = scmp.ne.s32.totalorder %s115, %s117
      %p124 = scmp.eq.s32.totalorder %s18, 1
      %p125 = por %p123, %p124
      %p126 = scmp.ne.s32.totalorder %s117, %s118
      %p127 = scmp.eq.s32.totalorder %s18, 0
      %p128 = por %p126, %p127
      %p129 = scmp.ne.s32.totalorder %s117, %s118
      %p130 = scmp.eq.s32.totalorder %s19, 1
      %p131 = por %p129, %p130
      %p133 = scmp.ne.s32.totalorder %s118, %s132
      %p134 = scmp.eq.s32.totalorder %s19, 0
      %p135 = por %p133, %p134
      %s137 = sadd.s32 %s136, 1
      %p140 = scmp.eq.s32.totalorder %s13, 1
      %p141 = scmp.ne.s32.totalorder %s136, %s138
      %p142 = scmp.eq.s32.totalorder %s13, 0
      %p143 = por %p141, %p142
      %p144 = scmp.ne.s32.totalorder %s136, %s138
      %p145 = scmp.eq.s32.totalorder %s18, 1
      %p146 = por %p144, %p145
      %p147 = scmp.ne.s32.totalorder %s138, %s139
      %p148 = scmp.eq.s32.totalorder %s18, 0
      %p149 = por %p147, %p148
      %p150 = scmp.ne.s32.totalorder %s138, %s139
      %p151 = scmp.eq.s32.totalorder %s19, 1
      %p152 = por %p150, %p151
      %p154 = scmp.ne.s32.totalorder %s139, %s153
      %p155 = scmp.eq.s32.totalorder %s19, 0
      %p156 = por %p154, %p155
      %s157 = ssub.s32 %s13, %s20
      %p158 = scmp.eq.s32.totalorder %s157, 0
      %s160 = sadd.s32 %s159, 1
      %s161 = scalar_select %p158, %s159, %s160
      %p164 = pneg %p158
      %p165 = scmp.eq.s32.totalorder %s13, 1
      %p166 = por %p164, %p165
      %p167 = scmp.ne.s32.totalorder %s159, %s162
      %p168 = scmp.eq.s32.totalorder %s13, 0
      %p169 = por %p167, %p168
      %p170 = scmp.ne.s32.totalorder %s159, %s162
      %p171 = scmp.eq.s32.totalorder %s18, 1
      %p172 = por %p170, %p171
      %p173 = scmp.ne.s32.totalorder %s162, %s163
      %p174 = scmp.eq.s32.totalorder %s18, 0
      %p175 = por %p173, %p174
      %p176 = scmp.ne.s32.totalorder %s162, %s163
      %p177 = scmp.eq.s32.totalorder %s19, 1
      %p178 = por %p176, %p177
      %p180 = scmp.ne.s32.totalorder %s163, %s179
      %p181 = scmp.eq.s32.totalorder %s19, 0
      %p182 = por %p180, %p181
      %p183 = scmp.le.s32.totalorder 1, %s13
      %p184 = scmp.lt.s32.totalorder %s13, 3
      %p185 = pnand %p183, %p184
      %p186 = pneg %p185
      // Predicated region
      $region9: #{mol_aggregator_forward.5} parent=5 // pred_check
        _
      $region10: #{mol_aggregator_forward.5} parent=5 // pred_check_branch
        %188 = sbr.rel (%p185) target = $region12
      $region11: #{mol_aggregator_forward.5} parent=5 // pred_region
        %s189 = ssub.s32 %s13, 1
        // Predicated region
        $region13: #{mol_aggregator_forward.5} parent=11 // pred_check
          %p190 = pneg %p86
        $region14: #{mol_aggregator_forward.5} parent=11 // pred_check_branch
          %192 = sbr.rel (%p190) target = $region16
        $region15: #{mol_aggregator_forward.5} parent=11 // pred_region
          _
        $region16: #{mol_aggregator_forward.5} parent=11 // pred_fallthru
          _
        // Predicated region
        $region17: #{mol_aggregator_forward.5} parent=11 // pred_check
          %p193 = pneg %p107
        $region18: #{mol_aggregator_forward.5} parent=11 // pred_check_branch
          %195 = sbr.rel (%p193) target = $region20
        $region19: #{mol_aggregator_forward.5} parent=11 // pred_region
          _
        $region20: #{mol_aggregator_forward.5} parent=11 // pred_fallthru
          _
        // Predicated region
        $region21: #{mol_aggregator_forward.5} parent=11 // pred_check
          %p196 = pneg %p128
        $region22: #{mol_aggregator_forward.5} parent=11 // pred_check_branch
          %198 = sbr.rel (%p196) target = $region24
        $region23: #{mol_aggregator_forward.5} parent=11 // pred_region
          _
        $region24: #{mol_aggregator_forward.5} parent=11 // pred_fallthru
          _
        // Predicated region
        $region25: #{mol_aggregator_forward.5} parent=11 // pred_check
          %p199 = pneg %p149
        $region26: #{mol_aggregator_forward.5} parent=11 // pred_check_branch
          %201 = sbr.rel (%p199) target = $region28
        $region27: #{mol_aggregator_forward.5} parent=11 // pred_region
          %203 = vsyncadd [#allocation3], 0
          %s205 = sshll.u32 %s5, 4
          %s206 = int_to_ptr.vmem [resolvable:$true] %s205
          %208 = dma.vmem_to_smem %s206, 16, [#allocation2], [#allocation3]
        $region28: #{mol_aggregator_forward.5} parent=11 // pred_fallthru
          _
      $region12: #{mol_aggregator_forward.5} parent=5 // pred_fallthru
        _
      %p209 = scmp.lt.s32.totalorder %s13, 2
      // Predicated region
      $region29: #{mol_aggregator_forward.5} parent=5 // pred_check
        %p210 = pneg %p209
      $region30: #{mol_aggregator_forward.5} parent=5 // pred_check_branch
        %212 = sbr.rel (%p210) target = $region32
      $region31: #{mol_aggregator_forward.5} parent=5 // pred_region
        // Predicated region
        $region33: #{mol_aggregator_forward.5} parent=31 // pred_check
          %p213 = pneg %p33
        $region34: #{mol_aggregator_forward.5} parent=31 // pred_check_branch
          %215 = sbr.rel (%p213) target = $region36
        $region35: #{mol_aggregator_forward.5} parent=31 // pred_region
          %p216 = scmp.lt.s32.totalorder %s13, 1
          %s217 = scalar_select %p216, %s13, 1
          %s218 = smul.addr %s217, 5
          %s219 = smul.addr %s218, 8
          %s220 = scalar_lea.vmem %s0, %s219
        $region36: #{mol_aggregator_forward.5} parent=31 // pred_fallthru
          _
        // Predicated region
        $region37: #{mol_aggregator_forward.5} parent=31 // pred_check
          %p221 = pneg %p59
        $region38: #{mol_aggregator_forward.5} parent=31 // pred_check_branch
          %223 = sbr.rel (%p221) target = $region40
        $region39: #{mol_aggregator_forward.5} parent=31 // pred_region
          %p224 = scmp.lt.s32.totalorder %s13, 1
          %s225 = scalar_select %p224, %s13, 1
          %s226 = smul.addr %s225, 2
          %s227 = smul.addr %s226, 8
          %s228 = scalar_lea.vmem %s1, %s227
        $region40: #{mol_aggregator_forward.5} parent=31 // pred_fallthru
          _
      $region32: #{mol_aggregator_forward.5} parent=5 // pred_fallthru
        _
      %p229 = scmp.le.s32.totalorder 1, %s13
      %p230 = scmp.lt.s32.totalorder %s13, 3
      %p231 = pnand %p229, %p230
      %p232 = pneg %p231
      // Predicated region
      $region41: #{mol_aggregator_forward.5} parent=5 // pred_check
        _
      $region42: #{mol_aggregator_forward.5} parent=5 // pred_check_branch
        %234 = sbr.rel (%p231) target = $region44
      $region43: #{mol_aggregator_forward.5} parent=5 // pred_region
        %s235 = ssub.s32 %s13, 1
        // Predicated region
        $region45: #{mol_aggregator_forward.5} parent=43 // pred_check
          %p236 = pneg %p149
        $region46: #{mol_aggregator_forward.5} parent=43 // pred_check_branch
          %238 = sbr.rel (%p236) target = $region48
        $region47: #{mol_aggregator_forward.5} parent=43 // pred_region
          %240 = dma.done [#allocation3], 16
        $region48: #{mol_aggregator_forward.5} parent=43 // pred_fallthru
          _
        %241 = sfence
        %p242 = scmp.lt.s32.totalorder %s18, 1
        %s243 = scalar_select %p242, %s18, 1
        %s244 = smul.addr %s243, 5
        %s245 = smul.addr %s244, 8
        %s246 = scalar_lea.vmem %s0, %s245
        %p247 = pneg %p39
        %p248 = pneg %p36
        %p249 = scmp.lt.s32.totalorder %s18, 1
        %s250 = scalar_select %p249, %s18, 1
        %s251 = smul.addr %s250, 2
        %s252 = smul.addr %s251, 8
        %s253 = scalar_lea.vmem %s1, %s252
        %p254 = pneg %p65
        %p255 = pneg %p62
        %p256 = pneg %p86
        %p257 = pneg %p83
        %p258 = pneg %p107
        %p259 = pneg %p104
        %p260 = pneg %p128
        %p261 = pneg %p125
        %p262 = pneg %p149
        %p263 = pneg %p146
        %p264 = pneg %p175
        %p265 = pneg %p172
        %p266 = scmp.lt.s32.totalorder %s18, 1
        %s267 = scalar_select %p266, %s18, 1
        %s268 = scalar_lea.vmem %s6, %s267
        %p269 = scmp.lt.s32.totalorder %s18, 1
        %s270 = scalar_select %p269, %s18, 1
        %s271 = smul.addr %s270, 5
        %s272 = smul.addr %s271, 8
        %s273 = scalar_lea.vmem %s0, %s272
        %p274 = scmp.lt.s32.totalorder %s18, 1
        %s275 = scalar_select %p274, %s18, 1
        %s276 = smul.addr %s275, 2
        %s277 = smul.addr %s276, 8
        %s278 = scalar_lea.vmem %s1, %s277
        %p279 = scmp.lt.s32.totalorder %s18, 1
        %s280 = scalar_select %p279, %s18, 1
        %s281 = scalar_lea.vmem %s6, %s280
        %v282 = vld [vmem:[%s273] sm:$0xff]
        %v283 = vld [vmem:[%s273 + $0x8] sm:$0xff]
        %v284 = vld [vmem:[%s273 + $0x10] sm:$0xff]
        %v285 = vld [vmem:[%s273 + $0x18] sm:$0xff]
        %v286 = vld [vmem:[%s278] sm:$0xff]
        %v287 = vld [vmem:[%s278 + $0x8] sm:$0xff]
        %vm288 = vcmask 261120
        %v290 = vsel %vm288, %v286, 0
        %v293 = vsel %vm288, %v287, 0
        %295 = vmatpush.msra.mxu0 0.0
        %296 = vmatpush.msra.mxu0 0.0
        %297 = vmatpush.msra.mxu0 0.0
        %298 = vmatpush.msra.mxu0 0.0
        %299 = vmatpush.msra.mxu0 0.0
        %300 = vmatpush.msra.mxu0 0.0
        %301 = vmatpush.msra.mxu0 0.0
        %302 = vmatpush.msra.mxu0 0.0
        %303 = vmatpush.msra.mxu0 0.0
        %304 = vmatpush.msra.mxu0 0.0
        %305 = vmatpush.msra.mxu0 0.0
        %306 = vmatpush.msra.mxu0 0.0
        %307 = vmatpush.msra.mxu0 %v285
        %308 = vmatpush.msra.mxu0 %v284
        %309 = vmatpush.msra.mxu0 %v283
        %310 = vmatpush.msra.mxu0 %v282
        %311 = vmatmul.f32.gmra.mxu0 %v290
        %v312 = vpop.f32.mrf.mxu0
        %v313 = vadd.f32 0.0, %v312
        %314 = vmatmul.f32.gmra.mxu0 %v293
        %v315 = vpop.f32.mrf.mxu0
        %v316 = vadd.f32 0.0, %v315
        %317 = vdwg.mxu0
        %322 = vrot.lane.b32.xlu0 %v282, 96
        %v323 = vpop.permute.xlu0 %322
        %324 = vrot.lane.b32.xlu0 %v283, 96
        %v325 = vpop.permute.xlu0 %324
        %326 = vrot.lane.b32.xlu0 %v284, 96
        %v327 = vpop.permute.xlu0 %326
        %328 = vrot.lane.b32.xlu0 %v285, 96
        %v329 = vpop.permute.xlu0 %328
        %334 = vmatpush.msra.mxu0 0.0
        %335 = vmatpush.msra.mxu0 0.0
        %336 = vmatpush.msra.mxu0 0.0
        %337 = vmatpush.msra.mxu0 0.0
        %338 = vmatpush.msra.mxu0 0.0
        %339 = vmatpush.msra.mxu0 0.0
        %340 = vmatpush.msra.mxu0 0.0
        %341 = vmatpush.msra.mxu0 0.0
        %342 = vmatpush.msra.mxu0 0.0
        %343 = vmatpush.msra.mxu0 0.0
        %344 = vmatpush.msra.mxu0 0.0
        %345 = vmatpush.msra.mxu0 0.0
        %346 = vmatpush.msra.mxu0 %v329
        %347 = vmatpush.msra.mxu0 %v327
        %348 = vmatpush.msra.mxu0 %v325
        %349 = vmatpush.msra.mxu0 %v323
        %350 = vmatmul.f32.gmra.mxu0 %v290
        %v351 = vpop.f32.mrf.mxu0
        %v352 = vadd.f32 0.0, %v351
        %353 = vmatmul.f32.gmra.mxu0 %v293
        %v354 = vpop.f32.mrf.mxu0
        %v355 = vadd.f32 0.0, %v354
        %356 = vdwg.mxu0
        %358 = vset.pattern.permute.xlu0 0
        %359 = vperm.xlu0 %358, %v352
        %v360 = vpop.permute.xlu0 %359
        %363 = vset.pattern.permute.xlu0 0
        %364 = vperm.xlu0 %363, %v355
        %v365 = vpop.permute.xlu0 %364
        %v367 = vmul.f32 %v313, %v360
        %v368 = vmul.f32 %v316, %v365
        %369 = vrot.lane.b32.xlu0 %v282, 32
        %v370 = vpop.permute.xlu0 %369
        %371 = vrot.lane.b32.xlu0 %v283, 32
        %v372 = vpop.permute.xlu0 %371
        %373 = vrot.lane.b32.xlu0 %v284, 32
        %v374 = vpop.permute.xlu0 %373
        %375 = vrot.lane.b32.xlu0 %v285, 32
        %v376 = vpop.permute.xlu0 %375
        %381 = vmatpush.msra.mxu0 0.0
        %382 = vmatpush.msra.mxu0 0.0
        %383 = vmatpush.msra.mxu0 0.0
        %384 = vmatpush.msra.mxu0 0.0
        %385 = vmatpush.msra.mxu0 0.0
        %386 = vmatpush.msra.mxu0 0.0
        %387 = vmatpush.msra.mxu0 0.0
        %388 = vmatpush.msra.mxu0 0.0
        %389 = vmatpush.msra.mxu0 0.0
        %390 = vmatpush.msra.mxu0 0.0
        %391 = vmatpush.msra.mxu0 0.0
        %392 = vmatpush.msra.mxu0 0.0
        %393 = vmatpush.msra.mxu0 %v376
        %394 = vmatpush.msra.mxu0 %v374
        %395 = vmatpush.msra.mxu0 %v372
        %396 = vmatpush.msra.mxu0 %v370
        %397 = vmatmul.f32.gmra.mxu0 %v290
        %v398 = vpop.f32.mrf.mxu0
        %v399 = vadd.f32 0.0, %v398
        %400 = vmatmul.f32.gmra.mxu0 %v293
        %v401 = vpop.f32.mrf.mxu0
        %v402 = vadd.f32 0.0, %v401
        %403 = vdwg.mxu0
        %404 = vrot.lane.b32.xlu0 %v282, 64
        %v405 = vpop.permute.xlu0 %404
        %406 = vrot.lane.b32.xlu0 %v283, 64
        %v407 = vpop.permute.xlu0 %406
        %408 = vrot.lane.b32.xlu0 %v284, 64
        %v409 = vpop.permute.xlu0 %408
        %410 = vrot.lane.b32.xlu0 %v285, 64
        %v411 = vpop.permute.xlu0 %410
        %416 = vmatpush.msra.mxu0 0.0
        %417 = vmatpush.msra.mxu0 0.0
        %418 = vmatpush.msra.mxu0 0.0
        %419 = vmatpush.msra.mxu0 0.0
        %420 = vmatpush.msra.mxu0 0.0
        %421 = vmatpush.msra.mxu0 0.0
        %422 = vmatpush.msra.mxu0 0.0
        %423 = vmatpush.msra.mxu0 0.0
        %424 = vmatpush.msra.mxu0 0.0
        %425 = vmatpush.msra.mxu0 0.0
        %426 = vmatpush.msra.mxu0 0.0
        %427 = vmatpush.msra.mxu0 0.0
        %428 = vmatpush.msra.mxu0 %v411
        %429 = vmatpush.msra.mxu0 %v409
        %430 = vmatpush.msra.mxu0 %v407
        %431 = vmatpush.msra.mxu0 %v405
        %432 = vmatmul.f32.gmra.mxu0 %v290
        %v433 = vpop.f32.mrf.mxu0
        %v434 = vadd.f32 0.0, %v433
        %435 = vmatmul.f32.gmra.mxu0 %v293
        %v436 = vpop.f32.mrf.mxu0
        %v437 = vadd.f32 0.0, %v436
        %438 = vdwg.mxu0
        %v440 = vsel %vm288, %v434, 0
        %v443 = vsel %vm288, %v437, 0
        %445 = vmatpush.xpose.msra.mxu0 0.0
        %446 = vmatpush.xpose.msra.mxu0 0.0
        %447 = vmatpush.xpose.msra.mxu0 0.0
        %448 = vmatpush.xpose.msra.mxu0 0.0
        %449 = vmatpush.xpose.msra.mxu0 0.0
        %450 = vmatpush.xpose.msra.mxu0 0.0
        %451 = vmatpush.xpose.msra.mxu0 0.0
        %452 = vmatpush.xpose.msra.mxu0 0.0
        %453 = vmatpush.xpose.msra.mxu0 0.0
        %454 = vmatpush.xpose.msra.mxu0 0.0
        %455 = vmatpush.xpose.msra.mxu0 0.0
        %456 = vmatpush.xpose.msra.mxu0 0.0
        %457 = vmatpush.xpose.msra.mxu0 0.0
        %458 = vmatpush.xpose.msra.mxu0 0.0
        %459 = vmatpush.xpose.msra.mxu0 %v293
        %460 = vmatpush.xpose.msra.mxu0 %v290
        %461 = vmatmul.f32.gmra.mxu0 %v440
        %v462 = vpop.f32.mrf.mxu0
        %v463 = vadd.f32 0.0, %v462
        %464 = vmatmul.f32.gmra.mxu0 %v443
        %v465 = vpop.f32.mrf.mxu0
        %v466 = vadd.f32 0.0, %v465
        %467 = vdwg.mxu0
        %v468 = vlaneseq
        %v469 = vshrl.u32 %v468, 7
        %v470 = vadd.s32 %v469, 8
        %v471 = vlaneseq
        %v472 = vand.u32 %v471, 127
        %vm473 = vcmp.eq.s32.totalorder %v469, %v472
        %vm474 = vcmp.eq.s32.totalorder %v470, %v472
        %v475 = vsel %vm473, 1, 0
        %v476 = vsel %vm474, 1, 0
        %v477 = vcvt.s32.f32 %v475
        %v478 = vcvt.s32.f32 %v476
        %v479 = vmax.f32 %v463, %v477
        %v480 = vmax.f32 %v466, %v478
        %v481 = vld [vmem:[%s2] sm:$0xff]
        %v482 = vld [vmem:[%s2 + $0x8] sm:$0xff]
        %v483 = vld [vmem:[%s2 + $0x10] sm:$0xff]
        %v484 = vld [vmem:[%s2 + $0x18] sm:$0xff]
        %vm485 = vcmask 130048
        %v486 = vsel %vm485, %v479, 0.0
        %487 = vadd.xlane.f32.xlu0 %v486
        %v488 = vpop.xlane.xlu0 %487
        %v489 = vsel %vm485, %v480, 0.0
        %490 = vadd.xlane.f32.xlu0 %v489
        %v491 = vpop.xlane.xlu0 %490
        %v492 = vadd.f32 %v486, %v489
        %v493 = vrot.slane %v492, 4
        %v494 = vadd.f32 %v492, %v493
        %v495 = vrot.slane %v494, 2
        %v496 = vadd.f32 %v494, %v495
        %v497 = vrot.slane %v496, 1
        %v498 = vadd.f32 %v496, %v497
        %vm499 = vcmp.gt.f32.partialorder %v488, 0.0
        %vm500 = vcmp.gt.f32.partialorder %v491, 0.0
        %v501 = vrsqrt.pop %v488
        %v502 = vmul.f32 %v501, %v488
        %v503 = vmul.f32 %v502, %v501
        %v504 = vmul.f32 0.5, %v503
        %v505 = vsub.f32 1.5, %v504
        %v506 = vmul.f32 %v501, %v505
        %vm507 = vweird.f32 %v488
        %vm508 = vweird.f32 %v501
        %vm509 = vmor %vm507, %vm508
        %v510 = vsel %vm509, %v501, %v506
        %v511 = vrsqrt.pop %v491
        %v512 = vmul.f32 %v511, %v491
        %v513 = vmul.f32 %v512, %v511
        %v514 = vmul.f32 0.5, %v513
        %v515 = vsub.f32 1.5, %v514
        %v516 = vmul.f32 %v511, %v515
        %vm517 = vweird.f32 %v491
        %vm518 = vweird.f32 %v511
        %vm519 = vmor %vm517, %vm518
        %v520 = vsel %vm519, %v511, %v516
        %v521 = vsel %vm499, %v510, 0.0
        %v522 = vsel %vm500, %v520, 0.0
        %vm523 = vcmp.gt.f32.partialorder %v498, 0.0
        %v524 = vrsqrt.pop %v498
        %v525 = vmul.f32 %v524, %v498
        %v526 = vmul.f32 %v525, %v524
        %v527 = vmul.f32 0.5, %v526
        %v528 = vsub.f32 1.5, %v527
        %v529 = vmul.f32 %v524, %v528
        %vm530 = vweird.f32 %v498
        %vm531 = vweird.f32 %v524
        %vm532 = vmor %vm530, %vm531
        %v533 = vsel %vm532, %v524, %v529
        %v534 = vsel %vm523, %v533, 0.0
        %v535 = vmul.f32 %v521, %v479
        %v536 = vmul.f32 %v522, %v480
        %v537 = vmul.f32 %v535, %v534
        %v538 = vmul.f32 %v536, %v534
        %v540 = vsel %vm485, %v537, 0
        %v543 = vsel %vm485, %v538, 0
        %545 = vmatpush.msra.mxu0 0.0
        %546 = vmatpush.msra.mxu0 0.0
        %547 = vmatpush.msra.mxu0 0.0
        %548 = vmatpush.msra.mxu0 0.0
        %549 = vmatpush.msra.mxu0 0.0
        %550 = vmatpush.msra.mxu0 0.0
        %551 = vmatpush.msra.mxu0 0.0
        %552 = vmatpush.msra.mxu0 0.0
        %553 = vmatpush.msra.mxu0 0.0
        %554 = vmatpush.msra.mxu0 0.0
        %555 = vmatpush.msra.mxu0 0.0
        %556 = vmatpush.msra.mxu0 0.0
        %557 = vmatpush.msra.mxu0 0.0
        %558 = vmatpush.msra.mxu0 0.0
        %559 = vmatpush.msra.mxu0 %v368
        %560 = vmatpush.msra.mxu0 %v367
        %561 = vmatmul.f32.gmra.mxu0 %v540
        %v562 = vpop.f32.mrf.mxu0
        %v563 = vadd.f32 0.0, %v562
        %564 = vmatmul.f32.gmra.mxu0 %v543
        %v565 = vpop.f32.mrf.mxu0
        %v566 = vadd.f32 0.0, %v565
        %567 = vdwg.mxu0
        %v568 = vmul.f32 %v563, 0.8
        %v569 = vmul.f32 %v566, 0.8
        %v570 = vmul.f32 %v399, 0.2
        %v571 = vmul.f32 %v402, 0.2
        %v572 = vadd.f32 %v568, %v570
        %v573 = vadd.f32 %v569, %v571
        %v575 = vsel %vm288, %v572, 0
        %v578 = vsel %vm288, %v573, 0
        %580 = vmatpush.msra.mxu0 0.0
        %581 = vmatpush.msra.mxu0 0.0
        %582 = vmatpush.msra.mxu0 0.0
        %583 = vmatpush.msra.mxu0 0.0
        %584 = vmatpush.msra.mxu0 0.0
        %585 = vmatpush.msra.mxu0 0.0
        %586 = vmatpush.msra.mxu0 0.0
        %587 = vmatpush.msra.mxu0 0.0
        %588 = vmatpush.msra.mxu0 0.0
        %589 = vmatpush.msra.mxu0 0.0
        %590 = vmatpush.msra.mxu0 0.0
        %591 = vmatpush.msra.mxu0 0.0
        %592 = vmatpush.msra.mxu0 %v484
        %593 = vmatpush.msra.mxu0 %v483
        %594 = vmatpush.msra.mxu0 %v482
        %595 = vmatpush.msra.mxu0 %v481
        %596 = vmatmul.f32.gmra.mxu0 %v575
        %v597 = vpop.f32.mrf.mxu0
        %v598 = vadd.f32 0.0, %v597
        %599 = vmatmul.f32.gmra.mxu0 %v578
        %v600 = vpop.f32.mrf.mxu0
        %v601 = vadd.f32 0.0, %v600
        %602 = vdwg.mxu0
        %v603 = vsel %vm288, %v598, 0.0
        %v604 = vsel %vm288, %v601, 0.0
        %v605 = vadd.f32 %v603, %v604
        %v606 = vrot.slane %v605, 4
        %v607 = vadd.f32 %v605, %v606
        %v608 = vrot.slane %v607, 2
        %v609 = vadd.f32 %v607, %v608
        %v610 = vrot.slane %v609, 1
        %v611 = vadd.f32 %v609, %v610
        %v612 = vmul.f32 %v611, 0.0625
        %v613 = vsub.f32 %v598, %v612
        %v614 = vsub.f32 %v601, %v612
        %v615 = vmul.f32 %v613, %v613
        %v616 = vmul.f32 %v614, %v614
        %v617 = vsel %vm288, %v615, 0.0
        %v618 = vsel %vm288, %v616, 0.0
        %v619 = vadd.f32 %v617, %v618
        %v620 = vrot.slane %v619, 4
        %v621 = vadd.f32 %v619, %v620
        %v622 = vrot.slane %v621, 2
        %v623 = vadd.f32 %v621, %v622
        %v624 = vrot.slane %v623, 1
        %v625 = vadd.f32 %v623, %v624
        %v626 = vmul.f32 %v625, 0.0625
        %v627 = vadd.f32 %v626, 1e-05
        %v628 = vrsqrt.pop %v627
        %v629 = vmul.f32 %v628, %v627
        %v630 = vmul.f32 %v629, %v628
        %v631 = vmul.f32 0.5, %v630
        %v632 = vsub.f32 1.5, %v631
        %v633 = vmul.f32 %v628, %v632
        %vm634 = vweird.f32 %v627
        %vm635 = vweird.f32 %v628
        %vm636 = vmor %vm634, %vm635
        %v637 = vsel %vm636, %v628, %v633
        %v638 = vmul.f32 %v613, %v637
        %v639 = vmul.f32 %v614, %v637
        %v640 = vmax.f32 %v638, 0.0
        %v641 = vmax.f32 %v639, 0.0
        %v642 = vld [vmem:[%s3] sm:$0xff]
        %v643 = vld [vmem:[%s3 + $0x8] sm:$0xff]
        %v644 = vld [vmem:[%s3 + $0x10] sm:$0xff]
        %v645 = vld [vmem:[%s3 + $0x18] sm:$0xff]
        %v646 = vld [vmem:[%s3 + $0x20] sm:$0xff]
        %v647 = vld [vmem:[%s4] sm:$0xff]
        %v648 = vld [vmem:[%s4 + $0x8] sm:$0xff]
        %v649 = vld [vmem:[%s4 + $0x10] sm:$0xff]
        %v650 = vld [vmem:[%s4 + $0x18] sm:$0xff]
        %s651 = sld [smem:[#allocation2]]
        %v652 = vperm.slane %v646, 0
        %v654 = vsel %vm288, %v640, 0
        %v657 = vsel %vm288, %v641, 0
        %659 = vmatpush.msra.mxu0 0.0
        %660 = vmatpush.msra.mxu0 0.0
        %661 = vmatpush.msra.mxu0 0.0
        %662 = vmatpush.msra.mxu0 0.0
        %663 = vmatpush.msra.mxu0 0.0
        %664 = vmatpush.msra.mxu0 0.0
        %665 = vmatpush.msra.mxu0 0.0
        %666 = vmatpush.msra.mxu0 0.0
        %667 = vmatpush.msra.mxu0 0.0
        %668 = vmatpush.msra.mxu0 0.0
        %669 = vmatpush.msra.mxu0 0.0
        %670 = vmatpush.msra.mxu0 0.0
        %671 = vmatpush.msra.mxu0 %v645
        %672 = vmatpush.msra.mxu0 %v644
        %673 = vmatpush.msra.mxu0 %v643
        %674 = vmatpush.msra.mxu0 %v642
        %675 = vmatmul.f32.gmra.mxu0 %v654
        %v676 = vpop.f32.mrf.mxu0
        %v677 = vadd.f32 %v652, %v676
        %678 = vmatmul.f32.gmra.mxu0 %v657
        %v679 = vpop.f32.mrf.mxu0
        %v680 = vadd.f32 %v652, %v679
        %681 = vdwg.mxu0
        %v682 = vstv %s651
        %683 = vmatpush.msra.mxu0 0.0
        %684 = vmatpush.msra.mxu0 0.0
        %685 = vmatpush.msra.mxu0 0.0
        %686 = vmatpush.msra.mxu0 0.0
        %687 = vmatpush.msra.mxu0 0.0
        %688 = vmatpush.msra.mxu0 0.0
        %689 = vmatpush.msra.mxu0 0.0
        %690 = vmatpush.msra.mxu0 0.0
        %691 = vmatpush.msra.mxu0 0.0
        %692 = vmatpush.msra.mxu0 0.0
        %693 = vmatpush.msra.mxu0 0.0
        %694 = vmatpush.msra.mxu0 0.0
        %695 = vmatpush.msra.mxu0 %v650
        %696 = vmatpush.msra.mxu0 %v649
        %697 = vmatpush.msra.mxu0 %v648
        %698 = vmatpush.msra.mxu0 %v647
        %699 = vmatmul.f32.gmra.mxu0 %v654
        %v700 = vpop.f32.mrf.mxu0
        %v701 = vadd.f32 %v682, %v700
        %702 = vmatmul.f32.gmra.mxu0 %v657
        %v703 = vpop.f32.mrf.mxu0
        %v704 = vadd.f32 %v682, %v703
        %705 = vdwg.mxu0
        %vm706 = vcmask 7168
        %v707 = vsel %vm706, %v701, -inf
        %v708 = vsel %vm706, %v704, -inf
        %v709 = vmax.f32 %v707, %v708
        %v710 = vrot.slane %v709, 4
        %v711 = vmax.f32 %v709, %v710
        %v712 = vrot.slane %v711, 2
        %v713 = vmax.f32 %v711, %v712
        %v714 = vrot.slane %v713, 1
        %v715 = vmax.f32 %v713, %v714
        %v716 = vsub.f32 %v701, %v715
        %v717 = vsub.f32 %v704, %v715
        %v718 = vmul.f32 %v716, 1.442695
        %v719 = vpow.pop %v718
        %v720 = vmul.f32 %v717, 1.442695
        %v721 = vpow.pop %v720
        %v722 = vsel %vm706, %v719, 0.0
        %v723 = vsel %vm706, %v721, 0.0
        %v724 = vadd.f32 %v722, %v723
        %v725 = vrot.slane %v724, 4
        %v726 = vadd.f32 %v724, %v725
        %v727 = vrot.slane %v726, 2
        %v728 = vadd.f32 %v726, %v727
        %v729 = vrot.slane %v728, 1
        %v730 = vadd.f32 %v728, %v729
        %v731 = vrcp.pop %v730
        %v732 = vmul.f32 %v719, %v731
        %v733 = vmul.f32 %v721, %v731
        %735 = vset.pattern.permute.xlu0 0
        %736 = vperm.xlu0 %735, %v732
        %v737 = vpop.permute.xlu0 %736
        %740 = vset.pattern.permute.xlu0 0
        %741 = vperm.xlu0 %740, %v733
        %v742 = vpop.permute.xlu0 %741
        %v744 = vmul.f32 %v737, %v677
        %v745 = vmul.f32 %v742, %v680
        %v746 = vsel %vm288, %v744, 0.0
        %v747 = vsel %vm288, %v745, 0.0
        %v748 = vadd.f32 %v746, %v747
        %v749 = vrot.slane %v748, 4
        %v750 = vadd.f32 %v748, %v749
        %v751 = vrot.slane %v750, 2
        %v752 = vadd.f32 %v750, %v751
        %v753 = vrot.slane %v752, 1
        %v754 = vadd.f32 %v752, %v753
        %v755 = vsel %vm288, %v754, 0.0
        %756 = vst [vmem:[%s281] sm:$0x1] %v755
        %p757 = scmp.lt.s32.totalorder %s18, 1
        %s758 = scalar_select %p757, %s18, 1
        %s759 = scalar_lea.vmem %s6, %s758
        // Predicated region
        $region49: #{mol_aggregator_forward.5} parent=43 // pred_check
          %p760 = pneg %p172
        $region50: #{mol_aggregator_forward.5} parent=43 // pred_check_branch
          %762 = sbr.rel (%p760) target = $region52
        $region51: #{mol_aggregator_forward.5} parent=43 // pred_region
          _
        $region52: #{mol_aggregator_forward.5} parent=43 // pred_fallthru
          _
      $region44: #{mol_aggregator_forward.5} parent=5 // pred_fallthru
        _
      %p763 = scmp.le.s32.totalorder 2, %s13
      // Predicated region
      $region53: #{mol_aggregator_forward.5} parent=5 // pred_check
        %p764 = pneg %p763
      $region54: #{mol_aggregator_forward.5} parent=5 // pred_check_branch
        %766 = sbr.rel (%p764) target = $region56
      $region55: #{mol_aggregator_forward.5} parent=5 // pred_region
        %s767 = ssub.s32 %s13, 2
        // Predicated region
        $region57: #{mol_aggregator_forward.5} parent=55 // pred_check
          %p768 = pneg %p178
        $region58: #{mol_aggregator_forward.5} parent=55 // pred_check_branch
          %770 = sbr.rel (%p768) target = $region60
        $region59: #{mol_aggregator_forward.5} parent=55 // pred_region
          %p771 = scmp.lt.s32.totalorder %s19, 1
          %s772 = scalar_select %p771, %s19, 1
          %s773 = scalar_lea.vmem %s6, %s772
        $region60: #{mol_aggregator_forward.5} parent=55 // pred_fallthru
          _
      $region56: #{mol_aggregator_forward.5} parent=5 // pred_fallthru
        _
    $region6: #{mol_aggregator_forward.5} parent=1 // loop_footer
      %s17 = sadd.s32 1, %s13
    $region7: #{mol_aggregator_forward.5} parent=1 // loop_footer_branch
      %12 = sbr.rel target = $region3
    $region8: #{mol_aggregator_forward.5} parent=1 // loop_exit
      _
    %774 = vsyncpa [#allocation3], 1
    %s775 = scalar_lea.sflag [#allocation3], 1
    %776 = vsyncpa %s775, 1

</llo_original>
